<compile_context>
chip_gen: v6e
topology: v6e:2x2x1
jax: 0.10.0
libtpu: 0.0.40
codegen_flags: <defaults>
</compile_context>

<pallas_src>
import numpy as np

import jax
import jax.numpy as jnp
from jax.experimental import pallas as pl
from jax.experimental.pallas import tpu as pltpu


# ----------------------------- kernel helpers ------------------------------

def _lrelu(y):
    return jnp.where(y >= 0, y, 0.2 * y)


def _inorm_lrelu(y):
    """InstanceNorm2d (affine=False, eps=1e-5, biased var) + LeakyReLU(0.2).

    y: (C, spatial) for a single sample -> per-row mean/var over the lane axis.
    """
    m = jnp.mean(y, axis=-1, keepdims=True)
    v = jnp.mean(jnp.square(y - m), axis=-1, keepdims=True)
    y = (y - m) * jax.lax.rsqrt(v + 1e-5)
    return _lrelu(y)


# ------------------------------ fused kernel --------------------------------

def _discriminator_kernel(x_ref, s1_ref, s2_ref, s3_ref,
                          w1_ref, b1_ref, w2_ref, w3_ref, w4_ref, b4_ref,
                          out_ref, prob_ref):
    """Whole Discriminator forward for one sample; everything stays in VMEM.

    x_ref : (1, 4, Cin, (H/2)*(W/2))  space-to-depth input (parity planes)
    s1    : (4,  (H/2)*(W/2), oh1*ow1) one-hot window-shift gathers (layer 1)
    s2    : (16, oh1*ow1,     oh2*ow2) one-hot strided-patch gathers (layer 2)
    s3    : (16, oh2*ow2,     oh3*ow3) one-hot strided-patch gathers (layer 3)
    w*_ref: (16, Cout, Cin)            conv weights, offset-major blocks
    """
    f32 = jnp.float32

    # 4 parity planes of the space-to-depth input, each (Cin, (H/2)*(W/2)).
    xpar = [x_ref[0, p] for p in range(4)]

    # ---- layer 1: Conv(Cin->8, k4, s2, bias=True) + LeakyReLU(0.2) ---------
    y1 = jnp.zeros((w1_ref.shape[1], s1_ref.shape[2]), f32)       # (8, oh1*ow1)
    for i in range(4):
        for j in range(4):
            k = i * 4 + j
            par = (i % 2) * 2 + (j % 2)        # parity plane for offset (i, j)
            sel = (i // 2) * 2 + (j // 2)      # window shift inside the plane
            patch = jnp.dot(xpar[par], s1_ref[sel],
                            preferred_element_type=f32)           # (Cin, oh1*ow1)
            y1 = y1 + jnp.dot(w1_ref[k], patch,
                              preferred_element_type=f32)         # (8,   oh1*ow1)
    y1 = _lrelu(y1 + b1_ref[...])

    # ---- layer 2: Conv(8->16, k4, s2) + InstanceNorm(16) + LeakyReLU -------
    y2 = jnp.zeros((w2_ref.shape[1], s2_ref.shape[2]), f32)       # (16, oh2*ow2)
    for k in range(16):
        patch = jnp.dot(y1, s2_ref[k], preferred_element_type=f32)
        y2 = y2 + jnp.dot(w2_ref[k], patch, preferred_element_type=f32)
    y2 = _inorm_lrelu(y2)

    # ---- layer 3: Conv(16->32, k4, s2) + InstanceNorm(32) + LeakyReLU ------
    y3 = jnp.zeros((w3_ref.shape[1], s3_ref.shape[2]), f32)       # (32, oh3*ow3)
    for k in range(16):
        patch = jnp.dot(y2, s3_ref[k], preferred_element_type=f32)
        y3 = y3 + jnp.dot(w3_ref[k], patch, preferred_element_type=f32)
    y3 = _inorm_lrelu(y3)

    # ---- head: 1x1 Conv(32->1, bias=True) + sigmoid (VPU mul + sublane sum)
    logit = jnp.sum(y3 * w4_ref[...], axis=0, keepdims=True) + b4_ref[...]
    out_ref[0] = logit
    prob_ref[0] = jax.nn.sigmoid(logit)


# ------------------------- wrapper-side preparation --------------------------

def _conv_out(n):            # kernel 4, stride 2, VALID
    return (n - 4) // 2 + 1


def _build_selectors(H, W):
    """One-hot gather operators that extract strided conv patches on-chip."""
    Hh, Wh = H // 2, W // 2
    oh1, ow1 = _conv_out(H), _conv_out(W)
    oh2, ow2 = _conv_out(oh1), _conv_out(ow1)
    oh3, ow3 = _conv_out(oh2), _conv_out(ow2)

    def gather(h_in, w_in, h_out, w_out, stride, offsets):
        m = np.zeros((len(offsets), h_in * w_in, h_out * w_out), np.float32)
        for k, (di, dj) in enumerate(offsets):
            for ph in range(h_out):
                for pw in range(w_out):
                    m[k, (stride * ph + di) * w_in + (stride * pw + dj),
                      ph * w_out + pw] = 1.0
        return m

    # layer 1 works on the half-resolution parity planes -> 4 stride-1 shifts.
    s1 = gather(Hh, Wh, oh1, ow1, 1, [(a, b) for a in (0, 1) for b in (0, 1)])
    # layers 2/3 gather the 16 (i, j) kernel offsets directly (stride 2).
    off16 = [(i, j) for i in range(4) for j in range(4)]
    s2 = gather(oh1, ow1, oh2, ow2, 2, off16)
    s3 = gather(oh2, ow2, oh3, ow3, 2, off16)
    return s1, s2, s3, (oh3, ow3)


def init_params(key, image_nc):
    """Random parameters in the PyTorch layout (OIHW weights)."""
    ks = jax.random.split(key, 6)
    scale = 0.1
    return {
        "w1": scale * jax.random.normal(ks[0], (8, image_nc, 4, 4), jnp.float32),
        "b1": scale * jax.random.normal(ks[1], (8,), jnp.float32),
        "w2": scale * jax.random.normal(ks[2], (16, 8, 4, 4), jnp.float32),
        "w3": scale * jax.random.normal(ks[3], (32, 16, 4, 4), jnp.float32),
        "w4": scale * jax.random.normal(ks[4], (1, 32, 1, 1), jnp.float32),
        "b4": scale * jax.random.normal(ks[5], (1,), jnp.float32),
    }


def prepare_params(params):
    """One-time re-layout of PyTorch weights into the kernel's block layout."""
    def blocks(w):           # (Cout, Cin, 4, 4) -> (16, Cout, Cin), offset-major
        cout, cin = w.shape[0], w.shape[1]
        return jnp.transpose(w, (2, 3, 0, 1)).reshape(16, cout, cin)
    return {
        "w1b": blocks(params["w1"]),              # (16, 8,  Cin)
        "b1": params["b1"].reshape(8, 1),
        "w2b": blocks(params["w2"]),              # (16, 16, 8)
        "w3b": blocks(params["w3"]),              # (16, 32, 16)
        "w4": params["w4"].reshape(32, 1),
        "b4": params["b4"].reshape(1, 1),
    }


def _full_spec(a):
    """BlockSpec covering a whole grid-invariant array (fetched once)."""
    if a.ndim == 2:
        return pl.BlockSpec(a.shape, lambda n: (0, 0))
    return pl.BlockSpec(a.shape, lambda n: (0, 0, 0))


@jax.jit
def discriminator_forward(prep, x):
    N, cin, H, W = x.shape
    assert H % 2 == 0 and W % 2 == 0, "stride-2 space-to-depth needs even H, W"
    s1, s2, s3, (oh3, ow3) = _build_selectors(H, W)
    s1, s2, s3 = jnp.asarray(s1), jnp.asarray(s2), jnp.asarray(s3)

    # space-to-depth (zero replication): (N, Cin, H, W) -> (N, 4, Cin, Hh*Wh).
    x_s2d = (x.reshape(N, cin, H // 2, 2, W // 2, 2)
               .transpose(0, 3, 5, 1, 2, 4)
               .reshape(N, 4, cin, (H // 2) * (W // 2)))

    so3 = oh3 * ow3
    out_flat, prob_flat = pl.pallas_call(
        _discriminator_kernel,
        out_shape=(jax.ShapeDtypeStruct((N, 1, so3), jnp.float32),
                   jax.ShapeDtypeStruct((N, 1, so3), jnp.float32)),
        grid=(N,),
        in_specs=[
            pl.BlockSpec((1, 4, cin, (H // 2) * (W // 2)),
                         lambda n: (n, 0, 0, 0)),
            _full_spec(s1), _full_spec(s2), _full_spec(s3),
            _full_spec(prep["w1b"]), _full_spec(prep["b1"]),
            _full_spec(prep["w2b"]), _full_spec(prep["w3b"]),
            _full_spec(prep["w4"]), _full_spec(prep["b4"]),
        ],
        out_specs=(
            pl.BlockSpec((1, 1, so3), lambda n: (n, 0, 0)),
            pl.BlockSpec((1, 1, so3), lambda n: (n, 0, 0)),
        ),
        compiler_params=pltpu.CompilerParams(
            dimension_semantics=("parallel",)),
    )(x_s2d, s1, s2, s3, prep["w1b"], prep["b1"], prep["w2b"],
      prep["w3b"], prep["w4"], prep["b4"])

    out = out_flat.reshape(N, 1, oh3, ow3)
    prob = prob_flat.reshape(N, 1, oh3, ow3)
    # PyTorch `.squeeze()` removes ALL size-1 dims.
    return jnp.squeeze(out), jnp.squeeze(prob)


# ------------------------------ reference check ------------------------------

def _reference_forward(params, x):
    """Pure-JAX reference (lax.conv) used to validate the fused kernel."""
    def conv(h, w, stride):
        return jax.lax.conv_general_dilated(
            h, w, window_strides=(stride, stride), padding="VALID",
            dimension_numbers=("NCHW", "OIHW", "NCHW"))

    def inorm_lrelu(h):
        m = jnp.mean(h, axis=(2, 3), keepdims=True)
        v = jnp.mean(jnp.square(h - m), axis=(2, 3), keepdims=True)
        h = (h - m) * jax.lax.rsqrt(v + 1e-5)
        return jnp.where(h >= 0, h, 0.2 * h)

    h = conv(x, params["w1"], 2) + params["b1"].reshape(1, -1, 1, 1)
    h = jnp.where(h >= 0, h, 0.2 * h)
    h = inorm_lrelu(conv(h, params["w2"], 2))
    h = inorm_lrelu(conv(h, params["w3"], 2))
    out = conv(h, params["w4"], 1) + params["b4"].reshape(1, -1, 1, 1)
    out = jnp.squeeze(out)
    return out, jax.nn.sigmoid(out)


if __name__ == "__main__":
    key = jax.random.PRNGKey(0)
    kp, kx = jax.random.split(key)
    image_nc = 3
    # 32x32 -> 15 -> 6 -> 2 spatial; final output (2, 2, 2) after squeeze (N=2).
    x = jax.random.normal(kx, (2, image_nc, 32, 32), jnp.float32)
    params = init_params(kp, image_nc)
    prep = prepare_params(params)          # one-time weight re-layout

    output, probs = discriminator_forward(prep, x)
    jax.block_until_ready((output, probs))
    assert output.shape == (2, 2, 2) and probs.shape == (2, 2, 2)

    ref_out, ref_probs = _reference_forward(params, x)
    assert float(jnp.max(jnp.abs(output - ref_out))) < 1e-3
    assert float(jnp.max(jnp.abs(probs - ref_probs))) < 1e-3
    print("KERNEL_OK")
</pallas_src>

<mosaic_0001>
module attributes {stable_mosaic.version = 11 : i64} {
  func.func @_discriminator_kernel(%arg0: i32, %arg1: memref<1x4x3x256xf32, #tpu.memory_space<vmem>>, %arg2: memref<4x256x225xf32, #tpu.memory_space<vmem>>, %arg3: memref<16x225x36xf32, #tpu.memory_space<vmem>>, %arg4: memref<16x36x4xf32, #tpu.memory_space<vmem>>, %arg5: memref<16x8x3xf32, #tpu.memory_space<vmem>>, %arg6: memref<8x1xf32, #tpu.memory_space<vmem>>, %arg7: memref<16x16x8xf32, #tpu.memory_space<vmem>>, %arg8: memref<16x32x16xf32, #tpu.memory_space<vmem>>, %arg9: memref<32x1xf32, #tpu.memory_space<vmem>>, %arg10: memref<1x1xf32, #tpu.memory_space<vmem>>, %arg11: memref<1x1x4xf32, #tpu.memory_space<vmem>>, %arg12: memref<1x1x4xf32, #tpu.memory_space<vmem>>) attributes {dimension_semantics = [#tpu.dimension_semantics<parallel>], iteration_bounds = array<i64: 2>, scalar_prefetch = 0 : i64, scratch_operands = 0 : i64, tpu.core_type = #tpu.core_type<tc>, window_params = [{transform_indices = @transform_0, window_bounds = array<i64: 1, 4, 3, 256>}, {pipeline_mode = #tpu.pipeline_mode<synchronous>, transform_indices = @transform_1, window_bounds = array<i64: 4, 256, 225>}, {pipeline_mode = #tpu.pipeline_mode<synchronous>, transform_indices = @transform_2, window_bounds = array<i64: 16, 225, 36>}, {pipeline_mode = #tpu.pipeline_mode<synchronous>, transform_indices = @transform_3, window_bounds = array<i64: 16, 36, 4>}, {pipeline_mode = #tpu.pipeline_mode<synchronous>, transform_indices = @transform_4, window_bounds = array<i64: 16, 8, 3>}, {pipeline_mode = #tpu.pipeline_mode<synchronous>, transform_indices = @transform_5, window_bounds = array<i64: 8, 1>}, {pipeline_mode = #tpu.pipeline_mode<synchronous>, transform_indices = @transform_6, window_bounds = array<i64: 16, 16, 8>}, {pipeline_mode = #tpu.pipeline_mode<synchronous>, transform_indices = @transform_7, window_bounds = array<i64: 16, 32, 16>}, {pipeline_mode = #tpu.pipeline_mode<synchronous>, transform_indices = @transform_8, window_bounds = array<i64: 32, 1>}, {pipeline_mode = #tpu.pipeline_mode<synchronous>, transform_indices = @transform_9, window_bounds = array<i64: 1, 1>}, {transform_indices = @transform_10, window_bounds = array<i64: 1, 1, 4>}, {transform_indices = @transform_11, window_bounds = array<i64: 1, 1, 4>}]} {
    %c0 = arith.constant 0 : index
    %c0_0 = arith.constant 0 : index
    %c0_1 = arith.constant 0 : index
    %c0_2 = arith.constant 0 : index
    %0 = vector.load %arg1[%c0, %c0_0, %c0_1, %c0_2] : memref<1x4x3x256xf32, #tpu.memory_space<vmem>>, vector<1x1x3x256xf32>
    %1 = vector.shape_cast %0 : vector<1x1x3x256xf32> to vector<3x256xf32>
    %c0_3 = arith.constant 0 : index
    %c1 = arith.constant 1 : index
    %c0_4 = arith.constant 0 : index
    %c0_5 = arith.constant 0 : index
    %2 = vector.load %arg1[%c0_3, %c1, %c0_4, %c0_5] : memref<1x4x3x256xf32, #tpu.memory_space<vmem>>, vector<1x1x3x256xf32>
    %3 = vector.shape_cast %2 : vector<1x1x3x256xf32> to vector<3x256xf32>
    %c0_6 = arith.constant 0 : index
    %c2 = arith.constant 2 : index
    %c0_7 = arith.constant 0 : index
    %c0_8 = arith.constant 0 : index
    %4 = vector.load %arg1[%c0_6, %c2, %c0_7, %c0_8] : memref<1x4x3x256xf32, #tpu.memory_space<vmem>>, vector<1x1x3x256xf32>
    %5 = vector.shape_cast %4 : vector<1x1x3x256xf32> to vector<3x256xf32>
    %c0_9 = arith.constant 0 : index
    %c3 = arith.constant 3 : index
    %c0_10 = arith.constant 0 : index
    %c0_11 = arith.constant 0 : index
    %6 = vector.load %arg1[%c0_9, %c3, %c0_10, %c0_11] : memref<1x4x3x256xf32, #tpu.memory_space<vmem>>, vector<1x1x3x256xf32>
    %7 = vector.shape_cast %6 : vector<1x1x3x256xf32> to vector<3x256xf32>
    %cst = arith.constant 0.000000e+00 : f32
    %8 = vector.broadcast %cst : f32 to vector<8x225xf32>
    %c0_12 = arith.constant 0 : index
    %c0_13 = arith.constant 0 : index
    %c0_14 = arith.constant 0 : index
    %9 = vector.load %arg2[%c0_12, %c0_13, %c0_14] : memref<4x256x225xf32, #tpu.memory_space<vmem>>, vector<1x256x225xf32>
    %10 = vector.shape_cast %9 : vector<1x256x225xf32> to vector<256x225xf32>
    %cst_15 = arith.constant dense<0.000000e+00> : vector<3x225xf32>
    %11 = tpu.matmul %1, %10, %cst_15 {dimension_numbers = #tpu.dot_dimension_numbers<[1], [0], [0], [1], [0, 0, 1, 1], [], []>} : vector<3x256xf32>, vector<256x225xf32>, vector<3x225xf32> -> vector<3x225xf32>
    %c0_16 = arith.constant 0 : index
    %c0_17 = arith.constant 0 : index
    %c0_18 = arith.constant 0 : index
    %12 = vector.load %arg5[%c0_16, %c0_17, %c0_18] : memref<16x8x3xf32, #tpu.memory_space<vmem>>, vector<1x8x3xf32>
    %13 = vector.shape_cast %12 : vector<1x8x3xf32> to vector<8x3xf32>
    %cst_19 = arith.constant dense<0.000000e+00> : vector<8x225xf32>
    %14 = tpu.matmul %13, %11, %cst_19 {dimension_numbers = #tpu.dot_dimension_numbers<[1], [0], [0], [1], [0, 0, 1, 1], [], []>} : vector<8x3xf32>, vector<3x225xf32>, vector<8x225xf32> -> vector<8x225xf32>
    %15 = arith.addf %8, %14 : vector<8x225xf32>
    %c0_20 = arith.constant 0 : index
    %c0_21 = arith.constant 0 : index
    %c0_22 = arith.constant 0 : index
    %16 = vector.load %arg2[%c0_20, %c0_21, %c0_22] : memref<4x256x225xf32, #tpu.memory_space<vmem>>, vector<1x256x225xf32>
    %17 = vector.shape_cast %16 : vector<1x256x225xf32> to vector<256x225xf32>
    %cst_23 = arith.constant dense<0.000000e+00> : vector<3x225xf32>
    %18 = tpu.matmul %3, %17, %cst_23 {dimension_numbers = #tpu.dot_dimension_numbers<[1], [0], [0], [1], [0, 0, 1, 1], [], []>} : vector<3x256xf32>, vector<256x225xf32>, vector<3x225xf32> -> vector<3x225xf32>
    %c1_24 = arith.constant 1 : index
    %c0_25 = arith.constant 0 : index
    %c0_26 = arith.constant 0 : index
    %19 = vector.load %arg5[%c1_24, %c0_25, %c0_26] : memref<16x8x3xf32, #tpu.memory_space<vmem>>, vector<1x8x3xf32>
    %20 = vector.shape_cast %19 : vector<1x8x3xf32> to vector<8x3xf32>
    %cst_27 = arith.constant dense<0.000000e+00> : vector<8x225xf32>
    %21 = tpu.matmul %20, %18, %cst_27 {dimension_numbers = #tpu.dot_dimension_numbers<[1], [0], [0], [1], [0, 0, 1, 1], [], []>} : vector<8x3xf32>, vector<3x225xf32>, vector<8x225xf32> -> vector<8x225xf32>
    %22 = arith.addf %15, %21 : vector<8x225xf32>
    %c1_28 = arith.constant 1 : index
    %c0_29 = arith.constant 0 : index
    %c0_30 = arith.constant 0 : index
    %23 = vector.load %arg2[%c1_28, %c0_29, %c0_30] : memref<4x256x225xf32, #tpu.memory_space<vmem>>, vector<1x256x225xf32>
    %24 = vector.shape_cast %23 : vector<1x256x225xf32> to vector<256x225xf32>
    %cst_31 = arith.constant dense<0.000000e+00> : vector<3x225xf32>
    %25 = tpu.matmul %1, %24, %cst_31 {dimension_numbers = #tpu.dot_dimension_numbers<[1], [0], [0], [1], [0, 0, 1, 1], [], []>} : vector<3x256xf32>, vector<256x225xf32>, vector<3x225xf32> -> vector<3x225xf32>
    %c2_32 = arith.constant 2 : index
    %c0_33 = arith.constant 0 : index
    %c0_34 = arith.constant 0 : index
    %26 = vector.load %arg5[%c2_32, %c0_33, %c0_34] : memref<16x8x3xf32, #tpu.memory_space<vmem>>, vector<1x8x3xf32>
    %27 = vector.shape_cast %26 : vector<1x8x3xf32> to vector<8x3xf32>
    %cst_35 = arith.constant dense<0.000000e+00> : vector<8x225xf32>
    %28 = tpu.matmul %27, %25, %cst_35 {dimension_numbers = #tpu.dot_dimension_numbers<[1], [0], [0], [1], [0, 0, 1, 1], [], []>} : vector<8x3xf32>, vector<3x225xf32>, vector<8x225xf32> -> vector<8x225xf32>
    %29 = arith.addf %22, %28 : vector<8x225xf32>
    %c1_36 = arith.constant 1 : index
    %c0_37 = arith.constant 0 : index
    %c0_38 = arith.constant 0 : index
    %30 = vector.load %arg2[%c1_36, %c0_37, %c0_38] : memref<4x256x225xf32, #tpu.memory_space<vmem>>, vector<1x256x225xf32>
    %31 = vector.shape_cast %30 : vector<1x256x225xf32> to vector<256x225xf32>
    %cst_39 = arith.constant dense<0.000000e+00> : vector<3x225xf32>
    %32 = tpu.matmul %3, %31, %cst_39 {dimension_numbers = #tpu.dot_dimension_numbers<[1], [0], [0], [1], [0, 0, 1, 1], [], []>} : vector<3x256xf32>, vector<256x225xf32>, vector<3x225xf32> -> vector<3x225xf32>
    %c3_40 = arith.constant 3 : index
    %c0_41 = arith.constant 0 : index
    %c0_42 = arith.constant 0 : index
    %33 = vector.load %arg5[%c3_40, %c0_41, %c0_42] : memref<16x8x3xf32, #tpu.memory_space<vmem>>, vector<1x8x3xf32>
    %34 = vector.shape_cast %33 : vector<1x8x3xf32> to vector<8x3xf32>
    %cst_43 = arith.constant dense<0.000000e+00> : vector<8x225xf32>
    %35 = tpu.matmul %34, %32, %cst_43 {dimension_numbers = #tpu.dot_dimension_numbers<[1], [0], [0], [1], [0, 0, 1, 1], [], []>} : vector<8x3xf32>, vector<3x225xf32>, vector<8x225xf32> -> vector<8x225xf32>
    %36 = arith.addf %29, %35 : vector<8x225xf32>
    %c0_44 = arith.constant 0 : index
    %c0_45 = arith.constant 0 : index
    %c0_46 = arith.constant 0 : index
    %37 = vector.load %arg2[%c0_44, %c0_45, %c0_46] : memref<4x256x225xf32, #tpu.memory_space<vmem>>, vector<1x256x225xf32>
    %38 = vector.shape_cast %37 : vector<1x256x225xf32> to vector<256x225xf32>
    %cst_47 = arith.constant dense<0.000000e+00> : vector<3x225xf32>
    %39 = tpu.matmul %5, %38, %cst_47 {dimension_numbers = #tpu.dot_dimension_numbers<[1], [0], [0], [1], [0, 0, 1, 1], [], []>} : vector<3x256xf32>, vector<256x225xf32>, vector<3x225xf32> -> vector<3x225xf32>
    %c4 = arith.constant 4 : index
    %c0_48 = arith.constant 0 : index
    %c0_49 = arith.constant 0 : index
    %40 = vector.load %arg5[%c4, %c0_48, %c0_49] : memref<16x8x3xf32, #tpu.memory_space<vmem>>, vector<1x8x3xf32>
    %41 = vector.shape_cast %40 : vector<1x8x3xf32> to vector<8x3xf32>
    %cst_50 = arith.constant dense<0.000000e+00> : vector<8x225xf32>
    %42 = tpu.matmul %41, %39, %cst_50 {dimension_numbers = #tpu.dot_dimension_numbers<[1], [0], [0], [1], [0, 0, 1, 1], [], []>} : vector<8x3xf32>, vector<3x225xf32>, vector<8x225xf32> -> vector<8x225xf32>
    %43 = arith.addf %36, %42 : vector<8x225xf32>
    %c0_51 = arith.constant 0 : index
    %c0_52 = arith.constant 0 : index
    %c0_53 = arith.constant 0 : index
    %44 = vector.load %arg2[%c0_51, %c0_52, %c0_53] : memref<4x256x225xf32, #tpu.memory_space<vmem>>, vector<1x256x225xf32>
    %45 = vector.shape_cast %44 : vector<1x256x225xf32> to vector<256x225xf32>
    %cst_54 = arith.constant dense<0.000000e+00> : vector<3x225xf32>
    %46 = tpu.matmul %7, %45, %cst_54 {dimension_numbers = #tpu.dot_dimension_numbers<[1], [0], [0], [1], [0, 0, 1, 1], [], []>} : vector<3x256xf32>, vector<256x225xf32>, vector<3x225xf32> -> vector<3x225xf32>
    %c5 = arith.constant 5 : index
    %c0_55 = arith.constant 0 : index
    %c0_56 = arith.constant 0 : index
    %47 = vector.load %arg5[%c5, %c0_55, %c0_56] : memref<16x8x3xf32, #tpu.memory_space<vmem>>, vector<1x8x3xf32>
    %48 = vector.shape_cast %47 : vector<1x8x3xf32> to vector<8x3xf32>
    %cst_57 = arith.constant dense<0.000000e+00> : vector<8x225xf32>
    %49 = tpu.matmul %48, %46, %cst_57 {dimension_numbers = #tpu.dot_dimension_numbers<[1], [0], [0], [1], [0, 0, 1, 1], [], []>} : vector<8x3xf32>, vector<3x225xf32>, vector<8x225xf32> -> vector<8x225xf32>
    %50 = arith.addf %43, %49 : vector<8x225xf32>
    %c1_58 = arith.constant 1 : index
    %c0_59 = arith.constant 0 : index
    %c0_60 = arith.constant 0 : index
    %51 = vector.load %arg2[%c1_58, %c0_59, %c0_60] : memref<4x256x225xf32, #tpu.memory_space<vmem>>, vector<1x256x225xf32>
    %52 = vector.shape_cast %51 : vector<1x256x225xf32> to vector<256x225xf32>
    %cst_61 = arith.constant dense<0.000000e+00> : vector<3x225xf32>
    %53 = tpu.matmul %5, %52, %cst_61 {dimension_numbers = #tpu.dot_dimension_numbers<[1], [0], [0], [1], [0, 0, 1, 1], [], []>} : vector<3x256xf32>, vector<256x225xf32>, vector<3x225xf32> -> vector<3x225xf32>
    %c6 = arith.constant 6 : index
    %c0_62 = arith.constant 0 : index
    %c0_63 = arith.constant 0 : index
    %54 = vector.load %arg5[%c6, %c0_62, %c0_63] : memref<16x8x3xf32, #tpu.memory_space<vmem>>, vector<1x8x3xf32>
    %55 = vector.shape_cast %54 : vector<1x8x3xf32> to vector<8x3xf32>
    %cst_64 = arith.constant dense<0.000000e+00> : vector<8x225xf32>
    %56 = tpu.matmul %55, %53, %cst_64 {dimension_numbers = #tpu.dot_dimension_numbers<[1], [0], [0], [1], [0, 0, 1, 1], [], []>} : vector<8x3xf32>, vector<3x225xf32>, vector<8x225xf32> -> vector<8x225xf32>
    %57 = arith.addf %50, %56 : vector<8x225xf32>
    %c1_65 = arith.constant 1 : index
    %c0_66 = arith.constant 0 : index
    %c0_67 = arith.constant 0 : index
    %58 = vector.load %arg2[%c1_65, %c0_66, %c0_67] : memref<4x256x225xf32, #tpu.memory_space<vmem>>, vector<1x256x225xf32>
    %59 = vector.shape_cast %58 : vector<1x256x225xf32> to vector<256x225xf32>
    %cst_68 = arith.constant dense<0.000000e+00> : vector<3x225xf32>
    %60 = tpu.matmul %7, %59, %cst_68 {dimension_numbers = #tpu.dot_dimension_numbers<[1], [0], [0], [1], [0, 0, 1, 1], [], []>} : vector<3x256xf32>, vector<256x225xf32>, vector<3x225xf32> -> vector<3x225xf32>
    %c7 = arith.constant 7 : index
    %c0_69 = arith.constant 0 : index
    %c0_70 = arith.constant 0 : index
    %61 = vector.load %arg5[%c7, %c0_69, %c0_70] : memref<16x8x3xf32, #tpu.memory_space<vmem>>, vector<1x8x3xf32>
    %62 = vector.shape_cast %61 : vector<1x8x3xf32> to vector<8x3xf32>
    %cst_71 = arith.constant dense<0.000000e+00> : vector<8x225xf32>
    %63 = tpu.matmul %62, %60, %cst_71 {dimension_numbers = #tpu.dot_dimension_numbers<[1], [0], [0], [1], [0, 0, 1, 1], [], []>} : vector<8x3xf32>, vector<3x225xf32>, vector<8x225xf32> -> vector<8x225xf32>
    %64 = arith.addf %57, %63 : vector<8x225xf32>
    %c2_72 = arith.constant 2 : index
    %c0_73 = arith.constant 0 : index
    %c0_74 = arith.constant 0 : index
    %65 = vector.load %arg2[%c2_72, %c0_73, %c0_74] : memref<4x256x225xf32, #tpu.memory_space<vmem>>, vector<1x256x225xf32>
    %66 = vector.shape_cast %65 : vector<1x256x225xf32> to vector<256x225xf32>
    %cst_75 = arith.constant dense<0.000000e+00> : vector<3x225xf32>
    %67 = tpu.matmul %1, %66, %cst_75 {dimension_numbers = #tpu.dot_dimension_numbers<[1], [0], [0], [1], [0, 0, 1, 1], [], []>} : vector<3x256xf32>, vector<256x225xf32>, vector<3x225xf32> -> vector<3x225xf32>
    %c8 = arith.constant 8 : index
    %c0_76 = arith.constant 0 : index
    %c0_77 = arith.constant 0 : index
    %68 = vector.load %arg5[%c8, %c0_76, %c0_77] : memref<16x8x3xf32, #tpu.memory_space<vmem>>, vector<1x8x3xf32>
    %69 = vector.shape_cast %68 : vector<1x8x3xf32> to vector<8x3xf32>
    %cst_78 = arith.constant dense<0.000000e+00> : vector<8x225xf32>
    %70 = tpu.matmul %69, %67, %cst_78 {dimension_numbers = #tpu.dot_dimension_numbers<[1], [0], [0], [1], [0, 0, 1, 1], [], []>} : vector<8x3xf32>, vector<3x225xf32>, vector<8x225xf32> -> vector<8x225xf32>
    %71 = arith.addf %64, %70 : vector<8x225xf32>
    %c2_79 = arith.constant 2 : index
    %c0_80 = arith.constant 0 : index
    %c0_81 = arith.constant 0 : index
    %72 = vector.load %arg2[%c2_79, %c0_80, %c0_81] : memref<4x256x225xf32, #tpu.memory_space<vmem>>, vector<1x256x225xf32>
    %73 = vector.shape_cast %72 : vector<1x256x225xf32> to vector<256x225xf32>
    %cst_82 = arith.constant dense<0.000000e+00> : vector<3x225xf32>
    %74 = tpu.matmul %3, %73, %cst_82 {dimension_numbers = #tpu.dot_dimension_numbers<[1], [0], [0], [1], [0, 0, 1, 1], [], []>} : vector<3x256xf32>, vector<256x225xf32>, vector<3x225xf32> -> vector<3x225xf32>
    %c9 = arith.constant 9 : index
    %c0_83 = arith.constant 0 : index
    %c0_84 = arith.constant 0 : index
    %75 = vector.load %arg5[%c9, %c0_83, %c0_84] : memref<16x8x3xf32, #tpu.memory_space<vmem>>, vector<1x8x3xf32>
    %76 = vector.shape_cast %75 : vector<1x8x3xf32> to vector<8x3xf32>
    %cst_85 = arith.constant dense<0.000000e+00> : vector<8x225xf32>
    %77 = tpu.matmul %76, %74, %cst_85 {dimension_numbers = #tpu.dot_dimension_numbers<[1], [0], [0], [1], [0, 0, 1, 1], [], []>} : vector<8x3xf32>, vector<3x225xf32>, vector<8x225xf32> -> vector<8x225xf32>
    %78 = arith.addf %71, %77 : vector<8x225xf32>
    %c3_86 = arith.constant 3 : index
    %c0_87 = arith.constant 0 : index
    %c0_88 = arith.constant 0 : index
    %79 = vector.load %arg2[%c3_86, %c0_87, %c0_88] : memref<4x256x225xf32, #tpu.memory_space<vmem>>, vector<1x256x225xf32>
    %80 = vector.shape_cast %79 : vector<1x256x225xf32> to vector<256x225xf32>
    %cst_89 = arith.constant dense<0.000000e+00> : vector<3x225xf32>
    %81 = tpu.matmul %1, %80, %cst_89 {dimension_numbers = #tpu.dot_dimension_numbers<[1], [0], [0], [1], [0, 0, 1, 1], [], []>} : vector<3x256xf32>, vector<256x225xf32>, vector<3x225xf32> -> vector<3x225xf32>
    %c10 = arith.constant 10 : index
    %c0_90 = arith.constant 0 : index
    %c0_91 = arith.constant 0 : index
    %82 = vector.load %arg5[%c10, %c0_90, %c0_91] : memref<16x8x3xf32, #tpu.memory_space<vmem>>, vector<1x8x3xf32>
    %83 = vector.shape_cast %82 : vector<1x8x3xf32> to vector<8x3xf32>
    %cst_92 = arith.constant dense<0.000000e+00> : vector<8x225xf32>
    %84 = tpu.matmul %83, %81, %cst_92 {dimension_numbers = #tpu.dot_dimension_numbers<[1], [0], [0], [1], [0, 0, 1, 1], [], []>} : vector<8x3xf32>, vector<3x225xf32>, vector<8x225xf32> -> vector<8x225xf32>
    %85 = arith.addf %78, %84 : vector<8x225xf32>
    %c3_93 = arith.constant 3 : index
    %c0_94 = arith.constant 0 : index
    %c0_95 = arith.constant 0 : index
    %86 = vector.load %arg2[%c3_93, %c0_94, %c0_95] : memref<4x256x225xf32, #tpu.memory_space<vmem>>, vector<1x256x225xf32>
    %87 = vector.shape_cast %86 : vector<1x256x225xf32> to vector<256x225xf32>
    %cst_96 = arith.constant dense<0.000000e+00> : vector<3x225xf32>
    %88 = tpu.matmul %3, %87, %cst_96 {dimension_numbers = #tpu.dot_dimension_numbers<[1], [0], [0], [1], [0, 0, 1, 1], [], []>} : vector<3x256xf32>, vector<256x225xf32>, vector<3x225xf32> -> vector<3x225xf32>
    %c11 = arith.constant 11 : index
    %c0_97 = arith.constant 0 : index
    %c0_98 = arith.constant 0 : index
    %89 = vector.load %arg5[%c11, %c0_97, %c0_98] : memref<16x8x3xf32, #tpu.memory_space<vmem>>, vector<1x8x3xf32>
    %90 = vector.shape_cast %89 : vector<1x8x3xf32> to vector<8x3xf32>
    %cst_99 = arith.constant dense<0.000000e+00> : vector<8x225xf32>
    %91 = tpu.matmul %90, %88, %cst_99 {dimension_numbers = #tpu.dot_dimension_numbers<[1], [0], [0], [1], [0, 0, 1, 1], [], []>} : vector<8x3xf32>, vector<3x225xf32>, vector<8x225xf32> -> vector<8x225xf32>
    %92 = arith.addf %85, %91 : vector<8x225xf32>
    %c2_100 = arith.constant 2 : index
    %c0_101 = arith.constant 0 : index
    %c0_102 = arith.constant 0 : index
    %93 = vector.load %arg2[%c2_100, %c0_101, %c0_102] : memref<4x256x225xf32, #tpu.memory_space<vmem>>, vector<1x256x225xf32>
    %94 = vector.shape_cast %93 : vector<1x256x225xf32> to vector<256x225xf32>
    %cst_103 = arith.constant dense<0.000000e+00> : vector<3x225xf32>
    %95 = tpu.matmul %5, %94, %cst_103 {dimension_numbers = #tpu.dot_dimension_numbers<[1], [0], [0], [1], [0, 0, 1, 1], [], []>} : vector<3x256xf32>, vector<256x225xf32>, vector<3x225xf32> -> vector<3x225xf32>
    %c12 = arith.constant 12 : index
    %c0_104 = arith.constant 0 : index
    %c0_105 = arith.constant 0 : index
    %96 = vector.load %arg5[%c12, %c0_104, %c0_105] : memref<16x8x3xf32, #tpu.memory_space<vmem>>, vector<1x8x3xf32>
    %97 = vector.shape_cast %96 : vector<1x8x3xf32> to vector<8x3xf32>
    %cst_106 = arith.constant dense<0.000000e+00> : vector<8x225xf32>
    %98 = tpu.matmul %97, %95, %cst_106 {dimension_numbers = #tpu.dot_dimension_numbers<[1], [0], [0], [1], [0, 0, 1, 1], [], []>} : vector<8x3xf32>, vector<3x225xf32>, vector<8x225xf32> -> vector<8x225xf32>
    %99 = arith.addf %92, %98 : vector<8x225xf32>
    %c2_107 = arith.constant 2 : index
    %c0_108 = arith.constant 0 : index
    %c0_109 = arith.constant 0 : index
    %100 = vector.load %arg2[%c2_107, %c0_108, %c0_109] : memref<4x256x225xf32, #tpu.memory_space<vmem>>, vector<1x256x225xf32>
    %101 = vector.shape_cast %100 : vector<1x256x225xf32> to vector<256x225xf32>
    %cst_110 = arith.constant dense<0.000000e+00> : vector<3x225xf32>
    %102 = tpu.matmul %7, %101, %cst_110 {dimension_numbers = #tpu.dot_dimension_numbers<[1], [0], [0], [1], [0, 0, 1, 1], [], []>} : vector<3x256xf32>, vector<256x225xf32>, vector<3x225xf32> -> vector<3x225xf32>
    %c13 = arith.constant 13 : index
    %c0_111 = arith.constant 0 : index
    %c0_112 = arith.constant 0 : index
    %103 = vector.load %arg5[%c13, %c0_111, %c0_112] : memref<16x8x3xf32, #tpu.memory_space<vmem>>, vector<1x8x3xf32>
    %104 = vector.shape_cast %103 : vector<1x8x3xf32> to vector<8x3xf32>
    %cst_113 = arith.constant dense<0.000000e+00> : vector<8x225xf32>
    %105 = tpu.matmul %104, %102, %cst_113 {dimension_numbers = #tpu.dot_dimension_numbers<[1], [0], [0], [1], [0, 0, 1, 1], [], []>} : vector<8x3xf32>, vector<3x225xf32>, vector<8x225xf32> -> vector<8x225xf32>
    %106 = arith.addf %99, %105 : vector<8x225xf32>
    %c3_114 = arith.constant 3 : index
    %c0_115 = arith.constant 0 : index
    %c0_116 = arith.constant 0 : index
    %107 = vector.load %arg2[%c3_114, %c0_115, %c0_116] : memref<4x256x225xf32, #tpu.memory_space<vmem>>, vector<1x256x225xf32>
    %108 = vector.shape_cast %107 : vector<1x256x225xf32> to vector<256x225xf32>
    %cst_117 = arith.constant dense<0.000000e+00> : vector<3x225xf32>
    %109 = tpu.matmul %5, %108, %cst_117 {dimension_numbers = #tpu.dot_dimension_numbers<[1], [0], [0], [1], [0, 0, 1, 1], [], []>} : vector<3x256xf32>, vector<256x225xf32>, vector<3x225xf32> -> vector<3x225xf32>
    %c14 = arith.constant 14 : index
    %c0_118 = arith.constant 0 : index
    %c0_119 = arith.constant 0 : index
    %110 = vector.load %arg5[%c14, %c0_118, %c0_119] : memref<16x8x3xf32, #tpu.memory_space<vmem>>, vector<1x8x3xf32>
    %111 = vector.shape_cast %110 : vector<1x8x3xf32> to vector<8x3xf32>
    %cst_120 = arith.constant dense<0.000000e+00> : vector<8x225xf32>
    %112 = tpu.matmul %111, %109, %cst_120 {dimension_numbers = #tpu.dot_dimension_numbers<[1], [0], [0], [1], [0, 0, 1, 1], [], []>} : vector<8x3xf32>, vector<3x225xf32>, vector<8x225xf32> -> vector<8x225xf32>
    %113 = arith.addf %106, %112 : vector<8x225xf32>
    %c3_121 = arith.constant 3 : index
    %c0_122 = arith.constant 0 : index
    %c0_123 = arith.constant 0 : index
    %114 = vector.load %arg2[%c3_121, %c0_122, %c0_123] : memref<4x256x225xf32, #tpu.memory_space<vmem>>, vector<1x256x225xf32>
    %115 = vector.shape_cast %114 : vector<1x256x225xf32> to vector<256x225xf32>
    %cst_124 = arith.constant dense<0.000000e+00> : vector<3x225xf32>
    %116 = tpu.matmul %7, %115, %cst_124 {dimension_numbers = #tpu.dot_dimension_numbers<[1], [0], [0], [1], [0, 0, 1, 1], [], []>} : vector<3x256xf32>, vector<256x225xf32>, vector<3x225xf32> -> vector<3x225xf32>
    %c15 = arith.constant 15 : index
    %c0_125 = arith.constant 0 : index
    %c0_126 = arith.constant 0 : index
    %117 = vector.load %arg5[%c15, %c0_125, %c0_126] : memref<16x8x3xf32, #tpu.memory_space<vmem>>, vector<1x8x3xf32>
    %118 = vector.shape_cast %117 : vector<1x8x3xf32> to vector<8x3xf32>
    %cst_127 = arith.constant dense<0.000000e+00> : vector<8x225xf32>
    %119 = tpu.matmul %118, %116, %cst_127 {dimension_numbers = #tpu.dot_dimension_numbers<[1], [0], [0], [1], [0, 0, 1, 1], [], []>} : vector<8x3xf32>, vector<3x225xf32>, vector<8x225xf32> -> vector<8x225xf32>
    %120 = arith.addf %113, %119 : vector<8x225xf32>
    %c0_128 = arith.constant 0 : index
    %c0_129 = arith.constant 0 : index
    %121 = vector.load %arg6[%c0_128, %c0_129] : memref<8x1xf32, #tpu.memory_space<vmem>>, vector<8x1xf32>
    %122 = vector.broadcast %121 : vector<8x1xf32> to vector<8x225xf32>
    %123 = arith.addf %120, %122 : vector<8x225xf32>
    %cst_130 = arith.constant 0.000000e+00 : f32
    %124 = vector.broadcast %cst_130 : f32 to vector<8x225xf32>
    %125 = arith.cmpf oge, %123, %124 : vector<8x225xf32>
    %cst_131 = arith.constant 2.000000e-01 : f32
    %126 = vector.broadcast %cst_131 : f32 to vector<8x225xf32>
    %127 = arith.mulf %126, %123 : vector<8x225xf32>
    %128 = arith.select %125, %123, %127 : vector<8x225xi1>, vector<8x225xf32>
    %cst_132 = arith.constant 0.000000e+00 : f32
    %129 = vector.broadcast %cst_132 : f32 to vector<16x36xf32>
    %c0_133 = arith.constant 0 : index
    %c0_134 = arith.constant 0 : index
    %c0_135 = arith.constant 0 : index
    %130 = vector.load %arg3[%c0_133, %c0_134, %c0_135] : memref<16x225x36xf32, #tpu.memory_space<vmem>>, vector<1x225x36xf32>
    %131 = vector.shape_cast %130 : vector<1x225x36xf32> to vector<225x36xf32>
    %cst_136 = arith.constant dense<0.000000e+00> : vector<8x36xf32>
    %132 = tpu.matmul %128, %131, %cst_136 {dimension_numbers = #tpu.dot_dimension_numbers<[1], [0], [0], [1], [0, 0, 1, 1], [], []>} : vector<8x225xf32>, vector<225x36xf32>, vector<8x36xf32> -> vector<8x36xf32>
    %c0_137 = arith.constant 0 : index
    %c0_138 = arith.constant 0 : index
    %c0_139 = arith.constant 0 : index
    %133 = vector.load %arg7[%c0_137, %c0_138, %c0_139] : memref<16x16x8xf32, #tpu.memory_space<vmem>>, vector<1x16x8xf32>
    %134 = vector.shape_cast %133 : vector<1x16x8xf32> to vector<16x8xf32>
    %cst_140 = arith.constant dense<0.000000e+00> : vector<16x36xf32>
    %135 = tpu.matmul %134, %132, %cst_140 {dimension_numbers = #tpu.dot_dimension_numbers<[1], [0], [0], [1], [0, 0, 1, 1], [], []>} : vector<16x8xf32>, vector<8x36xf32>, vector<16x36xf32> -> vector<16x36xf32>
    %136 = arith.addf %129, %135 : vector<16x36xf32>
    %c1_141 = arith.constant 1 : index
    %c0_142 = arith.constant 0 : index
    %c0_143 = arith.constant 0 : index
    %137 = vector.load %arg3[%c1_141, %c0_142, %c0_143] : memref<16x225x36xf32, #tpu.memory_space<vmem>>, vector<1x225x36xf32>
    %138 = vector.shape_cast %137 : vector<1x225x36xf32> to vector<225x36xf32>
    %cst_144 = arith.constant dense<0.000000e+00> : vector<8x36xf32>
    %139 = tpu.matmul %128, %138, %cst_144 {dimension_numbers = #tpu.dot_dimension_numbers<[1], [0], [0], [1], [0, 0, 1, 1], [], []>} : vector<8x225xf32>, vector<225x36xf32>, vector<8x36xf32> -> vector<8x36xf32>
    %c1_145 = arith.constant 1 : index
    %c0_146 = arith.constant 0 : index
    %c0_147 = arith.constant 0 : index
    %140 = vector.load %arg7[%c1_145, %c0_146, %c0_147] : memref<16x16x8xf32, #tpu.memory_space<vmem>>, vector<1x16x8xf32>
    %141 = vector.shape_cast %140 : vector<1x16x8xf32> to vector<16x8xf32>
    %cst_148 = arith.constant dense<0.000000e+00> : vector<16x36xf32>
    %142 = tpu.matmul %141, %139, %cst_148 {dimension_numbers = #tpu.dot_dimension_numbers<[1], [0], [0], [1], [0, 0, 1, 1], [], []>} : vector<16x8xf32>, vector<8x36xf32>, vector<16x36xf32> -> vector<16x36xf32>
    %143 = arith.addf %136, %142 : vector<16x36xf32>
    %c2_149 = arith.constant 2 : index
    %c0_150 = arith.constant 0 : index
    %c0_151 = arith.constant 0 : index
    %144 = vector.load %arg3[%c2_149, %c0_150, %c0_151] : memref<16x225x36xf32, #tpu.memory_space<vmem>>, vector<1x225x36xf32>
    %145 = vector.shape_cast %144 : vector<1x225x36xf32> to vector<225x36xf32>
    %cst_152 = arith.constant dense<0.000000e+00> : vector<8x36xf32>
    %146 = tpu.matmul %128, %145, %cst_152 {dimension_numbers = #tpu.dot_dimension_numbers<[1], [0], [0], [1], [0, 0, 1, 1], [], []>} : vector<8x225xf32>, vector<225x36xf32>, vector<8x36xf32> -> vector<8x36xf32>
    %c2_153 = arith.constant 2 : index
    %c0_154 = arith.constant 0 : index
    %c0_155 = arith.constant 0 : index
    %147 = vector.load %arg7[%c2_153, %c0_154, %c0_155] : memref<16x16x8xf32, #tpu.memory_space<vmem>>, vector<1x16x8xf32>
    %148 = vector.shape_cast %147 : vector<1x16x8xf32> to vector<16x8xf32>
    %cst_156 = arith.constant dense<0.000000e+00> : vector<16x36xf32>
    %149 = tpu.matmul %148, %146, %cst_156 {dimension_numbers = #tpu.dot_dimension_numbers<[1], [0], [0], [1], [0, 0, 1, 1], [], []>} : vector<16x8xf32>, vector<8x36xf32>, vector<16x36xf32> -> vector<16x36xf32>
    %150 = arith.addf %143, %149 : vector<16x36xf32>
    %c3_157 = arith.constant 3 : index
    %c0_158 = arith.constant 0 : index
    %c0_159 = arith.constant 0 : index
    %151 = vector.load %arg3[%c3_157, %c0_158, %c0_159] : memref<16x225x36xf32, #tpu.memory_space<vmem>>, vector<1x225x36xf32>
    %152 = vector.shape_cast %151 : vector<1x225x36xf32> to vector<225x36xf32>
    %cst_160 = arith.constant dense<0.000000e+00> : vector<8x36xf32>
    %153 = tpu.matmul %128, %152, %cst_160 {dimension_numbers = #tpu.dot_dimension_numbers<[1], [0], [0], [1], [0, 0, 1, 1], [], []>} : vector<8x225xf32>, vector<225x36xf32>, vector<8x36xf32> -> vector<8x36xf32>
    %c3_161 = arith.constant 3 : index
    %c0_162 = arith.constant 0 : index
    %c0_163 = arith.constant 0 : index
    %154 = vector.load %arg7[%c3_161, %c0_162, %c0_163] : memref<16x16x8xf32, #tpu.memory_space<vmem>>, vector<1x16x8xf32>
    %155 = vector.shape_cast %154 : vector<1x16x8xf32> to vector<16x8xf32>
    %cst_164 = arith.constant dense<0.000000e+00> : vector<16x36xf32>
    %156 = tpu.matmul %155, %153, %cst_164 {dimension_numbers = #tpu.dot_dimension_numbers<[1], [0], [0], [1], [0, 0, 1, 1], [], []>} : vector<16x8xf32>, vector<8x36xf32>, vector<16x36xf32> -> vector<16x36xf32>
    %157 = arith.addf %150, %156 : vector<16x36xf32>
    %c4_165 = arith.constant 4 : index
    %c0_166 = arith.constant 0 : index
    %c0_167 = arith.constant 0 : index
    %158 = vector.load %arg3[%c4_165, %c0_166, %c0_167] : memref<16x225x36xf32, #tpu.memory_space<vmem>>, vector<1x225x36xf32>
    %159 = vector.shape_cast %158 : vector<1x225x36xf32> to vector<225x36xf32>
    %cst_168 = arith.constant dense<0.000000e+00> : vector<8x36xf32>
    %160 = tpu.matmul %128, %159, %cst_168 {dimension_numbers = #tpu.dot_dimension_numbers<[1], [0], [0], [1], [0, 0, 1, 1], [], []>} : vector<8x225xf32>, vector<225x36xf32>, vector<8x36xf32> -> vector<8x36xf32>
    %c4_169 = arith.constant 4 : index
    %c0_170 = arith.constant 0 : index
    %c0_171 = arith.constant 0 : index
    %161 = vector.load %arg7[%c4_169, %c0_170, %c0_171] : memref<16x16x8xf32, #tpu.memory_space<vmem>>, vector<1x16x8xf32>
    %162 = vector.shape_cast %161 : vector<1x16x8xf32> to vector<16x8xf32>
    %cst_172 = arith.constant dense<0.000000e+00> : vector<16x36xf32>
    %163 = tpu.matmul %162, %160, %cst_172 {dimension_numbers = #tpu.dot_dimension_numbers<[1], [0], [0], [1], [0, 0, 1, 1], [], []>} : vector<16x8xf32>, vector<8x36xf32>, vector<16x36xf32> -> vector<16x36xf32>
    %164 = arith.addf %157, %163 : vector<16x36xf32>
    %c5_173 = arith.constant 5 : index
    %c0_174 = arith.constant 0 : index
    %c0_175 = arith.constant 0 : index
    %165 = vector.load %arg3[%c5_173, %c0_174, %c0_175] : memref<16x225x36xf32, #tpu.memory_space<vmem>>, vector<1x225x36xf32>
    %166 = vector.shape_cast %165 : vector<1x225x36xf32> to vector<225x36xf32>
    %cst_176 = arith.constant dense<0.000000e+00> : vector<8x36xf32>
    %167 = tpu.matmul %128, %166, %cst_176 {dimension_numbers = #tpu.dot_dimension_numbers<[1], [0], [0], [1], [0, 0, 1, 1], [], []>} : vector<8x225xf32>, vector<225x36xf32>, vector<8x36xf32> -> vector<8x36xf32>
    %c5_177 = arith.constant 5 : index
    %c0_178 = arith.constant 0 : index
    %c0_179 = arith.constant 0 : index
    %168 = vector.load %arg7[%c5_177, %c0_178, %c0_179] : memref<16x16x8xf32, #tpu.memory_space<vmem>>, vector<1x16x8xf32>
    %169 = vector.shape_cast %168 : vector<1x16x8xf32> to vector<16x8xf32>
    %cst_180 = arith.constant dense<0.000000e+00> : vector<16x36xf32>
    %170 = tpu.matmul %169, %167, %cst_180 {dimension_numbers = #tpu.dot_dimension_numbers<[1], [0], [0], [1], [0, 0, 1, 1], [], []>} : vector<16x8xf32>, vector<8x36xf32>, vector<16x36xf32> -> vector<16x36xf32>
    %171 = arith.addf %164, %170 : vector<16x36xf32>
    %c6_181 = arith.constant 6 : index
    %c0_182 = arith.constant 0 : index
    %c0_183 = arith.constant 0 : index
    %172 = vector.load %arg3[%c6_181, %c0_182, %c0_183] : memref<16x225x36xf32, #tpu.memory_space<vmem>>, vector<1x225x36xf32>
    %173 = vector.shape_cast %172 : vector<1x225x36xf32> to vector<225x36xf32>
    %cst_184 = arith.constant dense<0.000000e+00> : vector<8x36xf32>
    %174 = tpu.matmul %128, %173, %cst_184 {dimension_numbers = #tpu.dot_dimension_numbers<[1], [0], [0], [1], [0, 0, 1, 1], [], []>} : vector<8x225xf32>, vector<225x36xf32>, vector<8x36xf32> -> vector<8x36xf32>
    %c6_185 = arith.constant 6 : index
    %c0_186 = arith.constant 0 : index
    %c0_187 = arith.constant 0 : index
    %175 = vector.load %arg7[%c6_185, %c0_186, %c0_187] : memref<16x16x8xf32, #tpu.memory_space<vmem>>, vector<1x16x8xf32>
    %176 = vector.shape_cast %175 : vector<1x16x8xf32> to vector<16x8xf32>
    %cst_188 = arith.constant dense<0.000000e+00> : vector<16x36xf32>
    %177 = tpu.matmul %176, %174, %cst_188 {dimension_numbers = #tpu.dot_dimension_numbers<[1], [0], [0], [1], [0, 0, 1, 1], [], []>} : vector<16x8xf32>, vector<8x36xf32>, vector<16x36xf32> -> vector<16x36xf32>
    %178 = arith.addf %171, %177 : vector<16x36xf32>
    %c7_189 = arith.constant 7 : index
    %c0_190 = arith.constant 0 : index
    %c0_191 = arith.constant 0 : index
    %179 = vector.load %arg3[%c7_189, %c0_190, %c0_191] : memref<16x225x36xf32, #tpu.memory_space<vmem>>, vector<1x225x36xf32>
    %180 = vector.shape_cast %179 : vector<1x225x36xf32> to vector<225x36xf32>
    %cst_192 = arith.constant dense<0.000000e+00> : vector<8x36xf32>
    %181 = tpu.matmul %128, %180, %cst_192 {dimension_numbers = #tpu.dot_dimension_numbers<[1], [0], [0], [1], [0, 0, 1, 1], [], []>} : vector<8x225xf32>, vector<225x36xf32>, vector<8x36xf32> -> vector<8x36xf32>
    %c7_193 = arith.constant 7 : index
    %c0_194 = arith.constant 0 : index
    %c0_195 = arith.constant 0 : index
    %182 = vector.load %arg7[%c7_193, %c0_194, %c0_195] : memref<16x16x8xf32, #tpu.memory_space<vmem>>, vector<1x16x8xf32>
    %183 = vector.shape_cast %182 : vector<1x16x8xf32> to vector<16x8xf32>
    %cst_196 = arith.constant dense<0.000000e+00> : vector<16x36xf32>
    %184 = tpu.matmul %183, %181, %cst_196 {dimension_numbers = #tpu.dot_dimension_numbers<[1], [0], [0], [1], [0, 0, 1, 1], [], []>} : vector<16x8xf32>, vector<8x36xf32>, vector<16x36xf32> -> vector<16x36xf32>
    %185 = arith.addf %178, %184 : vector<16x36xf32>
    %c8_197 = arith.constant 8 : index
    %c0_198 = arith.constant 0 : index
    %c0_199 = arith.constant 0 : index
    %186 = vector.load %arg3[%c8_197, %c0_198, %c0_199] : memref<16x225x36xf32, #tpu.memory_space<vmem>>, vector<1x225x36xf32>
    %187 = vector.shape_cast %186 : vector<1x225x36xf32> to vector<225x36xf32>
    %cst_200 = arith.constant dense<0.000000e+00> : vector<8x36xf32>
    %188 = tpu.matmul %128, %187, %cst_200 {dimension_numbers = #tpu.dot_dimension_numbers<[1], [0], [0], [1], [0, 0, 1, 1], [], []>} : vector<8x225xf32>, vector<225x36xf32>, vector<8x36xf32> -> vector<8x36xf32>
    %c8_201 = arith.constant 8 : index
    %c0_202 = arith.constant 0 : index
    %c0_203 = arith.constant 0 : index
    %189 = vector.load %arg7[%c8_201, %c0_202, %c0_203] : memref<16x16x8xf32, #tpu.memory_space<vmem>>, vector<1x16x8xf32>
    %190 = vector.shape_cast %189 : vector<1x16x8xf32> to vector<16x8xf32>
    %cst_204 = arith.constant dense<0.000000e+00> : vector<16x36xf32>
    %191 = tpu.matmul %190, %188, %cst_204 {dimension_numbers = #tpu.dot_dimension_numbers<[1], [0], [0], [1], [0, 0, 1, 1], [], []>} : vector<16x8xf32>, vector<8x36xf32>, vector<16x36xf32> -> vector<16x36xf32>
    %192 = arith.addf %185, %191 : vector<16x36xf32>
    %c9_205 = arith.constant 9 : index
    %c0_206 = arith.constant 0 : index
    %c0_207 = arith.constant 0 : index
    %193 = vector.load %arg3[%c9_205, %c0_206, %c0_207] : memref<16x225x36xf32, #tpu.memory_space<vmem>>, vector<1x225x36xf32>
    %194 = vector.shape_cast %193 : vector<1x225x36xf32> to vector<225x36xf32>
    %cst_208 = arith.constant dense<0.000000e+00> : vector<8x36xf32>
    %195 = tpu.matmul %128, %194, %cst_208 {dimension_numbers = #tpu.dot_dimension_numbers<[1], [0], [0], [1], [0, 0, 1, 1], [], []>} : vector<8x225xf32>, vector<225x36xf32>, vector<8x36xf32> -> vector<8x36xf32>
    %c9_209 = arith.constant 9 : index
    %c0_210 = arith.constant 0 : index
    %c0_211 = arith.constant 0 : index
    %196 = vector.load %arg7[%c9_209, %c0_210, %c0_211] : memref<16x16x8xf32, #tpu.memory_space<vmem>>, vector<1x16x8xf32>
    %197 = vector.shape_cast %196 : vector<1x16x8xf32> to vector<16x8xf32>
    %cst_212 = arith.constant dense<0.000000e+00> : vector<16x36xf32>
    %198 = tpu.matmul %197, %195, %cst_212 {dimension_numbers = #tpu.dot_dimension_numbers<[1], [0], [0], [1], [0, 0, 1, 1], [], []>} : vector<16x8xf32>, vector<8x36xf32>, vector<16x36xf32> -> vector<16x36xf32>
    %199 = arith.addf %192, %198 : vector<16x36xf32>
    %c10_213 = arith.constant 10 : index
    %c0_214 = arith.constant 0 : index
    %c0_215 = arith.constant 0 : index
    %200 = vector.load %arg3[%c10_213, %c0_214, %c0_215] : memref<16x225x36xf32, #tpu.memory_space<vmem>>, vector<1x225x36xf32>
    %201 = vector.shape_cast %200 : vector<1x225x36xf32> to vector<225x36xf32>
    %cst_216 = arith.constant dense<0.000000e+00> : vector<8x36xf32>
    %202 = tpu.matmul %128, %201, %cst_216 {dimension_numbers = #tpu.dot_dimension_numbers<[1], [0], [0], [1], [0, 0, 1, 1], [], []>} : vector<8x225xf32>, vector<225x36xf32>, vector<8x36xf32> -> vector<8x36xf32>
    %c10_217 = arith.constant 10 : index
    %c0_218 = arith.constant 0 : index
    %c0_219 = arith.constant 0 : index
    %203 = vector.load %arg7[%c10_217, %c0_218, %c0_219] : memref<16x16x8xf32, #tpu.memory_space<vmem>>, vector<1x16x8xf32>
    %204 = vector.shape_cast %203 : vector<1x16x8xf32> to vector<16x8xf32>
    %cst_220 = arith.constant dense<0.000000e+00> : vector<16x36xf32>
    %205 = tpu.matmul %204, %202, %cst_220 {dimension_numbers = #tpu.dot_dimension_numbers<[1], [0], [0], [1], [0, 0, 1, 1], [], []>} : vector<16x8xf32>, vector<8x36xf32>, vector<16x36xf32> -> vector<16x36xf32>
    %206 = arith.addf %199, %205 : vector<16x36xf32>
    %c11_221 = arith.constant 11 : index
    %c0_222 = arith.constant 0 : index
    %c0_223 = arith.constant 0 : index
    %207 = vector.load %arg3[%c11_221, %c0_222, %c0_223] : memref<16x225x36xf32, #tpu.memory_space<vmem>>, vector<1x225x36xf32>
    %208 = vector.shape_cast %207 : vector<1x225x36xf32> to vector<225x36xf32>
    %cst_224 = arith.constant dense<0.000000e+00> : vector<8x36xf32>
    %209 = tpu.matmul %128, %208, %cst_224 {dimension_numbers = #tpu.dot_dimension_numbers<[1], [0], [0], [1], [0, 0, 1, 1], [], []>} : vector<8x225xf32>, vector<225x36xf32>, vector<8x36xf32> -> vector<8x36xf32>
    %c11_225 = arith.constant 11 : index
    %c0_226 = arith.constant 0 : index
    %c0_227 = arith.constant 0 : index
    %210 = vector.load %arg7[%c11_225, %c0_226, %c0_227] : memref<16x16x8xf32, #tpu.memory_space<vmem>>, vector<1x16x8xf32>
    %211 = vector.shape_cast %210 : vector<1x16x8xf32> to vector<16x8xf32>
    %cst_228 = arith.constant dense<0.000000e+00> : vector<16x36xf32>
    %212 = tpu.matmul %211, %209, %cst_228 {dimension_numbers = #tpu.dot_dimension_numbers<[1], [0], [0], [1], [0, 0, 1, 1], [], []>} : vector<16x8xf32>, vector<8x36xf32>, vector<16x36xf32> -> vector<16x36xf32>
    %213 = arith.addf %206, %212 : vector<16x36xf32>
    %c12_229 = arith.constant 12 : index
    %c0_230 = arith.constant 0 : index
    %c0_231 = arith.constant 0 : index
    %214 = vector.load %arg3[%c12_229, %c0_230, %c0_231] : memref<16x225x36xf32, #tpu.memory_space<vmem>>, vector<1x225x36xf32>
    %215 = vector.shape_cast %214 : vector<1x225x36xf32> to vector<225x36xf32>
    %cst_232 = arith.constant dense<0.000000e+00> : vector<8x36xf32>
    %216 = tpu.matmul %128, %215, %cst_232 {dimension_numbers = #tpu.dot_dimension_numbers<[1], [0], [0], [1], [0, 0, 1, 1], [], []>} : vector<8x225xf32>, vector<225x36xf32>, vector<8x36xf32> -> vector<8x36xf32>
    %c12_233 = arith.constant 12 : index
    %c0_234 = arith.constant 0 : index
    %c0_235 = arith.constant 0 : index
    %217 = vector.load %arg7[%c12_233, %c0_234, %c0_235] : memref<16x16x8xf32, #tpu.memory_space<vmem>>, vector<1x16x8xf32>
    %218 = vector.shape_cast %217 : vector<1x16x8xf32> to vector<16x8xf32>
    %cst_236 = arith.constant dense<0.000000e+00> : vector<16x36xf32>
    %219 = tpu.matmul %218, %216, %cst_236 {dimension_numbers = #tpu.dot_dimension_numbers<[1], [0], [0], [1], [0, 0, 1, 1], [], []>} : vector<16x8xf32>, vector<8x36xf32>, vector<16x36xf32> -> vector<16x36xf32>
    %220 = arith.addf %213, %219 : vector<16x36xf32>
    %c13_237 = arith.constant 13 : index
    %c0_238 = arith.constant 0 : index
    %c0_239 = arith.constant 0 : index
    %221 = vector.load %arg3[%c13_237, %c0_238, %c0_239] : memref<16x225x36xf32, #tpu.memory_space<vmem>>, vector<1x225x36xf32>
    %222 = vector.shape_cast %221 : vector<1x225x36xf32> to vector<225x36xf32>
    %cst_240 = arith.constant dense<0.000000e+00> : vector<8x36xf32>
    %223 = tpu.matmul %128, %222, %cst_240 {dimension_numbers = #tpu.dot_dimension_numbers<[1], [0], [0], [1], [0, 0, 1, 1], [], []>} : vector<8x225xf32>, vector<225x36xf32>, vector<8x36xf32> -> vector<8x36xf32>
    %c13_241 = arith.constant 13 : index
    %c0_242 = arith.constant 0 : index
    %c0_243 = arith.constant 0 : index
    %224 = vector.load %arg7[%c13_241, %c0_242, %c0_243] : memref<16x16x8xf32, #tpu.memory_space<vmem>>, vector<1x16x8xf32>
    %225 = vector.shape_cast %224 : vector<1x16x8xf32> to vector<16x8xf32>
    %cst_244 = arith.constant dense<0.000000e+00> : vector<16x36xf32>
    %226 = tpu.matmul %225, %223, %cst_244 {dimension_numbers = #tpu.dot_dimension_numbers<[1], [0], [0], [1], [0, 0, 1, 1], [], []>} : vector<16x8xf32>, vector<8x36xf32>, vector<16x36xf32> -> vector<16x36xf32>
    %227 = arith.addf %220, %226 : vector<16x36xf32>
    %c14_245 = arith.constant 14 : index
    %c0_246 = arith.constant 0 : index
    %c0_247 = arith.constant 0 : index
    %228 = vector.load %arg3[%c14_245, %c0_246, %c0_247] : memref<16x225x36xf32, #tpu.memory_space<vmem>>, vector<1x225x36xf32>
    %229 = vector.shape_cast %228 : vector<1x225x36xf32> to vector<225x36xf32>
    %cst_248 = arith.constant dense<0.000000e+00> : vector<8x36xf32>
    %230 = tpu.matmul %128, %229, %cst_248 {dimension_numbers = #tpu.dot_dimension_numbers<[1], [0], [0], [1], [0, 0, 1, 1], [], []>} : vector<8x225xf32>, vector<225x36xf32>, vector<8x36xf32> -> vector<8x36xf32>
    %c14_249 = arith.constant 14 : index
    %c0_250 = arith.constant 0 : index
    %c0_251 = arith.constant 0 : index
    %231 = vector.load %arg7[%c14_249, %c0_250, %c0_251] : memref<16x16x8xf32, #tpu.memory_space<vmem>>, vector<1x16x8xf32>
    %232 = vector.shape_cast %231 : vector<1x16x8xf32> to vector<16x8xf32>
    %cst_252 = arith.constant dense<0.000000e+00> : vector<16x36xf32>
    %233 = tpu.matmul %232, %230, %cst_252 {dimension_numbers = #tpu.dot_dimension_numbers<[1], [0], [0], [1], [0, 0, 1, 1], [], []>} : vector<16x8xf32>, vector<8x36xf32>, vector<16x36xf32> -> vector<16x36xf32>
    %234 = arith.addf %227, %233 : vector<16x36xf32>
    %c15_253 = arith.constant 15 : index
    %c0_254 = arith.constant 0 : index
    %c0_255 = arith.constant 0 : index
    %235 = vector.load %arg3[%c15_253, %c0_254, %c0_255] : memref<16x225x36xf32, #tpu.memory_space<vmem>>, vector<1x225x36xf32>
    %236 = vector.shape_cast %235 : vector<1x225x36xf32> to vector<225x36xf32>
    %cst_256 = arith.constant dense<0.000000e+00> : vector<8x36xf32>
    %237 = tpu.matmul %128, %236, %cst_256 {dimension_numbers = #tpu.dot_dimension_numbers<[1], [0], [0], [1], [0, 0, 1, 1], [], []>} : vector<8x225xf32>, vector<225x36xf32>, vector<8x36xf32> -> vector<8x36xf32>
    %c15_257 = arith.constant 15 : index
    %c0_258 = arith.constant 0 : index
    %c0_259 = arith.constant 0 : index
    %238 = vector.load %arg7[%c15_257, %c0_258, %c0_259] : memref<16x16x8xf32, #tpu.memory_space<vmem>>, vector<1x16x8xf32>
    %239 = vector.shape_cast %238 : vector<1x16x8xf32> to vector<16x8xf32>
    %cst_260 = arith.constant dense<0.000000e+00> : vector<16x36xf32>
    %240 = tpu.matmul %239, %237, %cst_260 {dimension_numbers = #tpu.dot_dimension_numbers<[1], [0], [0], [1], [0, 0, 1, 1], [], []>} : vector<16x8xf32>, vector<8x36xf32>, vector<16x36xf32> -> vector<16x36xf32>
    %241 = arith.addf %234, %240 : vector<16x36xf32>
    %cst_261 = arith.constant dense<0.000000e+00> : vector<16xf32>
    %242 = vector.multi_reduction <add>, %241, %cst_261 [1] : vector<16x36xf32> to vector<16xf32>
    %243 = vector.shape_cast %242 : vector<16xf32> to vector<16x1xf32>
    %cst_262 = arith.constant 3.600000e+01 : f32
    %244 = vector.broadcast %cst_262 : f32 to vector<16x1xf32>
    %245 = arith.divf %243, %244 : vector<16x1xf32>
    %246 = vector.broadcast %245 : vector<16x1xf32> to vector<16x36xf32>
    %247 = arith.subf %241, %246 : vector<16x36xf32>
    %248 = arith.mulf %247, %247 : vector<16x36xf32>
    %cst_263 = arith.constant dense<0.000000e+00> : vector<16xf32>
    %249 = vector.multi_reduction <add>, %248, %cst_263 [1] : vector<16x36xf32> to vector<16xf32>
    %250 = vector.shape_cast %249 : vector<16xf32> to vector<16x1xf32>
    %cst_264 = arith.constant 3.600000e+01 : f32
    %251 = vector.broadcast %cst_264 : f32 to vector<16x1xf32>
    %252 = arith.divf %250, %251 : vector<16x1xf32>
    %253 = vector.broadcast %245 : vector<16x1xf32> to vector<16x36xf32>
    %254 = arith.subf %241, %253 : vector<16x36xf32>
    %cst_265 = arith.constant 9.99999974E-6 : f32
    %255 = vector.broadcast %cst_265 : f32 to vector<16x1xf32>
    %256 = arith.addf %252, %255 : vector<16x1xf32>
    %257 = math.rsqrt %256 : vector<16x1xf32>
    %258 = vector.broadcast %257 : vector<16x1xf32> to vector<16x36xf32>
    %259 = arith.mulf %254, %258 : vector<16x36xf32>
    %cst_266 = arith.constant 0.000000e+00 : f32
    %260 = vector.broadcast %cst_266 : f32 to vector<16x36xf32>
    %261 = arith.cmpf oge, %259, %260 : vector<16x36xf32>
    %cst_267 = arith.constant 2.000000e-01 : f32
    %262 = vector.broadcast %cst_267 : f32 to vector<16x36xf32>
    %263 = arith.mulf %262, %259 : vector<16x36xf32>
    %264 = arith.select %261, %259, %263 : vector<16x36xi1>, vector<16x36xf32>
    %cst_268 = arith.constant 0.000000e+00 : f32
    %265 = vector.broadcast %cst_268 : f32 to vector<32x4xf32>
    %c0_269 = arith.constant 0 : index
    %c0_270 = arith.constant 0 : index
    %c0_271 = arith.constant 0 : index
    %266 = vector.load %arg4[%c0_269, %c0_270, %c0_271] : memref<16x36x4xf32, #tpu.memory_space<vmem>>, vector<1x36x4xf32>
    %267 = vector.shape_cast %266 : vector<1x36x4xf32> to vector<36x4xf32>
    %cst_272 = arith.constant dense<0.000000e+00> : vector<16x4xf32>
    %268 = tpu.matmul %264, %267, %cst_272 {dimension_numbers = #tpu.dot_dimension_numbers<[1], [0], [0], [1], [0, 0, 1, 1], [], []>} : vector<16x36xf32>, vector<36x4xf32>, vector<16x4xf32> -> vector<16x4xf32>
    %c0_273 = arith.constant 0 : index
    %c0_274 = arith.constant 0 : index
    %c0_275 = arith.constant 0 : index
    %269 = vector.load %arg8[%c0_273, %c0_274, %c0_275] : memref<16x32x16xf32, #tpu.memory_space<vmem>>, vector<1x32x16xf32>
    %270 = vector.shape_cast %269 : vector<1x32x16xf32> to vector<32x16xf32>
    %cst_276 = arith.constant dense<0.000000e+00> : vector<32x4xf32>
    %271 = tpu.matmul %270, %268, %cst_276 {dimension_numbers = #tpu.dot_dimension_numbers<[1], [0], [0], [1], [0, 0, 1, 1], [], []>} : vector<32x16xf32>, vector<16x4xf32>, vector<32x4xf32> -> vector<32x4xf32>
    %272 = arith.addf %265, %271 : vector<32x4xf32>
    %c1_277 = arith.constant 1 : index
    %c0_278 = arith.constant 0 : index
    %c0_279 = arith.constant 0 : index
    %273 = vector.load %arg4[%c1_277, %c0_278, %c0_279] : memref<16x36x4xf32, #tpu.memory_space<vmem>>, vector<1x36x4xf32>
    %274 = vector.shape_cast %273 : vector<1x36x4xf32> to vector<36x4xf32>
    %cst_280 = arith.constant dense<0.000000e+00> : vector<16x4xf32>
    %275 = tpu.matmul %264, %274, %cst_280 {dimension_numbers = #tpu.dot_dimension_numbers<[1], [0], [0], [1], [0, 0, 1, 1], [], []>} : vector<16x36xf32>, vector<36x4xf32>, vector<16x4xf32> -> vector<16x4xf32>
    %c1_281 = arith.constant 1 : index
    %c0_282 = arith.constant 0 : index
    %c0_283 = arith.constant 0 : index
    %276 = vector.load %arg8[%c1_281, %c0_282, %c0_283] : memref<16x32x16xf32, #tpu.memory_space<vmem>>, vector<1x32x16xf32>
    %277 = vector.shape_cast %276 : vector<1x32x16xf32> to vector<32x16xf32>
    %cst_284 = arith.constant dense<0.000000e+00> : vector<32x4xf32>
    %278 = tpu.matmul %277, %275, %cst_284 {dimension_numbers = #tpu.dot_dimension_numbers<[1], [0], [0], [1], [0, 0, 1, 1], [], []>} : vector<32x16xf32>, vector<16x4xf32>, vector<32x4xf32> -> vector<32x4xf32>
    %279 = arith.addf %272, %278 : vector<32x4xf32>
    %c2_285 = arith.constant 2 : index
    %c0_286 = arith.constant 0 : index
    %c0_287 = arith.constant 0 : index
    %280 = vector.load %arg4[%c2_285, %c0_286, %c0_287] : memref<16x36x4xf32, #tpu.memory_space<vmem>>, vector<1x36x4xf32>
    %281 = vector.shape_cast %280 : vector<1x36x4xf32> to vector<36x4xf32>
    %cst_288 = arith.constant dense<0.000000e+00> : vector<16x4xf32>
    %282 = tpu.matmul %264, %281, %cst_288 {dimension_numbers = #tpu.dot_dimension_numbers<[1], [0], [0], [1], [0, 0, 1, 1], [], []>} : vector<16x36xf32>, vector<36x4xf32>, vector<16x4xf32> -> vector<16x4xf32>
    %c2_289 = arith.constant 2 : index
    %c0_290 = arith.constant 0 : index
    %c0_291 = arith.constant 0 : index
    %283 = vector.load %arg8[%c2_289, %c0_290, %c0_291] : memref<16x32x16xf32, #tpu.memory_space<vmem>>, vector<1x32x16xf32>
    %284 = vector.shape_cast %283 : vector<1x32x16xf32> to vector<32x16xf32>
    %cst_292 = arith.constant dense<0.000000e+00> : vector<32x4xf32>
    %285 = tpu.matmul %284, %282, %cst_292 {dimension_numbers = #tpu.dot_dimension_numbers<[1], [0], [0], [1], [0, 0, 1, 1], [], []>} : vector<32x16xf32>, vector<16x4xf32>, vector<32x4xf32> -> vector<32x4xf32>
    %286 = arith.addf %279, %285 : vector<32x4xf32>
    %c3_293 = arith.constant 3 : index
    %c0_294 = arith.constant 0 : index
    %c0_295 = arith.constant 0 : index
    %287 = vector.load %arg4[%c3_293, %c0_294, %c0_295] : memref<16x36x4xf32, #tpu.memory_space<vmem>>, vector<1x36x4xf32>
    %288 = vector.shape_cast %287 : vector<1x36x4xf32> to vector<36x4xf32>
    %cst_296 = arith.constant dense<0.000000e+00> : vector<16x4xf32>
    %289 = tpu.matmul %264, %288, %cst_296 {dimension_numbers = #tpu.dot_dimension_numbers<[1], [0], [0], [1], [0, 0, 1, 1], [], []>} : vector<16x36xf32>, vector<36x4xf32>, vector<16x4xf32> -> vector<16x4xf32>
    %c3_297 = arith.constant 3 : index
    %c0_298 = arith.constant 0 : index
    %c0_299 = arith.constant 0 : index
    %290 = vector.load %arg8[%c3_297, %c0_298, %c0_299] : memref<16x32x16xf32, #tpu.memory_space<vmem>>, vector<1x32x16xf32>
    %291 = vector.shape_cast %290 : vector<1x32x16xf32> to vector<32x16xf32>
    %cst_300 = arith.constant dense<0.000000e+00> : vector<32x4xf32>
    %292 = tpu.matmul %291, %289, %cst_300 {dimension_numbers = #tpu.dot_dimension_numbers<[1], [0], [0], [1], [0, 0, 1, 1], [], []>} : vector<32x16xf32>, vector<16x4xf32>, vector<32x4xf32> -> vector<32x4xf32>
    %293 = arith.addf %286, %292 : vector<32x4xf32>
    %c4_301 = arith.constant 4 : index
    %c0_302 = arith.constant 0 : index
    %c0_303 = arith.constant 0 : index
    %294 = vector.load %arg4[%c4_301, %c0_302, %c0_303] : memref<16x36x4xf32, #tpu.memory_space<vmem>>, vector<1x36x4xf32>
    %295 = vector.shape_cast %294 : vector<1x36x4xf32> to vector<36x4xf32>
    %cst_304 = arith.constant dense<0.000000e+00> : vector<16x4xf32>
    %296 = tpu.matmul %264, %295, %cst_304 {dimension_numbers = #tpu.dot_dimension_numbers<[1], [0], [0], [1], [0, 0, 1, 1], [], []>} : vector<16x36xf32>, vector<36x4xf32>, vector<16x4xf32> -> vector<16x4xf32>
    %c4_305 = arith.constant 4 : index
    %c0_306 = arith.constant 0 : index
    %c0_307 = arith.constant 0 : index
    %297 = vector.load %arg8[%c4_305, %c0_306, %c0_307] : memref<16x32x16xf32, #tpu.memory_space<vmem>>, vector<1x32x16xf32>
    %298 = vector.shape_cast %297 : vector<1x32x16xf32> to vector<32x16xf32>
    %cst_308 = arith.constant dense<0.000000e+00> : vector<32x4xf32>
    %299 = tpu.matmul %298, %296, %cst_308 {dimension_numbers = #tpu.dot_dimension_numbers<[1], [0], [0], [1], [0, 0, 1, 1], [], []>} : vector<32x16xf32>, vector<16x4xf32>, vector<32x4xf32> -> vector<32x4xf32>
    %300 = arith.addf %293, %299 : vector<32x4xf32>
    %c5_309 = arith.constant 5 : index
    %c0_310 = arith.constant 0 : index
    %c0_311 = arith.constant 0 : index
    %301 = vector.load %arg4[%c5_309, %c0_310, %c0_311] : memref<16x36x4xf32, #tpu.memory_space<vmem>>, vector<1x36x4xf32>
    %302 = vector.shape_cast %301 : vector<1x36x4xf32> to vector<36x4xf32>
    %cst_312 = arith.constant dense<0.000000e+00> : vector<16x4xf32>
    %303 = tpu.matmul %264, %302, %cst_312 {dimension_numbers = #tpu.dot_dimension_numbers<[1], [0], [0], [1], [0, 0, 1, 1], [], []>} : vector<16x36xf32>, vector<36x4xf32>, vector<16x4xf32> -> vector<16x4xf32>
    %c5_313 = arith.constant 5 : index
    %c0_314 = arith.constant 0 : index
    %c0_315 = arith.constant 0 : index
    %304 = vector.load %arg8[%c5_313, %c0_314, %c0_315] : memref<16x32x16xf32, #tpu.memory_space<vmem>>, vector<1x32x16xf32>
    %305 = vector.shape_cast %304 : vector<1x32x16xf32> to vector<32x16xf32>
    %cst_316 = arith.constant dense<0.000000e+00> : vector<32x4xf32>
    %306 = tpu.matmul %305, %303, %cst_316 {dimension_numbers = #tpu.dot_dimension_numbers<[1], [0], [0], [1], [0, 0, 1, 1], [], []>} : vector<32x16xf32>, vector<16x4xf32>, vector<32x4xf32> -> vector<32x4xf32>
    %307 = arith.addf %300, %306 : vector<32x4xf32>
    %c6_317 = arith.constant 6 : index
    %c0_318 = arith.constant 0 : index
    %c0_319 = arith.constant 0 : index
    %308 = vector.load %arg4[%c6_317, %c0_318, %c0_319] : memref<16x36x4xf32, #tpu.memory_space<vmem>>, vector<1x36x4xf32>
    %309 = vector.shape_cast %308 : vector<1x36x4xf32> to vector<36x4xf32>
    %cst_320 = arith.constant dense<0.000000e+00> : vector<16x4xf32>
    %310 = tpu.matmul %264, %309, %cst_320 {dimension_numbers = #tpu.dot_dimension_numbers<[1], [0], [0], [1], [0, 0, 1, 1], [], []>} : vector<16x36xf32>, vector<36x4xf32>, vector<16x4xf32> -> vector<16x4xf32>
    %c6_321 = arith.constant 6 : index
    %c0_322 = arith.constant 0 : index
    %c0_323 = arith.constant 0 : index
    %311 = vector.load %arg8[%c6_321, %c0_322, %c0_323] : memref<16x32x16xf32, #tpu.memory_space<vmem>>, vector<1x32x16xf32>
    %312 = vector.shape_cast %311 : vector<1x32x16xf32> to vector<32x16xf32>
    %cst_324 = arith.constant dense<0.000000e+00> : vector<32x4xf32>
    %313 = tpu.matmul %312, %310, %cst_324 {dimension_numbers = #tpu.dot_dimension_numbers<[1], [0], [0], [1], [0, 0, 1, 1], [], []>} : vector<32x16xf32>, vector<16x4xf32>, vector<32x4xf32> -> vector<32x4xf32>
    %314 = arith.addf %307, %313 : vector<32x4xf32>
    %c7_325 = arith.constant 7 : index
    %c0_326 = arith.constant 0 : index
    %c0_327 = arith.constant 0 : index
    %315 = vector.load %arg4[%c7_325, %c0_326, %c0_327] : memref<16x36x4xf32, #tpu.memory_space<vmem>>, vector<1x36x4xf32>
    %316 = vector.shape_cast %315 : vector<1x36x4xf32> to vector<36x4xf32>
    %cst_328 = arith.constant dense<0.000000e+00> : vector<16x4xf32>
    %317 = tpu.matmul %264, %316, %cst_328 {dimension_numbers = #tpu.dot_dimension_numbers<[1], [0], [0], [1], [0, 0, 1, 1], [], []>} : vector<16x36xf32>, vector<36x4xf32>, vector<16x4xf32> -> vector<16x4xf32>
    %c7_329 = arith.constant 7 : index
    %c0_330 = arith.constant 0 : index
    %c0_331 = arith.constant 0 : index
    %318 = vector.load %arg8[%c7_329, %c0_330, %c0_331] : memref<16x32x16xf32, #tpu.memory_space<vmem>>, vector<1x32x16xf32>
    %319 = vector.shape_cast %318 : vector<1x32x16xf32> to vector<32x16xf32>
    %cst_332 = arith.constant dense<0.000000e+00> : vector<32x4xf32>
    %320 = tpu.matmul %319, %317, %cst_332 {dimension_numbers = #tpu.dot_dimension_numbers<[1], [0], [0], [1], [0, 0, 1, 1], [], []>} : vector<32x16xf32>, vector<16x4xf32>, vector<32x4xf32> -> vector<32x4xf32>
    %321 = arith.addf %314, %320 : vector<32x4xf32>
    %c8_333 = arith.constant 8 : index
    %c0_334 = arith.constant 0 : index
    %c0_335 = arith.constant 0 : index
    %322 = vector.load %arg4[%c8_333, %c0_334, %c0_335] : memref<16x36x4xf32, #tpu.memory_space<vmem>>, vector<1x36x4xf32>
    %323 = vector.shape_cast %322 : vector<1x36x4xf32> to vector<36x4xf32>
    %cst_336 = arith.constant dense<0.000000e+00> : vector<16x4xf32>
    %324 = tpu.matmul %264, %323, %cst_336 {dimension_numbers = #tpu.dot_dimension_numbers<[1], [0], [0], [1], [0, 0, 1, 1], [], []>} : vector<16x36xf32>, vector<36x4xf32>, vector<16x4xf32> -> vector<16x4xf32>
    %c8_337 = arith.constant 8 : index
    %c0_338 = arith.constant 0 : index
    %c0_339 = arith.constant 0 : index
    %325 = vector.load %arg8[%c8_337, %c0_338, %c0_339] : memref<16x32x16xf32, #tpu.memory_space<vmem>>, vector<1x32x16xf32>
    %326 = vector.shape_cast %325 : vector<1x32x16xf32> to vector<32x16xf32>
    %cst_340 = arith.constant dense<0.000000e+00> : vector<32x4xf32>
    %327 = tpu.matmul %326, %324, %cst_340 {dimension_numbers = #tpu.dot_dimension_numbers<[1], [0], [0], [1], [0, 0, 1, 1], [], []>} : vector<32x16xf32>, vector<16x4xf32>, vector<32x4xf32> -> vector<32x4xf32>
    %328 = arith.addf %321, %327 : vector<32x4xf32>
    %c9_341 = arith.constant 9 : index
    %c0_342 = arith.constant 0 : index
    %c0_343 = arith.constant 0 : index
    %329 = vector.load %arg4[%c9_341, %c0_342, %c0_343] : memref<16x36x4xf32, #tpu.memory_space<vmem>>, vector<1x36x4xf32>
    %330 = vector.shape_cast %329 : vector<1x36x4xf32> to vector<36x4xf32>
    %cst_344 = arith.constant dense<0.000000e+00> : vector<16x4xf32>
    %331 = tpu.matmul %264, %330, %cst_344 {dimension_numbers = #tpu.dot_dimension_numbers<[1], [0], [0], [1], [0, 0, 1, 1], [], []>} : vector<16x36xf32>, vector<36x4xf32>, vector<16x4xf32> -> vector<16x4xf32>
    %c9_345 = arith.constant 9 : index
    %c0_346 = arith.constant 0 : index
    %c0_347 = arith.constant 0 : index
    %332 = vector.load %arg8[%c9_345, %c0_346, %c0_347] : memref<16x32x16xf32, #tpu.memory_space<vmem>>, vector<1x32x16xf32>
    %333 = vector.shape_cast %332 : vector<1x32x16xf32> to vector<32x16xf32>
    %cst_348 = arith.constant dense<0.000000e+00> : vector<32x4xf32>
    %334 = tpu.matmul %333, %331, %cst_348 {dimension_numbers = #tpu.dot_dimension_numbers<[1], [0], [0], [1], [0, 0, 1, 1], [], []>} : vector<32x16xf32>, vector<16x4xf32>, vector<32x4xf32> -> vector<32x4xf32>
    %335 = arith.addf %328, %334 : vector<32x4xf32>
    %c10_349 = arith.constant 10 : index
    %c0_350 = arith.constant 0 : index
    %c0_351 = arith.constant 0 : index
    %336 = vector.load %arg4[%c10_349, %c0_350, %c0_351] : memref<16x36x4xf32, #tpu.memory_space<vmem>>, vector<1x36x4xf32>
    %337 = vector.shape_cast %336 : vector<1x36x4xf32> to vector<36x4xf32>
    %cst_352 = arith.constant dense<0.000000e+00> : vector<16x4xf32>
    %338 = tpu.matmul %264, %337, %cst_352 {dimension_numbers = #tpu.dot_dimension_numbers<[1], [0], [0], [1], [0, 0, 1, 1], [], []>} : vector<16x36xf32>, vector<36x4xf32>, vector<16x4xf32> -> vector<16x4xf32>
    %c10_353 = arith.constant 10 : index
    %c0_354 = arith.constant 0 : index
    %c0_355 = arith.constant 0 : index
    %339 = vector.load %arg8[%c10_353, %c0_354, %c0_355] : memref<16x32x16xf32, #tpu.memory_space<vmem>>, vector<1x32x16xf32>
    %340 = vector.shape_cast %339 : vector<1x32x16xf32> to vector<32x16xf32>
    %cst_356 = arith.constant dense<0.000000e+00> : vector<32x4xf32>
    %341 = tpu.matmul %340, %338, %cst_356 {dimension_numbers = #tpu.dot_dimension_numbers<[1], [0], [0], [1], [0, 0, 1, 1], [], []>} : vector<32x16xf32>, vector<16x4xf32>, vector<32x4xf32> -> vector<32x4xf32>
    %342 = arith.addf %335, %341 : vector<32x4xf32>
    %c11_357 = arith.constant 11 : index
    %c0_358 = arith.constant 0 : index
    %c0_359 = arith.constant 0 : index
    %343 = vector.load %arg4[%c11_357, %c0_358, %c0_359] : memref<16x36x4xf32, #tpu.memory_space<vmem>>, vector<1x36x4xf32>
    %344 = vector.shape_cast %343 : vector<1x36x4xf32> to vector<36x4xf32>
    %cst_360 = arith.constant dense<0.000000e+00> : vector<16x4xf32>
    %345 = tpu.matmul %264, %344, %cst_360 {dimension_numbers = #tpu.dot_dimension_numbers<[1], [0], [0], [1], [0, 0, 1, 1], [], []>} : vector<16x36xf32>, vector<36x4xf32>, vector<16x4xf32> -> vector<16x4xf32>
    %c11_361 = arith.constant 11 : index
    %c0_362 = arith.constant 0 : index
    %c0_363 = arith.constant 0 : index
    %346 = vector.load %arg8[%c11_361, %c0_362, %c0_363] : memref<16x32x16xf32, #tpu.memory_space<vmem>>, vector<1x32x16xf32>
    %347 = vector.shape_cast %346 : vector<1x32x16xf32> to vector<32x16xf32>
    %cst_364 = arith.constant dense<0.000000e+00> : vector<32x4xf32>
    %348 = tpu.matmul %347, %345, %cst_364 {dimension_numbers = #tpu.dot_dimension_numbers<[1], [0], [0], [1], [0, 0, 1, 1], [], []>} : vector<32x16xf32>, vector<16x4xf32>, vector<32x4xf32> -> vector<32x4xf32>
    %349 = arith.addf %342, %348 : vector<32x4xf32>
    %c12_365 = arith.constant 12 : index
    %c0_366 = arith.constant 0 : index
    %c0_367 = arith.constant 0 : index
    %350 = vector.load %arg4[%c12_365, %c0_366, %c0_367] : memref<16x36x4xf32, #tpu.memory_space<vmem>>, vector<1x36x4xf32>
    %351 = vector.shape_cast %350 : vector<1x36x4xf32> to vector<36x4xf32>
    %cst_368 = arith.constant dense<0.000000e+00> : vector<16x4xf32>
    %352 = tpu.matmul %264, %351, %cst_368 {dimension_numbers = #tpu.dot_dimension_numbers<[1], [0], [0], [1], [0, 0, 1, 1], [], []>} : vector<16x36xf32>, vector<36x4xf32>, vector<16x4xf32> -> vector<16x4xf32>
    %c12_369 = arith.constant 12 : index
    %c0_370 = arith.constant 0 : index
    %c0_371 = arith.constant 0 : index
    %353 = vector.load %arg8[%c12_369, %c0_370, %c0_371] : memref<16x32x16xf32, #tpu.memory_space<vmem>>, vector<1x32x16xf32>
    %354 = vector.shape_cast %353 : vector<1x32x16xf32> to vector<32x16xf32>
    %cst_372 = arith.constant dense<0.000000e+00> : vector<32x4xf32>
    %355 = tpu.matmul %354, %352, %cst_372 {dimension_numbers = #tpu.dot_dimension_numbers<[1], [0], [0], [1], [0, 0, 1, 1], [], []>} : vector<32x16xf32>, vector<16x4xf32>, vector<32x4xf32> -> vector<32x4xf32>
    %356 = arith.addf %349, %355 : vector<32x4xf32>
    %c13_373 = arith.constant 13 : index
    %c0_374 = arith.constant 0 : index
    %c0_375 = arith.constant 0 : index
    %357 = vector.load %arg4[%c13_373, %c0_374, %c0_375] : memref<16x36x4xf32, #tpu.memory_space<vmem>>, vector<1x36x4xf32>
    %358 = vector.shape_cast %357 : vector<1x36x4xf32> to vector<36x4xf32>
    %cst_376 = arith.constant dense<0.000000e+00> : vector<16x4xf32>
    %359 = tpu.matmul %264, %358, %cst_376 {dimension_numbers = #tpu.dot_dimension_numbers<[1], [0], [0], [1], [0, 0, 1, 1], [], []>} : vector<16x36xf32>, vector<36x4xf32>, vector<16x4xf32> -> vector<16x4xf32>
    %c13_377 = arith.constant 13 : index
    %c0_378 = arith.constant 0 : index
    %c0_379 = arith.constant 0 : index
    %360 = vector.load %arg8[%c13_377, %c0_378, %c0_379] : memref<16x32x16xf32, #tpu.memory_space<vmem>>, vector<1x32x16xf32>
    %361 = vector.shape_cast %360 : vector<1x32x16xf32> to vector<32x16xf32>
    %cst_380 = arith.constant dense<0.000000e+00> : vector<32x4xf32>
    %362 = tpu.matmul %361, %359, %cst_380 {dimension_numbers = #tpu.dot_dimension_numbers<[1], [0], [0], [1], [0, 0, 1, 1], [], []>} : vector<32x16xf32>, vector<16x4xf32>, vector<32x4xf32> -> vector<32x4xf32>
    %363 = arith.addf %356, %362 : vector<32x4xf32>
    %c14_381 = arith.constant 14 : index
    %c0_382 = arith.constant 0 : index
    %c0_383 = arith.constant 0 : index
    %364 = vector.load %arg4[%c14_381, %c0_382, %c0_383] : memref<16x36x4xf32, #tpu.memory_space<vmem>>, vector<1x36x4xf32>
    %365 = vector.shape_cast %364 : vector<1x36x4xf32> to vector<36x4xf32>
    %cst_384 = arith.constant dense<0.000000e+00> : vector<16x4xf32>
    %366 = tpu.matmul %264, %365, %cst_384 {dimension_numbers = #tpu.dot_dimension_numbers<[1], [0], [0], [1], [0, 0, 1, 1], [], []>} : vector<16x36xf32>, vector<36x4xf32>, vector<16x4xf32> -> vector<16x4xf32>
    %c14_385 = arith.constant 14 : index
    %c0_386 = arith.constant 0 : index
    %c0_387 = arith.constant 0 : index
    %367 = vector.load %arg8[%c14_385, %c0_386, %c0_387] : memref<16x32x16xf32, #tpu.memory_space<vmem>>, vector<1x32x16xf32>
    %368 = vector.shape_cast %367 : vector<1x32x16xf32> to vector<32x16xf32>
    %cst_388 = arith.constant dense<0.000000e+00> : vector<32x4xf32>
    %369 = tpu.matmul %368, %366, %cst_388 {dimension_numbers = #tpu.dot_dimension_numbers<[1], [0], [0], [1], [0, 0, 1, 1], [], []>} : vector<32x16xf32>, vector<16x4xf32>, vector<32x4xf32> -> vector<32x4xf32>
    %370 = arith.addf %363, %369 : vector<32x4xf32>
    %c15_389 = arith.constant 15 : index
    %c0_390 = arith.constant 0 : index
    %c0_391 = arith.constant 0 : index
    %371 = vector.load %arg4[%c15_389, %c0_390, %c0_391] : memref<16x36x4xf32, #tpu.memory_space<vmem>>, vector<1x36x4xf32>
    %372 = vector.shape_cast %371 : vector<1x36x4xf32> to vector<36x4xf32>
    %cst_392 = arith.constant dense<0.000000e+00> : vector<16x4xf32>
    %373 = tpu.matmul %264, %372, %cst_392 {dimension_numbers = #tpu.dot_dimension_numbers<[1], [0], [0], [1], [0, 0, 1, 1], [], []>} : vector<16x36xf32>, vector<36x4xf32>, vector<16x4xf32> -> vector<16x4xf32>
    %c15_393 = arith.constant 15 : index
    %c0_394 = arith.constant 0 : index
    %c0_395 = arith.constant 0 : index
    %374 = vector.load %arg8[%c15_393, %c0_394, %c0_395] : memref<16x32x16xf32, #tpu.memory_space<vmem>>, vector<1x32x16xf32>
    %375 = vector.shape_cast %374 : vector<1x32x16xf32> to vector<32x16xf32>
    %cst_396 = arith.constant dense<0.000000e+00> : vector<32x4xf32>
    %376 = tpu.matmul %375, %373, %cst_396 {dimension_numbers = #tpu.dot_dimension_numbers<[1], [0], [0], [1], [0, 0, 1, 1], [], []>} : vector<32x16xf32>, vector<16x4xf32>, vector<32x4xf32> -> vector<32x4xf32>
    %377 = arith.addf %370, %376 : vector<32x4xf32>
    %cst_397 = arith.constant dense<0.000000e+00> : vector<32xf32>
    %378 = vector.multi_reduction <add>, %377, %cst_397 [1] : vector<32x4xf32> to vector<32xf32>
    %379 = vector.shape_cast %378 : vector<32xf32> to vector<32x1xf32>
    %cst_398 = arith.constant 4.000000e+00 : f32
    %380 = vector.broadcast %cst_398 : f32 to vector<32x1xf32>
    %381 = arith.divf %379, %380 : vector<32x1xf32>
    %382 = vector.broadcast %381 : vector<32x1xf32> to vector<32x4xf32>
    %383 = arith.subf %377, %382 : vector<32x4xf32>
    %384 = arith.mulf %383, %383 : vector<32x4xf32>
    %cst_399 = arith.constant dense<0.000000e+00> : vector<32xf32>
    %385 = vector.multi_reduction <add>, %384, %cst_399 [1] : vector<32x4xf32> to vector<32xf32>
    %386 = vector.shape_cast %385 : vector<32xf32> to vector<32x1xf32>
    %cst_400 = arith.constant 4.000000e+00 : f32
    %387 = vector.broadcast %cst_400 : f32 to vector<32x1xf32>
    %388 = arith.divf %386, %387 : vector<32x1xf32>
    %389 = vector.broadcast %381 : vector<32x1xf32> to vector<32x4xf32>
    %390 = arith.subf %377, %389 : vector<32x4xf32>
    %cst_401 = arith.constant 9.99999974E-6 : f32
    %391 = vector.broadcast %cst_401 : f32 to vector<32x1xf32>
    %392 = arith.addf %388, %391 : vector<32x1xf32>
    %393 = math.rsqrt %392 : vector<32x1xf32>
    %394 = vector.broadcast %393 : vector<32x1xf32> to vector<32x4xf32>
    %395 = arith.mulf %390, %394 : vector<32x4xf32>
    %cst_402 = arith.constant 0.000000e+00 : f32
    %396 = vector.broadcast %cst_402 : f32 to vector<32x4xf32>
    %397 = arith.cmpf oge, %395, %396 : vector<32x4xf32>
    %cst_403 = arith.constant 2.000000e-01 : f32
    %398 = vector.broadcast %cst_403 : f32 to vector<32x4xf32>
    %399 = arith.mulf %398, %395 : vector<32x4xf32>
    %400 = arith.select %397, %395, %399 : vector<32x4xi1>, vector<32x4xf32>
    %c0_404 = arith.constant 0 : index
    %c0_405 = arith.constant 0 : index
    %401 = vector.load %arg9[%c0_404, %c0_405] : memref<32x1xf32, #tpu.memory_space<vmem>>, vector<32x1xf32>
    %402 = vector.broadcast %401 : vector<32x1xf32> to vector<32x4xf32>
    %403 = arith.mulf %400, %402 : vector<32x4xf32>
    %cst_406 = arith.constant dense<0.000000e+00> : vector<4xf32>
    %404 = vector.multi_reduction <add>, %403, %cst_406 [0] : vector<32x4xf32> to vector<4xf32>
    %405 = vector.shape_cast %404 : vector<4xf32> to vector<1x4xf32>
    %c0_407 = arith.constant 0 : index
    %c0_408 = arith.constant 0 : index
    %406 = vector.load %arg10[%c0_407, %c0_408] : memref<1x1xf32, #tpu.memory_space<vmem>>, vector<1x1xf32>
    %407 = vector.broadcast %406 : vector<1x1xf32> to vector<1x4xf32>
    %408 = arith.addf %405, %407 : vector<1x4xf32>
    %c0_409 = arith.constant 0 : index
    %c0_410 = arith.constant 0 : index
    %c0_411 = arith.constant 0 : index
    %409 = vector.load %arg11[%c0_409, %c0_410, %c0_411] : memref<1x1x4xf32, #tpu.memory_space<vmem>>, vector<1x1x4xf32>
    %410 = vector.shape_cast %409 : vector<1x1x4xf32> to vector<1x4xf32>
    %411 = vector.shape_cast %408 : vector<1x4xf32> to vector<1x1x4xf32>
    tpu.vector_store %arg11[%c0_409, %c0_410, %c0_411], %411 {strides = array<i32>} : memref<1x1x4xf32, #tpu.memory_space<vmem>>, vector<1x1x4xf32>,
    %412 = arith.negf %408 : vector<1x4xf32>
    %413 = math.exp %412 : vector<1x4xf32>
    %cst_412 = arith.constant 1.000000e+00 : f32
    %414 = vector.broadcast %cst_412 : f32 to vector<1x4xf32>
    %415 = arith.addf %414, %413 : vector<1x4xf32>
    %416 = arith.divf %414, %415 : vector<1x4xf32>
    %c0_413 = arith.constant 0 : index
    %c0_414 = arith.constant 0 : index
    %c0_415 = arith.constant 0 : index
    %417 = vector.load %arg12[%c0_413, %c0_414, %c0_415] : memref<1x1x4xf32, #tpu.memory_space<vmem>>, vector<1x1x4xf32>
    %418 = vector.shape_cast %417 : vector<1x1x4xf32> to vector<1x4xf32>
    %419 = vector.shape_cast %416 : vector<1x4xf32> to vector<1x1x4xf32>
    tpu.vector_store %arg12[%c0_413, %c0_414, %c0_415], %419 {strides = array<i32>} : memref<1x1x4xf32, #tpu.memory_space<vmem>>, vector<1x1x4xf32>,
    return
  }
  func.func @transform_0(%arg0: i32) -> (i32, i32, i32, i32) {
    %c0_i32 = arith.constant 0 : i32
    %c0_i32_0 = arith.constant 0 : i32
    %c0_i32_1 = arith.constant 0 : i32
    %c0_i32_2 = arith.constant 0 : i32
    return %arg0, %c0_i32, %c0_i32_0, %c0_i32_1 : i32, i32, i32, i32
  }
  func.func @transform_1(%arg0: i32) -> (i32, i32, i32) {
    %c0_i32 = arith.constant 0 : i32
    %c0_i32_0 = arith.constant 0 : i32
    %c0_i32_1 = arith.constant 0 : i32
    %c0_i32_2 = arith.constant 0 : i32
    return %c0_i32, %c0_i32_0, %c0_i32_1 : i32, i32, i32
  }
  func.func @transform_2(%arg0: i32) -> (i32, i32, i32) {
    %c0_i32 = arith.constant 0 : i32
    %c0_i32_0 = arith.constant 0 : i32
    %c0_i32_1 = arith.constant 0 : i32
    %c0_i32_2 = arith.constant 0 : i32
    return %c0_i32, %c0_i32_0, %c0_i32_1 : i32, i32, i32
  }
  func.func @transform_3(%arg0: i32) -> (i32, i32, i32) {
    %c0_i32 = arith.constant 0 : i32
    %c0_i32_0 = arith.constant 0 : i32
    %c0_i32_1 = arith.constant 0 : i32
    %c0_i32_2 = arith.constant 0 : i32
    return %c0_i32, %c0_i32_0, %c0_i32_1 : i32, i32, i32
  }
  func.func @transform_4(%arg0: i32) -> (i32, i32, i32) {
    %c0_i32 = arith.constant 0 : i32
    %c0_i32_0 = arith.constant 0 : i32
    %c0_i32_1 = arith.constant 0 : i32
    %c0_i32_2 = arith.constant 0 : i32
    return %c0_i32, %c0_i32_0, %c0_i32_1 : i32, i32, i32
  }
  func.func @transform_5(%arg0: i32) -> (i32, i32) {
    %c0_i32 = arith.constant 0 : i32
    %c0_i32_0 = arith.constant 0 : i32
    %c0_i32_1 = arith.constant 0 : i32
    return %c0_i32, %c0_i32_0 : i32, i32
  }
  func.func @transform_6(%arg0: i32) -> (i32, i32, i32) {
    %c0_i32 = arith.constant 0 : i32
    %c0_i32_0 = arith.constant 0 : i32
    %c0_i32_1 = arith.constant 0 : i32
    %c0_i32_2 = arith.constant 0 : i32
    return %c0_i32, %c0_i32_0, %c0_i32_1 : i32, i32, i32
  }
  func.func @transform_7(%arg0: i32) -> (i32, i32, i32) {
    %c0_i32 = arith.constant 0 : i32
    %c0_i32_0 = arith.constant 0 : i32
    %c0_i32_1 = arith.constant 0 : i32
    %c0_i32_2 = arith.constant 0 : i32
    return %c0_i32, %c0_i32_0, %c0_i32_1 : i32, i32, i32
  }
  func.func @transform_8(%arg0: i32) -> (i32, i32) {
    %c0_i32 = arith.constant 0 : i32
    %c0_i32_0 = arith.constant 0 : i32
    %c0_i32_1 = arith.constant 0 : i32
    return %c0_i32, %c0_i32_0 : i32, i32
  }
  func.func @transform_9(%arg0: i32) -> (i32, i32) {
    %c0_i32 = arith.constant 0 : i32
    %c0_i32_0 = arith.constant 0 : i32
    %c0_i32_1 = arith.constant 0 : i32
    return %c0_i32, %c0_i32_0 : i32, i32
  }
  func.func @transform_10(%arg0: i32) -> (i32, i32, i32) {
    %c0_i32 = arith.constant 0 : i32
    %c0_i32_0 = arith.constant 0 : i32
    %c0_i32_1 = arith.constant 0 : i32
    return %arg0, %c0_i32, %c0_i32_0 : i32, i32, i32
  }
  func.func @transform_11(%arg0: i32) -> (i32, i32, i32) {
    %c0_i32 = arith.constant 0 : i32
    %c0_i32_0 = arith.constant 0 : i32
    %c0_i32_1 = arith.constant 0 : i32
    return %arg0, %c0_i32, %c0_i32_0 : i32, i32, i32
  }
}

</mosaic_0001>

<llo_original>
// kernel: discriminator_forward.1
$region0: #{discriminator_forward.1}
  #allocation0 [shape = 'u32[]', space=smem, size = 0x4, offset = 0x4, fixed_abs, tag = 'smem constant byte address 0x4 - core index']
  #allocation1 [shape = 'u32[144,128]{1,0:T(1,128)}', space=vmem, size = 0x12000, scoped, tag = 'internal scratch']
  #allocation2 [shape = 'f32[1,1]{1,0:T(1,128)S(1)}', space=vmem, size = 0x200, scoped, tag = 'scoped memory for discriminator_forward.1']
  %s0 = inlined_call_operand.vmem [shape: f32[2,4,3,256], index: 0, kind: input, shape index: {}]
  %s1 = inlined_call_operand.vmem [shape: f32[4,256,225], index: 1, kind: input, shape index: {}]
  %s2 = inlined_call_operand.vmem [shape: f32[16,225,36], index: 2, kind: input, shape index: {}]
  %s3 = inlined_call_operand.vmem [shape: f32[16,36,4], index: 3, kind: input, shape index: {}]
  %s4 = inlined_call_operand.vmem [shape: f32[16,8,3], index: 4, kind: input, shape index: {}]
  %s5 = inlined_call_operand.vmem [shape: f32[8,1], index: 5, kind: input, shape index: {}]
  %s6 = inlined_call_operand.vmem [shape: f32[16,16,8], index: 6, kind: input, shape index: {}]
  %s7 = inlined_call_operand.vmem [shape: f32[16,32,16], index: 7, kind: input, shape index: {}]
  %s8 = inlined_call_operand.vmem [shape: f32[32,1], index: 8, kind: input, shape index: {}]
  %s9 = inlined_call_operand.<no memory space> [shape: f32[1,1], index: 9, kind: input, shape index: {}]
  %s10 = inlined_call_operand.vmem [shape: f32[2,1,4], index: 10, kind: output, shape index: {0}]
  %s11 = inlined_call_operand.vmem [shape: f32[2,1,4], index: 11, kind: output, shape index: {1}]
  %12 = xla_tuple %s10, %s11
  %s13 = sld [smem:[#allocation0]]
  $region81: #{discriminator_forward.1} parent=0
    _
  %s15 = ssub.s32 1, %s13
  %s16 = scalar_select 0, %s15, %s13
  %v17 = vstv %s9
  %18 = vst [vmem:[#allocation2] sm:$0x1] %v17
  loop: start=0, step=1, limit=4
  $region2: #{discriminator_forward.1} parent=0 // loop_pre_header
    _
  $region3: #{discriminator_forward.1} parent=0 // loop_header
    %s20 = sphi 0, %s24
    %p21 = scmp.ge.s32.totalorder %s20, 4
    %s30 = sphi 0, %s32
    %s33 = sphi 0, %s30
    %s34 = sphi 0, %s33
    %s50 = sphi 0, %s34
    %s54 = sphi 0, %s54
    %s56 = sphi 0, %s54
    %s57 = sphi 0, %s56
    %s71 = sphi 0, %s57
    %s75 = sphi 0, %s75
    %s77 = sphi 0, %s75
    %s78 = sphi 0, %s77
    %s92 = sphi 0, %s78
    %s96 = sphi 0, %s96
    %s98 = sphi 0, %s96
    %s99 = sphi 0, %s98
    %s113 = sphi 0, %s99
    %s117 = sphi 0, %s117
    %s119 = sphi 0, %s117
    %s120 = sphi 0, %s119
    %s134 = sphi 0, %s120
    %s138 = sphi 0, %s138
    %s140 = sphi 0, %s138
    %s141 = sphi 0, %s140
    %s155 = sphi 0, %s141
    %s159 = sphi 0, %s159
    %s161 = sphi 0, %s159
    %s162 = sphi 0, %s161
    %s176 = sphi 0, %s162
    %s180 = sphi 0, %s180
    %s182 = sphi 0, %s180
    %s183 = sphi 0, %s182
    %s197 = sphi 0, %s183
    %s201 = sphi 0, %s201
    %s203 = sphi 0, %s201
    %s204 = sphi 0, %s203
    %s218 = sphi 0, %s204
    %s222 = sphi 0, %s222
    %s224 = sphi 0, %s222
    %s225 = sphi 0, %s224
    %s239 = sphi 0, %s225
    %s245 = sphi 0, %s247
    %s248 = sphi 0, %s245
    %s249 = sphi 0, %s248
    %s265 = sphi 0, %s249
    %s271 = sphi 0, %s273
    %s274 = sphi 0, %s271
    %s275 = sphi 0, %s274
    %s291 = sphi 0, %s275
  $region4: #{discriminator_forward.1} parent=0 // loop_header_branch
    %23 = sbr.rel (%p21) target = $region8
  $region5: #{discriminator_forward.1} parent=0 // loop_body
    %s25 = ssub.s32 %s20, 1
    %s26 = ssub.s32 %s20, 2
    %s27 = sadd.s32 %s20, 1
    %s28 = ssub.s32 %s20, %s27
    %p29 = scmp.eq.s32.totalorder %s28, 0
    %s31 = sadd.s32 %s30, 1
    %s32 = scalar_select %p29, %s30, %s31
    %p35 = pneg %p29
    %p36 = scmp.eq.s32.totalorder %s20, 1
    %p37 = por %p35, %p36
    %p38 = scmp.ne.s32.totalorder %s30, %s33
    %p39 = scmp.eq.s32.totalorder %s20, 0
    %p40 = por %p38, %p39
    %p41 = scmp.ne.s32.totalorder %s30, %s33
    %p42 = scmp.eq.s32.totalorder %s25, 1
    %p43 = por %p41, %p42
    %p44 = scmp.ne.s32.totalorder %s33, %s34
    %p45 = scmp.eq.s32.totalorder %s25, 0
    %p46 = por %p44, %p45
    %p47 = scmp.ne.s32.totalorder %s33, %s34
    %p48 = scmp.eq.s32.totalorder %s26, 1
    %p49 = por %p47, %p48
    %p51 = scmp.ne.s32.totalorder %s34, %s50
    %p52 = scmp.eq.s32.totalorder %s26, 0
    %p53 = por %p51, %p52
    %s55 = sadd.s32 %s54, 1
    %p58 = scmp.eq.s32.totalorder %s20, 1
    %p59 = scmp.ne.s32.totalorder %s54, %s56
    %p60 = scmp.eq.s32.totalorder %s20, 0
    %p61 = por %p59, %p60
    %p62 = scmp.ne.s32.totalorder %s54, %s56
    %p63 = scmp.eq.s32.totalorder %s25, 1
    %p64 = por %p62, %p63
    %p65 = scmp.ne.s32.totalorder %s56, %s57
    %p66 = scmp.eq.s32.totalorder %s25, 0
    %p67 = por %p65, %p66
    %p68 = scmp.ne.s32.totalorder %s56, %s57
    %p69 = scmp.eq.s32.totalorder %s26, 1
    %p70 = por %p68, %p69
    %p72 = scmp.ne.s32.totalorder %s57, %s71
    %p73 = scmp.eq.s32.totalorder %s26, 0
    %p74 = por %p72, %p73
    %s76 = sadd.s32 %s75, 1
    %p79 = scmp.eq.s32.totalorder %s20, 1
    %p80 = scmp.ne.s32.totalorder %s75, %s77
    %p81 = scmp.eq.s32.totalorder %s20, 0
    %p82 = por %p80, %p81
    %p83 = scmp.ne.s32.totalorder %s75, %s77
    %p84 = scmp.eq.s32.totalorder %s25, 1
    %p85 = por %p83, %p84
    %p86 = scmp.ne.s32.totalorder %s77, %s78
    %p87 = scmp.eq.s32.totalorder %s25, 0
    %p88 = por %p86, %p87
    %p89 = scmp.ne.s32.totalorder %s77, %s78
    %p90 = scmp.eq.s32.totalorder %s26, 1
    %p91 = por %p89, %p90
    %p93 = scmp.ne.s32.totalorder %s78, %s92
    %p94 = scmp.eq.s32.totalorder %s26, 0
    %p95 = por %p93, %p94
    %s97 = sadd.s32 %s96, 1
    %p100 = scmp.eq.s32.totalorder %s20, 1
    %p101 = scmp.ne.s32.totalorder %s96, %s98
    %p102 = scmp.eq.s32.totalorder %s20, 0
    %p103 = por %p101, %p102
    %p104 = scmp.ne.s32.totalorder %s96, %s98
    %p105 = scmp.eq.s32.totalorder %s25, 1
    %p106 = por %p104, %p105
    %p107 = scmp.ne.s32.totalorder %s98, %s99
    %p108 = scmp.eq.s32.totalorder %s25, 0
    %p109 = por %p107, %p108
    %p110 = scmp.ne.s32.totalorder %s98, %s99
    %p111 = scmp.eq.s32.totalorder %s26, 1
    %p112 = por %p110, %p111
    %p114 = scmp.ne.s32.totalorder %s99, %s113
    %p115 = scmp.eq.s32.totalorder %s26, 0
    %p116 = por %p114, %p115
    %s118 = sadd.s32 %s117, 1
    %p121 = scmp.eq.s32.totalorder %s20, 1
    %p122 = scmp.ne.s32.totalorder %s117, %s119
    %p123 = scmp.eq.s32.totalorder %s20, 0
    %p124 = por %p122, %p123
    %p125 = scmp.ne.s32.totalorder %s117, %s119
    %p126 = scmp.eq.s32.totalorder %s25, 1
    %p127 = por %p125, %p126
    %p128 = scmp.ne.s32.totalorder %s119, %s120
    %p129 = scmp.eq.s32.totalorder %s25, 0
    %p130 = por %p128, %p129
    %p131 = scmp.ne.s32.totalorder %s119, %s120
    %p132 = scmp.eq.s32.totalorder %s26, 1
    %p133 = por %p131, %p132
    %p135 = scmp.ne.s32.totalorder %s120, %s134
    %p136 = scmp.eq.s32.totalorder %s26, 0
    %p137 = por %p135, %p136
    %s139 = sadd.s32 %s138, 1
    %p142 = scmp.eq.s32.totalorder %s20, 1
    %p143 = scmp.ne.s32.totalorder %s138, %s140
    %p144 = scmp.eq.s32.totalorder %s20, 0
    %p145 = por %p143, %p144
    %p146 = scmp.ne.s32.totalorder %s138, %s140
    %p147 = scmp.eq.s32.totalorder %s25, 1
    %p148 = por %p146, %p147
    %p149 = scmp.ne.s32.totalorder %s140, %s141
    %p150 = scmp.eq.s32.totalorder %s25, 0
    %p151 = por %p149, %p150
    %p152 = scmp.ne.s32.totalorder %s140, %s141
    %p153 = scmp.eq.s32.totalorder %s26, 1
    %p154 = por %p152, %p153
    %p156 = scmp.ne.s32.totalorder %s141, %s155
    %p157 = scmp.eq.s32.totalorder %s26, 0
    %p158 = por %p156, %p157
    %s160 = sadd.s32 %s159, 1
    %p163 = scmp.eq.s32.totalorder %s20, 1
    %p164 = scmp.ne.s32.totalorder %s159, %s161
    %p165 = scmp.eq.s32.totalorder %s20, 0
    %p166 = por %p164, %p165
    %p167 = scmp.ne.s32.totalorder %s159, %s161
    %p168 = scmp.eq.s32.totalorder %s25, 1
    %p169 = por %p167, %p168
    %p170 = scmp.ne.s32.totalorder %s161, %s162
    %p171 = scmp.eq.s32.totalorder %s25, 0
    %p172 = por %p170, %p171
    %p173 = scmp.ne.s32.totalorder %s161, %s162
    %p174 = scmp.eq.s32.totalorder %s26, 1
    %p175 = por %p173, %p174
    %p177 = scmp.ne.s32.totalorder %s162, %s176
    %p178 = scmp.eq.s32.totalorder %s26, 0
    %p179 = por %p177, %p178
    %s181 = sadd.s32 %s180, 1
    %p184 = scmp.eq.s32.totalorder %s20, 1
    %p185 = scmp.ne.s32.totalorder %s180, %s182
    %p186 = scmp.eq.s32.totalorder %s20, 0
    %p187 = por %p185, %p186
    %p188 = scmp.ne.s32.totalorder %s180, %s182
    %p189 = scmp.eq.s32.totalorder %s25, 1
    %p190 = por %p188, %p189
    %p191 = scmp.ne.s32.totalorder %s182, %s183
    %p192 = scmp.eq.s32.totalorder %s25, 0
    %p193 = por %p191, %p192
    %p194 = scmp.ne.s32.totalorder %s182, %s183
    %p195 = scmp.eq.s32.totalorder %s26, 1
    %p196 = por %p194, %p195
    %p198 = scmp.ne.s32.totalorder %s183, %s197
    %p199 = scmp.eq.s32.totalorder %s26, 0
    %p200 = por %p198, %p199
    %s202 = sadd.s32 %s201, 1
    %p205 = scmp.eq.s32.totalorder %s20, 1
    %p206 = scmp.ne.s32.totalorder %s201, %s203
    %p207 = scmp.eq.s32.totalorder %s20, 0
    %p208 = por %p206, %p207
    %p209 = scmp.ne.s32.totalorder %s201, %s203
    %p210 = scmp.eq.s32.totalorder %s25, 1
    %p211 = por %p209, %p210
    %p212 = scmp.ne.s32.totalorder %s203, %s204
    %p213 = scmp.eq.s32.totalorder %s25, 0
    %p214 = por %p212, %p213
    %p215 = scmp.ne.s32.totalorder %s203, %s204
    %p216 = scmp.eq.s32.totalorder %s26, 1
    %p217 = por %p215, %p216
    %p219 = scmp.ne.s32.totalorder %s204, %s218
    %p220 = scmp.eq.s32.totalorder %s26, 0
    %p221 = por %p219, %p220
    %s223 = sadd.s32 %s222, 1
    %p226 = scmp.eq.s32.totalorder %s20, 1
    %p227 = scmp.ne.s32.totalorder %s222, %s224
    %p228 = scmp.eq.s32.totalorder %s20, 0
    %p229 = por %p227, %p228
    %p230 = scmp.ne.s32.totalorder %s222, %s224
    %p231 = scmp.eq.s32.totalorder %s25, 1
    %p232 = por %p230, %p231
    %p233 = scmp.ne.s32.totalorder %s224, %s225
    %p234 = scmp.eq.s32.totalorder %s25, 0
    %p235 = por %p233, %p234
    %p236 = scmp.ne.s32.totalorder %s224, %s225
    %p237 = scmp.eq.s32.totalorder %s26, 1
    %p238 = por %p236, %p237
    %p240 = scmp.ne.s32.totalorder %s225, %s239
    %p241 = scmp.eq.s32.totalorder %s26, 0
    %p242 = por %p240, %p241
    %s243 = ssub.s32 %s20, %s27
    %p244 = scmp.eq.s32.totalorder %s243, 0
    %s246 = sadd.s32 %s245, 1
    %s247 = scalar_select %p244, %s245, %s246
    %p250 = pneg %p244
    %p251 = scmp.eq.s32.totalorder %s20, 1
    %p252 = por %p250, %p251
    %p253 = scmp.ne.s32.totalorder %s245, %s248
    %p254 = scmp.eq.s32.totalorder %s20, 0
    %p255 = por %p253, %p254
    %p256 = scmp.ne.s32.totalorder %s245, %s248
    %p257 = scmp.eq.s32.totalorder %s25, 1
    %p258 = por %p256, %p257
    %p259 = scmp.ne.s32.totalorder %s248, %s249
    %p260 = scmp.eq.s32.totalorder %s25, 0
    %p261 = por %p259, %p260
    %p262 = scmp.ne.s32.totalorder %s248, %s249
    %p263 = scmp.eq.s32.totalorder %s26, 1
    %p264 = por %p262, %p263
    %p266 = scmp.ne.s32.totalorder %s249, %s265
    %p267 = scmp.eq.s32.totalorder %s26, 0
    %p268 = por %p266, %p267
    %s269 = ssub.s32 %s20, %s27
    %p270 = scmp.eq.s32.totalorder %s269, 0
    %s272 = sadd.s32 %s271, 1
    %s273 = scalar_select %p270, %s271, %s272
    %p276 = pneg %p270
    %p277 = scmp.eq.s32.totalorder %s20, 1
    %p278 = por %p276, %p277
    %p279 = scmp.ne.s32.totalorder %s271, %s274
    %p280 = scmp.eq.s32.totalorder %s20, 0
    %p281 = por %p279, %p280
    %p282 = scmp.ne.s32.totalorder %s271, %s274
    %p283 = scmp.eq.s32.totalorder %s25, 1
    %p284 = por %p282, %p283
    %p285 = scmp.ne.s32.totalorder %s274, %s275
    %p286 = scmp.eq.s32.totalorder %s25, 0
    %p287 = por %p285, %p286
    %p288 = scmp.ne.s32.totalorder %s274, %s275
    %p289 = scmp.eq.s32.totalorder %s26, 1
    %p290 = por %p288, %p289
    %p292 = scmp.ne.s32.totalorder %s275, %s291
    %p293 = scmp.eq.s32.totalorder %s26, 0
    %p294 = por %p292, %p293
    %p295 = scmp.le.s32.totalorder 1, %s20
    %p296 = scmp.lt.s32.totalorder %s20, 3
    %p297 = pnand %p295, %p296
    %p298 = pneg %p297
    // Predicated region
    $region9: #{discriminator_forward.1} parent=5 // pred_check
      _
    $region10: #{discriminator_forward.1} parent=5 // pred_check_branch
      %300 = sbr.rel (%p297) target = $region12
    $region11: #{discriminator_forward.1} parent=5 // pred_region
      %s301 = ssub.s32 %s20, 1
      // Predicated region
      $region13: #{discriminator_forward.1} parent=11 // pred_check
        %p302 = pneg %p67
      $region14: #{discriminator_forward.1} parent=11 // pred_check_branch
        %304 = sbr.rel (%p302) target = $region16
      $region15: #{discriminator_forward.1} parent=11 // pred_region
        _
      $region16: #{discriminator_forward.1} parent=11 // pred_fallthru
        _
      // Predicated region
      $region17: #{discriminator_forward.1} parent=11 // pred_check
        %p305 = pneg %p88
      $region18: #{discriminator_forward.1} parent=11 // pred_check_branch
        %307 = sbr.rel (%p305) target = $region20
      $region19: #{discriminator_forward.1} parent=11 // pred_region
        _
      $region20: #{discriminator_forward.1} parent=11 // pred_fallthru
        _
      // Predicated region
      $region21: #{discriminator_forward.1} parent=11 // pred_check
        %p308 = pneg %p109
      $region22: #{discriminator_forward.1} parent=11 // pred_check_branch
        %310 = sbr.rel (%p308) target = $region24
      $region23: #{discriminator_forward.1} parent=11 // pred_region
        _
      $region24: #{discriminator_forward.1} parent=11 // pred_fallthru
        _
      // Predicated region
      $region25: #{discriminator_forward.1} parent=11 // pred_check
        %p311 = pneg %p130
      $region26: #{discriminator_forward.1} parent=11 // pred_check_branch
        %313 = sbr.rel (%p311) target = $region28
      $region27: #{discriminator_forward.1} parent=11 // pred_region
        _
      $region28: #{discriminator_forward.1} parent=11 // pred_fallthru
        _
      // Predicated region
      $region29: #{discriminator_forward.1} parent=11 // pred_check
        %p314 = pneg %p151
      $region30: #{discriminator_forward.1} parent=11 // pred_check_branch
        %316 = sbr.rel (%p314) target = $region32
      $region31: #{discriminator_forward.1} parent=11 // pred_region
        _
      $region32: #{discriminator_forward.1} parent=11 // pred_fallthru
        _
      // Predicated region
      $region33: #{discriminator_forward.1} parent=11 // pred_check
        %p317 = pneg %p172
      $region34: #{discriminator_forward.1} parent=11 // pred_check_branch
        %319 = sbr.rel (%p317) target = $region36
      $region35: #{discriminator_forward.1} parent=11 // pred_region
        _
      $region36: #{discriminator_forward.1} parent=11 // pred_fallthru
        _
      // Predicated region
      $region37: #{discriminator_forward.1} parent=11 // pred_check
        %p320 = pneg %p193
      $region38: #{discriminator_forward.1} parent=11 // pred_check_branch
        %322 = sbr.rel (%p320) target = $region40
      $region39: #{discriminator_forward.1} parent=11 // pred_region
        _
      $region40: #{discriminator_forward.1} parent=11 // pred_fallthru
        _
      // Predicated region
      $region41: #{discriminator_forward.1} parent=11 // pred_check
        %p323 = pneg %p214
      $region42: #{discriminator_forward.1} parent=11 // pred_check_branch
        %325 = sbr.rel (%p323) target = $region44
      $region43: #{discriminator_forward.1} parent=11 // pred_region
        _
      $region44: #{discriminator_forward.1} parent=11 // pred_fallthru
        _
      // Predicated region
      $region45: #{discriminator_forward.1} parent=11 // pred_check
        %p326 = pneg %p235
      $region46: #{discriminator_forward.1} parent=11 // pred_check_branch
        %328 = sbr.rel (%p326) target = $region48
      $region47: #{discriminator_forward.1} parent=11 // pred_region
        _
      $region48: #{discriminator_forward.1} parent=11 // pred_fallthru
        _
    $region12: #{discriminator_forward.1} parent=5 // pred_fallthru
      _
    %p329 = scmp.lt.s32.totalorder %s20, 2
    // Predicated region
    $region49: #{discriminator_forward.1} parent=5 // pred_check
      %p330 = pneg %p329
    $region50: #{discriminator_forward.1} parent=5 // pred_check_branch
      %332 = sbr.rel (%p330) target = $region52
    $region51: #{discriminator_forward.1} parent=5 // pred_region
      // Predicated region
      $region53: #{discriminator_forward.1} parent=51 // pred_check
        %p333 = pneg %p40
      $region54: #{discriminator_forward.1} parent=51 // pred_check_branch
        %335 = sbr.rel (%p333) target = $region56
      $region55: #{discriminator_forward.1} parent=51 // pred_region
        %p336 = scmp.lt.s32.totalorder %s20, 1
        %s337 = scalar_select %p336, %s20, 1
        %s338 = smul.addr %s337, 8
        %s339 = smul.addr %s338, 4
        %s340 = scalar_lea.vmem %s0, %s339
      $region56: #{discriminator_forward.1} parent=51 // pred_fallthru
        _
    $region52: #{discriminator_forward.1} parent=5 // pred_fallthru
      _
    %p341 = scmp.le.s32.totalorder 1, %s20
    %p342 = scmp.lt.s32.totalorder %s20, 3
    %p343 = pnand %p341, %p342
    %p344 = pneg %p343
    // Predicated region
    $region57: #{discriminator_forward.1} parent=5 // pred_check
      _
    $region58: #{discriminator_forward.1} parent=5 // pred_check_branch
      %346 = sbr.rel (%p343) target = $region60
    $region59: #{discriminator_forward.1} parent=5 // pred_region
      %s347 = ssub.s32 %s20, 1
      %p348 = scmp.lt.s32.totalorder %s25, 1
      %s349 = scalar_select %p348, %s25, 1
      %s350 = smul.addr %s349, 8
      %s351 = smul.addr %s350, 4
      %s352 = scalar_lea.vmem %s0, %s351
      %p353 = pneg %p46
      %p354 = pneg %p43
      %p355 = pneg %p67
      %p356 = pneg %p64
      %p357 = pneg %p88
      %p358 = pneg %p85
      %p359 = pneg %p109
      %p360 = pneg %p106
      %p361 = pneg %p130
      %p362 = pneg %p127
      %p363 = pneg %p151
      %p364 = pneg %p148
      %p365 = pneg %p172
      %p366 = pneg %p169
      %p367 = pneg %p193
      %p368 = pneg %p190
      %p369 = pneg %p214
      %p370 = pneg %p211
      %p371 = pneg %p235
      %p372 = pneg %p232
      %p373 = pneg %p261
      %p374 = pneg %p258
      %p375 = scmp.lt.s32.totalorder %s25, 1
      %s376 = scalar_select %p375, %s25, 1
      %s377 = scalar_lea.vmem %s10, %s376
      %p378 = pneg %p287
      %p379 = pneg %p284
      %p380 = scmp.lt.s32.totalorder %s25, 1
      %s381 = scalar_select %p380, %s25, 1
      %s382 = scalar_lea.vmem %s11, %s381
      %p383 = scmp.lt.s32.totalorder %s25, 1
      %s384 = scalar_select %p383, %s25, 1
      %s385 = smul.addr %s384, 8
      %s386 = smul.addr %s385, 4
      %s387 = scalar_lea.vmem %s0, %s386
      %p388 = scmp.lt.s32.totalorder %s25, 1
      %s389 = scalar_select %p388, %s25, 1
      %s390 = scalar_lea.vmem %s10, %s389
      %p391 = scmp.lt.s32.totalorder %s25, 1
      %s392 = scalar_select %p391, %s25, 1
      %s393 = scalar_lea.vmem %s11, %s392
      %v394 = vld [vmem:[%s387] sm:$0x77]
      %s395 = scalar_lea.vmem %s387, 8
      %v396 = vld [vmem:[%s395] sm:$0x77]
      %s397 = scalar_lea.vmem %s387, 16
      %v398 = vld [vmem:[%s397] sm:$0x77]
      %s399 = scalar_lea.vmem %s387, 24
      %v400 = vld [vmem:[%s399] sm:$0x77]
      %v401 = vld [vmem:[%s1] sm:$0xff]
      %v402 = vld [vmem:[%s1 + $0x8] sm:$0xff]
      %v403 = vld [vmem:[%s1 + $0x10] sm:$0xff]
      %v404 = vld [vmem:[%s1 + $0x18] sm:$0xff]
      %v405 = vld [vmem:[%s1 + $0x20] sm:$0xff]
      %v406 = vld [vmem:[%s1 + $0x28] sm:$0xff]
      %v407 = vld [vmem:[%s1 + $0x30] sm:$0xff]
      %v408 = vld [vmem:[%s1 + $0x38] sm:$0xff]
      %v409 = vld [vmem:[%s1 + $0x40] sm:$0xff]
      %v410 = vld [vmem:[%s1 + $0x48] sm:$0xff]
      %v411 = vld [vmem:[%s1 + $0x50] sm:$0xff]
      %v412 = vld [vmem:[%s1 + $0x58] sm:$0xff]
      %v413 = vld [vmem:[%s1 + $0x60] sm:$0xff]
      %v414 = vld [vmem:[%s1 + $0x68] sm:$0xff]
      %v415 = vld [vmem:[%s1 + $0x70] sm:$0xff]
      %v416 = vld [vmem:[%s1 + $0x78] sm:$0xff]
      %v417 = vld [vmem:[%s1 + $0x80] sm:$0xff]
      %v418 = vld [vmem:[%s1 + $0x88] sm:$0xff]
      %v419 = vld [vmem:[%s1 + $0x90] sm:$0xff]
      %v420 = vld [vmem:[%s1 + $0x98] sm:$0xff]
      %v421 = vld [vmem:[%s1 + $0xa0] sm:$0xff]
      %v422 = vld [vmem:[%s1 + $0xa8] sm:$0xff]
      %v423 = vld [vmem:[%s1 + $0xb0] sm:$0xff]
      %v424 = vld [vmem:[%s1 + $0xb8] sm:$0xff]
      %v425 = vld [vmem:[%s1 + $0xc0] sm:$0xff]
      %v426 = vld [vmem:[%s1 + $0xc8] sm:$0xff]
      %v427 = vld [vmem:[%s1 + $0xd0] sm:$0xff]
      %v428 = vld [vmem:[%s1 + $0xd8] sm:$0xff]
      %v429 = vld [vmem:[%s1 + $0xe0] sm:$0xff]
      %v430 = vld [vmem:[%s1 + $0xe8] sm:$0xff]
      %v431 = vld [vmem:[%s1 + $0xf0] sm:$0xff]
      %v432 = vld [vmem:[%s1 + $0xf8] sm:$0xff]
      %v433 = vld [vmem:[%s1 + $0x100] sm:$0xff]
      %v434 = vld [vmem:[%s1 + $0x108] sm:$0xff]
      %v435 = vld [vmem:[%s1 + $0x110] sm:$0xff]
      %v436 = vld [vmem:[%s1 + $0x118] sm:$0xff]
      %v437 = vld [vmem:[%s1 + $0x120] sm:$0xff]
      %v438 = vld [vmem:[%s1 + $0x128] sm:$0xff]
      %v439 = vld [vmem:[%s1 + $0x130] sm:$0xff]
      %v440 = vld [vmem:[%s1 + $0x138] sm:$0xff]
      %v441 = vld [vmem:[%s1 + $0x140] sm:$0xff]
      %v442 = vld [vmem:[%s1 + $0x148] sm:$0xff]
      %v443 = vld [vmem:[%s1 + $0x150] sm:$0xff]
      %v444 = vld [vmem:[%s1 + $0x158] sm:$0xff]
      %v445 = vld [vmem:[%s1 + $0x160] sm:$0xff]
      %v446 = vld [vmem:[%s1 + $0x168] sm:$0xff]
      %v447 = vld [vmem:[%s1 + $0x170] sm:$0xff]
      %v448 = vld [vmem:[%s1 + $0x178] sm:$0xff]
      %v449 = vld [vmem:[%s1 + $0x180] sm:$0xff]
      %v450 = vld [vmem:[%s1 + $0x188] sm:$0xff]
      %v451 = vld [vmem:[%s1 + $0x190] sm:$0xff]
      %v452 = vld [vmem:[%s1 + $0x198] sm:$0xff]
      %v453 = vld [vmem:[%s1 + $0x1a0] sm:$0xff]
      %v454 = vld [vmem:[%s1 + $0x1a8] sm:$0xff]
      %v455 = vld [vmem:[%s1 + $0x1b0] sm:$0xff]
      %v456 = vld [vmem:[%s1 + $0x1b8] sm:$0xff]
      %v457 = vld [vmem:[%s1 + $0x1c0] sm:$0xff]
      %v458 = vld [vmem:[%s1 + $0x1c8] sm:$0xff]
      %v459 = vld [vmem:[%s1 + $0x1d0] sm:$0xff]
      %v460 = vld [vmem:[%s1 + $0x1d8] sm:$0xff]
      %v461 = vld [vmem:[%s1 + $0x1e0] sm:$0xff]
      %v462 = vld [vmem:[%s1 + $0x1e8] sm:$0xff]
      %v463 = vld [vmem:[%s1 + $0x1f0] sm:$0xff]
      %v464 = vld [vmem:[%s1 + $0x1f8] sm:$0xff]
      %v466 = vcombine.high %v394, %v394
      %468 = vmatprep.subr.mxu0 %v432
      %469 = vmatpush1.msra.mxu0 %v431
      %470 = vmatprep.subr.mxu0 %v430
      %471 = vmatpush1.msra.mxu0 %v429
      %472 = vmatprep.subr.mxu0 %v428
      %473 = vmatpush1.msra.mxu0 %v427
      %474 = vmatprep.subr.mxu0 %v426
      %475 = vmatpush1.msra.mxu0 %v425
      %476 = vmatprep.subr.mxu0 %v424
      %477 = vmatpush1.msra.mxu0 %v423
      %478 = vmatprep.subr.mxu0 %v422
      %479 = vmatpush1.msra.mxu0 %v421
      %480 = vmatprep.subr.mxu0 %v420
      %481 = vmatpush1.msra.mxu0 %v419
      %482 = vmatprep.subr.mxu0 %v418
      %483 = vmatpush1.msra.mxu0 %v417
      %484 = vmatprep.subr.mxu0 %v416
      %485 = vmatpush1.msra.mxu0 %v415
      %486 = vmatprep.subr.mxu0 %v414
      %487 = vmatpush1.msra.mxu0 %v413
      %488 = vmatprep.subr.mxu0 %v412
      %489 = vmatpush1.msra.mxu0 %v411
      %490 = vmatprep.subr.mxu0 %v410
      %491 = vmatpush1.msra.mxu0 %v409
      %492 = vmatprep.subr.mxu0 %v408
      %493 = vmatpush1.msra.mxu0 %v407
      %494 = vmatprep.subr.mxu0 %v406
      %495 = vmatpush1.msra.mxu0 %v405
      %496 = vmatprep.subr.mxu0 %v404
      %497 = vmatpush1.msra.mxu0 %v403
      %498 = vmatprep.subr.mxu0 %v402
      %499 = vmatpush1.msra.mxu0 %v401
      %500 = vmatprep.subr.mxu0 %v464
      %501 = vmatpush2.msra.mxu0 %v463
      %502 = vmatprep.subr.mxu0 %v462
      %503 = vmatpush2.msra.mxu0 %v461
      %504 = vmatprep.subr.mxu0 %v460
      %505 = vmatpush2.msra.mxu0 %v459
      %506 = vmatprep.subr.mxu0 %v458
      %507 = vmatpush2.msra.mxu0 %v457
      %508 = vmatprep.subr.mxu0 %v456
      %509 = vmatpush2.msra.mxu0 %v455
      %510 = vmatprep.subr.mxu0 %v454
      %511 = vmatpush2.msra.mxu0 %v453
      %512 = vmatprep.subr.mxu0 %v452
      %513 = vmatpush2.msra.mxu0 %v451
      %514 = vmatprep.subr.mxu0 %v450
      %515 = vmatpush2.msra.mxu0 %v449
      %516 = vmatprep.subr.mxu0 %v448
      %517 = vmatpush2.msra.mxu0 %v447
      %518 = vmatprep.subr.mxu0 %v446
      %519 = vmatpush2.msra.mxu0 %v445
      %520 = vmatprep.subr.mxu0 %v444
      %521 = vmatpush2.msra.mxu0 %v443
      %522 = vmatprep.subr.mxu0 %v442
      %523 = vmatpush2.msra.mxu0 %v441
      %524 = vmatprep.subr.mxu0 %v440
      %525 = vmatpush2.msra.mxu0 %v439
      %526 = vmatprep.subr.mxu0 %v438
      %527 = vmatpush2.msra.mxu0 %v437
      %528 = vmatprep.subr.mxu0 %v436
      %529 = vmatpush2.msra.mxu0 %v435
      %530 = vmatprep.subr.mxu0 %v434
      %531 = vmatpush2.msra.mxu0 %v433
      %532 = vmatprep.mubr.f32.mxu0 %v466
      %533 = vmatmul.mubr.f32.gmra.mxu0 %v394
      %v534 = vpop.f32.mrf.mxu0
      %v535 = vadd.f32 0.0, %v534
      %v536 = vpop.f32.mrf.mxu0
      %v537 = vadd.f32 0.0, %v536
      %538 = vdwg.mxu0
      %v539 = vld [vmem:[%s4] sm:$0xff]
      %v541 = vcombine.high %v396, %v396
      %543 = vmatprep.subr.mxu0 %v432
      %544 = vmatpush1.msra.mxu0 %v431
      %545 = vmatprep.subr.mxu0 %v430
      %546 = vmatpush1.msra.mxu0 %v429
      %547 = vmatprep.subr.mxu0 %v428
      %548 = vmatpush1.msra.mxu0 %v427
      %549 = vmatprep.subr.mxu0 %v426
      %550 = vmatpush1.msra.mxu0 %v425
      %551 = vmatprep.subr.mxu0 %v424
      %552 = vmatpush1.msra.mxu0 %v423
      %553 = vmatprep.subr.mxu0 %v422
      %554 = vmatpush1.msra.mxu0 %v421
      %555 = vmatprep.subr.mxu0 %v420
      %556 = vmatpush1.msra.mxu0 %v419
      %557 = vmatprep.subr.mxu0 %v418
      %558 = vmatpush1.msra.mxu0 %v417
      %559 = vmatprep.subr.mxu0 %v416
      %560 = vmatpush1.msra.mxu0 %v415
      %561 = vmatprep.subr.mxu0 %v414
      %562 = vmatpush1.msra.mxu0 %v413
      %563 = vmatprep.subr.mxu0 %v412
      %564 = vmatpush1.msra.mxu0 %v411
      %565 = vmatprep.subr.mxu0 %v410
      %566 = vmatpush1.msra.mxu0 %v409
      %567 = vmatprep.subr.mxu0 %v408
      %568 = vmatpush1.msra.mxu0 %v407
      %569 = vmatprep.subr.mxu0 %v406
      %570 = vmatpush1.msra.mxu0 %v405
      %571 = vmatprep.subr.mxu0 %v404
      %572 = vmatpush1.msra.mxu0 %v403
      %573 = vmatprep.subr.mxu0 %v402
      %574 = vmatpush1.msra.mxu0 %v401
      %575 = vmatprep.subr.mxu0 %v464
      %576 = vmatpush2.msra.mxu0 %v463
      %577 = vmatprep.subr.mxu0 %v462
      %578 = vmatpush2.msra.mxu0 %v461
      %579 = vmatprep.subr.mxu0 %v460
      %580 = vmatpush2.msra.mxu0 %v459
      %581 = vmatprep.subr.mxu0 %v458
      %582 = vmatpush2.msra.mxu0 %v457
      %583 = vmatprep.subr.mxu0 %v456
      %584 = vmatpush2.msra.mxu0 %v455
      %585 = vmatprep.subr.mxu0 %v454
      %586 = vmatpush2.msra.mxu0 %v453
      %587 = vmatprep.subr.mxu0 %v452
      %588 = vmatpush2.msra.mxu0 %v451
      %589 = vmatprep.subr.mxu0 %v450
      %590 = vmatpush2.msra.mxu0 %v449
      %591 = vmatprep.subr.mxu0 %v448
      %592 = vmatpush2.msra.mxu0 %v447
      %593 = vmatprep.subr.mxu0 %v446
      %594 = vmatpush2.msra.mxu0 %v445
      %595 = vmatprep.subr.mxu0 %v444
      %596 = vmatpush2.msra.mxu0 %v443
      %597 = vmatprep.subr.mxu0 %v442
      %598 = vmatpush2.msra.mxu0 %v441
      %599 = vmatprep.subr.mxu0 %v440
      %600 = vmatpush2.msra.mxu0 %v439
      %601 = vmatprep.subr.mxu0 %v438
      %602 = vmatpush2.msra.mxu0 %v437
      %603 = vmatprep.subr.mxu0 %v436
      %604 = vmatpush2.msra.mxu0 %v435
      %605 = vmatprep.subr.mxu0 %v434
      %606 = vmatpush2.msra.mxu0 %v433
      %607 = vmatprep.mubr.f32.mxu0 %v541
      %608 = vmatmul.mubr.f32.gmra.mxu0 %v396
      %v609 = vpop.f32.mrf.mxu0
      %v610 = vadd.f32 0.0, %v609
      %v611 = vpop.f32.mrf.mxu0
      %v612 = vadd.f32 0.0, %v611
      %613 = vdwg.mxu0
      %s614 = scalar_lea.vmem %s4, 8
      %v615 = vld [vmem:[%s614] sm:$0xff]
      %vm616 = vcmask 23552
      %v618 = vsel %vm616, %v615, 0
      %vm620 = vcmask 1042432
      %v622 = vsel %vm620, %v610, 0
      %v625 = vsel %vm620, %v612, 0
      %627 = vmatprep.subr.mxu0 0.0
      %628 = vmatpush1.msra.mxu0 0.0
      %629 = vmatprep.subr.mxu0 0.0
      %630 = vmatpush1.msra.mxu0 0.0
      %631 = vmatprep.subr.mxu0 0.0
      %632 = vmatpush1.msra.mxu0 0.0
      %633 = vmatprep.subr.mxu0 0.0
      %634 = vmatpush1.msra.mxu0 0.0
      %635 = vmatprep.subr.mxu0 0.0
      %636 = vmatpush1.msra.mxu0 0.0
      %637 = vmatprep.subr.mxu0 0.0
      %638 = vmatpush1.msra.mxu0 0.0
      %639 = vmatprep.subr.mxu0 0.0
      %640 = vmatpush1.msra.mxu0 0.0
      %641 = vmatprep.subr.mxu0 0.0
      %642 = vmatpush1.msra.mxu0 0.0
      %643 = vmatprep.subr.mxu0 0.0
      %644 = vmatpush1.msra.mxu0 0.0
      %645 = vmatprep.subr.mxu0 0.0
      %646 = vmatpush1.msra.mxu0 0.0
      %647 = vmatprep.subr.mxu0 0.0
      %648 = vmatpush1.msra.mxu0 0.0
      %649 = vmatprep.subr.mxu0 0.0
      %650 = vmatpush1.msra.mxu0 0.0
      %651 = vmatprep.subr.mxu0 0.0
      %652 = vmatpush1.msra.mxu0 0.0
      %653 = vmatprep.subr.mxu0 0.0
      %654 = vmatpush1.msra.mxu0 0.0
      %655 = vmatprep.subr.mxu0 0.0
      %656 = vmatpush1.msra.mxu0 0.0
      %657 = vmatprep.subr.mxu0 %v625
      %658 = vmatpush1.msra.mxu0 %v622
      %659 = vmatprep.subr.mxu0 0.0
      %660 = vmatpush2.msra.mxu0 0.0
      %661 = vmatprep.subr.mxu0 0.0
      %662 = vmatpush2.msra.mxu0 0.0
      %663 = vmatprep.subr.mxu0 0.0
      %664 = vmatpush2.msra.mxu0 0.0
      %665 = vmatprep.subr.mxu0 0.0
      %666 = vmatpush2.msra.mxu0 0.0
      %667 = vmatprep.subr.mxu0 0.0
      %668 = vmatpush2.msra.mxu0 0.0
      %669 = vmatprep.subr.mxu0 0.0
      %670 = vmatpush2.msra.mxu0 0.0
      %671 = vmatprep.subr.mxu0 0.0
      %672 = vmatpush2.msra.mxu0 0.0
      %673 = vmatprep.subr.mxu0 0.0
      %674 = vmatpush2.msra.mxu0 0.0
      %675 = vmatprep.subr.mxu0 0.0
      %676 = vmatpush2.msra.mxu0 0.0
      %677 = vmatprep.subr.mxu0 0.0
      %678 = vmatpush2.msra.mxu0 0.0
      %679 = vmatprep.subr.mxu0 0.0
      %680 = vmatpush2.msra.mxu0 0.0
      %681 = vmatprep.subr.mxu0 0.0
      %682 = vmatpush2.msra.mxu0 0.0
      %683 = vmatprep.subr.mxu0 0.0
      %684 = vmatpush2.msra.mxu0 0.0
      %685 = vmatprep.subr.mxu0 0.0
      %686 = vmatpush2.msra.mxu0 0.0
      %687 = vmatprep.subr.mxu0 0.0
      %688 = vmatpush2.msra.mxu0 0.0
      %689 = vmatprep.subr.mxu0 0.0
      %690 = vmatpush2.msra.mxu0 0.0
      %691 = vmatprep.mubr.f32.mxu0 0.0
      %692 = vmatmul.mubr.f32.gmra.mxu0 %v618
      %v693 = vpop.f32.mrf.mxu0
      %v694 = vadd.f32 0.0, %v693
      %v695 = vpop.f32.mrf.mxu0
      %v696 = vadd.f32 0.0, %v695
      %697 = vdwg.mxu0
      %v699 = vsel %vm616, %v539, 0
      %v702 = vsel %vm620, %v535, 0
      %v705 = vsel %vm620, %v537, 0
      %707 = vmatprep.subr.mxu0 0.0
      %708 = vmatpush1.msra.mxu0 0.0
      %709 = vmatprep.subr.mxu0 0.0
      %710 = vmatpush1.msra.mxu0 0.0
      %711 = vmatprep.subr.mxu0 0.0
      %712 = vmatpush1.msra.mxu0 0.0
      %713 = vmatprep.subr.mxu0 0.0
      %714 = vmatpush1.msra.mxu0 0.0
      %715 = vmatprep.subr.mxu0 0.0
      %716 = vmatpush1.msra.mxu0 0.0
      %717 = vmatprep.subr.mxu0 0.0
      %718 = vmatpush1.msra.mxu0 0.0
      %719 = vmatprep.subr.mxu0 0.0
      %720 = vmatpush1.msra.mxu0 0.0
      %721 = vmatprep.subr.mxu0 0.0
      %722 = vmatpush1.msra.mxu0 0.0
      %723 = vmatprep.subr.mxu0 0.0
      %724 = vmatpush1.msra.mxu0 0.0
      %725 = vmatprep.subr.mxu0 0.0
      %726 = vmatpush1.msra.mxu0 0.0
      %727 = vmatprep.subr.mxu0 0.0
      %728 = vmatpush1.msra.mxu0 0.0
      %729 = vmatprep.subr.mxu0 0.0
      %730 = vmatpush1.msra.mxu0 0.0
      %731 = vmatprep.subr.mxu0 0.0
      %732 = vmatpush1.msra.mxu0 0.0
      %733 = vmatprep.subr.mxu0 0.0
      %734 = vmatpush1.msra.mxu0 0.0
      %735 = vmatprep.subr.mxu0 0.0
      %736 = vmatpush1.msra.mxu0 0.0
      %737 = vmatprep.subr.mxu0 %v705
      %738 = vmatpush1.msra.mxu0 %v702
      %739 = vmatprep.subr.mxu0 0.0
      %740 = vmatpush2.msra.mxu0 0.0
      %741 = vmatprep.subr.mxu0 0.0
      %742 = vmatpush2.msra.mxu0 0.0
      %743 = vmatprep.subr.mxu0 0.0
      %744 = vmatpush2.msra.mxu0 0.0
      %745 = vmatprep.subr.mxu0 0.0
      %746 = vmatpush2.msra.mxu0 0.0
      %747 = vmatprep.subr.mxu0 0.0
      %748 = vmatpush2.msra.mxu0 0.0
      %749 = vmatprep.subr.mxu0 0.0
      %750 = vmatpush2.msra.mxu0 0.0
      %751 = vmatprep.subr.mxu0 0.0
      %752 = vmatpush2.msra.mxu0 0.0
      %753 = vmatprep.subr.mxu0 0.0
      %754 = vmatpush2.msra.mxu0 0.0
      %755 = vmatprep.subr.mxu0 0.0
      %756 = vmatpush2.msra.mxu0 0.0
      %757 = vmatprep.subr.mxu0 0.0
      %758 = vmatpush2.msra.mxu0 0.0
      %759 = vmatprep.subr.mxu0 0.0
      %760 = vmatpush2.msra.mxu0 0.0
      %761 = vmatprep.subr.mxu0 0.0
      %762 = vmatpush2.msra.mxu0 0.0
      %763 = vmatprep.subr.mxu0 0.0
      %764 = vmatpush2.msra.mxu0 0.0
      %765 = vmatprep.subr.mxu0 0.0
      %766 = vmatpush2.msra.mxu0 0.0
      %767 = vmatprep.subr.mxu0 0.0
      %768 = vmatpush2.msra.mxu0 0.0
      %769 = vmatprep.subr.mxu0 0.0
      %770 = vmatpush2.msra.mxu0 0.0
      %771 = vmatprep.mubr.f32.mxu0 0.0
      %772 = vmatmul.mubr.f32.gmra.mxu0 %v699
      %v773 = vpop.f32.mrf.mxu0
      %v774 = vadd.f32 %v694, %v773
      %v775 = vpop.f32.mrf.mxu0
      %v776 = vadd.f32 %v696, %v775
      %777 = vdwg.mxu0
      %s778 = scalar_lea.vmem %s1, 512
      %v779 = vld [vmem:[%s778] sm:$0xff]
      %v780 = vld [vmem:[%s778 + $0x8] sm:$0xff]
      %v781 = vld [vmem:[%s778 + $0x10] sm:$0xff]
      %v782 = vld [vmem:[%s778 + $0x18] sm:$0xff]
      %v783 = vld [vmem:[%s778 + $0x20] sm:$0xff]
      %v784 = vld [vmem:[%s778 + $0x28] sm:$0xff]
      %v785 = vld [vmem:[%s778 + $0x30] sm:$0xff]
      %v786 = vld [vmem:[%s778 + $0x38] sm:$0xff]
      %v787 = vld [vmem:[%s778 + $0x40] sm:$0xff]
      %v788 = vld [vmem:[%s778 + $0x48] sm:$0xff]
      %v789 = vld [vmem:[%s778 + $0x50] sm:$0xff]
      %v790 = vld [vmem:[%s778 + $0x58] sm:$0xff]
      %v791 = vld [vmem:[%s778 + $0x60] sm:$0xff]
      %v792 = vld [vmem:[%s778 + $0x68] sm:$0xff]
      %v793 = vld [vmem:[%s778 + $0x70] sm:$0xff]
      %v794 = vld [vmem:[%s778 + $0x78] sm:$0xff]
      %v795 = vld [vmem:[%s778 + $0x80] sm:$0xff]
      %v796 = vld [vmem:[%s778 + $0x88] sm:$0xff]
      %v797 = vld [vmem:[%s778 + $0x90] sm:$0xff]
      %v798 = vld [vmem:[%s778 + $0x98] sm:$0xff]
      %v799 = vld [vmem:[%s778 + $0xa0] sm:$0xff]
      %v800 = vld [vmem:[%s778 + $0xa8] sm:$0xff]
      %v801 = vld [vmem:[%s778 + $0xb0] sm:$0xff]
      %v802 = vld [vmem:[%s778 + $0xb8] sm:$0xff]
      %v803 = vld [vmem:[%s778 + $0xc0] sm:$0xff]
      %v804 = vld [vmem:[%s778 + $0xc8] sm:$0xff]
      %v805 = vld [vmem:[%s778 + $0xd0] sm:$0xff]
      %v806 = vld [vmem:[%s778 + $0xd8] sm:$0xff]
      %v807 = vld [vmem:[%s778 + $0xe0] sm:$0xff]
      %v808 = vld [vmem:[%s778 + $0xe8] sm:$0xff]
      %v809 = vld [vmem:[%s778 + $0xf0] sm:$0xff]
      %v810 = vld [vmem:[%s778 + $0xf8] sm:$0xff]
      %v811 = vld [vmem:[%s778 + $0x100] sm:$0xff]
      %v812 = vld [vmem:[%s778 + $0x108] sm:$0xff]
      %v813 = vld [vmem:[%s778 + $0x110] sm:$0xff]
      %v814 = vld [vmem:[%s778 + $0x118] sm:$0xff]
      %v815 = vld [vmem:[%s778 + $0x120] sm:$0xff]
      %v816 = vld [vmem:[%s778 + $0x128] sm:$0xff]
      %v817 = vld [vmem:[%s778 + $0x130] sm:$0xff]
      %v818 = vld [vmem:[%s778 + $0x138] sm:$0xff]
      %v819 = vld [vmem:[%s778 + $0x140] sm:$0xff]
      %v820 = vld [vmem:[%s778 + $0x148] sm:$0xff]
      %v821 = vld [vmem:[%s778 + $0x150] sm:$0xff]
      %v822 = vld [vmem:[%s778 + $0x158] sm:$0xff]
      %v823 = vld [vmem:[%s778 + $0x160] sm:$0xff]
      %v824 = vld [vmem:[%s778 + $0x168] sm:$0xff]
      %v825 = vld [vmem:[%s778 + $0x170] sm:$0xff]
      %v826 = vld [vmem:[%s778 + $0x178] sm:$0xff]
      %v827 = vld [vmem:[%s778 + $0x180] sm:$0xff]
      %v828 = vld [vmem:[%s778 + $0x188] sm:$0xff]
      %v829 = vld [vmem:[%s778 + $0x190] sm:$0xff]
      %v830 = vld [vmem:[%s778 + $0x198] sm:$0xff]
      %v831 = vld [vmem:[%s778 + $0x1a0] sm:$0xff]
      %v832 = vld [vmem:[%s778 + $0x1a8] sm:$0xff]
      %v833 = vld [vmem:[%s778 + $0x1b0] sm:$0xff]
      %v834 = vld [vmem:[%s778 + $0x1b8] sm:$0xff]
      %v835 = vld [vmem:[%s778 + $0x1c0] sm:$0xff]
      %v836 = vld [vmem:[%s778 + $0x1c8] sm:$0xff]
      %v837 = vld [vmem:[%s778 + $0x1d0] sm:$0xff]
      %v838 = vld [vmem:[%s778 + $0x1d8] sm:$0xff]
      %v839 = vld [vmem:[%s778 + $0x1e0] sm:$0xff]
      %v840 = vld [vmem:[%s778 + $0x1e8] sm:$0xff]
      %v841 = vld [vmem:[%s778 + $0x1f0] sm:$0xff]
      %v842 = vld [vmem:[%s778 + $0x1f8] sm:$0xff]
      %843 = vmatprep.subr.mxu0 %v810
      %844 = vmatpush1.msra.mxu0 %v809
      %845 = vmatprep.subr.mxu0 %v808
      %846 = vmatpush1.msra.mxu0 %v807
      %847 = vmatprep.subr.mxu0 %v806
      %848 = vmatpush1.msra.mxu0 %v805
      %849 = vmatprep.subr.mxu0 %v804
      %850 = vmatpush1.msra.mxu0 %v803
      %851 = vmatprep.subr.mxu0 %v802
      %852 = vmatpush1.msra.mxu0 %v801
      %853 = vmatprep.subr.mxu0 %v800
      %854 = vmatpush1.msra.mxu0 %v799
      %855 = vmatprep.subr.mxu0 %v798
      %856 = vmatpush1.msra.mxu0 %v797
      %857 = vmatprep.subr.mxu0 %v796
      %858 = vmatpush1.msra.mxu0 %v795
      %859 = vmatprep.subr.mxu0 %v794
      %860 = vmatpush1.msra.mxu0 %v793
      %861 = vmatprep.subr.mxu0 %v792
      %862 = vmatpush1.msra.mxu0 %v791
      %863 = vmatprep.subr.mxu0 %v790
      %864 = vmatpush1.msra.mxu0 %v789
      %865 = vmatprep.subr.mxu0 %v788
      %866 = vmatpush1.msra.mxu0 %v787
      %867 = vmatprep.subr.mxu0 %v786
      %868 = vmatpush1.msra.mxu0 %v785
      %869 = vmatprep.subr.mxu0 %v784
      %870 = vmatpush1.msra.mxu0 %v783
      %871 = vmatprep.subr.mxu0 %v782
      %872 = vmatpush1.msra.mxu0 %v781
      %873 = vmatprep.subr.mxu0 %v780
      %874 = vmatpush1.msra.mxu0 %v779
      %875 = vmatprep.subr.mxu0 %v842
      %876 = vmatpush2.msra.mxu0 %v841
      %877 = vmatprep.subr.mxu0 %v840
      %878 = vmatpush2.msra.mxu0 %v839
      %879 = vmatprep.subr.mxu0 %v838
      %880 = vmatpush2.msra.mxu0 %v837
      %881 = vmatprep.subr.mxu0 %v836
      %882 = vmatpush2.msra.mxu0 %v835
      %883 = vmatprep.subr.mxu0 %v834
      %884 = vmatpush2.msra.mxu0 %v833
      %885 = vmatprep.subr.mxu0 %v832
      %886 = vmatpush2.msra.mxu0 %v831
      %887 = vmatprep.subr.mxu0 %v830
      %888 = vmatpush2.msra.mxu0 %v829
      %889 = vmatprep.subr.mxu0 %v828
      %890 = vmatpush2.msra.mxu0 %v827
      %891 = vmatprep.subr.mxu0 %v826
      %892 = vmatpush2.msra.mxu0 %v825
      %893 = vmatprep.subr.mxu0 %v824
      %894 = vmatpush2.msra.mxu0 %v823
      %895 = vmatprep.subr.mxu0 %v822
      %896 = vmatpush2.msra.mxu0 %v821
      %897 = vmatprep.subr.mxu0 %v820
      %898 = vmatpush2.msra.mxu0 %v819
      %899 = vmatprep.subr.mxu0 %v818
      %900 = vmatpush2.msra.mxu0 %v817
      %901 = vmatprep.subr.mxu0 %v816
      %902 = vmatpush2.msra.mxu0 %v815
      %903 = vmatprep.subr.mxu0 %v814
      %904 = vmatpush2.msra.mxu0 %v813
      %905 = vmatprep.subr.mxu0 %v812
      %906 = vmatpush2.msra.mxu0 %v811
      %907 = vmatprep.mubr.f32.mxu0 %v466
      %908 = vmatmul.mubr.f32.gmra.mxu0 %v394
      %v909 = vpop.f32.mrf.mxu0
      %v910 = vadd.f32 0.0, %v909
      %v911 = vpop.f32.mrf.mxu0
      %v912 = vadd.f32 0.0, %v911
      %913 = vdwg.mxu0
      %s914 = scalar_lea.vmem %s4, 16
      %v915 = vld [vmem:[%s914] sm:$0xff]
      %v917 = vsel %vm616, %v915, 0
      %v920 = vsel %vm620, %v910, 0
      %v923 = vsel %vm620, %v912, 0
      %925 = vmatprep.subr.mxu0 0.0
      %926 = vmatpush1.msra.mxu0 0.0
      %927 = vmatprep.subr.mxu0 0.0
      %928 = vmatpush1.msra.mxu0 0.0
      %929 = vmatprep.subr.mxu0 0.0
      %930 = vmatpush1.msra.mxu0 0.0
      %931 = vmatprep.subr.mxu0 0.0
      %932 = vmatpush1.msra.mxu0 0.0
      %933 = vmatprep.subr.mxu0 0.0
      %934 = vmatpush1.msra.mxu0 0.0
      %935 = vmatprep.subr.mxu0 0.0
      %936 = vmatpush1.msra.mxu0 0.0
      %937 = vmatprep.subr.mxu0 0.0
      %938 = vmatpush1.msra.mxu0 0.0
      %939 = vmatprep.subr.mxu0 0.0
      %940 = vmatpush1.msra.mxu0 0.0
      %941 = vmatprep.subr.mxu0 0.0
      %942 = vmatpush1.msra.mxu0 0.0
      %943 = vmatprep.subr.mxu0 0.0
      %944 = vmatpush1.msra.mxu0 0.0
      %945 = vmatprep.subr.mxu0 0.0
      %946 = vmatpush1.msra.mxu0 0.0
      %947 = vmatprep.subr.mxu0 0.0
      %948 = vmatpush1.msra.mxu0 0.0
      %949 = vmatprep.subr.mxu0 0.0
      %950 = vmatpush1.msra.mxu0 0.0
      %951 = vmatprep.subr.mxu0 0.0
      %952 = vmatpush1.msra.mxu0 0.0
      %953 = vmatprep.subr.mxu0 0.0
      %954 = vmatpush1.msra.mxu0 0.0
      %955 = vmatprep.subr.mxu0 %v923
      %956 = vmatpush1.msra.mxu0 %v920
      %957 = vmatprep.subr.mxu0 0.0
      %958 = vmatpush2.msra.mxu0 0.0
      %959 = vmatprep.subr.mxu0 0.0
      %960 = vmatpush2.msra.mxu0 0.0
      %961 = vmatprep.subr.mxu0 0.0
      %962 = vmatpush2.msra.mxu0 0.0
      %963 = vmatprep.subr.mxu0 0.0
      %964 = vmatpush2.msra.mxu0 0.0
      %965 = vmatprep.subr.mxu0 0.0
      %966 = vmatpush2.msra.mxu0 0.0
      %967 = vmatprep.subr.mxu0 0.0
      %968 = vmatpush2.msra.mxu0 0.0
      %969 = vmatprep.subr.mxu0 0.0
      %970 = vmatpush2.msra.mxu0 0.0
      %971 = vmatprep.subr.mxu0 0.0
      %972 = vmatpush2.msra.mxu0 0.0
      %973 = vmatprep.subr.mxu0 0.0
      %974 = vmatpush2.msra.mxu0 0.0
      %975 = vmatprep.subr.mxu0 0.0
      %976 = vmatpush2.msra.mxu0 0.0
      %977 = vmatprep.subr.mxu0 0.0
      %978 = vmatpush2.msra.mxu0 0.0
      %979 = vmatprep.subr.mxu0 0.0
      %980 = vmatpush2.msra.mxu0 0.0
      %981 = vmatprep.subr.mxu0 0.0
      %982 = vmatpush2.msra.mxu0 0.0
      %983 = vmatprep.subr.mxu0 0.0
      %984 = vmatpush2.msra.mxu0 0.0
      %985 = vmatprep.subr.mxu0 0.0
      %986 = vmatpush2.msra.mxu0 0.0
      %987 = vmatprep.subr.mxu0 0.0
      %988 = vmatpush2.msra.mxu0 0.0
      %989 = vmatprep.mubr.f32.mxu0 0.0
      %990 = vmatmul.mubr.f32.gmra.mxu0 %v917
      %v991 = vpop.f32.mrf.mxu0
      %v992 = vadd.f32 0.0, %v991
      %v993 = vpop.f32.mrf.mxu0
      %v994 = vadd.f32 0.0, %v993
      %995 = vdwg.mxu0
      %v996 = vadd.f32 %v774, %v992
      %v997 = vadd.f32 %v776, %v994
      %998 = vmatprep.subr.mxu0 %v810
      %999 = vmatpush1.msra.mxu0 %v809
      %1000 = vmatprep.subr.mxu0 %v808
      %1001 = vmatpush1.msra.mxu0 %v807
      %1002 = vmatprep.subr.mxu0 %v806
      %1003 = vmatpush1.msra.mxu0 %v805
      %1004 = vmatprep.subr.mxu0 %v804
      %1005 = vmatpush1.msra.mxu0 %v803
      %1006 = vmatprep.subr.mxu0 %v802
      %1007 = vmatpush1.msra.mxu0 %v801
      %1008 = vmatprep.subr.mxu0 %v800
      %1009 = vmatpush1.msra.mxu0 %v799
      %1010 = vmatprep.subr.mxu0 %v798
      %1011 = vmatpush1.msra.mxu0 %v797
      %1012 = vmatprep.subr.mxu0 %v796
      %1013 = vmatpush1.msra.mxu0 %v795
      %1014 = vmatprep.subr.mxu0 %v794
      %1015 = vmatpush1.msra.mxu0 %v793
      %1016 = vmatprep.subr.mxu0 %v792
      %1017 = vmatpush1.msra.mxu0 %v791
      %1018 = vmatprep.subr.mxu0 %v790
      %1019 = vmatpush1.msra.mxu0 %v789
      %1020 = vmatprep.subr.mxu0 %v788
      %1021 = vmatpush1.msra.mxu0 %v787
      %1022 = vmatprep.subr.mxu0 %v786
      %1023 = vmatpush1.msra.mxu0 %v785
      %1024 = vmatprep.subr.mxu0 %v784
      %1025 = vmatpush1.msra.mxu0 %v783
      %1026 = vmatprep.subr.mxu0 %v782
      %1027 = vmatpush1.msra.mxu0 %v781
      %1028 = vmatprep.subr.mxu0 %v780
      %1029 = vmatpush1.msra.mxu0 %v779
      %1030 = vmatprep.subr.mxu0 %v842
      %1031 = vmatpush2.msra.mxu0 %v841
      %1032 = vmatprep.subr.mxu0 %v840
      %1033 = vmatpush2.msra.mxu0 %v839
      %1034 = vmatprep.subr.mxu0 %v838
      %1035 = vmatpush2.msra.mxu0 %v837
      %1036 = vmatprep.subr.mxu0 %v836
      %1037 = vmatpush2.msra.mxu0 %v835
      %1038 = vmatprep.subr.mxu0 %v834
      %1039 = vmatpush2.msra.mxu0 %v833
      %1040 = vmatprep.subr.mxu0 %v832
      %1041 = vmatpush2.msra.mxu0 %v831
      %1042 = vmatprep.subr.mxu0 %v830
      %1043 = vmatpush2.msra.mxu0 %v829
      %1044 = vmatprep.subr.mxu0 %v828
      %1045 = vmatpush2.msra.mxu0 %v827
      %1046 = vmatprep.subr.mxu0 %v826
      %1047 = vmatpush2.msra.mxu0 %v825
      %1048 = vmatprep.subr.mxu0 %v824
      %1049 = vmatpush2.msra.mxu0 %v823
      %1050 = vmatprep.subr.mxu0 %v822
      %1051 = vmatpush2.msra.mxu0 %v821
      %1052 = vmatprep.subr.mxu0 %v820
      %1053 = vmatpush2.msra.mxu0 %v819
      %1054 = vmatprep.subr.mxu0 %v818
      %1055 = vmatpush2.msra.mxu0 %v817
      %1056 = vmatprep.subr.mxu0 %v816
      %1057 = vmatpush2.msra.mxu0 %v815
      %1058 = vmatprep.subr.mxu0 %v814
      %1059 = vmatpush2.msra.mxu0 %v813
      %1060 = vmatprep.subr.mxu0 %v812
      %1061 = vmatpush2.msra.mxu0 %v811
      %1062 = vmatprep.mubr.f32.mxu0 %v541
      %1063 = vmatmul.mubr.f32.gmra.mxu0 %v396
      %v1064 = vpop.f32.mrf.mxu0
      %v1065 = vadd.f32 0.0, %v1064
      %v1066 = vpop.f32.mrf.mxu0
      %v1067 = vadd.f32 0.0, %v1066
      %1068 = vdwg.mxu0
      %s1069 = scalar_lea.vmem %s4, 24
      %v1070 = vld [vmem:[%s1069] sm:$0xff]
      %v1072 = vsel %vm616, %v1070, 0
      %v1075 = vsel %vm620, %v1065, 0
      %v1078 = vsel %vm620, %v1067, 0
      %1080 = vmatprep.subr.mxu0 0.0
      %1081 = vmatpush1.msra.mxu0 0.0
      %1082 = vmatprep.subr.mxu0 0.0
      %1083 = vmatpush1.msra.mxu0 0.0
      %1084 = vmatprep.subr.mxu0 0.0
      %1085 = vmatpush1.msra.mxu0 0.0
      %1086 = vmatprep.subr.mxu0 0.0
      %1087 = vmatpush1.msra.mxu0 0.0
      %1088 = vmatprep.subr.mxu0 0.0
      %1089 = vmatpush1.msra.mxu0 0.0
      %1090 = vmatprep.subr.mxu0 0.0
      %1091 = vmatpush1.msra.mxu0 0.0
      %1092 = vmatprep.subr.mxu0 0.0
      %1093 = vmatpush1.msra.mxu0 0.0
      %1094 = vmatprep.subr.mxu0 0.0
      %1095 = vmatpush1.msra.mxu0 0.0
      %1096 = vmatprep.subr.mxu0 0.0
      %1097 = vmatpush1.msra.mxu0 0.0
      %1098 = vmatprep.subr.mxu0 0.0
      %1099 = vmatpush1.msra.mxu0 0.0
      %1100 = vmatprep.subr.mxu0 0.0
      %1101 = vmatpush1.msra.mxu0 0.0
      %1102 = vmatprep.subr.mxu0 0.0
      %1103 = vmatpush1.msra.mxu0 0.0
      %1104 = vmatprep.subr.mxu0 0.0
      %1105 = vmatpush1.msra.mxu0 0.0
      %1106 = vmatprep.subr.mxu0 0.0
      %1107 = vmatpush1.msra.mxu0 0.0
      %1108 = vmatprep.subr.mxu0 0.0
      %1109 = vmatpush1.msra.mxu0 0.0
      %1110 = vmatprep.subr.mxu0 %v1078
      %1111 = vmatpush1.msra.mxu0 %v1075
      %1112 = vmatprep.subr.mxu0 0.0
      %1113 = vmatpush2.msra.mxu0 0.0
      %1114 = vmatprep.subr.mxu0 0.0
      %1115 = vmatpush2.msra.mxu0 0.0
      %1116 = vmatprep.subr.mxu0 0.0
      %1117 = vmatpush2.msra.mxu0 0.0
      %1118 = vmatprep.subr.mxu0 0.0
      %1119 = vmatpush2.msra.mxu0 0.0
      %1120 = vmatprep.subr.mxu0 0.0
      %1121 = vmatpush2.msra.mxu0 0.0
      %1122 = vmatprep.subr.mxu0 0.0
      %1123 = vmatpush2.msra.mxu0 0.0
      %1124 = vmatprep.subr.mxu0 0.0
      %1125 = vmatpush2.msra.mxu0 0.0
      %1126 = vmatprep.subr.mxu0 0.0
      %1127 = vmatpush2.msra.mxu0 0.0
      %1128 = vmatprep.subr.mxu0 0.0
      %1129 = vmatpush2.msra.mxu0 0.0
      %1130 = vmatprep.subr.mxu0 0.0
      %1131 = vmatpush2.msra.mxu0 0.0
      %1132 = vmatprep.subr.mxu0 0.0
      %1133 = vmatpush2.msra.mxu0 0.0
      %1134 = vmatprep.subr.mxu0 0.0
      %1135 = vmatpush2.msra.mxu0 0.0
      %1136 = vmatprep.subr.mxu0 0.0
      %1137 = vmatpush2.msra.mxu0 0.0
      %1138 = vmatprep.subr.mxu0 0.0
      %1139 = vmatpush2.msra.mxu0 0.0
      %1140 = vmatprep.subr.mxu0 0.0
      %1141 = vmatpush2.msra.mxu0 0.0
      %1142 = vmatprep.subr.mxu0 0.0
      %1143 = vmatpush2.msra.mxu0 0.0
      %1144 = vmatprep.mubr.f32.mxu0 0.0
      %1145 = vmatmul.mubr.f32.gmra.mxu0 %v1072
      %v1146 = vpop.f32.mrf.mxu0
      %v1147 = vadd.f32 0.0, %v1146
      %v1148 = vpop.f32.mrf.mxu0
      %v1149 = vadd.f32 0.0, %v1148
      %1150 = vdwg.mxu0
      %v1151 = vadd.f32 %v996, %v1147
      %v1152 = vadd.f32 %v997, %v1149
      %v1154 = vcombine.high %v398, %v398
      %1156 = vmatprep.subr.mxu0 %v432
      %1157 = vmatpush1.msra.mxu0 %v431
      %1158 = vmatprep.subr.mxu0 %v430
      %1159 = vmatpush1.msra.mxu0 %v429
      %1160 = vmatprep.subr.mxu0 %v428
      %1161 = vmatpush1.msra.mxu0 %v427
      %1162 = vmatprep.subr.mxu0 %v426
      %1163 = vmatpush1.msra.mxu0 %v425
      %1164 = vmatprep.subr.mxu0 %v424
      %1165 = vmatpush1.msra.mxu0 %v423
      %1166 = vmatprep.subr.mxu0 %v422
      %1167 = vmatpush1.msra.mxu0 %v421
      %1168 = vmatprep.subr.mxu0 %v420
      %1169 = vmatpush1.msra.mxu0 %v419
      %1170 = vmatprep.subr.mxu0 %v418
      %1171 = vmatpush1.msra.mxu0 %v417
      %1172 = vmatprep.subr.mxu0 %v416
      %1173 = vmatpush1.msra.mxu0 %v415
      %1174 = vmatprep.subr.mxu0 %v414
      %1175 = vmatpush1.msra.mxu0 %v413
      %1176 = vmatprep.subr.mxu0 %v412
      %1177 = vmatpush1.msra.mxu0 %v411
      %1178 = vmatprep.subr.mxu0 %v410
      %1179 = vmatpush1.msra.mxu0 %v409
      %1180 = vmatprep.subr.mxu0 %v408
      %1181 = vmatpush1.msra.mxu0 %v407
      %1182 = vmatprep.subr.mxu0 %v406
      %1183 = vmatpush1.msra.mxu0 %v405
      %1184 = vmatprep.subr.mxu0 %v404
      %1185 = vmatpush1.msra.mxu0 %v403
      %1186 = vmatprep.subr.mxu0 %v402
      %1187 = vmatpush1.msra.mxu0 %v401
      %1188 = vmatprep.subr.mxu0 %v464
      %1189 = vmatpush2.msra.mxu0 %v463
      %1190 = vmatprep.subr.mxu0 %v462
      %1191 = vmatpush2.msra.mxu0 %v461
      %1192 = vmatprep.subr.mxu0 %v460
      %1193 = vmatpush2.msra.mxu0 %v459
      %1194 = vmatprep.subr.mxu0 %v458
      %1195 = vmatpush2.msra.mxu0 %v457
      %1196 = vmatprep.subr.mxu0 %v456
      %1197 = vmatpush2.msra.mxu0 %v455
      %1198 = vmatprep.subr.mxu0 %v454
      %1199 = vmatpush2.msra.mxu0 %v453
      %1200 = vmatprep.subr.mxu0 %v452
      %1201 = vmatpush2.msra.mxu0 %v451
      %1202 = vmatprep.subr.mxu0 %v450
      %1203 = vmatpush2.msra.mxu0 %v449
      %1204 = vmatprep.subr.mxu0 %v448
      %1205 = vmatpush2.msra.mxu0 %v447
      %1206 = vmatprep.subr.mxu0 %v446
      %1207 = vmatpush2.msra.mxu0 %v445
      %1208 = vmatprep.subr.mxu0 %v444
      %1209 = vmatpush2.msra.mxu0 %v443
      %1210 = vmatprep.subr.mxu0 %v442
      %1211 = vmatpush2.msra.mxu0 %v441
      %1212 = vmatprep.subr.mxu0 %v440
      %1213 = vmatpush2.msra.mxu0 %v439
      %1214 = vmatprep.subr.mxu0 %v438
      %1215 = vmatpush2.msra.mxu0 %v437
      %1216 = vmatprep.subr.mxu0 %v436
      %1217 = vmatpush2.msra.mxu0 %v435
      %1218 = vmatprep.subr.mxu0 %v434
      %1219 = vmatpush2.msra.mxu0 %v433
      %1220 = vmatprep.mubr.f32.mxu0 %v1154
      %1221 = vmatmul.mubr.f32.gmra.mxu0 %v398
      %v1222 = vpop.f32.mrf.mxu0
      %v1223 = vadd.f32 0.0, %v1222
      %v1224 = vpop.f32.mrf.mxu0
      %v1225 = vadd.f32 0.0, %v1224
      %1226 = vdwg.mxu0
      %s1227 = scalar_lea.vmem %s4, 32
      %v1228 = vld [vmem:[%s1227] sm:$0xff]
      %v1230 = vsel %vm616, %v1228, 0
      %v1233 = vsel %vm620, %v1223, 0
      %v1236 = vsel %vm620, %v1225, 0
      %1238 = vmatprep.subr.mxu0 0.0
      %1239 = vmatpush1.msra.mxu0 0.0
      %1240 = vmatprep.subr.mxu0 0.0
      %1241 = vmatpush1.msra.mxu0 0.0
      %1242 = vmatprep.subr.mxu0 0.0
      %1243 = vmatpush1.msra.mxu0 0.0
      %1244 = vmatprep.subr.mxu0 0.0
      %1245 = vmatpush1.msra.mxu0 0.0
      %1246 = vmatprep.subr.mxu0 0.0
      %1247 = vmatpush1.msra.mxu0 0.0
      %1248 = vmatprep.subr.mxu0 0.0
      %1249 = vmatpush1.msra.mxu0 0.0
      %1250 = vmatprep.subr.mxu0 0.0
      %1251 = vmatpush1.msra.mxu0 0.0
      %1252 = vmatprep.subr.mxu0 0.0
      %1253 = vmatpush1.msra.mxu0 0.0
      %1254 = vmatprep.subr.mxu0 0.0
      %1255 = vmatpush1.msra.mxu0 0.0
      %1256 = vmatprep.subr.mxu0 0.0
      %1257 = vmatpush1.msra.mxu0 0.0
      %1258 = vmatprep.subr.mxu0 0.0
      %1259 = vmatpush1.msra.mxu0 0.0
      %1260 = vmatprep.subr.mxu0 0.0
      %1261 = vmatpush1.msra.mxu0 0.0
      %1262 = vmatprep.subr.mxu0 0.0
      %1263 = vmatpush1.msra.mxu0 0.0
      %1264 = vmatprep.subr.mxu0 0.0
      %1265 = vmatpush1.msra.mxu0 0.0
      %1266 = vmatprep.subr.mxu0 0.0
      %1267 = vmatpush1.msra.mxu0 0.0
      %1268 = vmatprep.subr.mxu0 %v1236
      %1269 = vmatpush1.msra.mxu0 %v1233
      %1270 = vmatprep.subr.mxu0 0.0
      %1271 = vmatpush2.msra.mxu0 0.0
      %1272 = vmatprep.subr.mxu0 0.0
      %1273 = vmatpush2.msra.mxu0 0.0
      %1274 = vmatprep.subr.mxu0 0.0
      %1275 = vmatpush2.msra.mxu0 0.0
      %1276 = vmatprep.subr.mxu0 0.0
      %1277 = vmatpush2.msra.mxu0 0.0
      %1278 = vmatprep.subr.mxu0 0.0
      %1279 = vmatpush2.msra.mxu0 0.0
      %1280 = vmatprep.subr.mxu0 0.0
      %1281 = vmatpush2.msra.mxu0 0.0
      %1282 = vmatprep.subr.mxu0 0.0
      %1283 = vmatpush2.msra.mxu0 0.0
      %1284 = vmatprep.subr.mxu0 0.0
      %1285 = vmatpush2.msra.mxu0 0.0
      %1286 = vmatprep.subr.mxu0 0.0
      %1287 = vmatpush2.msra.mxu0 0.0
      %1288 = vmatprep.subr.mxu0 0.0
      %1289 = vmatpush2.msra.mxu0 0.0
      %1290 = vmatprep.subr.mxu0 0.0
      %1291 = vmatpush2.msra.mxu0 0.0
      %1292 = vmatprep.subr.mxu0 0.0
      %1293 = vmatpush2.msra.mxu0 0.0
      %1294 = vmatprep.subr.mxu0 0.0
      %1295 = vmatpush2.msra.mxu0 0.0
      %1296 = vmatprep.subr.mxu0 0.0
      %1297 = vmatpush2.msra.mxu0 0.0
      %1298 = vmatprep.subr.mxu0 0.0
      %1299 = vmatpush2.msra.mxu0 0.0
      %1300 = vmatprep.subr.mxu0 0.0
      %1301 = vmatpush2.msra.mxu0 0.0
      %1302 = vmatprep.mubr.f32.mxu0 0.0
      %1303 = vmatmul.mubr.f32.gmra.mxu0 %v1230
      %v1304 = vpop.f32.mrf.mxu0
      %v1305 = vadd.f32 0.0, %v1304
      %v1306 = vpop.f32.mrf.mxu0
      %v1307 = vadd.f32 0.0, %v1306
      %1308 = vdwg.mxu0
      %v1309 = vadd.f32 %v1151, %v1305
      %v1310 = vadd.f32 %v1152, %v1307
      %v1312 = vcombine.high %v400, %v400
      %1314 = vmatprep.subr.mxu0 %v432
      %1315 = vmatpush1.msra.mxu0 %v431
      %1316 = vmatprep.subr.mxu0 %v430
      %1317 = vmatpush1.msra.mxu0 %v429
      %1318 = vmatprep.subr.mxu0 %v428
      %1319 = vmatpush1.msra.mxu0 %v427
      %1320 = vmatprep.subr.mxu0 %v426
      %1321 = vmatpush1.msra.mxu0 %v425
      %1322 = vmatprep.subr.mxu0 %v424
      %1323 = vmatpush1.msra.mxu0 %v423
      %1324 = vmatprep.subr.mxu0 %v422
      %1325 = vmatpush1.msra.mxu0 %v421
      %1326 = vmatprep.subr.mxu0 %v420
      %1327 = vmatpush1.msra.mxu0 %v419
      %1328 = vmatprep.subr.mxu0 %v418
      %1329 = vmatpush1.msra.mxu0 %v417
      %1330 = vmatprep.subr.mxu0 %v416
      %1331 = vmatpush1.msra.mxu0 %v415
      %1332 = vmatprep.subr.mxu0 %v414
      %1333 = vmatpush1.msra.mxu0 %v413
      %1334 = vmatprep.subr.mxu0 %v412
      %1335 = vmatpush1.msra.mxu0 %v411
      %1336 = vmatprep.subr.mxu0 %v410
      %1337 = vmatpush1.msra.mxu0 %v409
      %1338 = vmatprep.subr.mxu0 %v408
      %1339 = vmatpush1.msra.mxu0 %v407
      %1340 = vmatprep.subr.mxu0 %v406
      %1341 = vmatpush1.msra.mxu0 %v405
      %1342 = vmatprep.subr.mxu0 %v404
      %1343 = vmatpush1.msra.mxu0 %v403
      %1344 = vmatprep.subr.mxu0 %v402
      %1345 = vmatpush1.msra.mxu0 %v401
      %1346 = vmatprep.subr.mxu0 %v464
      %1347 = vmatpush2.msra.mxu0 %v463
      %1348 = vmatprep.subr.mxu0 %v462
      %1349 = vmatpush2.msra.mxu0 %v461
      %1350 = vmatprep.subr.mxu0 %v460
      %1351 = vmatpush2.msra.mxu0 %v459
      %1352 = vmatprep.subr.mxu0 %v458
      %1353 = vmatpush2.msra.mxu0 %v457
      %1354 = vmatprep.subr.mxu0 %v456
      %1355 = vmatpush2.msra.mxu0 %v455
      %1356 = vmatprep.subr.mxu0 %v454
      %1357 = vmatpush2.msra.mxu0 %v453
      %1358 = vmatprep.subr.mxu0 %v452
      %1359 = vmatpush2.msra.mxu0 %v451
      %1360 = vmatprep.subr.mxu0 %v450
      %1361 = vmatpush2.msra.mxu0 %v449
      %1362 = vmatprep.subr.mxu0 %v448
      %1363 = vmatpush2.msra.mxu0 %v447
      %1364 = vmatprep.subr.mxu0 %v446
      %1365 = vmatpush2.msra.mxu0 %v445
      %1366 = vmatprep.subr.mxu0 %v444
      %1367 = vmatpush2.msra.mxu0 %v443
      %1368 = vmatprep.subr.mxu0 %v442
      %1369 = vmatpush2.msra.mxu0 %v441
      %1370 = vmatprep.subr.mxu0 %v440
      %1371 = vmatpush2.msra.mxu0 %v439
      %1372 = vmatprep.subr.mxu0 %v438
      %1373 = vmatpush2.msra.mxu0 %v437
      %1374 = vmatprep.subr.mxu0 %v436
      %1375 = vmatpush2.msra.mxu0 %v435
      %1376 = vmatprep.subr.mxu0 %v434
      %1377 = vmatpush2.msra.mxu0 %v433
      %1378 = vmatprep.mubr.f32.mxu0 %v1312
      %1379 = vmatmul.mubr.f32.gmra.mxu0 %v400
      %v1380 = vpop.f32.mrf.mxu0
      %v1381 = vadd.f32 0.0, %v1380
      %v1382 = vpop.f32.mrf.mxu0
      %v1383 = vadd.f32 0.0, %v1382
      %1384 = vdwg.mxu0
      %s1385 = scalar_lea.vmem %s4, 40
      %v1386 = vld [vmem:[%s1385] sm:$0xff]
      %v1388 = vsel %vm616, %v1386, 0
      %v1391 = vsel %vm620, %v1381, 0
      %v1394 = vsel %vm620, %v1383, 0
      %1396 = vmatprep.subr.mxu0 0.0
      %1397 = vmatpush1.msra.mxu0 0.0
      %1398 = vmatprep.subr.mxu0 0.0
      %1399 = vmatpush1.msra.mxu0 0.0
      %1400 = vmatprep.subr.mxu0 0.0
      %1401 = vmatpush1.msra.mxu0 0.0
      %1402 = vmatprep.subr.mxu0 0.0
      %1403 = vmatpush1.msra.mxu0 0.0
      %1404 = vmatprep.subr.mxu0 0.0
      %1405 = vmatpush1.msra.mxu0 0.0
      %1406 = vmatprep.subr.mxu0 0.0
      %1407 = vmatpush1.msra.mxu0 0.0
      %1408 = vmatprep.subr.mxu0 0.0
      %1409 = vmatpush1.msra.mxu0 0.0
      %1410 = vmatprep.subr.mxu0 0.0
      %1411 = vmatpush1.msra.mxu0 0.0
      %1412 = vmatprep.subr.mxu0 0.0
      %1413 = vmatpush1.msra.mxu0 0.0
      %1414 = vmatprep.subr.mxu0 0.0
      %1415 = vmatpush1.msra.mxu0 0.0
      %1416 = vmatprep.subr.mxu0 0.0
      %1417 = vmatpush1.msra.mxu0 0.0
      %1418 = vmatprep.subr.mxu0 0.0
      %1419 = vmatpush1.msra.mxu0 0.0
      %1420 = vmatprep.subr.mxu0 0.0
      %1421 = vmatpush1.msra.mxu0 0.0
      %1422 = vmatprep.subr.mxu0 0.0
      %1423 = vmatpush1.msra.mxu0 0.0
      %1424 = vmatprep.subr.mxu0 0.0
      %1425 = vmatpush1.msra.mxu0 0.0
      %1426 = vmatprep.subr.mxu0 %v1394
      %1427 = vmatpush1.msra.mxu0 %v1391
      %1428 = vmatprep.subr.mxu0 0.0
      %1429 = vmatpush2.msra.mxu0 0.0
      %1430 = vmatprep.subr.mxu0 0.0
      %1431 = vmatpush2.msra.mxu0 0.0
      %1432 = vmatprep.subr.mxu0 0.0
      %1433 = vmatpush2.msra.mxu0 0.0
      %1434 = vmatprep.subr.mxu0 0.0
      %1435 = vmatpush2.msra.mxu0 0.0
      %1436 = vmatprep.subr.mxu0 0.0
      %1437 = vmatpush2.msra.mxu0 0.0
      %1438 = vmatprep.subr.mxu0 0.0
      %1439 = vmatpush2.msra.mxu0 0.0
      %1440 = vmatprep.subr.mxu0 0.0
      %1441 = vmatpush2.msra.mxu0 0.0
      %1442 = vmatprep.subr.mxu0 0.0
      %1443 = vmatpush2.msra.mxu0 0.0
      %1444 = vmatprep.subr.mxu0 0.0
      %1445 = vmatpush2.msra.mxu0 0.0
      %1446 = vmatprep.subr.mxu0 0.0
      %1447 = vmatpush2.msra.mxu0 0.0
      %1448 = vmatprep.subr.mxu0 0.0
      %1449 = vmatpush2.msra.mxu0 0.0
      %1450 = vmatprep.subr.mxu0 0.0
      %1451 = vmatpush2.msra.mxu0 0.0
      %1452 = vmatprep.subr.mxu0 0.0
      %1453 = vmatpush2.msra.mxu0 0.0
      %1454 = vmatprep.subr.mxu0 0.0
      %1455 = vmatpush2.msra.mxu0 0.0
      %1456 = vmatprep.subr.mxu0 0.0
      %1457 = vmatpush2.msra.mxu0 0.0
      %1458 = vmatprep.subr.mxu0 0.0
      %1459 = vmatpush2.msra.mxu0 0.0
      %1460 = vmatprep.mubr.f32.mxu0 0.0
      %1461 = vmatmul.mubr.f32.gmra.mxu0 %v1388
      %v1462 = vpop.f32.mrf.mxu0
      %v1463 = vadd.f32 0.0, %v1462
      %v1464 = vpop.f32.mrf.mxu0
      %v1465 = vadd.f32 0.0, %v1464
      %1466 = vdwg.mxu0
      %v1467 = vadd.f32 %v1309, %v1463
      %v1468 = vadd.f32 %v1310, %v1465
      %1469 = vmatprep.subr.mxu0 %v810
      %1470 = vmatpush1.msra.mxu0 %v809
      %1471 = vmatprep.subr.mxu0 %v808
      %1472 = vmatpush1.msra.mxu0 %v807
      %1473 = vmatprep.subr.mxu0 %v806
      %1474 = vmatpush1.msra.mxu0 %v805
      %1475 = vmatprep.subr.mxu0 %v804
      %1476 = vmatpush1.msra.mxu0 %v803
      %1477 = vmatprep.subr.mxu0 %v802
      %1478 = vmatpush1.msra.mxu0 %v801
      %1479 = vmatprep.subr.mxu0 %v800
      %1480 = vmatpush1.msra.mxu0 %v799
      %1481 = vmatprep.subr.mxu0 %v798
      %1482 = vmatpush1.msra.mxu0 %v797
      %1483 = vmatprep.subr.mxu0 %v796
      %1484 = vmatpush1.msra.mxu0 %v795
      %1485 = vmatprep.subr.mxu0 %v794
      %1486 = vmatpush1.msra.mxu0 %v793
      %1487 = vmatprep.subr.mxu0 %v792
      %1488 = vmatpush1.msra.mxu0 %v791
      %1489 = vmatprep.subr.mxu0 %v790
      %1490 = vmatpush1.msra.mxu0 %v789
      %1491 = vmatprep.subr.mxu0 %v788
      %1492 = vmatpush1.msra.mxu0 %v787
      %1493 = vmatprep.subr.mxu0 %v786
      %1494 = vmatpush1.msra.mxu0 %v785
      %1495 = vmatprep.subr.mxu0 %v784
      %1496 = vmatpush1.msra.mxu0 %v783
      %1497 = vmatprep.subr.mxu0 %v782
      %1498 = vmatpush1.msra.mxu0 %v781
      %1499 = vmatprep.subr.mxu0 %v780
      %1500 = vmatpush1.msra.mxu0 %v779
      %1501 = vmatprep.subr.mxu0 %v842
      %1502 = vmatpush2.msra.mxu0 %v841
      %1503 = vmatprep.subr.mxu0 %v840
      %1504 = vmatpush2.msra.mxu0 %v839
      %1505 = vmatprep.subr.mxu0 %v838
      %1506 = vmatpush2.msra.mxu0 %v837
      %1507 = vmatprep.subr.mxu0 %v836
      %1508 = vmatpush2.msra.mxu0 %v835
      %1509 = vmatprep.subr.mxu0 %v834
      %1510 = vmatpush2.msra.mxu0 %v833
      %1511 = vmatprep.subr.mxu0 %v832
      %1512 = vmatpush2.msra.mxu0 %v831
      %1513 = vmatprep.subr.mxu0 %v830
      %1514 = vmatpush2.msra.mxu0 %v829
      %1515 = vmatprep.subr.mxu0 %v828
      %1516 = vmatpush2.msra.mxu0 %v827
      %1517 = vmatprep.subr.mxu0 %v826
      %1518 = vmatpush2.msra.mxu0 %v825
      %1519 = vmatprep.subr.mxu0 %v824
      %1520 = vmatpush2.msra.mxu0 %v823
      %1521 = vmatprep.subr.mxu0 %v822
      %1522 = vmatpush2.msra.mxu0 %v821
      %1523 = vmatprep.subr.mxu0 %v820
      %1524 = vmatpush2.msra.mxu0 %v819
      %1525 = vmatprep.subr.mxu0 %v818
      %1526 = vmatpush2.msra.mxu0 %v817
      %1527 = vmatprep.subr.mxu0 %v816
      %1528 = vmatpush2.msra.mxu0 %v815
      %1529 = vmatprep.subr.mxu0 %v814
      %1530 = vmatpush2.msra.mxu0 %v813
      %1531 = vmatprep.subr.mxu0 %v812
      %1532 = vmatpush2.msra.mxu0 %v811
      %1533 = vmatprep.mubr.f32.mxu0 %v1154
      %1534 = vmatmul.mubr.f32.gmra.mxu0 %v398
      %v1535 = vpop.f32.mrf.mxu0
      %v1536 = vadd.f32 0.0, %v1535
      %v1537 = vpop.f32.mrf.mxu0
      %v1538 = vadd.f32 0.0, %v1537
      %1539 = vdwg.mxu0
      %s1540 = scalar_lea.vmem %s4, 48
      %v1541 = vld [vmem:[%s1540] sm:$0xff]
      %v1543 = vsel %vm616, %v1541, 0
      %v1546 = vsel %vm620, %v1536, 0
      %v1549 = vsel %vm620, %v1538, 0
      %1551 = vmatprep.subr.mxu0 0.0
      %1552 = vmatpush1.msra.mxu0 0.0
      %1553 = vmatprep.subr.mxu0 0.0
      %1554 = vmatpush1.msra.mxu0 0.0
      %1555 = vmatprep.subr.mxu0 0.0
      %1556 = vmatpush1.msra.mxu0 0.0
      %1557 = vmatprep.subr.mxu0 0.0
      %1558 = vmatpush1.msra.mxu0 0.0
      %1559 = vmatprep.subr.mxu0 0.0
      %1560 = vmatpush1.msra.mxu0 0.0
      %1561 = vmatprep.subr.mxu0 0.0
      %1562 = vmatpush1.msra.mxu0 0.0
      %1563 = vmatprep.subr.mxu0 0.0
      %1564 = vmatpush1.msra.mxu0 0.0
      %1565 = vmatprep.subr.mxu0 0.0
      %1566 = vmatpush1.msra.mxu0 0.0
      %1567 = vmatprep.subr.mxu0 0.0
      %1568 = vmatpush1.msra.mxu0 0.0
      %1569 = vmatprep.subr.mxu0 0.0
      %1570 = vmatpush1.msra.mxu0 0.0
      %1571 = vmatprep.subr.mxu0 0.0
      %1572 = vmatpush1.msra.mxu0 0.0
      %1573 = vmatprep.subr.mxu0 0.0
      %1574 = vmatpush1.msra.mxu0 0.0
      %1575 = vmatprep.subr.mxu0 0.0
      %1576 = vmatpush1.msra.mxu0 0.0
      %1577 = vmatprep.subr.mxu0 0.0
      %1578 = vmatpush1.msra.mxu0 0.0
      %1579 = vmatprep.subr.mxu0 0.0
      %1580 = vmatpush1.msra.mxu0 0.0
      %1581 = vmatprep.subr.mxu0 %v1549
      %1582 = vmatpush1.msra.mxu0 %v1546
      %1583 = vmatprep.subr.mxu0 0.0
      %1584 = vmatpush2.msra.mxu0 0.0
      %1585 = vmatprep.subr.mxu0 0.0
      %1586 = vmatpush2.msra.mxu0 0.0
      %1587 = vmatprep.subr.mxu0 0.0
      %1588 = vmatpush2.msra.mxu0 0.0
      %1589 = vmatprep.subr.mxu0 0.0
      %1590 = vmatpush2.msra.mxu0 0.0
      %1591 = vmatprep.subr.mxu0 0.0
      %1592 = vmatpush2.msra.mxu0 0.0
      %1593 = vmatprep.subr.mxu0 0.0
      %1594 = vmatpush2.msra.mxu0 0.0
      %1595 = vmatprep.subr.mxu0 0.0
      %1596 = vmatpush2.msra.mxu0 0.0
      %1597 = vmatprep.subr.mxu0 0.0
      %1598 = vmatpush2.msra.mxu0 0.0
      %1599 = vmatprep.subr.mxu0 0.0
      %1600 = vmatpush2.msra.mxu0 0.0
      %1601 = vmatprep.subr.mxu0 0.0
      %1602 = vmatpush2.msra.mxu0 0.0
      %1603 = vmatprep.subr.mxu0 0.0
      %1604 = vmatpush2.msra.mxu0 0.0
      %1605 = vmatprep.subr.mxu0 0.0
      %1606 = vmatpush2.msra.mxu0 0.0
      %1607 = vmatprep.subr.mxu0 0.0
      %1608 = vmatpush2.msra.mxu0 0.0
      %1609 = vmatprep.subr.mxu0 0.0
      %1610 = vmatpush2.msra.mxu0 0.0
      %1611 = vmatprep.subr.mxu0 0.0
      %1612 = vmatpush2.msra.mxu0 0.0
      %1613 = vmatprep.subr.mxu0 0.0
      %1614 = vmatpush2.msra.mxu0 0.0
      %1615 = vmatprep.mubr.f32.mxu0 0.0
      %1616 = vmatmul.mubr.f32.gmra.mxu0 %v1543
      %v1617 = vpop.f32.mrf.mxu0
      %v1618 = vadd.f32 0.0, %v1617
      %v1619 = vpop.f32.mrf.mxu0
      %v1620 = vadd.f32 0.0, %v1619
      %1621 = vdwg.mxu0
      %v1622 = vadd.f32 %v1467, %v1618
      %v1623 = vadd.f32 %v1468, %v1620
      %1624 = vmatprep.subr.mxu0 %v810
      %1625 = vmatpush1.msra.mxu0 %v809
      %1626 = vmatprep.subr.mxu0 %v808
      %1627 = vmatpush1.msra.mxu0 %v807
      %1628 = vmatprep.subr.mxu0 %v806
      %1629 = vmatpush1.msra.mxu0 %v805
      %1630 = vmatprep.subr.mxu0 %v804
      %1631 = vmatpush1.msra.mxu0 %v803
      %1632 = vmatprep.subr.mxu0 %v802
      %1633 = vmatpush1.msra.mxu0 %v801
      %1634 = vmatprep.subr.mxu0 %v800
      %1635 = vmatpush1.msra.mxu0 %v799
      %1636 = vmatprep.subr.mxu0 %v798
      %1637 = vmatpush1.msra.mxu0 %v797
      %1638 = vmatprep.subr.mxu0 %v796
      %1639 = vmatpush1.msra.mxu0 %v795
      %1640 = vmatprep.subr.mxu0 %v794
      %1641 = vmatpush1.msra.mxu0 %v793
      %1642 = vmatprep.subr.mxu0 %v792
      %1643 = vmatpush1.msra.mxu0 %v791
      %1644 = vmatprep.subr.mxu0 %v790
      %1645 = vmatpush1.msra.mxu0 %v789
      %1646 = vmatprep.subr.mxu0 %v788
      %1647 = vmatpush1.msra.mxu0 %v787
      %1648 = vmatprep.subr.mxu0 %v786
      %1649 = vmatpush1.msra.mxu0 %v785
      %1650 = vmatprep.subr.mxu0 %v784
      %1651 = vmatpush1.msra.mxu0 %v783
      %1652 = vmatprep.subr.mxu0 %v782
      %1653 = vmatpush1.msra.mxu0 %v781
      %1654 = vmatprep.subr.mxu0 %v780
      %1655 = vmatpush1.msra.mxu0 %v779
      %1656 = vmatprep.subr.mxu0 %v842
      %1657 = vmatpush2.msra.mxu0 %v841
      %1658 = vmatprep.subr.mxu0 %v840
      %1659 = vmatpush2.msra.mxu0 %v839
      %1660 = vmatprep.subr.mxu0 %v838
      %1661 = vmatpush2.msra.mxu0 %v837
      %1662 = vmatprep.subr.mxu0 %v836
      %1663 = vmatpush2.msra.mxu0 %v835
      %1664 = vmatprep.subr.mxu0 %v834
      %1665 = vmatpush2.msra.mxu0 %v833
      %1666 = vmatprep.subr.mxu0 %v832
      %1667 = vmatpush2.msra.mxu0 %v831
      %1668 = vmatprep.subr.mxu0 %v830
      %1669 = vmatpush2.msra.mxu0 %v829
      %1670 = vmatprep.subr.mxu0 %v828
      %1671 = vmatpush2.msra.mxu0 %v827
      %1672 = vmatprep.subr.mxu0 %v826
      %1673 = vmatpush2.msra.mxu0 %v825
      %1674 = vmatprep.subr.mxu0 %v824
      %1675 = vmatpush2.msra.mxu0 %v823
      %1676 = vmatprep.subr.mxu0 %v822
      %1677 = vmatpush2.msra.mxu0 %v821
      %1678 = vmatprep.subr.mxu0 %v820
      %1679 = vmatpush2.msra.mxu0 %v819
      %1680 = vmatprep.subr.mxu0 %v818
      %1681 = vmatpush2.msra.mxu0 %v817
      %1682 = vmatprep.subr.mxu0 %v816
      %1683 = vmatpush2.msra.mxu0 %v815
      %1684 = vmatprep.subr.mxu0 %v814
      %1685 = vmatpush2.msra.mxu0 %v813
      %1686 = vmatprep.subr.mxu0 %v812
      %1687 = vmatpush2.msra.mxu0 %v811
      %1688 = vmatprep.mubr.f32.mxu0 %v1312
      %1689 = vmatmul.mubr.f32.gmra.mxu0 %v400
      %v1690 = vpop.f32.mrf.mxu0
      %v1691 = vadd.f32 0.0, %v1690
      %v1692 = vpop.f32.mrf.mxu0
      %v1693 = vadd.f32 0.0, %v1692
      %1694 = vdwg.mxu0
      %s1695 = scalar_lea.vmem %s4, 56
      %v1696 = vld [vmem:[%s1695] sm:$0xff]
      %v1698 = vsel %vm616, %v1696, 0
      %v1701 = vsel %vm620, %v1691, 0
      %v1704 = vsel %vm620, %v1693, 0
      %1706 = vmatprep.subr.mxu0 0.0
      %1707 = vmatpush1.msra.mxu0 0.0
      %1708 = vmatprep.subr.mxu0 0.0
      %1709 = vmatpush1.msra.mxu0 0.0
      %1710 = vmatprep.subr.mxu0 0.0
      %1711 = vmatpush1.msra.mxu0 0.0
      %1712 = vmatprep.subr.mxu0 0.0
      %1713 = vmatpush1.msra.mxu0 0.0
      %1714 = vmatprep.subr.mxu0 0.0
      %1715 = vmatpush1.msra.mxu0 0.0
      %1716 = vmatprep.subr.mxu0 0.0
      %1717 = vmatpush1.msra.mxu0 0.0
      %1718 = vmatprep.subr.mxu0 0.0
      %1719 = vmatpush1.msra.mxu0 0.0
      %1720 = vmatprep.subr.mxu0 0.0
      %1721 = vmatpush1.msra.mxu0 0.0
      %1722 = vmatprep.subr.mxu0 0.0
      %1723 = vmatpush1.msra.mxu0 0.0
      %1724 = vmatprep.subr.mxu0 0.0
      %1725 = vmatpush1.msra.mxu0 0.0
      %1726 = vmatprep.subr.mxu0 0.0
      %1727 = vmatpush1.msra.mxu0 0.0
      %1728 = vmatprep.subr.mxu0 0.0
      %1729 = vmatpush1.msra.mxu0 0.0
      %1730 = vmatprep.subr.mxu0 0.0
      %1731 = vmatpush1.msra.mxu0 0.0
      %1732 = vmatprep.subr.mxu0 0.0
      %1733 = vmatpush1.msra.mxu0 0.0
      %1734 = vmatprep.subr.mxu0 0.0
      %1735 = vmatpush1.msra.mxu0 0.0
      %1736 = vmatprep.subr.mxu0 %v1704
      %1737 = vmatpush1.msra.mxu0 %v1701
      %1738 = vmatprep.subr.mxu0 0.0
      %1739 = vmatpush2.msra.mxu0 0.0
      %1740 = vmatprep.subr.mxu0 0.0
      %1741 = vmatpush2.msra.mxu0 0.0
      %1742 = vmatprep.subr.mxu0 0.0
      %1743 = vmatpush2.msra.mxu0 0.0
      %1744 = vmatprep.subr.mxu0 0.0
      %1745 = vmatpush2.msra.mxu0 0.0
      %1746 = vmatprep.subr.mxu0 0.0
      %1747 = vmatpush2.msra.mxu0 0.0
      %1748 = vmatprep.subr.mxu0 0.0
      %1749 = vmatpush2.msra.mxu0 0.0
      %1750 = vmatprep.subr.mxu0 0.0
      %1751 = vmatpush2.msra.mxu0 0.0
      %1752 = vmatprep.subr.mxu0 0.0
      %1753 = vmatpush2.msra.mxu0 0.0
      %1754 = vmatprep.subr.mxu0 0.0
      %1755 = vmatpush2.msra.mxu0 0.0
      %1756 = vmatprep.subr.mxu0 0.0
      %1757 = vmatpush2.msra.mxu0 0.0
      %1758 = vmatprep.subr.mxu0 0.0
      %1759 = vmatpush2.msra.mxu0 0.0
      %1760 = vmatprep.subr.mxu0 0.0
      %1761 = vmatpush2.msra.mxu0 0.0
      %1762 = vmatprep.subr.mxu0 0.0
      %1763 = vmatpush2.msra.mxu0 0.0
      %1764 = vmatprep.subr.mxu0 0.0
      %1765 = vmatpush2.msra.mxu0 0.0
      %1766 = vmatprep.subr.mxu0 0.0
      %1767 = vmatpush2.msra.mxu0 0.0
      %1768 = vmatprep.subr.mxu0 0.0
      %1769 = vmatpush2.msra.mxu0 0.0
      %1770 = vmatprep.mubr.f32.mxu0 0.0
      %1771 = vmatmul.mubr.f32.gmra.mxu0 %v1698
      %v1772 = vpop.f32.mrf.mxu0
      %v1773 = vadd.f32 0.0, %v1772
      %v1774 = vpop.f32.mrf.mxu0
      %v1775 = vadd.f32 0.0, %v1774
      %1776 = vdwg.mxu0
      %v1777 = vadd.f32 %v1622, %v1773
      %v1778 = vadd.f32 %v1623, %v1775
      %s1779 = scalar_lea.vmem %s1, 1024
      %v1780 = vld [vmem:[%s1779] sm:$0xff]
      %v1781 = vld [vmem:[%s1779 + $0x8] sm:$0xff]
      %v1782 = vld [vmem:[%s1779 + $0x10] sm:$0xff]
      %v1783 = vld [vmem:[%s1779 + $0x18] sm:$0xff]
      %v1784 = vld [vmem:[%s1779 + $0x20] sm:$0xff]
      %v1785 = vld [vmem:[%s1779 + $0x28] sm:$0xff]
      %v1786 = vld [vmem:[%s1779 + $0x30] sm:$0xff]
      %v1787 = vld [vmem:[%s1779 + $0x38] sm:$0xff]
      %v1788 = vld [vmem:[%s1779 + $0x40] sm:$0xff]
      %v1789 = vld [vmem:[%s1779 + $0x48] sm:$0xff]
      %v1790 = vld [vmem:[%s1779 + $0x50] sm:$0xff]
      %v1791 = vld [vmem:[%s1779 + $0x58] sm:$0xff]
      %v1792 = vld [vmem:[%s1779 + $0x60] sm:$0xff]
      %v1793 = vld [vmem:[%s1779 + $0x68] sm:$0xff]
      %v1794 = vld [vmem:[%s1779 + $0x70] sm:$0xff]
      %v1795 = vld [vmem:[%s1779 + $0x78] sm:$0xff]
      %v1796 = vld [vmem:[%s1779 + $0x80] sm:$0xff]
      %v1797 = vld [vmem:[%s1779 + $0x88] sm:$0xff]
      %v1798 = vld [vmem:[%s1779 + $0x90] sm:$0xff]
      %v1799 = vld [vmem:[%s1779 + $0x98] sm:$0xff]
      %v1800 = vld [vmem:[%s1779 + $0xa0] sm:$0xff]
      %v1801 = vld [vmem:[%s1779 + $0xa8] sm:$0xff]
      %v1802 = vld [vmem:[%s1779 + $0xb0] sm:$0xff]
      %v1803 = vld [vmem:[%s1779 + $0xb8] sm:$0xff]
      %v1804 = vld [vmem:[%s1779 + $0xc0] sm:$0xff]
      %v1805 = vld [vmem:[%s1779 + $0xc8] sm:$0xff]
      %v1806 = vld [vmem:[%s1779 + $0xd0] sm:$0xff]
      %v1807 = vld [vmem:[%s1779 + $0xd8] sm:$0xff]
      %v1808 = vld [vmem:[%s1779 + $0xe0] sm:$0xff]
      %v1809 = vld [vmem:[%s1779 + $0xe8] sm:$0xff]
      %v1810 = vld [vmem:[%s1779 + $0xf0] sm:$0xff]
      %v1811 = vld [vmem:[%s1779 + $0xf8] sm:$0xff]
      %v1812 = vld [vmem:[%s1779 + $0x100] sm:$0xff]
      %v1813 = vld [vmem:[%s1779 + $0x108] sm:$0xff]
      %v1814 = vld [vmem:[%s1779 + $0x110] sm:$0xff]
      %v1815 = vld [vmem:[%s1779 + $0x118] sm:$0xff]
      %v1816 = vld [vmem:[%s1779 + $0x120] sm:$0xff]
      %v1817 = vld [vmem:[%s1779 + $0x128] sm:$0xff]
      %v1818 = vld [vmem:[%s1779 + $0x130] sm:$0xff]
      %v1819 = vld [vmem:[%s1779 + $0x138] sm:$0xff]
      %v1820 = vld [vmem:[%s1779 + $0x140] sm:$0xff]
      %v1821 = vld [vmem:[%s1779 + $0x148] sm:$0xff]
      %v1822 = vld [vmem:[%s1779 + $0x150] sm:$0xff]
      %v1823 = vld [vmem:[%s1779 + $0x158] sm:$0xff]
      %v1824 = vld [vmem:[%s1779 + $0x160] sm:$0xff]
      %v1825 = vld [vmem:[%s1779 + $0x168] sm:$0xff]
      %v1826 = vld [vmem:[%s1779 + $0x170] sm:$0xff]
      %v1827 = vld [vmem:[%s1779 + $0x178] sm:$0xff]
      %v1828 = vld [vmem:[%s1779 + $0x180] sm:$0xff]
      %v1829 = vld [vmem:[%s1779 + $0x188] sm:$0xff]
      %v1830 = vld [vmem:[%s1779 + $0x190] sm:$0xff]
      %v1831 = vld [vmem:[%s1779 + $0x198] sm:$0xff]
      %v1832 = vld [vmem:[%s1779 + $0x1a0] sm:$0xff]
      %v1833 = vld [vmem:[%s1779 + $0x1a8] sm:$0xff]
      %v1834 = vld [vmem:[%s1779 + $0x1b0] sm:$0xff]
      %v1835 = vld [vmem:[%s1779 + $0x1b8] sm:$0xff]
      %v1836 = vld [vmem:[%s1779 + $0x1c0] sm:$0xff]
      %v1837 = vld [vmem:[%s1779 + $0x1c8] sm:$0xff]
      %v1838 = vld [vmem:[%s1779 + $0x1d0] sm:$0xff]
      %v1839 = vld [vmem:[%s1779 + $0x1d8] sm:$0xff]
      %v1840 = vld [vmem:[%s1779 + $0x1e0] sm:$0xff]
      %v1841 = vld [vmem:[%s1779 + $0x1e8] sm:$0xff]
      %v1842 = vld [vmem:[%s1779 + $0x1f0] sm:$0xff]
      %v1843 = vld [vmem:[%s1779 + $0x1f8] sm:$0xff]
      %1844 = vmatprep.subr.mxu0 %v1811
      %1845 = vmatpush1.msra.mxu0 %v1810
      %1846 = vmatprep.subr.mxu0 %v1809
      %1847 = vmatpush1.msra.mxu0 %v1808
      %1848 = vmatprep.subr.mxu0 %v1807
      %1849 = vmatpush1.msra.mxu0 %v1806
      %1850 = vmatprep.subr.mxu0 %v1805
      %1851 = vmatpush1.msra.mxu0 %v1804
      %1852 = vmatprep.subr.mxu0 %v1803
      %1853 = vmatpush1.msra.mxu0 %v1802
      %1854 = vmatprep.subr.mxu0 %v1801
      %1855 = vmatpush1.msra.mxu0 %v1800
      %1856 = vmatprep.subr.mxu0 %v1799
      %1857 = vmatpush1.msra.mxu0 %v1798
      %1858 = vmatprep.subr.mxu0 %v1797
      %1859 = vmatpush1.msra.mxu0 %v1796
      %1860 = vmatprep.subr.mxu0 %v1795
      %1861 = vmatpush1.msra.mxu0 %v1794
      %1862 = vmatprep.subr.mxu0 %v1793
      %1863 = vmatpush1.msra.mxu0 %v1792
      %1864 = vmatprep.subr.mxu0 %v1791
      %1865 = vmatpush1.msra.mxu0 %v1790
      %1866 = vmatprep.subr.mxu0 %v1789
      %1867 = vmatpush1.msra.mxu0 %v1788
      %1868 = vmatprep.subr.mxu0 %v1787
      %1869 = vmatpush1.msra.mxu0 %v1786
      %1870 = vmatprep.subr.mxu0 %v1785
      %1871 = vmatpush1.msra.mxu0 %v1784
      %1872 = vmatprep.subr.mxu0 %v1783
      %1873 = vmatpush1.msra.mxu0 %v1782
      %1874 = vmatprep.subr.mxu0 %v1781
      %1875 = vmatpush1.msra.mxu0 %v1780
      %1876 = vmatprep.subr.mxu0 %v1843
      %1877 = vmatpush2.msra.mxu0 %v1842
      %1878 = vmatprep.subr.mxu0 %v1841
      %1879 = vmatpush2.msra.mxu0 %v1840
      %1880 = vmatprep.subr.mxu0 %v1839
      %1881 = vmatpush2.msra.mxu0 %v1838
      %1882 = vmatprep.subr.mxu0 %v1837
      %1883 = vmatpush2.msra.mxu0 %v1836
      %1884 = vmatprep.subr.mxu0 %v1835
      %1885 = vmatpush2.msra.mxu0 %v1834
      %1886 = vmatprep.subr.mxu0 %v1833
      %1887 = vmatpush2.msra.mxu0 %v1832
      %1888 = vmatprep.subr.mxu0 %v1831
      %1889 = vmatpush2.msra.mxu0 %v1830
      %1890 = vmatprep.subr.mxu0 %v1829
      %1891 = vmatpush2.msra.mxu0 %v1828
      %1892 = vmatprep.subr.mxu0 %v1827
      %1893 = vmatpush2.msra.mxu0 %v1826
      %1894 = vmatprep.subr.mxu0 %v1825
      %1895 = vmatpush2.msra.mxu0 %v1824
      %1896 = vmatprep.subr.mxu0 %v1823
      %1897 = vmatpush2.msra.mxu0 %v1822
      %1898 = vmatprep.subr.mxu0 %v1821
      %1899 = vmatpush2.msra.mxu0 %v1820
      %1900 = vmatprep.subr.mxu0 %v1819
      %1901 = vmatpush2.msra.mxu0 %v1818
      %1902 = vmatprep.subr.mxu0 %v1817
      %1903 = vmatpush2.msra.mxu0 %v1816
      %1904 = vmatprep.subr.mxu0 %v1815
      %1905 = vmatpush2.msra.mxu0 %v1814
      %1906 = vmatprep.subr.mxu0 %v1813
      %1907 = vmatpush2.msra.mxu0 %v1812
      %1908 = vmatprep.mubr.f32.mxu0 %v466
      %1909 = vmatmul.mubr.f32.gmra.mxu0 %v394
      %v1910 = vpop.f32.mrf.mxu0
      %v1911 = vadd.f32 0.0, %v1910
      %v1912 = vpop.f32.mrf.mxu0
      %v1913 = vadd.f32 0.0, %v1912
      %1914 = vdwg.mxu0
      %s1915 = scalar_lea.vmem %s4, 64
      %v1916 = vld [vmem:[%s1915] sm:$0xff]
      %v1918 = vsel %vm616, %v1916, 0
      %v1921 = vsel %vm620, %v1911, 0
      %v1924 = vsel %vm620, %v1913, 0
      %1926 = vmatprep.subr.mxu0 0.0
      %1927 = vmatpush1.msra.mxu0 0.0
      %1928 = vmatprep.subr.mxu0 0.0
      %1929 = vmatpush1.msra.mxu0 0.0
      %1930 = vmatprep.subr.mxu0 0.0
      %1931 = vmatpush1.msra.mxu0 0.0
      %1932 = vmatprep.subr.mxu0 0.0
      %1933 = vmatpush1.msra.mxu0 0.0
      %1934 = vmatprep.subr.mxu0 0.0
      %1935 = vmatpush1.msra.mxu0 0.0
      %1936 = vmatprep.subr.mxu0 0.0
      %1937 = vmatpush1.msra.mxu0 0.0
      %1938 = vmatprep.subr.mxu0 0.0
      %1939 = vmatpush1.msra.mxu0 0.0
      %1940 = vmatprep.subr.mxu0 0.0
      %1941 = vmatpush1.msra.mxu0 0.0
      %1942 = vmatprep.subr.mxu0 0.0
      %1943 = vmatpush1.msra.mxu0 0.0
      %1944 = vmatprep.subr.mxu0 0.0
      %1945 = vmatpush1.msra.mxu0 0.0
      %1946 = vmatprep.subr.mxu0 0.0
      %1947 = vmatpush1.msra.mxu0 0.0
      %1948 = vmatprep.subr.mxu0 0.0
      %1949 = vmatpush1.msra.mxu0 0.0
      %1950 = vmatprep.subr.mxu0 0.0
      %1951 = vmatpush1.msra.mxu0 0.0
      %1952 = vmatprep.subr.mxu0 0.0
      %1953 = vmatpush1.msra.mxu0 0.0
      %1954 = vmatprep.subr.mxu0 0.0
      %1955 = vmatpush1.msra.mxu0 0.0
      %1956 = vmatprep.subr.mxu0 %v1924
      %1957 = vmatpush1.msra.mxu0 %v1921
      %1958 = vmatprep.subr.mxu0 0.0
      %1959 = vmatpush2.msra.mxu0 0.0
      %1960 = vmatprep.subr.mxu0 0.0
      %1961 = vmatpush2.msra.mxu0 0.0
      %1962 = vmatprep.subr.mxu0 0.0
      %1963 = vmatpush2.msra.mxu0 0.0
      %1964 = vmatprep.subr.mxu0 0.0
      %1965 = vmatpush2.msra.mxu0 0.0
      %1966 = vmatprep.subr.mxu0 0.0
      %1967 = vmatpush2.msra.mxu0 0.0
      %1968 = vmatprep.subr.mxu0 0.0
      %1969 = vmatpush2.msra.mxu0 0.0
      %1970 = vmatprep.subr.mxu0 0.0
      %1971 = vmatpush2.msra.mxu0 0.0
      %1972 = vmatprep.subr.mxu0 0.0
      %1973 = vmatpush2.msra.mxu0 0.0
      %1974 = vmatprep.subr.mxu0 0.0
      %1975 = vmatpush2.msra.mxu0 0.0
      %1976 = vmatprep.subr.mxu0 0.0
      %1977 = vmatpush2.msra.mxu0 0.0
      %1978 = vmatprep.subr.mxu0 0.0
      %1979 = vmatpush2.msra.mxu0 0.0
      %1980 = vmatprep.subr.mxu0 0.0
      %1981 = vmatpush2.msra.mxu0 0.0
      %1982 = vmatprep.subr.mxu0 0.0
      %1983 = vmatpush2.msra.mxu0 0.0
      %1984 = vmatprep.subr.mxu0 0.0
      %1985 = vmatpush2.msra.mxu0 0.0
      %1986 = vmatprep.subr.mxu0 0.0
      %1987 = vmatpush2.msra.mxu0 0.0
      %1988 = vmatprep.subr.mxu0 0.0
      %1989 = vmatpush2.msra.mxu0 0.0
      %1990 = vmatprep.mubr.f32.mxu0 0.0
      %1991 = vmatmul.mubr.f32.gmra.mxu0 %v1918
      %v1992 = vpop.f32.mrf.mxu0
      %v1993 = vadd.f32 0.0, %v1992
      %v1994 = vpop.f32.mrf.mxu0
      %v1995 = vadd.f32 0.0, %v1994
      %1996 = vdwg.mxu0
      %v1997 = vadd.f32 %v1777, %v1993
      %v1998 = vadd.f32 %v1778, %v1995
      %1999 = vmatprep.subr.mxu0 %v1811
      %2000 = vmatpush1.msra.mxu0 %v1810
      %2001 = vmatprep.subr.mxu0 %v1809
      %2002 = vmatpush1.msra.mxu0 %v1808
      %2003 = vmatprep.subr.mxu0 %v1807
      %2004 = vmatpush1.msra.mxu0 %v1806
      %2005 = vmatprep.subr.mxu0 %v1805
      %2006 = vmatpush1.msra.mxu0 %v1804
      %2007 = vmatprep.subr.mxu0 %v1803
      %2008 = vmatpush1.msra.mxu0 %v1802
      %2009 = vmatprep.subr.mxu0 %v1801
      %2010 = vmatpush1.msra.mxu0 %v1800
      %2011 = vmatprep.subr.mxu0 %v1799
      %2012 = vmatpush1.msra.mxu0 %v1798
      %2013 = vmatprep.subr.mxu0 %v1797
      %2014 = vmatpush1.msra.mxu0 %v1796
      %2015 = vmatprep.subr.mxu0 %v1795
      %2016 = vmatpush1.msra.mxu0 %v1794
      %2017 = vmatprep.subr.mxu0 %v1793
      %2018 = vmatpush1.msra.mxu0 %v1792
      %2019 = vmatprep.subr.mxu0 %v1791
      %2020 = vmatpush1.msra.mxu0 %v1790
      %2021 = vmatprep.subr.mxu0 %v1789
      %2022 = vmatpush1.msra.mxu0 %v1788
      %2023 = vmatprep.subr.mxu0 %v1787
      %2024 = vmatpush1.msra.mxu0 %v1786
      %2025 = vmatprep.subr.mxu0 %v1785
      %2026 = vmatpush1.msra.mxu0 %v1784
      %2027 = vmatprep.subr.mxu0 %v1783
      %2028 = vmatpush1.msra.mxu0 %v1782
      %2029 = vmatprep.subr.mxu0 %v1781
      %2030 = vmatpush1.msra.mxu0 %v1780
      %2031 = vmatprep.subr.mxu0 %v1843
      %2032 = vmatpush2.msra.mxu0 %v1842
      %2033 = vmatprep.subr.mxu0 %v1841
      %2034 = vmatpush2.msra.mxu0 %v1840
      %2035 = vmatprep.subr.mxu0 %v1839
      %2036 = vmatpush2.msra.mxu0 %v1838
      %2037 = vmatprep.subr.mxu0 %v1837
      %2038 = vmatpush2.msra.mxu0 %v1836
      %2039 = vmatprep.subr.mxu0 %v1835
      %2040 = vmatpush2.msra.mxu0 %v1834
      %2041 = vmatprep.subr.mxu0 %v1833
      %2042 = vmatpush2.msra.mxu0 %v1832
      %2043 = vmatprep.subr.mxu0 %v1831
      %2044 = vmatpush2.msra.mxu0 %v1830
      %2045 = vmatprep.subr.mxu0 %v1829
      %2046 = vmatpush2.msra.mxu0 %v1828
      %2047 = vmatprep.subr.mxu0 %v1827
      %2048 = vmatpush2.msra.mxu0 %v1826
      %2049 = vmatprep.subr.mxu0 %v1825
      %2050 = vmatpush2.msra.mxu0 %v1824
      %2051 = vmatprep.subr.mxu0 %v1823
      %2052 = vmatpush2.msra.mxu0 %v1822
      %2053 = vmatprep.subr.mxu0 %v1821
      %2054 = vmatpush2.msra.mxu0 %v1820
      %2055 = vmatprep.subr.mxu0 %v1819
      %2056 = vmatpush2.msra.mxu0 %v1818
      %2057 = vmatprep.subr.mxu0 %v1817
      %2058 = vmatpush2.msra.mxu0 %v1816
      %2059 = vmatprep.subr.mxu0 %v1815
      %2060 = vmatpush2.msra.mxu0 %v1814
      %2061 = vmatprep.subr.mxu0 %v1813
      %2062 = vmatpush2.msra.mxu0 %v1812
      %2063 = vmatprep.mubr.f32.mxu0 %v541
      %2064 = vmatmul.mubr.f32.gmra.mxu0 %v396
      %v2065 = vpop.f32.mrf.mxu0
      %v2066 = vadd.f32 0.0, %v2065
      %v2067 = vpop.f32.mrf.mxu0
      %v2068 = vadd.f32 0.0, %v2067
      %2069 = vdwg.mxu0
      %s2070 = scalar_lea.vmem %s4, 72
      %v2071 = vld [vmem:[%s2070] sm:$0xff]
      %v2073 = vsel %vm616, %v2071, 0
      %v2076 = vsel %vm620, %v2066, 0
      %v2079 = vsel %vm620, %v2068, 0
      %2081 = vmatprep.subr.mxu0 0.0
      %2082 = vmatpush1.msra.mxu0 0.0
      %2083 = vmatprep.subr.mxu0 0.0
      %2084 = vmatpush1.msra.mxu0 0.0
      %2085 = vmatprep.subr.mxu0 0.0
      %2086 = vmatpush1.msra.mxu0 0.0
      %2087 = vmatprep.subr.mxu0 0.0
      %2088 = vmatpush1.msra.mxu0 0.0
      %2089 = vmatprep.subr.mxu0 0.0
      %2090 = vmatpush1.msra.mxu0 0.0
      %2091 = vmatprep.subr.mxu0 0.0
      %2092 = vmatpush1.msra.mxu0 0.0
      %2093 = vmatprep.subr.mxu0 0.0
      %2094 = vmatpush1.msra.mxu0 0.0
      %2095 = vmatprep.subr.mxu0 0.0
      %2096 = vmatpush1.msra.mxu0 0.0
      %2097 = vmatprep.subr.mxu0 0.0
      %2098 = vmatpush1.msra.mxu0 0.0
      %2099 = vmatprep.subr.mxu0 0.0
      %2100 = vmatpush1.msra.mxu0 0.0
      %2101 = vmatprep.subr.mxu0 0.0
      %2102 = vmatpush1.msra.mxu0 0.0
      %2103 = vmatprep.subr.mxu0 0.0
      %2104 = vmatpush1.msra.mxu0 0.0
      %2105 = vmatprep.subr.mxu0 0.0
      %2106 = vmatpush1.msra.mxu0 0.0
      %2107 = vmatprep.subr.mxu0 0.0
      %2108 = vmatpush1.msra.mxu0 0.0
      %2109 = vmatprep.subr.mxu0 0.0
      %2110 = vmatpush1.msra.mxu0 0.0
      %2111 = vmatprep.subr.mxu0 %v2079
      %2112 = vmatpush1.msra.mxu0 %v2076
      %2113 = vmatprep.subr.mxu0 0.0
      %2114 = vmatpush2.msra.mxu0 0.0
      %2115 = vmatprep.subr.mxu0 0.0
      %2116 = vmatpush2.msra.mxu0 0.0
      %2117 = vmatprep.subr.mxu0 0.0
      %2118 = vmatpush2.msra.mxu0 0.0
      %2119 = vmatprep.subr.mxu0 0.0
      %2120 = vmatpush2.msra.mxu0 0.0
      %2121 = vmatprep.subr.mxu0 0.0
      %2122 = vmatpush2.msra.mxu0 0.0
      %2123 = vmatprep.subr.mxu0 0.0
      %2124 = vmatpush2.msra.mxu0 0.0
      %2125 = vmatprep.subr.mxu0 0.0
      %2126 = vmatpush2.msra.mxu0 0.0
      %2127 = vmatprep.subr.mxu0 0.0
      %2128 = vmatpush2.msra.mxu0 0.0
      %2129 = vmatprep.subr.mxu0 0.0
      %2130 = vmatpush2.msra.mxu0 0.0
      %2131 = vmatprep.subr.mxu0 0.0
      %2132 = vmatpush2.msra.mxu0 0.0
      %2133 = vmatprep.subr.mxu0 0.0
      %2134 = vmatpush2.msra.mxu0 0.0
      %2135 = vmatprep.subr.mxu0 0.0
      %2136 = vmatpush2.msra.mxu0 0.0
      %2137 = vmatprep.subr.mxu0 0.0
      %2138 = vmatpush2.msra.mxu0 0.0
      %2139 = vmatprep.subr.mxu0 0.0
      %2140 = vmatpush2.msra.mxu0 0.0
      %2141 = vmatprep.subr.mxu0 0.0
      %2142 = vmatpush2.msra.mxu0 0.0
      %2143 = vmatprep.subr.mxu0 0.0
      %2144 = vmatpush2.msra.mxu0 0.0
      %2145 = vmatprep.mubr.f32.mxu0 0.0
      %2146 = vmatmul.mubr.f32.gmra.mxu0 %v2073
      %v2147 = vpop.f32.mrf.mxu0
      %v2148 = vadd.f32 0.0, %v2147
      %v2149 = vpop.f32.mrf.mxu0
      %v2150 = vadd.f32 0.0, %v2149
      %2151 = vdwg.mxu0
      %v2152 = vadd.f32 %v1997, %v2148
      %v2153 = vadd.f32 %v1998, %v2150
      %s2154 = scalar_lea.vmem %s1, 1536
      %v2155 = vld [vmem:[%s2154] sm:$0xff]
      %v2156 = vld [vmem:[%s2154 + $0x8] sm:$0xff]
      %v2157 = vld [vmem:[%s2154 + $0x10] sm:$0xff]
      %v2158 = vld [vmem:[%s2154 + $0x18] sm:$0xff]
      %v2159 = vld [vmem:[%s2154 + $0x20] sm:$0xff]
      %v2160 = vld [vmem:[%s2154 + $0x28] sm:$0xff]
      %v2161 = vld [vmem:[%s2154 + $0x30] sm:$0xff]
      %v2162 = vld [vmem:[%s2154 + $0x38] sm:$0xff]
      %v2163 = vld [vmem:[%s2154 + $0x40] sm:$0xff]
      %v2164 = vld [vmem:[%s2154 + $0x48] sm:$0xff]
      %v2165 = vld [vmem:[%s2154 + $0x50] sm:$0xff]
      %v2166 = vld [vmem:[%s2154 + $0x58] sm:$0xff]
      %v2167 = vld [vmem:[%s2154 + $0x60] sm:$0xff]
      %v2168 = vld [vmem:[%s2154 + $0x68] sm:$0xff]
      %v2169 = vld [vmem:[%s2154 + $0x70] sm:$0xff]
      %v2170 = vld [vmem:[%s2154 + $0x78] sm:$0xff]
      %v2171 = vld [vmem:[%s2154 + $0x80] sm:$0xff]
      %v2172 = vld [vmem:[%s2154 + $0x88] sm:$0xff]
      %v2173 = vld [vmem:[%s2154 + $0x90] sm:$0xff]
      %v2174 = vld [vmem:[%s2154 + $0x98] sm:$0xff]
      %v2175 = vld [vmem:[%s2154 + $0xa0] sm:$0xff]
      %v2176 = vld [vmem:[%s2154 + $0xa8] sm:$0xff]
      %v2177 = vld [vmem:[%s2154 + $0xb0] sm:$0xff]
      %v2178 = vld [vmem:[%s2154 + $0xb8] sm:$0xff]
      %v2179 = vld [vmem:[%s2154 + $0xc0] sm:$0xff]
      %v2180 = vld [vmem:[%s2154 + $0xc8] sm:$0xff]
      %v2181 = vld [vmem:[%s2154 + $0xd0] sm:$0xff]
      %v2182 = vld [vmem:[%s2154 + $0xd8] sm:$0xff]
      %v2183 = vld [vmem:[%s2154 + $0xe0] sm:$0xff]
      %v2184 = vld [vmem:[%s2154 + $0xe8] sm:$0xff]
      %v2185 = vld [vmem:[%s2154 + $0xf0] sm:$0xff]
      %v2186 = vld [vmem:[%s2154 + $0xf8] sm:$0xff]
      %v2187 = vld [vmem:[%s2154 + $0x100] sm:$0xff]
      %v2188 = vld [vmem:[%s2154 + $0x108] sm:$0xff]
      %v2189 = vld [vmem:[%s2154 + $0x110] sm:$0xff]
      %v2190 = vld [vmem:[%s2154 + $0x118] sm:$0xff]
      %v2191 = vld [vmem:[%s2154 + $0x120] sm:$0xff]
      %v2192 = vld [vmem:[%s2154 + $0x128] sm:$0xff]
      %v2193 = vld [vmem:[%s2154 + $0x130] sm:$0xff]
      %v2194 = vld [vmem:[%s2154 + $0x138] sm:$0xff]
      %v2195 = vld [vmem:[%s2154 + $0x140] sm:$0xff]
      %v2196 = vld [vmem:[%s2154 + $0x148] sm:$0xff]
      %v2197 = vld [vmem:[%s2154 + $0x150] sm:$0xff]
      %v2198 = vld [vmem:[%s2154 + $0x158] sm:$0xff]
      %v2199 = vld [vmem:[%s2154 + $0x160] sm:$0xff]
      %v2200 = vld [vmem:[%s2154 + $0x168] sm:$0xff]
      %v2201 = vld [vmem:[%s2154 + $0x170] sm:$0xff]
      %v2202 = vld [vmem:[%s2154 + $0x178] sm:$0xff]
      %v2203 = vld [vmem:[%s2154 + $0x180] sm:$0xff]
      %v2204 = vld [vmem:[%s2154 + $0x188] sm:$0xff]
      %v2205 = vld [vmem:[%s2154 + $0x190] sm:$0xff]
      %v2206 = vld [vmem:[%s2154 + $0x198] sm:$0xff]
      %v2207 = vld [vmem:[%s2154 + $0x1a0] sm:$0xff]
      %v2208 = vld [vmem:[%s2154 + $0x1a8] sm:$0xff]
      %v2209 = vld [vmem:[%s2154 + $0x1b0] sm:$0xff]
      %v2210 = vld [vmem:[%s2154 + $0x1b8] sm:$0xff]
      %v2211 = vld [vmem:[%s2154 + $0x1c0] sm:$0xff]
      %v2212 = vld [vmem:[%s2154 + $0x1c8] sm:$0xff]
      %v2213 = vld [vmem:[%s2154 + $0x1d0] sm:$0xff]
      %v2214 = vld [vmem:[%s2154 + $0x1d8] sm:$0xff]
      %v2215 = vld [vmem:[%s2154 + $0x1e0] sm:$0xff]
      %v2216 = vld [vmem:[%s2154 + $0x1e8] sm:$0xff]
      %v2217 = vld [vmem:[%s2154 + $0x1f0] sm:$0xff]
      %v2218 = vld [vmem:[%s2154 + $0x1f8] sm:$0xff]
      %2219 = vmatprep.subr.mxu0 %v2186
      %2220 = vmatpush1.msra.mxu0 %v2185
      %2221 = vmatprep.subr.mxu0 %v2184
      %2222 = vmatpush1.msra.mxu0 %v2183
      %2223 = vmatprep.subr.mxu0 %v2182
      %2224 = vmatpush1.msra.mxu0 %v2181
      %2225 = vmatprep.subr.mxu0 %v2180
      %2226 = vmatpush1.msra.mxu0 %v2179
      %2227 = vmatprep.subr.mxu0 %v2178
      %2228 = vmatpush1.msra.mxu0 %v2177
      %2229 = vmatprep.subr.mxu0 %v2176
      %2230 = vmatpush1.msra.mxu0 %v2175
      %2231 = vmatprep.subr.mxu0 %v2174
      %2232 = vmatpush1.msra.mxu0 %v2173
      %2233 = vmatprep.subr.mxu0 %v2172
      %2234 = vmatpush1.msra.mxu0 %v2171
      %2235 = vmatprep.subr.mxu0 %v2170
      %2236 = vmatpush1.msra.mxu0 %v2169
      %2237 = vmatprep.subr.mxu0 %v2168
      %2238 = vmatpush1.msra.mxu0 %v2167
      %2239 = vmatprep.subr.mxu0 %v2166
      %2240 = vmatpush1.msra.mxu0 %v2165
      %2241 = vmatprep.subr.mxu0 %v2164
      %2242 = vmatpush1.msra.mxu0 %v2163
      %2243 = vmatprep.subr.mxu0 %v2162
      %2244 = vmatpush1.msra.mxu0 %v2161
      %2245 = vmatprep.subr.mxu0 %v2160
      %2246 = vmatpush1.msra.mxu0 %v2159
      %2247 = vmatprep.subr.mxu0 %v2158
      %2248 = vmatpush1.msra.mxu0 %v2157
      %2249 = vmatprep.subr.mxu0 %v2156
      %2250 = vmatpush1.msra.mxu0 %v2155
      %2251 = vmatprep.subr.mxu0 %v2218
      %2252 = vmatpush2.msra.mxu0 %v2217
      %2253 = vmatprep.subr.mxu0 %v2216
      %2254 = vmatpush2.msra.mxu0 %v2215
      %2255 = vmatprep.subr.mxu0 %v2214
      %2256 = vmatpush2.msra.mxu0 %v2213
      %2257 = vmatprep.subr.mxu0 %v2212
      %2258 = vmatpush2.msra.mxu0 %v2211
      %2259 = vmatprep.subr.mxu0 %v2210
      %2260 = vmatpush2.msra.mxu0 %v2209
      %2261 = vmatprep.subr.mxu0 %v2208
      %2262 = vmatpush2.msra.mxu0 %v2207
      %2263 = vmatprep.subr.mxu0 %v2206
      %2264 = vmatpush2.msra.mxu0 %v2205
      %2265 = vmatprep.subr.mxu0 %v2204
      %2266 = vmatpush2.msra.mxu0 %v2203
      %2267 = vmatprep.subr.mxu0 %v2202
      %2268 = vmatpush2.msra.mxu0 %v2201
      %2269 = vmatprep.subr.mxu0 %v2200
      %2270 = vmatpush2.msra.mxu0 %v2199
      %2271 = vmatprep.subr.mxu0 %v2198
      %2272 = vmatpush2.msra.mxu0 %v2197
      %2273 = vmatprep.subr.mxu0 %v2196
      %2274 = vmatpush2.msra.mxu0 %v2195
      %2275 = vmatprep.subr.mxu0 %v2194
      %2276 = vmatpush2.msra.mxu0 %v2193
      %2277 = vmatprep.subr.mxu0 %v2192
      %2278 = vmatpush2.msra.mxu0 %v2191
      %2279 = vmatprep.subr.mxu0 %v2190
      %2280 = vmatpush2.msra.mxu0 %v2189
      %2281 = vmatprep.subr.mxu0 %v2188
      %2282 = vmatpush2.msra.mxu0 %v2187
      %2283 = vmatprep.mubr.f32.mxu0 %v466
      %2284 = vmatmul.mubr.f32.gmra.mxu0 %v394
      %v2285 = vpop.f32.mrf.mxu0
      %v2286 = vadd.f32 0.0, %v2285
      %v2287 = vpop.f32.mrf.mxu0
      %v2288 = vadd.f32 0.0, %v2287
      %2289 = vdwg.mxu0
      %s2290 = scalar_lea.vmem %s4, 80
      %v2291 = vld [vmem:[%s2290] sm:$0xff]
      %v2293 = vsel %vm616, %v2291, 0
      %v2296 = vsel %vm620, %v2286, 0
      %v2299 = vsel %vm620, %v2288, 0
      %2301 = vmatprep.subr.mxu0 0.0
      %2302 = vmatpush1.msra.mxu0 0.0
      %2303 = vmatprep.subr.mxu0 0.0
      %2304 = vmatpush1.msra.mxu0 0.0
      %2305 = vmatprep.subr.mxu0 0.0
      %2306 = vmatpush1.msra.mxu0 0.0
      %2307 = vmatprep.subr.mxu0 0.0
      %2308 = vmatpush1.msra.mxu0 0.0
      %2309 = vmatprep.subr.mxu0 0.0
      %2310 = vmatpush1.msra.mxu0 0.0
      %2311 = vmatprep.subr.mxu0 0.0
      %2312 = vmatpush1.msra.mxu0 0.0
      %2313 = vmatprep.subr.mxu0 0.0
      %2314 = vmatpush1.msra.mxu0 0.0
      %2315 = vmatprep.subr.mxu0 0.0
      %2316 = vmatpush1.msra.mxu0 0.0
      %2317 = vmatprep.subr.mxu0 0.0
      %2318 = vmatpush1.msra.mxu0 0.0
      %2319 = vmatprep.subr.mxu0 0.0
      %2320 = vmatpush1.msra.mxu0 0.0
      %2321 = vmatprep.subr.mxu0 0.0
      %2322 = vmatpush1.msra.mxu0 0.0
      %2323 = vmatprep.subr.mxu0 0.0
      %2324 = vmatpush1.msra.mxu0 0.0
      %2325 = vmatprep.subr.mxu0 0.0
      %2326 = vmatpush1.msra.mxu0 0.0
      %2327 = vmatprep.subr.mxu0 0.0
      %2328 = vmatpush1.msra.mxu0 0.0
      %2329 = vmatprep.subr.mxu0 0.0
      %2330 = vmatpush1.msra.mxu0 0.0
      %2331 = vmatprep.subr.mxu0 %v2299
      %2332 = vmatpush1.msra.mxu0 %v2296
      %2333 = vmatprep.subr.mxu0 0.0
      %2334 = vmatpush2.msra.mxu0 0.0
      %2335 = vmatprep.subr.mxu0 0.0
      %2336 = vmatpush2.msra.mxu0 0.0
      %2337 = vmatprep.subr.mxu0 0.0
      %2338 = vmatpush2.msra.mxu0 0.0
      %2339 = vmatprep.subr.mxu0 0.0
      %2340 = vmatpush2.msra.mxu0 0.0
      %2341 = vmatprep.subr.mxu0 0.0
      %2342 = vmatpush2.msra.mxu0 0.0
      %2343 = vmatprep.subr.mxu0 0.0
      %2344 = vmatpush2.msra.mxu0 0.0
      %2345 = vmatprep.subr.mxu0 0.0
      %2346 = vmatpush2.msra.mxu0 0.0
      %2347 = vmatprep.subr.mxu0 0.0
      %2348 = vmatpush2.msra.mxu0 0.0
      %2349 = vmatprep.subr.mxu0 0.0
      %2350 = vmatpush2.msra.mxu0 0.0
      %2351 = vmatprep.subr.mxu0 0.0
      %2352 = vmatpush2.msra.mxu0 0.0
      %2353 = vmatprep.subr.mxu0 0.0
      %2354 = vmatpush2.msra.mxu0 0.0
      %2355 = vmatprep.subr.mxu0 0.0
      %2356 = vmatpush2.msra.mxu0 0.0
      %2357 = vmatprep.subr.mxu0 0.0
      %2358 = vmatpush2.msra.mxu0 0.0
      %2359 = vmatprep.subr.mxu0 0.0
      %2360 = vmatpush2.msra.mxu0 0.0
      %2361 = vmatprep.subr.mxu0 0.0
      %2362 = vmatpush2.msra.mxu0 0.0
      %2363 = vmatprep.subr.mxu0 0.0
      %2364 = vmatpush2.msra.mxu0 0.0
      %2365 = vmatprep.mubr.f32.mxu0 0.0
      %2366 = vmatmul.mubr.f32.gmra.mxu0 %v2293
      %v2367 = vpop.f32.mrf.mxu0
      %v2368 = vadd.f32 0.0, %v2367
      %v2369 = vpop.f32.mrf.mxu0
      %v2370 = vadd.f32 0.0, %v2369
      %2371 = vdwg.mxu0
      %v2372 = vadd.f32 %v2152, %v2368
      %v2373 = vadd.f32 %v2153, %v2370
      %2374 = vmatprep.subr.mxu0 %v2186
      %2375 = vmatpush1.msra.mxu0 %v2185
      %2376 = vmatprep.subr.mxu0 %v2184
      %2377 = vmatpush1.msra.mxu0 %v2183
      %2378 = vmatprep.subr.mxu0 %v2182
      %2379 = vmatpush1.msra.mxu0 %v2181
      %2380 = vmatprep.subr.mxu0 %v2180
      %2381 = vmatpush1.msra.mxu0 %v2179
      %2382 = vmatprep.subr.mxu0 %v2178
      %2383 = vmatpush1.msra.mxu0 %v2177
      %2384 = vmatprep.subr.mxu0 %v2176
      %2385 = vmatpush1.msra.mxu0 %v2175
      %2386 = vmatprep.subr.mxu0 %v2174
      %2387 = vmatpush1.msra.mxu0 %v2173
      %2388 = vmatprep.subr.mxu0 %v2172
      %2389 = vmatpush1.msra.mxu0 %v2171
      %2390 = vmatprep.subr.mxu0 %v2170
      %2391 = vmatpush1.msra.mxu0 %v2169
      %2392 = vmatprep.subr.mxu0 %v2168
      %2393 = vmatpush1.msra.mxu0 %v2167
      %2394 = vmatprep.subr.mxu0 %v2166
      %2395 = vmatpush1.msra.mxu0 %v2165
      %2396 = vmatprep.subr.mxu0 %v2164
      %2397 = vmatpush1.msra.mxu0 %v2163
      %2398 = vmatprep.subr.mxu0 %v2162
      %2399 = vmatpush1.msra.mxu0 %v2161
      %2400 = vmatprep.subr.mxu0 %v2160
      %2401 = vmatpush1.msra.mxu0 %v2159
      %2402 = vmatprep.subr.mxu0 %v2158
      %2403 = vmatpush1.msra.mxu0 %v2157
      %2404 = vmatprep.subr.mxu0 %v2156
      %2405 = vmatpush1.msra.mxu0 %v2155
      %2406 = vmatprep.subr.mxu0 %v2218
      %2407 = vmatpush2.msra.mxu0 %v2217
      %2408 = vmatprep.subr.mxu0 %v2216
      %2409 = vmatpush2.msra.mxu0 %v2215
      %2410 = vmatprep.subr.mxu0 %v2214
      %2411 = vmatpush2.msra.mxu0 %v2213
      %2412 = vmatprep.subr.mxu0 %v2212
      %2413 = vmatpush2.msra.mxu0 %v2211
      %2414 = vmatprep.subr.mxu0 %v2210
      %2415 = vmatpush2.msra.mxu0 %v2209
      %2416 = vmatprep.subr.mxu0 %v2208
      %2417 = vmatpush2.msra.mxu0 %v2207
      %2418 = vmatprep.subr.mxu0 %v2206
      %2419 = vmatpush2.msra.mxu0 %v2205
      %2420 = vmatprep.subr.mxu0 %v2204
      %2421 = vmatpush2.msra.mxu0 %v2203
      %2422 = vmatprep.subr.mxu0 %v2202
      %2423 = vmatpush2.msra.mxu0 %v2201
      %2424 = vmatprep.subr.mxu0 %v2200
      %2425 = vmatpush2.msra.mxu0 %v2199
      %2426 = vmatprep.subr.mxu0 %v2198
      %2427 = vmatpush2.msra.mxu0 %v2197
      %2428 = vmatprep.subr.mxu0 %v2196
      %2429 = vmatpush2.msra.mxu0 %v2195
      %2430 = vmatprep.subr.mxu0 %v2194
      %2431 = vmatpush2.msra.mxu0 %v2193
      %2432 = vmatprep.subr.mxu0 %v2192
      %2433 = vmatpush2.msra.mxu0 %v2191
      %2434 = vmatprep.subr.mxu0 %v2190
      %2435 = vmatpush2.msra.mxu0 %v2189
      %2436 = vmatprep.subr.mxu0 %v2188
      %2437 = vmatpush2.msra.mxu0 %v2187
      %2438 = vmatprep.mubr.f32.mxu0 %v541
      %2439 = vmatmul.mubr.f32.gmra.mxu0 %v396
      %v2440 = vpop.f32.mrf.mxu0
      %v2441 = vadd.f32 0.0, %v2440
      %v2442 = vpop.f32.mrf.mxu0
      %v2443 = vadd.f32 0.0, %v2442
      %2444 = vdwg.mxu0
      %s2445 = scalar_lea.vmem %s4, 88
      %v2446 = vld [vmem:[%s2445] sm:$0xff]
      %v2448 = vsel %vm616, %v2446, 0
      %v2451 = vsel %vm620, %v2441, 0
      %v2454 = vsel %vm620, %v2443, 0
      %2456 = vmatprep.subr.mxu0 0.0
      %2457 = vmatpush1.msra.mxu0 0.0
      %2458 = vmatprep.subr.mxu0 0.0
      %2459 = vmatpush1.msra.mxu0 0.0
      %2460 = vmatprep.subr.mxu0 0.0
      %2461 = vmatpush1.msra.mxu0 0.0
      %2462 = vmatprep.subr.mxu0 0.0
      %2463 = vmatpush1.msra.mxu0 0.0
      %2464 = vmatprep.subr.mxu0 0.0
      %2465 = vmatpush1.msra.mxu0 0.0
      %2466 = vmatprep.subr.mxu0 0.0
      %2467 = vmatpush1.msra.mxu0 0.0
      %2468 = vmatprep.subr.mxu0 0.0
      %2469 = vmatpush1.msra.mxu0 0.0
      %2470 = vmatprep.subr.mxu0 0.0
      %2471 = vmatpush1.msra.mxu0 0.0
      %2472 = vmatprep.subr.mxu0 0.0
      %2473 = vmatpush1.msra.mxu0 0.0
      %2474 = vmatprep.subr.mxu0 0.0
      %2475 = vmatpush1.msra.mxu0 0.0
      %2476 = vmatprep.subr.mxu0 0.0
      %2477 = vmatpush1.msra.mxu0 0.0
      %2478 = vmatprep.subr.mxu0 0.0
      %2479 = vmatpush1.msra.mxu0 0.0
      %2480 = vmatprep.subr.mxu0 0.0
      %2481 = vmatpush1.msra.mxu0 0.0
      %2482 = vmatprep.subr.mxu0 0.0
      %2483 = vmatpush1.msra.mxu0 0.0
      %2484 = vmatprep.subr.mxu0 0.0
      %2485 = vmatpush1.msra.mxu0 0.0
      %2486 = vmatprep.subr.mxu0 %v2454
      %2487 = vmatpush1.msra.mxu0 %v2451
      %2488 = vmatprep.subr.mxu0 0.0
      %2489 = vmatpush2.msra.mxu0 0.0
      %2490 = vmatprep.subr.mxu0 0.0
      %2491 = vmatpush2.msra.mxu0 0.0
      %2492 = vmatprep.subr.mxu0 0.0
      %2493 = vmatpush2.msra.mxu0 0.0
      %2494 = vmatprep.subr.mxu0 0.0
      %2495 = vmatpush2.msra.mxu0 0.0
      %2496 = vmatprep.subr.mxu0 0.0
      %2497 = vmatpush2.msra.mxu0 0.0
      %2498 = vmatprep.subr.mxu0 0.0
      %2499 = vmatpush2.msra.mxu0 0.0
      %2500 = vmatprep.subr.mxu0 0.0
      %2501 = vmatpush2.msra.mxu0 0.0
      %2502 = vmatprep.subr.mxu0 0.0
      %2503 = vmatpush2.msra.mxu0 0.0
      %2504 = vmatprep.subr.mxu0 0.0
      %2505 = vmatpush2.msra.mxu0 0.0
      %2506 = vmatprep.subr.mxu0 0.0
      %2507 = vmatpush2.msra.mxu0 0.0
      %2508 = vmatprep.subr.mxu0 0.0
      %2509 = vmatpush2.msra.mxu0 0.0
      %2510 = vmatprep.subr.mxu0 0.0
      %2511 = vmatpush2.msra.mxu0 0.0
      %2512 = vmatprep.subr.mxu0 0.0
      %2513 = vmatpush2.msra.mxu0 0.0
      %2514 = vmatprep.subr.mxu0 0.0
      %2515 = vmatpush2.msra.mxu0 0.0
      %2516 = vmatprep.subr.mxu0 0.0
      %2517 = vmatpush2.msra.mxu0 0.0
      %2518 = vmatprep.subr.mxu0 0.0
      %2519 = vmatpush2.msra.mxu0 0.0
      %2520 = vmatprep.mubr.f32.mxu0 0.0
      %2521 = vmatmul.mubr.f32.gmra.mxu0 %v2448
      %v2522 = vpop.f32.mrf.mxu0
      %v2523 = vadd.f32 0.0, %v2522
      %v2524 = vpop.f32.mrf.mxu0
      %v2525 = vadd.f32 0.0, %v2524
      %2526 = vdwg.mxu0
      %v2527 = vadd.f32 %v2372, %v2523
      %v2528 = vadd.f32 %v2373, %v2525
      %2529 = vmatprep.subr.mxu0 %v1811
      %2530 = vmatpush1.msra.mxu0 %v1810
      %2531 = vmatprep.subr.mxu0 %v1809
      %2532 = vmatpush1.msra.mxu0 %v1808
      %2533 = vmatprep.subr.mxu0 %v1807
      %2534 = vmatpush1.msra.mxu0 %v1806
      %2535 = vmatprep.subr.mxu0 %v1805
      %2536 = vmatpush1.msra.mxu0 %v1804
      %2537 = vmatprep.subr.mxu0 %v1803
      %2538 = vmatpush1.msra.mxu0 %v1802
      %2539 = vmatprep.subr.mxu0 %v1801
      %2540 = vmatpush1.msra.mxu0 %v1800
      %2541 = vmatprep.subr.mxu0 %v1799
      %2542 = vmatpush1.msra.mxu0 %v1798
      %2543 = vmatprep.subr.mxu0 %v1797
      %2544 = vmatpush1.msra.mxu0 %v1796
      %2545 = vmatprep.subr.mxu0 %v1795
      %2546 = vmatpush1.msra.mxu0 %v1794
      %2547 = vmatprep.subr.mxu0 %v1793
      %2548 = vmatpush1.msra.mxu0 %v1792
      %2549 = vmatprep.subr.mxu0 %v1791
      %2550 = vmatpush1.msra.mxu0 %v1790
      %2551 = vmatprep.subr.mxu0 %v1789
      %2552 = vmatpush1.msra.mxu0 %v1788
      %2553 = vmatprep.subr.mxu0 %v1787
      %2554 = vmatpush1.msra.mxu0 %v1786
      %2555 = vmatprep.subr.mxu0 %v1785
      %2556 = vmatpush1.msra.mxu0 %v1784
      %2557 = vmatprep.subr.mxu0 %v1783
      %2558 = vmatpush1.msra.mxu0 %v1782
      %2559 = vmatprep.subr.mxu0 %v1781
      %2560 = vmatpush1.msra.mxu0 %v1780
      %2561 = vmatprep.subr.mxu0 %v1843
      %2562 = vmatpush2.msra.mxu0 %v1842
      %2563 = vmatprep.subr.mxu0 %v1841
      %2564 = vmatpush2.msra.mxu0 %v1840
      %2565 = vmatprep.subr.mxu0 %v1839
      %2566 = vmatpush2.msra.mxu0 %v1838
      %2567 = vmatprep.subr.mxu0 %v1837
      %2568 = vmatpush2.msra.mxu0 %v1836
      %2569 = vmatprep.subr.mxu0 %v1835
      %2570 = vmatpush2.msra.mxu0 %v1834
      %2571 = vmatprep.subr.mxu0 %v1833
      %2572 = vmatpush2.msra.mxu0 %v1832
      %2573 = vmatprep.subr.mxu0 %v1831
      %2574 = vmatpush2.msra.mxu0 %v1830
      %2575 = vmatprep.subr.mxu0 %v1829
      %2576 = vmatpush2.msra.mxu0 %v1828
      %2577 = vmatprep.subr.mxu0 %v1827
      %2578 = vmatpush2.msra.mxu0 %v1826
      %2579 = vmatprep.subr.mxu0 %v1825
      %2580 = vmatpush2.msra.mxu0 %v1824
      %2581 = vmatprep.subr.mxu0 %v1823
      %2582 = vmatpush2.msra.mxu0 %v1822
      %2583 = vmatprep.subr.mxu0 %v1821
      %2584 = vmatpush2.msra.mxu0 %v1820
      %2585 = vmatprep.subr.mxu0 %v1819
      %2586 = vmatpush2.msra.mxu0 %v1818
      %2587 = vmatprep.subr.mxu0 %v1817
      %2588 = vmatpush2.msra.mxu0 %v1816
      %2589 = vmatprep.subr.mxu0 %v1815
      %2590 = vmatpush2.msra.mxu0 %v1814
      %2591 = vmatprep.subr.mxu0 %v1813
      %2592 = vmatpush2.msra.mxu0 %v1812
      %2593 = vmatprep.mubr.f32.mxu0 %v1154
      %2594 = vmatmul.mubr.f32.gmra.mxu0 %v398
      %v2595 = vpop.f32.mrf.mxu0
      %v2596 = vadd.f32 0.0, %v2595
      %v2597 = vpop.f32.mrf.mxu0
      %v2598 = vadd.f32 0.0, %v2597
      %2599 = vdwg.mxu0
      %s2600 = scalar_lea.vmem %s4, 96
      %v2601 = vld [vmem:[%s2600] sm:$0xff]
      %v2603 = vsel %vm616, %v2601, 0
      %v2606 = vsel %vm620, %v2596, 0
      %v2609 = vsel %vm620, %v2598, 0
      %2611 = vmatprep.subr.mxu0 0.0
      %2612 = vmatpush1.msra.mxu0 0.0
      %2613 = vmatprep.subr.mxu0 0.0
      %2614 = vmatpush1.msra.mxu0 0.0
      %2615 = vmatprep.subr.mxu0 0.0
      %2616 = vmatpush1.msra.mxu0 0.0
      %2617 = vmatprep.subr.mxu0 0.0
      %2618 = vmatpush1.msra.mxu0 0.0
      %2619 = vmatprep.subr.mxu0 0.0
      %2620 = vmatpush1.msra.mxu0 0.0
      %2621 = vmatprep.subr.mxu0 0.0
      %2622 = vmatpush1.msra.mxu0 0.0
      %2623 = vmatprep.subr.mxu0 0.0
      %2624 = vmatpush1.msra.mxu0 0.0
      %2625 = vmatprep.subr.mxu0 0.0
      %2626 = vmatpush1.msra.mxu0 0.0
      %2627 = vmatprep.subr.mxu0 0.0
      %2628 = vmatpush1.msra.mxu0 0.0
      %2629 = vmatprep.subr.mxu0 0.0
      %2630 = vmatpush1.msra.mxu0 0.0
      %2631 = vmatprep.subr.mxu0 0.0
      %2632 = vmatpush1.msra.mxu0 0.0
      %2633 = vmatprep.subr.mxu0 0.0
      %2634 = vmatpush1.msra.mxu0 0.0
      %2635 = vmatprep.subr.mxu0 0.0
      %2636 = vmatpush1.msra.mxu0 0.0
      %2637 = vmatprep.subr.mxu0 0.0
      %2638 = vmatpush1.msra.mxu0 0.0
      %2639 = vmatprep.subr.mxu0 0.0
      %2640 = vmatpush1.msra.mxu0 0.0
      %2641 = vmatprep.subr.mxu0 %v2609
      %2642 = vmatpush1.msra.mxu0 %v2606
      %2643 = vmatprep.subr.mxu0 0.0
      %2644 = vmatpush2.msra.mxu0 0.0
      %2645 = vmatprep.subr.mxu0 0.0
      %2646 = vmatpush2.msra.mxu0 0.0
      %2647 = vmatprep.subr.mxu0 0.0
      %2648 = vmatpush2.msra.mxu0 0.0
      %2649 = vmatprep.subr.mxu0 0.0
      %2650 = vmatpush2.msra.mxu0 0.0
      %2651 = vmatprep.subr.mxu0 0.0
      %2652 = vmatpush2.msra.mxu0 0.0
      %2653 = vmatprep.subr.mxu0 0.0
      %2654 = vmatpush2.msra.mxu0 0.0
      %2655 = vmatprep.subr.mxu0 0.0
      %2656 = vmatpush2.msra.mxu0 0.0
      %2657 = vmatprep.subr.mxu0 0.0
      %2658 = vmatpush2.msra.mxu0 0.0
      %2659 = vmatprep.subr.mxu0 0.0
      %2660 = vmatpush2.msra.mxu0 0.0
      %2661 = vmatprep.subr.mxu0 0.0
      %2662 = vmatpush2.msra.mxu0 0.0
      %2663 = vmatprep.subr.mxu0 0.0
      %2664 = vmatpush2.msra.mxu0 0.0
      %2665 = vmatprep.subr.mxu0 0.0
      %2666 = vmatpush2.msra.mxu0 0.0
      %2667 = vmatprep.subr.mxu0 0.0
      %2668 = vmatpush2.msra.mxu0 0.0
      %2669 = vmatprep.subr.mxu0 0.0
      %2670 = vmatpush2.msra.mxu0 0.0
      %2671 = vmatprep.subr.mxu0 0.0
      %2672 = vmatpush2.msra.mxu0 0.0
      %2673 = vmatprep.subr.mxu0 0.0
      %2674 = vmatpush2.msra.mxu0 0.0
      %2675 = vmatprep.mubr.f32.mxu0 0.0
      %2676 = vmatmul.mubr.f32.gmra.mxu0 %v2603
      %v2677 = vpop.f32.mrf.mxu0
      %v2678 = vadd.f32 0.0, %v2677
      %v2679 = vpop.f32.mrf.mxu0
      %v2680 = vadd.f32 0.0, %v2679
      %2681 = vdwg.mxu0
      %v2682 = vadd.f32 %v2527, %v2678
      %v2683 = vadd.f32 %v2528, %v2680
      %2684 = vmatprep.subr.mxu0 %v1811
      %2685 = vmatpush1.msra.mxu0 %v1810
      %2686 = vmatprep.subr.mxu0 %v1809
      %2687 = vmatpush1.msra.mxu0 %v1808
      %2688 = vmatprep.subr.mxu0 %v1807
      %2689 = vmatpush1.msra.mxu0 %v1806
      %2690 = vmatprep.subr.mxu0 %v1805
      %2691 = vmatpush1.msra.mxu0 %v1804
      %2692 = vmatprep.subr.mxu0 %v1803
      %2693 = vmatpush1.msra.mxu0 %v1802
      %2694 = vmatprep.subr.mxu0 %v1801
      %2695 = vmatpush1.msra.mxu0 %v1800
      %2696 = vmatprep.subr.mxu0 %v1799
      %2697 = vmatpush1.msra.mxu0 %v1798
      %2698 = vmatprep.subr.mxu0 %v1797
      %2699 = vmatpush1.msra.mxu0 %v1796
      %2700 = vmatprep.subr.mxu0 %v1795
      %2701 = vmatpush1.msra.mxu0 %v1794
      %2702 = vmatprep.subr.mxu0 %v1793
      %2703 = vmatpush1.msra.mxu0 %v1792
      %2704 = vmatprep.subr.mxu0 %v1791
      %2705 = vmatpush1.msra.mxu0 %v1790
      %2706 = vmatprep.subr.mxu0 %v1789
      %2707 = vmatpush1.msra.mxu0 %v1788
      %2708 = vmatprep.subr.mxu0 %v1787
      %2709 = vmatpush1.msra.mxu0 %v1786
      %2710 = vmatprep.subr.mxu0 %v1785
      %2711 = vmatpush1.msra.mxu0 %v1784
      %2712 = vmatprep.subr.mxu0 %v1783
      %2713 = vmatpush1.msra.mxu0 %v1782
      %2714 = vmatprep.subr.mxu0 %v1781
      %2715 = vmatpush1.msra.mxu0 %v1780
      %2716 = vmatprep.subr.mxu0 %v1843
      %2717 = vmatpush2.msra.mxu0 %v1842
      %2718 = vmatprep.subr.mxu0 %v1841
      %2719 = vmatpush2.msra.mxu0 %v1840
      %2720 = vmatprep.subr.mxu0 %v1839
      %2721 = vmatpush2.msra.mxu0 %v1838
      %2722 = vmatprep.subr.mxu0 %v1837
      %2723 = vmatpush2.msra.mxu0 %v1836
      %2724 = vmatprep.subr.mxu0 %v1835
      %2725 = vmatpush2.msra.mxu0 %v1834
      %2726 = vmatprep.subr.mxu0 %v1833
      %2727 = vmatpush2.msra.mxu0 %v1832
      %2728 = vmatprep.subr.mxu0 %v1831
      %2729 = vmatpush2.msra.mxu0 %v1830
      %2730 = vmatprep.subr.mxu0 %v1829
      %2731 = vmatpush2.msra.mxu0 %v1828
      %2732 = vmatprep.subr.mxu0 %v1827
      %2733 = vmatpush2.msra.mxu0 %v1826
      %2734 = vmatprep.subr.mxu0 %v1825
      %2735 = vmatpush2.msra.mxu0 %v1824
      %2736 = vmatprep.subr.mxu0 %v1823
      %2737 = vmatpush2.msra.mxu0 %v1822
      %2738 = vmatprep.subr.mxu0 %v1821
      %2739 = vmatpush2.msra.mxu0 %v1820
      %2740 = vmatprep.subr.mxu0 %v1819
      %2741 = vmatpush2.msra.mxu0 %v1818
      %2742 = vmatprep.subr.mxu0 %v1817
      %2743 = vmatpush2.msra.mxu0 %v1816
      %2744 = vmatprep.subr.mxu0 %v1815
      %2745 = vmatpush2.msra.mxu0 %v1814
      %2746 = vmatprep.subr.mxu0 %v1813
      %2747 = vmatpush2.msra.mxu0 %v1812
      %2748 = vmatprep.mubr.f32.mxu0 %v1312
      %2749 = vmatmul.mubr.f32.gmra.mxu0 %v400
      %v2750 = vpop.f32.mrf.mxu0
      %v2751 = vadd.f32 0.0, %v2750
      %v2752 = vpop.f32.mrf.mxu0
      %v2753 = vadd.f32 0.0, %v2752
      %2754 = vdwg.mxu0
      %s2755 = scalar_lea.vmem %s4, 104
      %v2756 = vld [vmem:[%s2755] sm:$0xff]
      %v2758 = vsel %vm616, %v2756, 0
      %v2761 = vsel %vm620, %v2751, 0
      %v2764 = vsel %vm620, %v2753, 0
      %2766 = vmatprep.subr.mxu0 0.0
      %2767 = vmatpush1.msra.mxu0 0.0
      %2768 = vmatprep.subr.mxu0 0.0
      %2769 = vmatpush1.msra.mxu0 0.0
      %2770 = vmatprep.subr.mxu0 0.0
      %2771 = vmatpush1.msra.mxu0 0.0
      %2772 = vmatprep.subr.mxu0 0.0
      %2773 = vmatpush1.msra.mxu0 0.0
      %2774 = vmatprep.subr.mxu0 0.0
      %2775 = vmatpush1.msra.mxu0 0.0
      %2776 = vmatprep.subr.mxu0 0.0
      %2777 = vmatpush1.msra.mxu0 0.0
      %2778 = vmatprep.subr.mxu0 0.0
      %2779 = vmatpush1.msra.mxu0 0.0
      %2780 = vmatprep.subr.mxu0 0.0
      %2781 = vmatpush1.msra.mxu0 0.0
      %2782 = vmatprep.subr.mxu0 0.0
      %2783 = vmatpush1.msra.mxu0 0.0
      %2784 = vmatprep.subr.mxu0 0.0
      %2785 = vmatpush1.msra.mxu0 0.0
      %2786 = vmatprep.subr.mxu0 0.0
      %2787 = vmatpush1.msra.mxu0 0.0
      %2788 = vmatprep.subr.mxu0 0.0
      %2789 = vmatpush1.msra.mxu0 0.0
      %2790 = vmatprep.subr.mxu0 0.0
      %2791 = vmatpush1.msra.mxu0 0.0
      %2792 = vmatprep.subr.mxu0 0.0
      %2793 = vmatpush1.msra.mxu0 0.0
      %2794 = vmatprep.subr.mxu0 0.0
      %2795 = vmatpush1.msra.mxu0 0.0
      %2796 = vmatprep.subr.mxu0 %v2764
      %2797 = vmatpush1.msra.mxu0 %v2761
      %2798 = vmatprep.subr.mxu0 0.0
      %2799 = vmatpush2.msra.mxu0 0.0
      %2800 = vmatprep.subr.mxu0 0.0
      %2801 = vmatpush2.msra.mxu0 0.0
      %2802 = vmatprep.subr.mxu0 0.0
      %2803 = vmatpush2.msra.mxu0 0.0
      %2804 = vmatprep.subr.mxu0 0.0
      %2805 = vmatpush2.msra.mxu0 0.0
      %2806 = vmatprep.subr.mxu0 0.0
      %2807 = vmatpush2.msra.mxu0 0.0
      %2808 = vmatprep.subr.mxu0 0.0
      %2809 = vmatpush2.msra.mxu0 0.0
      %2810 = vmatprep.subr.mxu0 0.0
      %2811 = vmatpush2.msra.mxu0 0.0
      %2812 = vmatprep.subr.mxu0 0.0
      %2813 = vmatpush2.msra.mxu0 0.0
      %2814 = vmatprep.subr.mxu0 0.0
      %2815 = vmatpush2.msra.mxu0 0.0
      %2816 = vmatprep.subr.mxu0 0.0
      %2817 = vmatpush2.msra.mxu0 0.0
      %2818 = vmatprep.subr.mxu0 0.0
      %2819 = vmatpush2.msra.mxu0 0.0
      %2820 = vmatprep.subr.mxu0 0.0
      %2821 = vmatpush2.msra.mxu0 0.0
      %2822 = vmatprep.subr.mxu0 0.0
      %2823 = vmatpush2.msra.mxu0 0.0
      %2824 = vmatprep.subr.mxu0 0.0
      %2825 = vmatpush2.msra.mxu0 0.0
      %2826 = vmatprep.subr.mxu0 0.0
      %2827 = vmatpush2.msra.mxu0 0.0
      %2828 = vmatprep.subr.mxu0 0.0
      %2829 = vmatpush2.msra.mxu0 0.0
      %2830 = vmatprep.mubr.f32.mxu0 0.0
      %2831 = vmatmul.mubr.f32.gmra.mxu0 %v2758
      %v2832 = vpop.f32.mrf.mxu0
      %v2833 = vadd.f32 0.0, %v2832
      %v2834 = vpop.f32.mrf.mxu0
      %v2835 = vadd.f32 0.0, %v2834
      %2836 = vdwg.mxu0
      %v2837 = vadd.f32 %v2682, %v2833
      %v2838 = vadd.f32 %v2683, %v2835
      %2839 = vmatprep.subr.mxu0 %v2186
      %2840 = vmatpush1.msra.mxu0 %v2185
      %2841 = vmatprep.subr.mxu0 %v2184
      %2842 = vmatpush1.msra.mxu0 %v2183
      %2843 = vmatprep.subr.mxu0 %v2182
      %2844 = vmatpush1.msra.mxu0 %v2181
      %2845 = vmatprep.subr.mxu0 %v2180
      %2846 = vmatpush1.msra.mxu0 %v2179
      %2847 = vmatprep.subr.mxu0 %v2178
      %2848 = vmatpush1.msra.mxu0 %v2177
      %2849 = vmatprep.subr.mxu0 %v2176
      %2850 = vmatpush1.msra.mxu0 %v2175
      %2851 = vmatprep.subr.mxu0 %v2174
      %2852 = vmatpush1.msra.mxu0 %v2173
      %2853 = vmatprep.subr.mxu0 %v2172
      %2854 = vmatpush1.msra.mxu0 %v2171
      %2855 = vmatprep.subr.mxu0 %v2170
      %2856 = vmatpush1.msra.mxu0 %v2169
      %2857 = vmatprep.subr.mxu0 %v2168
      %2858 = vmatpush1.msra.mxu0 %v2167
      %2859 = vmatprep.subr.mxu0 %v2166
      %2860 = vmatpush1.msra.mxu0 %v2165
      %2861 = vmatprep.subr.mxu0 %v2164
      %2862 = vmatpush1.msra.mxu0 %v2163
      %2863 = vmatprep.subr.mxu0 %v2162
      %2864 = vmatpush1.msra.mxu0 %v2161
      %2865 = vmatprep.subr.mxu0 %v2160
      %2866 = vmatpush1.msra.mxu0 %v2159
      %2867 = vmatprep.subr.mxu0 %v2158
      %2868 = vmatpush1.msra.mxu0 %v2157
      %2869 = vmatprep.subr.mxu0 %v2156
      %2870 = vmatpush1.msra.mxu0 %v2155
      %2871 = vmatprep.subr.mxu0 %v2218
      %2872 = vmatpush2.msra.mxu0 %v2217
      %2873 = vmatprep.subr.mxu0 %v2216
      %2874 = vmatpush2.msra.mxu0 %v2215
      %2875 = vmatprep.subr.mxu0 %v2214
      %2876 = vmatpush2.msra.mxu0 %v2213
      %2877 = vmatprep.subr.mxu0 %v2212
      %2878 = vmatpush2.msra.mxu0 %v2211
      %2879 = vmatprep.subr.mxu0 %v2210
      %2880 = vmatpush2.msra.mxu0 %v2209
      %2881 = vmatprep.subr.mxu0 %v2208
      %2882 = vmatpush2.msra.mxu0 %v2207
      %2883 = vmatprep.subr.mxu0 %v2206
      %2884 = vmatpush2.msra.mxu0 %v2205
      %2885 = vmatprep.subr.mxu0 %v2204
      %2886 = vmatpush2.msra.mxu0 %v2203
      %2887 = vmatprep.subr.mxu0 %v2202
      %2888 = vmatpush2.msra.mxu0 %v2201
      %2889 = vmatprep.subr.mxu0 %v2200
      %2890 = vmatpush2.msra.mxu0 %v2199
      %2891 = vmatprep.subr.mxu0 %v2198
      %2892 = vmatpush2.msra.mxu0 %v2197
      %2893 = vmatprep.subr.mxu0 %v2196
      %2894 = vmatpush2.msra.mxu0 %v2195
      %2895 = vmatprep.subr.mxu0 %v2194
      %2896 = vmatpush2.msra.mxu0 %v2193
      %2897 = vmatprep.subr.mxu0 %v2192
      %2898 = vmatpush2.msra.mxu0 %v2191
      %2899 = vmatprep.subr.mxu0 %v2190
      %2900 = vmatpush2.msra.mxu0 %v2189
      %2901 = vmatprep.subr.mxu0 %v2188
      %2902 = vmatpush2.msra.mxu0 %v2187
      %2903 = vmatprep.mubr.f32.mxu0 %v1154
      %2904 = vmatmul.mubr.f32.gmra.mxu0 %v398
      %v2905 = vpop.f32.mrf.mxu0
      %v2906 = vadd.f32 0.0, %v2905
      %v2907 = vpop.f32.mrf.mxu0
      %v2908 = vadd.f32 0.0, %v2907
      %2909 = vdwg.mxu0
      %s2910 = scalar_lea.vmem %s4, 112
      %v2911 = vld [vmem:[%s2910] sm:$0xff]
      %v2913 = vsel %vm616, %v2911, 0
      %v2916 = vsel %vm620, %v2906, 0
      %v2919 = vsel %vm620, %v2908, 0
      %2921 = vmatprep.subr.mxu0 0.0
      %2922 = vmatpush1.msra.mxu0 0.0
      %2923 = vmatprep.subr.mxu0 0.0
      %2924 = vmatpush1.msra.mxu0 0.0
      %2925 = vmatprep.subr.mxu0 0.0
      %2926 = vmatpush1.msra.mxu0 0.0
      %2927 = vmatprep.subr.mxu0 0.0
      %2928 = vmatpush1.msra.mxu0 0.0
      %2929 = vmatprep.subr.mxu0 0.0
      %2930 = vmatpush1.msra.mxu0 0.0
      %2931 = vmatprep.subr.mxu0 0.0
      %2932 = vmatpush1.msra.mxu0 0.0
      %2933 = vmatprep.subr.mxu0 0.0
      %2934 = vmatpush1.msra.mxu0 0.0
      %2935 = vmatprep.subr.mxu0 0.0
      %2936 = vmatpush1.msra.mxu0 0.0
      %2937 = vmatprep.subr.mxu0 0.0
      %2938 = vmatpush1.msra.mxu0 0.0
      %2939 = vmatprep.subr.mxu0 0.0
      %2940 = vmatpush1.msra.mxu0 0.0
      %2941 = vmatprep.subr.mxu0 0.0
      %2942 = vmatpush1.msra.mxu0 0.0
      %2943 = vmatprep.subr.mxu0 0.0
      %2944 = vmatpush1.msra.mxu0 0.0
      %2945 = vmatprep.subr.mxu0 0.0
      %2946 = vmatpush1.msra.mxu0 0.0
      %2947 = vmatprep.subr.mxu0 0.0
      %2948 = vmatpush1.msra.mxu0 0.0
      %2949 = vmatprep.subr.mxu0 0.0
      %2950 = vmatpush1.msra.mxu0 0.0
      %2951 = vmatprep.subr.mxu0 %v2919
      %2952 = vmatpush1.msra.mxu0 %v2916
      %2953 = vmatprep.subr.mxu0 0.0
      %2954 = vmatpush2.msra.mxu0 0.0
      %2955 = vmatprep.subr.mxu0 0.0
      %2956 = vmatpush2.msra.mxu0 0.0
      %2957 = vmatprep.subr.mxu0 0.0
      %2958 = vmatpush2.msra.mxu0 0.0
      %2959 = vmatprep.subr.mxu0 0.0
      %2960 = vmatpush2.msra.mxu0 0.0
      %2961 = vmatprep.subr.mxu0 0.0
      %2962 = vmatpush2.msra.mxu0 0.0
      %2963 = vmatprep.subr.mxu0 0.0
      %2964 = vmatpush2.msra.mxu0 0.0
      %2965 = vmatprep.subr.mxu0 0.0
      %2966 = vmatpush2.msra.mxu0 0.0
      %2967 = vmatprep.subr.mxu0 0.0
      %2968 = vmatpush2.msra.mxu0 0.0
      %2969 = vmatprep.subr.mxu0 0.0
      %2970 = vmatpush2.msra.mxu0 0.0
      %2971 = vmatprep.subr.mxu0 0.0
      %2972 = vmatpush2.msra.mxu0 0.0
      %2973 = vmatprep.subr.mxu0 0.0
      %2974 = vmatpush2.msra.mxu0 0.0
      %2975 = vmatprep.subr.mxu0 0.0
      %2976 = vmatpush2.msra.mxu0 0.0
      %2977 = vmatprep.subr.mxu0 0.0
      %2978 = vmatpush2.msra.mxu0 0.0
      %2979 = vmatprep.subr.mxu0 0.0
      %2980 = vmatpush2.msra.mxu0 0.0
      %2981 = vmatprep.subr.mxu0 0.0
      %2982 = vmatpush2.msra.mxu0 0.0
      %2983 = vmatprep.subr.mxu0 0.0
      %2984 = vmatpush2.msra.mxu0 0.0
      %2985 = vmatprep.mubr.f32.mxu0 0.0
      %2986 = vmatmul.mubr.f32.gmra.mxu0 %v2913
      %v2987 = vpop.f32.mrf.mxu0
      %v2988 = vadd.f32 0.0, %v2987
      %v2989 = vpop.f32.mrf.mxu0
      %v2990 = vadd.f32 0.0, %v2989
      %2991 = vdwg.mxu0
      %v2992 = vadd.f32 %v2837, %v2988
      %v2993 = vadd.f32 %v2838, %v2990
      %2994 = vmatprep.subr.mxu0 %v2186
      %2995 = vmatpush1.msra.mxu0 %v2185
      %2996 = vmatprep.subr.mxu0 %v2184
      %2997 = vmatpush1.msra.mxu0 %v2183
      %2998 = vmatprep.subr.mxu0 %v2182
      %2999 = vmatpush1.msra.mxu0 %v2181
      %3000 = vmatprep.subr.mxu0 %v2180
      %3001 = vmatpush1.msra.mxu0 %v2179
      %3002 = vmatprep.subr.mxu0 %v2178
      %3003 = vmatpush1.msra.mxu0 %v2177
      %3004 = vmatprep.subr.mxu0 %v2176
      %3005 = vmatpush1.msra.mxu0 %v2175
      %3006 = vmatprep.subr.mxu0 %v2174
      %3007 = vmatpush1.msra.mxu0 %v2173
      %3008 = vmatprep.subr.mxu0 %v2172
      %3009 = vmatpush1.msra.mxu0 %v2171
      %3010 = vmatprep.subr.mxu0 %v2170
      %3011 = vmatpush1.msra.mxu0 %v2169
      %3012 = vmatprep.subr.mxu0 %v2168
      %3013 = vmatpush1.msra.mxu0 %v2167
      %3014 = vmatprep.subr.mxu0 %v2166
      %3015 = vmatpush1.msra.mxu0 %v2165
      %3016 = vmatprep.subr.mxu0 %v2164
      %3017 = vmatpush1.msra.mxu0 %v2163
      %3018 = vmatprep.subr.mxu0 %v2162
      %3019 = vmatpush1.msra.mxu0 %v2161
      %3020 = vmatprep.subr.mxu0 %v2160
      %3021 = vmatpush1.msra.mxu0 %v2159
      %3022 = vmatprep.subr.mxu0 %v2158
      %3023 = vmatpush1.msra.mxu0 %v2157
      %3024 = vmatprep.subr.mxu0 %v2156
      %3025 = vmatpush1.msra.mxu0 %v2155
      %3026 = vmatprep.subr.mxu0 %v2218
      %3027 = vmatpush2.msra.mxu0 %v2217
      %3028 = vmatprep.subr.mxu0 %v2216
      %3029 = vmatpush2.msra.mxu0 %v2215
      %3030 = vmatprep.subr.mxu0 %v2214
      %3031 = vmatpush2.msra.mxu0 %v2213
      %3032 = vmatprep.subr.mxu0 %v2212
      %3033 = vmatpush2.msra.mxu0 %v2211
      %3034 = vmatprep.subr.mxu0 %v2210
      %3035 = vmatpush2.msra.mxu0 %v2209
      %3036 = vmatprep.subr.mxu0 %v2208
      %3037 = vmatpush2.msra.mxu0 %v2207
      %3038 = vmatprep.subr.mxu0 %v2206
      %3039 = vmatpush2.msra.mxu0 %v2205
      %3040 = vmatprep.subr.mxu0 %v2204
      %3041 = vmatpush2.msra.mxu0 %v2203
      %3042 = vmatprep.subr.mxu0 %v2202
      %3043 = vmatpush2.msra.mxu0 %v2201
      %3044 = vmatprep.subr.mxu0 %v2200
      %3045 = vmatpush2.msra.mxu0 %v2199
      %3046 = vmatprep.subr.mxu0 %v2198
      %3047 = vmatpush2.msra.mxu0 %v2197
      %3048 = vmatprep.subr.mxu0 %v2196
      %3049 = vmatpush2.msra.mxu0 %v2195
      %3050 = vmatprep.subr.mxu0 %v2194
      %3051 = vmatpush2.msra.mxu0 %v2193
      %3052 = vmatprep.subr.mxu0 %v2192
      %3053 = vmatpush2.msra.mxu0 %v2191
      %3054 = vmatprep.subr.mxu0 %v2190
      %3055 = vmatpush2.msra.mxu0 %v2189
      %3056 = vmatprep.subr.mxu0 %v2188
      %3057 = vmatpush2.msra.mxu0 %v2187
      %3058 = vmatprep.mubr.f32.mxu0 %v1312
      %3059 = vmatmul.mubr.f32.gmra.mxu0 %v400
      %v3060 = vpop.f32.mrf.mxu0
      %v3061 = vadd.f32 0.0, %v3060
      %v3062 = vpop.f32.mrf.mxu0
      %v3063 = vadd.f32 0.0, %v3062
      %3064 = vdwg.mxu0
      %s3065 = scalar_lea.vmem %s4, 120
      %v3066 = vld [vmem:[%s3065] sm:$0xff]
      %v3068 = vsel %vm616, %v3066, 0
      %v3071 = vsel %vm620, %v3061, 0
      %v3074 = vsel %vm620, %v3063, 0
      %3076 = vmatprep.subr.mxu0 0.0
      %3077 = vmatpush1.msra.mxu0 0.0
      %3078 = vmatprep.subr.mxu0 0.0
      %3079 = vmatpush1.msra.mxu0 0.0
      %3080 = vmatprep.subr.mxu0 0.0
      %3081 = vmatpush1.msra.mxu0 0.0
      %3082 = vmatprep.subr.mxu0 0.0
      %3083 = vmatpush1.msra.mxu0 0.0
      %3084 = vmatprep.subr.mxu0 0.0
      %3085 = vmatpush1.msra.mxu0 0.0
      %3086 = vmatprep.subr.mxu0 0.0
      %3087 = vmatpush1.msra.mxu0 0.0
      %3088 = vmatprep.subr.mxu0 0.0
      %3089 = vmatpush1.msra.mxu0 0.0
      %3090 = vmatprep.subr.mxu0 0.0
      %3091 = vmatpush1.msra.mxu0 0.0
      %3092 = vmatprep.subr.mxu0 0.0
      %3093 = vmatpush1.msra.mxu0 0.0
      %3094 = vmatprep.subr.mxu0 0.0
      %3095 = vmatpush1.msra.mxu0 0.0
      %3096 = vmatprep.subr.mxu0 0.0
      %3097 = vmatpush1.msra.mxu0 0.0
      %3098 = vmatprep.subr.mxu0 0.0
      %3099 = vmatpush1.msra.mxu0 0.0
      %3100 = vmatprep.subr.mxu0 0.0
      %3101 = vmatpush1.msra.mxu0 0.0
      %3102 = vmatprep.subr.mxu0 0.0
      %3103 = vmatpush1.msra.mxu0 0.0
      %3104 = vmatprep.subr.mxu0 0.0
      %3105 = vmatpush1.msra.mxu0 0.0
      %3106 = vmatprep.subr.mxu0 %v3074
      %3107 = vmatpush1.msra.mxu0 %v3071
      %3108 = vmatprep.subr.mxu0 0.0
      %3109 = vmatpush2.msra.mxu0 0.0
      %3110 = vmatprep.subr.mxu0 0.0
      %3111 = vmatpush2.msra.mxu0 0.0
      %3112 = vmatprep.subr.mxu0 0.0
      %3113 = vmatpush2.msra.mxu0 0.0
      %3114 = vmatprep.subr.mxu0 0.0
      %3115 = vmatpush2.msra.mxu0 0.0
      %3116 = vmatprep.subr.mxu0 0.0
      %3117 = vmatpush2.msra.mxu0 0.0
      %3118 = vmatprep.subr.mxu0 0.0
      %3119 = vmatpush2.msra.mxu0 0.0
      %3120 = vmatprep.subr.mxu0 0.0
      %3121 = vmatpush2.msra.mxu0 0.0
      %3122 = vmatprep.subr.mxu0 0.0
      %3123 = vmatpush2.msra.mxu0 0.0
      %3124 = vmatprep.subr.mxu0 0.0
      %3125 = vmatpush2.msra.mxu0 0.0
      %3126 = vmatprep.subr.mxu0 0.0
      %3127 = vmatpush2.msra.mxu0 0.0
      %3128 = vmatprep.subr.mxu0 0.0
      %3129 = vmatpush2.msra.mxu0 0.0
      %3130 = vmatprep.subr.mxu0 0.0
      %3131 = vmatpush2.msra.mxu0 0.0
      %3132 = vmatprep.subr.mxu0 0.0
      %3133 = vmatpush2.msra.mxu0 0.0
      %3134 = vmatprep.subr.mxu0 0.0
      %3135 = vmatpush2.msra.mxu0 0.0
      %3136 = vmatprep.subr.mxu0 0.0
      %3137 = vmatpush2.msra.mxu0 0.0
      %3138 = vmatprep.subr.mxu0 0.0
      %3139 = vmatpush2.msra.mxu0 0.0
      %3140 = vmatprep.mubr.f32.mxu0 0.0
      %3141 = vmatmul.mubr.f32.gmra.mxu0 %v3068
      %v3142 = vpop.f32.mrf.mxu0
      %v3143 = vadd.f32 0.0, %v3142
      %v3144 = vpop.f32.mrf.mxu0
      %v3145 = vadd.f32 0.0, %v3144
      %3146 = vdwg.mxu0
      %v3147 = vadd.f32 %v2992, %v3143
      %v3148 = vadd.f32 %v2993, %v3145
      %v3149 = vld [vmem:[%s5] sm:$0xff]
      %3151 = vset.pattern.permute.xlu0 0
      %3152 = vperm.xlu0 %3151, %v3149
      %v3153 = vpop.permute.xlu0 %3152
      %v3155 = vadd.f32 %v3147, %v3153
      %v3156 = vadd.f32 %v3148, %v3153
      %vm3157 = vcmp.ge.f32.partialorder %v3155, 0.0
      %vm3158 = vcmp.ge.f32.partialorder %v3156, 0.0
      %v3159 = vmul.f32 %v3155, 0.2
      %v3160 = vmul.f32 %v3156, 0.2
      %v3161 = vsel %vm3157, %v3155, %v3159
      %v3162 = vsel %vm3158, %v3156, %v3160
      %v3163 = vld [vmem:[%s2] sm:$0xff]
      %v3164 = vld [vmem:[%s2 + $0x8] sm:$0xff]
      %v3165 = vld [vmem:[%s2 + $0x10] sm:$0xff]
      %v3166 = vld [vmem:[%s2 + $0x18] sm:$0xff]
      %v3167 = vld [vmem:[%s2 + $0x20] sm:$0xff]
      %v3168 = vld [vmem:[%s2 + $0x28] sm:$0xff]
      %v3169 = vld [vmem:[%s2 + $0x30] sm:$0xff]
      %v3170 = vld [vmem:[%s2 + $0x38] sm:$0xff]
      %v3171 = vld [vmem:[%s2 + $0x40] sm:$0xff]
      %v3172 = vld [vmem:[%s2 + $0x48] sm:$0xff]
      %v3173 = vld [vmem:[%s2 + $0x50] sm:$0xff]
      %v3174 = vld [vmem:[%s2 + $0x58] sm:$0xff]
      %v3175 = vld [vmem:[%s2 + $0x60] sm:$0xff]
      %v3176 = vld [vmem:[%s2 + $0x68] sm:$0xff]
      %v3177 = vld [vmem:[%s2 + $0x70] sm:$0xff]
      %v3178 = vld [vmem:[%s2 + $0x78] sm:$0xff]
      %v3179 = vld [vmem:[%s2 + $0x80] sm:$0xff]
      %v3180 = vld [vmem:[%s2 + $0x88] sm:$0xff]
      %v3181 = vld [vmem:[%s2 + $0x90] sm:$0xff]
      %v3182 = vld [vmem:[%s2 + $0x98] sm:$0xff]
      %v3183 = vld [vmem:[%s2 + $0xa0] sm:$0xff]
      %v3184 = vld [vmem:[%s2 + $0xa8] sm:$0xff]
      %v3185 = vld [vmem:[%s2 + $0xb0] sm:$0xff]
      %v3186 = vld [vmem:[%s2 + $0xb8] sm:$0xff]
      %v3187 = vld [vmem:[%s2 + $0xc0] sm:$0xff]
      %v3188 = vld [vmem:[%s2 + $0xc8] sm:$0xff]
      %v3189 = vld [vmem:[%s2 + $0xd0] sm:$0xff]
      %v3190 = vld [vmem:[%s2 + $0xd8] sm:$0xff]
      %v3191 = vld [vmem:[%s2 + $0xe0] sm:$0x1]
      %vm3192 = vcmask 793600
      %v3194 = vsel %vm3192, %v3162, 0
      %vm3196 = vcmask 1040384
      %v3198 = vsel %vm3196, %v3191, 0
      %3200 = vmatprep.subr.mxu0 0.0
      %3201 = vmatpush1.msra.mxu0 %v3178
      %3202 = vmatprep.subr.mxu0 0.0
      %3203 = vmatpush1.msra.mxu0 %v3177
      %3204 = vmatprep.subr.mxu0 0.0
      %3205 = vmatpush1.msra.mxu0 %v3176
      %3206 = vmatprep.subr.mxu0 0.0
      %3207 = vmatpush1.msra.mxu0 %v3175
      %3208 = vmatprep.subr.mxu0 0.0
      %3209 = vmatpush1.msra.mxu0 %v3174
      %3210 = vmatprep.subr.mxu0 0.0
      %3211 = vmatpush1.msra.mxu0 %v3173
      %3212 = vmatprep.subr.mxu0 0.0
      %3213 = vmatpush1.msra.mxu0 %v3172
      %3214 = vmatprep.subr.mxu0 0.0
      %3215 = vmatpush1.msra.mxu0 %v3171
      %3216 = vmatprep.subr.mxu0 0.0
      %3217 = vmatpush1.msra.mxu0 %v3170
      %3218 = vmatprep.subr.mxu0 0.0
      %3219 = vmatpush1.msra.mxu0 %v3169
      %3220 = vmatprep.subr.mxu0 0.0
      %3221 = vmatpush1.msra.mxu0 %v3168
      %3222 = vmatprep.subr.mxu0 0.0
      %3223 = vmatpush1.msra.mxu0 %v3167
      %3224 = vmatprep.subr.mxu0 0.0
      %3225 = vmatpush1.msra.mxu0 %v3166
      %3226 = vmatprep.subr.mxu0 0.0
      %3227 = vmatpush1.msra.mxu0 %v3165
      %3228 = vmatprep.subr.mxu0 0.0
      %3229 = vmatpush1.msra.mxu0 %v3164
      %3230 = vmatprep.subr.mxu0 0.0
      %3231 = vmatpush1.msra.mxu0 %v3163
      %3232 = vmatprep.subr.mxu0 0.0
      %3233 = vmatpush2.msra.mxu0 0.0
      %3234 = vmatprep.subr.mxu0 0.0
      %3235 = vmatpush2.msra.mxu0 0.0
      %3236 = vmatprep.subr.mxu0 0.0
      %3237 = vmatpush2.msra.mxu0 0.0
      %3238 = vmatprep.subr.mxu0 0.0
      %3239 = vmatpush2.msra.mxu0 %v3198
      %3240 = vmatprep.subr.mxu0 0.0
      %3241 = vmatpush2.msra.mxu0 %v3190
      %3242 = vmatprep.subr.mxu0 0.0
      %3243 = vmatpush2.msra.mxu0 %v3189
      %3244 = vmatprep.subr.mxu0 0.0
      %3245 = vmatpush2.msra.mxu0 %v3188
      %3246 = vmatprep.subr.mxu0 0.0
      %3247 = vmatpush2.msra.mxu0 %v3187
      %3248 = vmatprep.subr.mxu0 0.0
      %3249 = vmatpush2.msra.mxu0 %v3186
      %3250 = vmatprep.subr.mxu0 0.0
      %3251 = vmatpush2.msra.mxu0 %v3185
      %3252 = vmatprep.subr.mxu0 0.0
      %3253 = vmatpush2.msra.mxu0 %v3184
      %3254 = vmatprep.subr.mxu0 0.0
      %3255 = vmatpush2.msra.mxu0 %v3183
      %3256 = vmatprep.subr.mxu0 0.0
      %3257 = vmatpush2.msra.mxu0 %v3182
      %3258 = vmatprep.subr.mxu0 0.0
      %3259 = vmatpush2.msra.mxu0 %v3181
      %3260 = vmatprep.subr.mxu0 0.0
      %3261 = vmatpush2.msra.mxu0 %v3180
      %3262 = vmatprep.subr.mxu0 0.0
      %3263 = vmatpush2.msra.mxu0 %v3179
      %3264 = vmatprep.mubr.f32.mxu0 %v3194
      %3265 = vmatmul.mubr.f32.gmra.mxu0 %v3161
      %v3266 = vpop.f32.mrf.mxu0
      %v3267 = vadd.f32 0.0, %v3266
      %v3268 = vpop.f32.mrf.mxu0
      %3269 = vdwg.mxu0
      %v3270 = vld [vmem:[%s6] sm:$0xff]
      %v3271 = vld [vmem:[%s6 + $0x8] sm:$0xff]
      %s3272 = scalar_lea.vmem %s2, 232
      %v3273 = vld [vmem:[%s3272] sm:$0xff]
      %v3274 = vld [vmem:[%s3272 + $0x8] sm:$0xff]
      %v3275 = vld [vmem:[%s3272 + $0x10] sm:$0xff]
      %v3276 = vld [vmem:[%s3272 + $0x18] sm:$0xff]
      %v3277 = vld [vmem:[%s3272 + $0x20] sm:$0xff]
      %v3278 = vld [vmem:[%s3272 + $0x28] sm:$0xff]
      %v3279 = vld [vmem:[%s3272 + $0x30] sm:$0xff]
      %v3280 = vld [vmem:[%s3272 + $0x38] sm:$0xff]
      %v3281 = vld [vmem:[%s3272 + $0x40] sm:$0xff]
      %v3282 = vld [vmem:[%s3272 + $0x48] sm:$0xff]
      %v3283 = vld [vmem:[%s3272 + $0x50] sm:$0xff]
      %v3284 = vld [vmem:[%s3272 + $0x58] sm:$0xff]
      %v3285 = vld [vmem:[%s3272 + $0x60] sm:$0xff]
      %v3286 = vld [vmem:[%s3272 + $0x68] sm:$0xff]
      %v3287 = vld [vmem:[%s3272 + $0x70] sm:$0xff]
      %v3288 = vld [vmem:[%s3272 + $0x78] sm:$0xff]
      %v3289 = vld [vmem:[%s3272 + $0x80] sm:$0xff]
      %v3290 = vld [vmem:[%s3272 + $0x88] sm:$0xff]
      %v3291 = vld [vmem:[%s3272 + $0x90] sm:$0xff]
      %v3292 = vld [vmem:[%s3272 + $0x98] sm:$0xff]
      %v3293 = vld [vmem:[%s3272 + $0xa0] sm:$0xff]
      %v3294 = vld [vmem:[%s3272 + $0xa8] sm:$0xff]
      %v3295 = vld [vmem:[%s3272 + $0xb0] sm:$0xff]
      %v3296 = vld [vmem:[%s3272 + $0xb8] sm:$0xff]
      %v3297 = vld [vmem:[%s3272 + $0xc0] sm:$0xff]
      %v3298 = vld [vmem:[%s3272 + $0xc8] sm:$0xff]
      %v3299 = vld [vmem:[%s3272 + $0xd0] sm:$0xff]
      %v3300 = vld [vmem:[%s3272 + $0xd8] sm:$0xff]
      %v3301 = vld [vmem:[%s3272 + $0xe0] sm:$0x1]
      %v3303 = vsel %vm3196, %v3301, 0
      %3305 = vmatprep.subr.mxu0 0.0
      %3306 = vmatpush1.msra.mxu0 %v3288
      %3307 = vmatprep.subr.mxu0 0.0
      %3308 = vmatpush1.msra.mxu0 %v3287
      %3309 = vmatprep.subr.mxu0 0.0
      %3310 = vmatpush1.msra.mxu0 %v3286
      %3311 = vmatprep.subr.mxu0 0.0
      %3312 = vmatpush1.msra.mxu0 %v3285
      %3313 = vmatprep.subr.mxu0 0.0
      %3314 = vmatpush1.msra.mxu0 %v3284
      %3315 = vmatprep.subr.mxu0 0.0
      %3316 = vmatpush1.msra.mxu0 %v3283
      %3317 = vmatprep.subr.mxu0 0.0
      %3318 = vmatpush1.msra.mxu0 %v3282
      %3319 = vmatprep.subr.mxu0 0.0
      %3320 = vmatpush1.msra.mxu0 %v3281
      %3321 = vmatprep.subr.mxu0 0.0
      %3322 = vmatpush1.msra.mxu0 %v3280
      %3323 = vmatprep.subr.mxu0 0.0
      %3324 = vmatpush1.msra.mxu0 %v3279
      %3325 = vmatprep.subr.mxu0 0.0
      %3326 = vmatpush1.msra.mxu0 %v3278
      %3327 = vmatprep.subr.mxu0 0.0
      %3328 = vmatpush1.msra.mxu0 %v3277
      %3329 = vmatprep.subr.mxu0 0.0
      %3330 = vmatpush1.msra.mxu0 %v3276
      %3331 = vmatprep.subr.mxu0 0.0
      %3332 = vmatpush1.msra.mxu0 %v3275
      %3333 = vmatprep.subr.mxu0 0.0
      %3334 = vmatpush1.msra.mxu0 %v3274
      %3335 = vmatprep.subr.mxu0 0.0
      %3336 = vmatpush1.msra.mxu0 %v3273
      %3337 = vmatprep.subr.mxu0 0.0
      %3338 = vmatpush2.msra.mxu0 0.0
      %3339 = vmatprep.subr.mxu0 0.0
      %3340 = vmatpush2.msra.mxu0 0.0
      %3341 = vmatprep.subr.mxu0 0.0
      %3342 = vmatpush2.msra.mxu0 0.0
      %3343 = vmatprep.subr.mxu0 0.0
      %3344 = vmatpush2.msra.mxu0 %v3303
      %3345 = vmatprep.subr.mxu0 0.0
      %3346 = vmatpush2.msra.mxu0 %v3300
      %3347 = vmatprep.subr.mxu0 0.0
      %3348 = vmatpush2.msra.mxu0 %v3299
      %3349 = vmatprep.subr.mxu0 0.0
      %3350 = vmatpush2.msra.mxu0 %v3298
      %3351 = vmatprep.subr.mxu0 0.0
      %3352 = vmatpush2.msra.mxu0 %v3297
      %3353 = vmatprep.subr.mxu0 0.0
      %3354 = vmatpush2.msra.mxu0 %v3296
      %3355 = vmatprep.subr.mxu0 0.0
      %3356 = vmatpush2.msra.mxu0 %v3295
      %3357 = vmatprep.subr.mxu0 0.0
      %3358 = vmatpush2.msra.mxu0 %v3294
      %3359 = vmatprep.subr.mxu0 0.0
      %3360 = vmatpush2.msra.mxu0 %v3293
      %3361 = vmatprep.subr.mxu0 0.0
      %3362 = vmatpush2.msra.mxu0 %v3292
      %3363 = vmatprep.subr.mxu0 0.0
      %3364 = vmatpush2.msra.mxu0 %v3291
      %3365 = vmatprep.subr.mxu0 0.0
      %3366 = vmatpush2.msra.mxu0 %v3290
      %3367 = vmatprep.subr.mxu0 0.0
      %3368 = vmatpush2.msra.mxu0 %v3289
      %3369 = vmatprep.mubr.f32.mxu0 %v3194
      %3370 = vmatmul.mubr.f32.gmra.mxu0 %v3161
      %v3371 = vpop.f32.mrf.mxu0
      %v3372 = vadd.f32 0.0, %v3371
      %v3373 = vpop.f32.mrf.mxu0
      %3374 = vdwg.mxu0
      %s3375 = scalar_lea.vmem %s6, 16
      %v3376 = vld [vmem:[%s3375] sm:$0xff]
      %v3377 = vld [vmem:[%s3375 + $0x8] sm:$0xff]
      %vm3378 = vcmask 64512
      %v3380 = vsel %vm3378, %v3376, 0
      %v3383 = vsel %vm3378, %v3377, 0
      %3385 = vmatprep.subr.mxu0 0.0
      %3386 = vmatpush1.msra.mxu0 0.0
      %3387 = vmatprep.subr.mxu0 0.0
      %3388 = vmatpush1.msra.mxu0 0.0
      %3389 = vmatprep.subr.mxu0 0.0
      %3390 = vmatpush1.msra.mxu0 0.0
      %3391 = vmatprep.subr.mxu0 0.0
      %3392 = vmatpush1.msra.mxu0 0.0
      %3393 = vmatprep.subr.mxu0 0.0
      %3394 = vmatpush1.msra.mxu0 0.0
      %3395 = vmatprep.subr.mxu0 0.0
      %3396 = vmatpush1.msra.mxu0 0.0
      %3397 = vmatprep.subr.mxu0 0.0
      %3398 = vmatpush1.msra.mxu0 0.0
      %3399 = vmatprep.subr.mxu0 0.0
      %3400 = vmatpush1.msra.mxu0 0.0
      %3401 = vmatprep.subr.mxu0 0.0
      %3402 = vmatpush1.msra.mxu0 0.0
      %3403 = vmatprep.subr.mxu0 0.0
      %3404 = vmatpush1.msra.mxu0 0.0
      %3405 = vmatprep.subr.mxu0 0.0
      %3406 = vmatpush1.msra.mxu0 0.0
      %3407 = vmatprep.subr.mxu0 0.0
      %3408 = vmatpush1.msra.mxu0 0.0
      %3409 = vmatprep.subr.mxu0 0.0
      %3410 = vmatpush1.msra.mxu0 0.0
      %3411 = vmatprep.subr.mxu0 0.0
      %3412 = vmatpush1.msra.mxu0 0.0
      %3413 = vmatprep.subr.mxu0 0.0
      %3414 = vmatpush1.msra.mxu0 0.0
      %3415 = vmatprep.subr.mxu0 0.0
      %3416 = vmatpush1.msra.mxu0 %v3372
      %3417 = vmatprep.subr.mxu0 0.0
      %3418 = vmatpush2.msra.mxu0 0.0
      %3419 = vmatprep.subr.mxu0 0.0
      %3420 = vmatpush2.msra.mxu0 0.0
      %3421 = vmatprep.subr.mxu0 0.0
      %3422 = vmatpush2.msra.mxu0 0.0
      %3423 = vmatprep.subr.mxu0 0.0
      %3424 = vmatpush2.msra.mxu0 0.0
      %3425 = vmatprep.subr.mxu0 0.0
      %3426 = vmatpush2.msra.mxu0 0.0
      %3427 = vmatprep.subr.mxu0 0.0
      %3428 = vmatpush2.msra.mxu0 0.0
      %3429 = vmatprep.subr.mxu0 0.0
      %3430 = vmatpush2.msra.mxu0 0.0
      %3431 = vmatprep.subr.mxu0 0.0
      %3432 = vmatpush2.msra.mxu0 0.0
      %3433 = vmatprep.subr.mxu0 0.0
      %3434 = vmatpush2.msra.mxu0 0.0
      %3435 = vmatprep.subr.mxu0 0.0
      %3436 = vmatpush2.msra.mxu0 0.0
      %3437 = vmatprep.subr.mxu0 0.0
      %3438 = vmatpush2.msra.mxu0 0.0
      %3439 = vmatprep.subr.mxu0 0.0
      %3440 = vmatpush2.msra.mxu0 0.0
      %3441 = vmatprep.subr.mxu0 0.0
      %3442 = vmatpush2.msra.mxu0 0.0
      %3443 = vmatprep.subr.mxu0 0.0
      %3444 = vmatpush2.msra.mxu0 0.0
      %3445 = vmatprep.subr.mxu0 0.0
      %3446 = vmatpush2.msra.mxu0 0.0
      %3447 = vmatprep.subr.mxu0 0.0
      %3448 = vmatpush2.msra.mxu0 0.0
      %3449 = vmatprep.mubr.f32.mxu0 0.0
      %3450 = vmatmul.mubr.f32.gmra.mxu0 %v3380
      %v3451 = vpop.f32.mrf.mxu0
      %v3452 = vadd.f32 0.0, %v3451
      %v3453 = vpop.f32.mrf.mxu0
      %3454 = vmatprep.mubr.f32.mxu0 0.0
      %3455 = vmatmul.mubr.f32.gmra.mxu0 %v3383
      %v3456 = vpop.f32.mrf.mxu0
      %v3457 = vadd.f32 0.0, %v3456
      %v3458 = vpop.f32.mrf.mxu0
      %3459 = vdwg.mxu0
      %v3461 = vsel %vm3378, %v3270, 0
      %v3464 = vsel %vm3378, %v3271, 0
      %3466 = vmatprep.subr.mxu0 0.0
      %3467 = vmatpush1.msra.mxu0 0.0
      %3468 = vmatprep.subr.mxu0 0.0
      %3469 = vmatpush1.msra.mxu0 0.0
      %3470 = vmatprep.subr.mxu0 0.0
      %3471 = vmatpush1.msra.mxu0 0.0
      %3472 = vmatprep.subr.mxu0 0.0
      %3473 = vmatpush1.msra.mxu0 0.0
      %3474 = vmatprep.subr.mxu0 0.0
      %3475 = vmatpush1.msra.mxu0 0.0
      %3476 = vmatprep.subr.mxu0 0.0
      %3477 = vmatpush1.msra.mxu0 0.0
      %3478 = vmatprep.subr.mxu0 0.0
      %3479 = vmatpush1.msra.mxu0 0.0
      %3480 = vmatprep.subr.mxu0 0.0
      %3481 = vmatpush1.msra.mxu0 0.0
      %3482 = vmatprep.subr.mxu0 0.0
      %3483 = vmatpush1.msra.mxu0 0.0
      %3484 = vmatprep.subr.mxu0 0.0
      %3485 = vmatpush1.msra.mxu0 0.0
      %3486 = vmatprep.subr.mxu0 0.0
      %3487 = vmatpush1.msra.mxu0 0.0
      %3488 = vmatprep.subr.mxu0 0.0
      %3489 = vmatpush1.msra.mxu0 0.0
      %3490 = vmatprep.subr.mxu0 0.0
      %3491 = vmatpush1.msra.mxu0 0.0
      %3492 = vmatprep.subr.mxu0 0.0
      %3493 = vmatpush1.msra.mxu0 0.0
      %3494 = vmatprep.subr.mxu0 0.0
      %3495 = vmatpush1.msra.mxu0 0.0
      %3496 = vmatprep.subr.mxu0 0.0
      %3497 = vmatpush1.msra.mxu0 %v3267
      %3498 = vmatprep.subr.mxu0 0.0
      %3499 = vmatpush2.msra.mxu0 0.0
      %3500 = vmatprep.subr.mxu0 0.0
      %3501 = vmatpush2.msra.mxu0 0.0
      %3502 = vmatprep.subr.mxu0 0.0
      %3503 = vmatpush2.msra.mxu0 0.0
      %3504 = vmatprep.subr.mxu0 0.0
      %3505 = vmatpush2.msra.mxu0 0.0
      %3506 = vmatprep.subr.mxu0 0.0
      %3507 = vmatpush2.msra.mxu0 0.0
      %3508 = vmatprep.subr.mxu0 0.0
      %3509 = vmatpush2.msra.mxu0 0.0
      %3510 = vmatprep.subr.mxu0 0.0
      %3511 = vmatpush2.msra.mxu0 0.0
      %3512 = vmatprep.subr.mxu0 0.0
      %3513 = vmatpush2.msra.mxu0 0.0
      %3514 = vmatprep.subr.mxu0 0.0
      %3515 = vmatpush2.msra.mxu0 0.0
      %3516 = vmatprep.subr.mxu0 0.0
      %3517 = vmatpush2.msra.mxu0 0.0
      %3518 = vmatprep.subr.mxu0 0.0
      %3519 = vmatpush2.msra.mxu0 0.0
      %3520 = vmatprep.subr.mxu0 0.0
      %3521 = vmatpush2.msra.mxu0 0.0
      %3522 = vmatprep.subr.mxu0 0.0
      %3523 = vmatpush2.msra.mxu0 0.0
      %3524 = vmatprep.subr.mxu0 0.0
      %3525 = vmatpush2.msra.mxu0 0.0
      %3526 = vmatprep.subr.mxu0 0.0
      %3527 = vmatpush2.msra.mxu0 0.0
      %3528 = vmatprep.subr.mxu0 0.0
      %3529 = vmatpush2.msra.mxu0 0.0
      %3530 = vmatprep.mubr.f32.mxu0 0.0
      %3531 = vmatmul.mubr.f32.gmra.mxu0 %v3461
      %v3532 = vpop.f32.mrf.mxu0
      %v3533 = vadd.f32 %v3452, %v3532
      %v3534 = vpop.f32.mrf.mxu0
      %3535 = vmatprep.mubr.f32.mxu0 0.0
      %3536 = vmatmul.mubr.f32.gmra.mxu0 %v3464
      %v3537 = vpop.f32.mrf.mxu0
      %v3538 = vadd.f32 %v3457, %v3537
      %v3539 = vpop.f32.mrf.mxu0
      %3540 = vdwg.mxu0
      %s3541 = scalar_lea.vmem %s2, 464
      %v3542 = vld [vmem:[%s3541] sm:$0xff]
      %v3543 = vld [vmem:[%s3541 + $0x8] sm:$0xff]
      %v3544 = vld [vmem:[%s3541 + $0x10] sm:$0xff]
      %v3545 = vld [vmem:[%s3541 + $0x18] sm:$0xff]
      %v3546 = vld [vmem:[%s3541 + $0x20] sm:$0xff]
      %v3547 = vld [vmem:[%s3541 + $0x28] sm:$0xff]
      %v3548 = vld [vmem:[%s3541 + $0x30] sm:$0xff]
      %v3549 = vld [vmem:[%s3541 + $0x38] sm:$0xff]
      %v3550 = vld [vmem:[%s3541 + $0x40] sm:$0xff]
      %v3551 = vld [vmem:[%s3541 + $0x48] sm:$0xff]
      %v3552 = vld [vmem:[%s3541 + $0x50] sm:$0xff]
      %v3553 = vld [vmem:[%s3541 + $0x58] sm:$0xff]
      %v3554 = vld [vmem:[%s3541 + $0x60] sm:$0xff]
      %v3555 = vld [vmem:[%s3541 + $0x68] sm:$0xff]
      %v3556 = vld [vmem:[%s3541 + $0x70] sm:$0xff]
      %v3557 = vld [vmem:[%s3541 + $0x78] sm:$0xff]
      %v3558 = vld [vmem:[%s3541 + $0x80] sm:$0xff]
      %v3559 = vld [vmem:[%s3541 + $0x88] sm:$0xff]
      %v3560 = vld [vmem:[%s3541 + $0x90] sm:$0xff]
      %v3561 = vld [vmem:[%s3541 + $0x98] sm:$0xff]
      %v3562 = vld [vmem:[%s3541 + $0xa0] sm:$0xff]
      %v3563 = vld [vmem:[%s3541 + $0xa8] sm:$0xff]
      %v3564 = vld [vmem:[%s3541 + $0xb0] sm:$0xff]
      %v3565 = vld [vmem:[%s3541 + $0xb8] sm:$0xff]
      %v3566 = vld [vmem:[%s3541 + $0xc0] sm:$0xff]
      %v3567 = vld [vmem:[%s3541 + $0xc8] sm:$0xff]
      %v3568 = vld [vmem:[%s3541 + $0xd0] sm:$0xff]
      %v3569 = vld [vmem:[%s3541 + $0xd8] sm:$0xff]
      %v3570 = vld [vmem:[%s3541 + $0xe0] sm:$0x1]
      %v3572 = vsel %vm3196, %v3570, 0
      %3574 = vmatprep.subr.mxu0 0.0
      %3575 = vmatpush1.msra.mxu0 %v3557
      %3576 = vmatprep.subr.mxu0 0.0
      %3577 = vmatpush1.msra.mxu0 %v3556
      %3578 = vmatprep.subr.mxu0 0.0
      %3579 = vmatpush1.msra.mxu0 %v3555
      %3580 = vmatprep.subr.mxu0 0.0
      %3581 = vmatpush1.msra.mxu0 %v3554
      %3582 = vmatprep.subr.mxu0 0.0
      %3583 = vmatpush1.msra.mxu0 %v3553
      %3584 = vmatprep.subr.mxu0 0.0
      %3585 = vmatpush1.msra.mxu0 %v3552
      %3586 = vmatprep.subr.mxu0 0.0
      %3587 = vmatpush1.msra.mxu0 %v3551
      %3588 = vmatprep.subr.mxu0 0.0
      %3589 = vmatpush1.msra.mxu0 %v3550
      %3590 = vmatprep.subr.mxu0 0.0
      %3591 = vmatpush1.msra.mxu0 %v3549
      %3592 = vmatprep.subr.mxu0 0.0
      %3593 = vmatpush1.msra.mxu0 %v3548
      %3594 = vmatprep.subr.mxu0 0.0
      %3595 = vmatpush1.msra.mxu0 %v3547
      %3596 = vmatprep.subr.mxu0 0.0
      %3597 = vmatpush1.msra.mxu0 %v3546
      %3598 = vmatprep.subr.mxu0 0.0
      %3599 = vmatpush1.msra.mxu0 %v3545
      %3600 = vmatprep.subr.mxu0 0.0
      %3601 = vmatpush1.msra.mxu0 %v3544
      %3602 = vmatprep.subr.mxu0 0.0
      %3603 = vmatpush1.msra.mxu0 %v3543
      %3604 = vmatprep.subr.mxu0 0.0
      %3605 = vmatpush1.msra.mxu0 %v3542
      %3606 = vmatprep.subr.mxu0 0.0
      %3607 = vmatpush2.msra.mxu0 0.0
      %3608 = vmatprep.subr.mxu0 0.0
      %3609 = vmatpush2.msra.mxu0 0.0
      %3610 = vmatprep.subr.mxu0 0.0
      %3611 = vmatpush2.msra.mxu0 0.0
      %3612 = vmatprep.subr.mxu0 0.0
      %3613 = vmatpush2.msra.mxu0 %v3572
      %3614 = vmatprep.subr.mxu0 0.0
      %3615 = vmatpush2.msra.mxu0 %v3569
      %3616 = vmatprep.subr.mxu0 0.0
      %3617 = vmatpush2.msra.mxu0 %v3568
      %3618 = vmatprep.subr.mxu0 0.0
      %3619 = vmatpush2.msra.mxu0 %v3567
      %3620 = vmatprep.subr.mxu0 0.0
      %3621 = vmatpush2.msra.mxu0 %v3566
      %3622 = vmatprep.subr.mxu0 0.0
      %3623 = vmatpush2.msra.mxu0 %v3565
      %3624 = vmatprep.subr.mxu0 0.0
      %3625 = vmatpush2.msra.mxu0 %v3564
      %3626 = vmatprep.subr.mxu0 0.0
      %3627 = vmatpush2.msra.mxu0 %v3563
      %3628 = vmatprep.subr.mxu0 0.0
      %3629 = vmatpush2.msra.mxu0 %v3562
      %3630 = vmatprep.subr.mxu0 0.0
      %3631 = vmatpush2.msra.mxu0 %v3561
      %3632 = vmatprep.subr.mxu0 0.0
      %3633 = vmatpush2.msra.mxu0 %v3560
      %3634 = vmatprep.subr.mxu0 0.0
      %3635 = vmatpush2.msra.mxu0 %v3559
      %3636 = vmatprep.subr.mxu0 0.0
      %3637 = vmatpush2.msra.mxu0 %v3558
      %3638 = vmatprep.mubr.f32.mxu0 %v3194
      %3639 = vmatmul.mubr.f32.gmra.mxu0 %v3161
      %v3640 = vpop.f32.mrf.mxu0
      %v3641 = vadd.f32 0.0, %v3640
      %v3642 = vpop.f32.mrf.mxu0
      %3643 = vdwg.mxu0
      %s3644 = scalar_lea.vmem %s6, 32
      %v3645 = vld [vmem:[%s3644] sm:$0xff]
      %v3646 = vld [vmem:[%s3644 + $0x8] sm:$0xff]
      %v3648 = vsel %vm3378, %v3645, 0
      %v3651 = vsel %vm3378, %v3646, 0
      %3653 = vmatprep.subr.mxu0 0.0
      %3654 = vmatpush1.msra.mxu0 0.0
      %3655 = vmatprep.subr.mxu0 0.0
      %3656 = vmatpush1.msra.mxu0 0.0
      %3657 = vmatprep.subr.mxu0 0.0
      %3658 = vmatpush1.msra.mxu0 0.0
      %3659 = vmatprep.subr.mxu0 0.0
      %3660 = vmatpush1.msra.mxu0 0.0
      %3661 = vmatprep.subr.mxu0 0.0
      %3662 = vmatpush1.msra.mxu0 0.0
      %3663 = vmatprep.subr.mxu0 0.0
      %3664 = vmatpush1.msra.mxu0 0.0
      %3665 = vmatprep.subr.mxu0 0.0
      %3666 = vmatpush1.msra.mxu0 0.0
      %3667 = vmatprep.subr.mxu0 0.0
      %3668 = vmatpush1.msra.mxu0 0.0
      %3669 = vmatprep.subr.mxu0 0.0
      %3670 = vmatpush1.msra.mxu0 0.0
      %3671 = vmatprep.subr.mxu0 0.0
      %3672 = vmatpush1.msra.mxu0 0.0
      %3673 = vmatprep.subr.mxu0 0.0
      %3674 = vmatpush1.msra.mxu0 0.0
      %3675 = vmatprep.subr.mxu0 0.0
      %3676 = vmatpush1.msra.mxu0 0.0
      %3677 = vmatprep.subr.mxu0 0.0
      %3678 = vmatpush1.msra.mxu0 0.0
      %3679 = vmatprep.subr.mxu0 0.0
      %3680 = vmatpush1.msra.mxu0 0.0
      %3681 = vmatprep.subr.mxu0 0.0
      %3682 = vmatpush1.msra.mxu0 0.0
      %3683 = vmatprep.subr.mxu0 0.0
      %3684 = vmatpush1.msra.mxu0 %v3641
      %3685 = vmatprep.subr.mxu0 0.0
      %3686 = vmatpush2.msra.mxu0 0.0
      %3687 = vmatprep.subr.mxu0 0.0
      %3688 = vmatpush2.msra.mxu0 0.0
      %3689 = vmatprep.subr.mxu0 0.0
      %3690 = vmatpush2.msra.mxu0 0.0
      %3691 = vmatprep.subr.mxu0 0.0
      %3692 = vmatpush2.msra.mxu0 0.0
      %3693 = vmatprep.subr.mxu0 0.0
      %3694 = vmatpush2.msra.mxu0 0.0
      %3695 = vmatprep.subr.mxu0 0.0
      %3696 = vmatpush2.msra.mxu0 0.0
      %3697 = vmatprep.subr.mxu0 0.0
      %3698 = vmatpush2.msra.mxu0 0.0
      %3699 = vmatprep.subr.mxu0 0.0
      %3700 = vmatpush2.msra.mxu0 0.0
      %3701 = vmatprep.subr.mxu0 0.0
      %3702 = vmatpush2.msra.mxu0 0.0
      %3703 = vmatprep.subr.mxu0 0.0
      %3704 = vmatpush2.msra.mxu0 0.0
      %3705 = vmatprep.subr.mxu0 0.0
      %3706 = vmatpush2.msra.mxu0 0.0
      %3707 = vmatprep.subr.mxu0 0.0
      %3708 = vmatpush2.msra.mxu0 0.0
      %3709 = vmatprep.subr.mxu0 0.0
      %3710 = vmatpush2.msra.mxu0 0.0
      %3711 = vmatprep.subr.mxu0 0.0
      %3712 = vmatpush2.msra.mxu0 0.0
      %3713 = vmatprep.subr.mxu0 0.0
      %3714 = vmatpush2.msra.mxu0 0.0
      %3715 = vmatprep.subr.mxu0 0.0
      %3716 = vmatpush2.msra.mxu0 0.0
      %3717 = vmatprep.mubr.f32.mxu0 0.0
      %3718 = vmatmul.mubr.f32.gmra.mxu0 %v3648
      %v3719 = vpop.f32.mrf.mxu0
      %v3720 = vadd.f32 0.0, %v3719
      %v3721 = vpop.f32.mrf.mxu0
      %3722 = vmatprep.mubr.f32.mxu0 0.0
      %3723 = vmatmul.mubr.f32.gmra.mxu0 %v3651
      %v3724 = vpop.f32.mrf.mxu0
      %v3725 = vadd.f32 0.0, %v3724
      %v3726 = vpop.f32.mrf.mxu0
      %3727 = vdwg.mxu0
      %v3728 = vadd.f32 %v3533, %v3720
      %v3729 = vadd.f32 %v3538, %v3725
      %s3730 = scalar_lea.vmem %s2, 696
      %v3731 = vld [vmem:[%s3730] sm:$0xff]
      %v3732 = vld [vmem:[%s3730 + $0x8] sm:$0xff]
      %v3733 = vld [vmem:[%s3730 + $0x10] sm:$0xff]
      %v3734 = vld [vmem:[%s3730 + $0x18] sm:$0xff]
      %v3735 = vld [vmem:[%s3730 + $0x20] sm:$0xff]
      %v3736 = vld [vmem:[%s3730 + $0x28] sm:$0xff]
      %v3737 = vld [vmem:[%s3730 + $0x30] sm:$0xff]
      %v3738 = vld [vmem:[%s3730 + $0x38] sm:$0xff]
      %v3739 = vld [vmem:[%s3730 + $0x40] sm:$0xff]
      %v3740 = vld [vmem:[%s3730 + $0x48] sm:$0xff]
      %v3741 = vld [vmem:[%s3730 + $0x50] sm:$0xff]
      %v3742 = vld [vmem:[%s3730 + $0x58] sm:$0xff]
      %v3743 = vld [vmem:[%s3730 + $0x60] sm:$0xff]
      %v3744 = vld [vmem:[%s3730 + $0x68] sm:$0xff]
      %v3745 = vld [vmem:[%s3730 + $0x70] sm:$0xff]
      %v3746 = vld [vmem:[%s3730 + $0x78] sm:$0xff]
      %v3747 = vld [vmem:[%s3730 + $0x80] sm:$0xff]
      %v3748 = vld [vmem:[%s3730 + $0x88] sm:$0xff]
      %v3749 = vld [vmem:[%s3730 + $0x90] sm:$0xff]
      %v3750 = vld [vmem:[%s3730 + $0x98] sm:$0xff]
      %v3751 = vld [vmem:[%s3730 + $0xa0] sm:$0xff]
      %v3752 = vld [vmem:[%s3730 + $0xa8] sm:$0xff]
      %v3753 = vld [vmem:[%s3730 + $0xb0] sm:$0xff]
      %v3754 = vld [vmem:[%s3730 + $0xb8] sm:$0xff]
      %v3755 = vld [vmem:[%s3730 + $0xc0] sm:$0xff]
      %v3756 = vld [vmem:[%s3730 + $0xc8] sm:$0xff]
      %v3757 = vld [vmem:[%s3730 + $0xd0] sm:$0xff]
      %v3758 = vld [vmem:[%s3730 + $0xd8] sm:$0xff]
      %v3759 = vld [vmem:[%s3730 + $0xe0] sm:$0x1]
      %v3761 = vsel %vm3196, %v3759, 0
      %3763 = vmatprep.subr.mxu0 0.0
      %3764 = vmatpush1.msra.mxu0 %v3746
      %3765 = vmatprep.subr.mxu0 0.0
      %3766 = vmatpush1.msra.mxu0 %v3745
      %3767 = vmatprep.subr.mxu0 0.0
      %3768 = vmatpush1.msra.mxu0 %v3744
      %3769 = vmatprep.subr.mxu0 0.0
      %3770 = vmatpush1.msra.mxu0 %v3743
      %3771 = vmatprep.subr.mxu0 0.0
      %3772 = vmatpush1.msra.mxu0 %v3742
      %3773 = vmatprep.subr.mxu0 0.0
      %3774 = vmatpush1.msra.mxu0 %v3741
      %3775 = vmatprep.subr.mxu0 0.0
      %3776 = vmatpush1.msra.mxu0 %v3740
      %3777 = vmatprep.subr.mxu0 0.0
      %3778 = vmatpush1.msra.mxu0 %v3739
      %3779 = vmatprep.subr.mxu0 0.0
      %3780 = vmatpush1.msra.mxu0 %v3738
      %3781 = vmatprep.subr.mxu0 0.0
      %3782 = vmatpush1.msra.mxu0 %v3737
      %3783 = vmatprep.subr.mxu0 0.0
      %3784 = vmatpush1.msra.mxu0 %v3736
      %3785 = vmatprep.subr.mxu0 0.0
      %3786 = vmatpush1.msra.mxu0 %v3735
      %3787 = vmatprep.subr.mxu0 0.0
      %3788 = vmatpush1.msra.mxu0 %v3734
      %3789 = vmatprep.subr.mxu0 0.0
      %3790 = vmatpush1.msra.mxu0 %v3733
      %3791 = vmatprep.subr.mxu0 0.0
      %3792 = vmatpush1.msra.mxu0 %v3732
      %3793 = vmatprep.subr.mxu0 0.0
      %3794 = vmatpush1.msra.mxu0 %v3731
      %3795 = vmatprep.subr.mxu0 0.0
      %3796 = vmatpush2.msra.mxu0 0.0
      %3797 = vmatprep.subr.mxu0 0.0
      %3798 = vmatpush2.msra.mxu0 0.0
      %3799 = vmatprep.subr.mxu0 0.0
      %3800 = vmatpush2.msra.mxu0 0.0
      %3801 = vmatprep.subr.mxu0 0.0
      %3802 = vmatpush2.msra.mxu0 %v3761
      %3803 = vmatprep.subr.mxu0 0.0
      %3804 = vmatpush2.msra.mxu0 %v3758
      %3805 = vmatprep.subr.mxu0 0.0
      %3806 = vmatpush2.msra.mxu0 %v3757
      %3807 = vmatprep.subr.mxu0 0.0
      %3808 = vmatpush2.msra.mxu0 %v3756
      %3809 = vmatprep.subr.mxu0 0.0
      %3810 = vmatpush2.msra.mxu0 %v3755
      %3811 = vmatprep.subr.mxu0 0.0
      %3812 = vmatpush2.msra.mxu0 %v3754
      %3813 = vmatprep.subr.mxu0 0.0
      %3814 = vmatpush2.msra.mxu0 %v3753
      %3815 = vmatprep.subr.mxu0 0.0
      %3816 = vmatpush2.msra.mxu0 %v3752
      %3817 = vmatprep.subr.mxu0 0.0
      %3818 = vmatpush2.msra.mxu0 %v3751
      %3819 = vmatprep.subr.mxu0 0.0
      %3820 = vmatpush2.msra.mxu0 %v3750
      %3821 = vmatprep.subr.mxu0 0.0
      %3822 = vmatpush2.msra.mxu0 %v3749
      %3823 = vmatprep.subr.mxu0 0.0
      %3824 = vmatpush2.msra.mxu0 %v3748
      %3825 = vmatprep.subr.mxu0 0.0
      %3826 = vmatpush2.msra.mxu0 %v3747
      %3827 = vmatprep.mubr.f32.mxu0 %v3194
      %3828 = vmatmul.mubr.f32.gmra.mxu0 %v3161
      %v3829 = vpop.f32.mrf.mxu0
      %v3830 = vadd.f32 0.0, %v3829
      %v3831 = vpop.f32.mrf.mxu0
      %3832 = vdwg.mxu0
      %s3833 = scalar_lea.vmem %s6, 48
      %v3834 = vld [vmem:[%s3833] sm:$0xff]
      %v3835 = vld [vmem:[%s3833 + $0x8] sm:$0xff]
      %v3837 = vsel %vm3378, %v3834, 0
      %v3840 = vsel %vm3378, %v3835, 0
      %3842 = vmatprep.subr.mxu0 0.0
      %3843 = vmatpush1.msra.mxu0 0.0
      %3844 = vmatprep.subr.mxu0 0.0
      %3845 = vmatpush1.msra.mxu0 0.0
      %3846 = vmatprep.subr.mxu0 0.0
      %3847 = vmatpush1.msra.mxu0 0.0
      %3848 = vmatprep.subr.mxu0 0.0
      %3849 = vmatpush1.msra.mxu0 0.0
      %3850 = vmatprep.subr.mxu0 0.0
      %3851 = vmatpush1.msra.mxu0 0.0
      %3852 = vmatprep.subr.mxu0 0.0
      %3853 = vmatpush1.msra.mxu0 0.0
      %3854 = vmatprep.subr.mxu0 0.0
      %3855 = vmatpush1.msra.mxu0 0.0
      %3856 = vmatprep.subr.mxu0 0.0
      %3857 = vmatpush1.msra.mxu0 0.0
      %3858 = vmatprep.subr.mxu0 0.0
      %3859 = vmatpush1.msra.mxu0 0.0
      %3860 = vmatprep.subr.mxu0 0.0
      %3861 = vmatpush1.msra.mxu0 0.0
      %3862 = vmatprep.subr.mxu0 0.0
      %3863 = vmatpush1.msra.mxu0 0.0
      %3864 = vmatprep.subr.mxu0 0.0
      %3865 = vmatpush1.msra.mxu0 0.0
      %3866 = vmatprep.subr.mxu0 0.0
      %3867 = vmatpush1.msra.mxu0 0.0
      %3868 = vmatprep.subr.mxu0 0.0
      %3869 = vmatpush1.msra.mxu0 0.0
      %3870 = vmatprep.subr.mxu0 0.0
      %3871 = vmatpush1.msra.mxu0 0.0
      %3872 = vmatprep.subr.mxu0 0.0
      %3873 = vmatpush1.msra.mxu0 %v3830
      %3874 = vmatprep.subr.mxu0 0.0
      %3875 = vmatpush2.msra.mxu0 0.0
      %3876 = vmatprep.subr.mxu0 0.0
      %3877 = vmatpush2.msra.mxu0 0.0
      %3878 = vmatprep.subr.mxu0 0.0
      %3879 = vmatpush2.msra.mxu0 0.0
      %3880 = vmatprep.subr.mxu0 0.0
      %3881 = vmatpush2.msra.mxu0 0.0
      %3882 = vmatprep.subr.mxu0 0.0
      %3883 = vmatpush2.msra.mxu0 0.0
      %3884 = vmatprep.subr.mxu0 0.0
      %3885 = vmatpush2.msra.mxu0 0.0
      %3886 = vmatprep.subr.mxu0 0.0
      %3887 = vmatpush2.msra.mxu0 0.0
      %3888 = vmatprep.subr.mxu0 0.0
      %3889 = vmatpush2.msra.mxu0 0.0
      %3890 = vmatprep.subr.mxu0 0.0
      %3891 = vmatpush2.msra.mxu0 0.0
      %3892 = vmatprep.subr.mxu0 0.0
      %3893 = vmatpush2.msra.mxu0 0.0
      %3894 = vmatprep.subr.mxu0 0.0
      %3895 = vmatpush2.msra.mxu0 0.0
      %3896 = vmatprep.subr.mxu0 0.0
      %3897 = vmatpush2.msra.mxu0 0.0
      %3898 = vmatprep.subr.mxu0 0.0
      %3899 = vmatpush2.msra.mxu0 0.0
      %3900 = vmatprep.subr.mxu0 0.0
      %3901 = vmatpush2.msra.mxu0 0.0
      %3902 = vmatprep.subr.mxu0 0.0
      %3903 = vmatpush2.msra.mxu0 0.0
      %3904 = vmatprep.subr.mxu0 0.0
      %3905 = vmatpush2.msra.mxu0 0.0
      %3906 = vmatprep.mubr.f32.mxu0 0.0
      %3907 = vmatmul.mubr.f32.gmra.mxu0 %v3837
      %v3908 = vpop.f32.mrf.mxu0
      %v3909 = vadd.f32 0.0, %v3908
      %v3910 = vpop.f32.mrf.mxu0
      %3911 = vmatprep.mubr.f32.mxu0 0.0
      %3912 = vmatmul.mubr.f32.gmra.mxu0 %v3840
      %v3913 = vpop.f32.mrf.mxu0
      %v3914 = vadd.f32 0.0, %v3913
      %v3915 = vpop.f32.mrf.mxu0
      %3916 = vdwg.mxu0
      %v3917 = vadd.f32 %v3728, %v3909
      %v3918 = vadd.f32 %v3729, %v3914
      %s3919 = scalar_lea.vmem %s2, 928
      %v3920 = vld [vmem:[%s3919] sm:$0xff]
      %v3921 = vld [vmem:[%s3919 + $0x8] sm:$0xff]
      %v3922 = vld [vmem:[%s3919 + $0x10] sm:$0xff]
      %v3923 = vld [vmem:[%s3919 + $0x18] sm:$0xff]
      %v3924 = vld [vmem:[%s3919 + $0x20] sm:$0xff]
      %v3925 = vld [vmem:[%s3919 + $0x28] sm:$0xff]
      %v3926 = vld [vmem:[%s3919 + $0x30] sm:$0xff]
      %v3927 = vld [vmem:[%s3919 + $0x38] sm:$0xff]
      %v3928 = vld [vmem:[%s3919 + $0x40] sm:$0xff]
      %v3929 = vld [vmem:[%s3919 + $0x48] sm:$0xff]
      %v3930 = vld [vmem:[%s3919 + $0x50] sm:$0xff]
      %v3931 = vld [vmem:[%s3919 + $0x58] sm:$0xff]
      %v3932 = vld [vmem:[%s3919 + $0x60] sm:$0xff]
      %v3933 = vld [vmem:[%s3919 + $0x68] sm:$0xff]
      %v3934 = vld [vmem:[%s3919 + $0x70] sm:$0xff]
      %v3935 = vld [vmem:[%s3919 + $0x78] sm:$0xff]
      %v3936 = vld [vmem:[%s3919 + $0x80] sm:$0xff]
      %v3937 = vld [vmem:[%s3919 + $0x88] sm:$0xff]
      %v3938 = vld [vmem:[%s3919 + $0x90] sm:$0xff]
      %v3939 = vld [vmem:[%s3919 + $0x98] sm:$0xff]
      %v3940 = vld [vmem:[%s3919 + $0xa0] sm:$0xff]
      %v3941 = vld [vmem:[%s3919 + $0xa8] sm:$0xff]
      %v3942 = vld [vmem:[%s3919 + $0xb0] sm:$0xff]
      %v3943 = vld [vmem:[%s3919 + $0xb8] sm:$0xff]
      %v3944 = vld [vmem:[%s3919 + $0xc0] sm:$0xff]
      %v3945 = vld [vmem:[%s3919 + $0xc8] sm:$0xff]
      %v3946 = vld [vmem:[%s3919 + $0xd0] sm:$0xff]
      %v3947 = vld [vmem:[%s3919 + $0xd8] sm:$0xff]
      %v3948 = vld [vmem:[%s3919 + $0xe0] sm:$0x1]
      %v3950 = vsel %vm3196, %v3948, 0
      %3952 = vmatprep.subr.mxu0 0.0
      %3953 = vmatpush1.msra.mxu0 %v3935
      %3954 = vmatprep.subr.mxu0 0.0
      %3955 = vmatpush1.msra.mxu0 %v3934
      %3956 = vmatprep.subr.mxu0 0.0
      %3957 = vmatpush1.msra.mxu0 %v3933
      %3958 = vmatprep.subr.mxu0 0.0
      %3959 = vmatpush1.msra.mxu0 %v3932
      %3960 = vmatprep.subr.mxu0 0.0
      %3961 = vmatpush1.msra.mxu0 %v3931
      %3962 = vmatprep.subr.mxu0 0.0
      %3963 = vmatpush1.msra.mxu0 %v3930
      %3964 = vmatprep.subr.mxu0 0.0
      %3965 = vmatpush1.msra.mxu0 %v3929
      %3966 = vmatprep.subr.mxu0 0.0
      %3967 = vmatpush1.msra.mxu0 %v3928
      %3968 = vmatprep.subr.mxu0 0.0
      %3969 = vmatpush1.msra.mxu0 %v3927
      %3970 = vmatprep.subr.mxu0 0.0
      %3971 = vmatpush1.msra.mxu0 %v3926
      %3972 = vmatprep.subr.mxu0 0.0
      %3973 = vmatpush1.msra.mxu0 %v3925
      %3974 = vmatprep.subr.mxu0 0.0
      %3975 = vmatpush1.msra.mxu0 %v3924
      %3976 = vmatprep.subr.mxu0 0.0
      %3977 = vmatpush1.msra.mxu0 %v3923
      %3978 = vmatprep.subr.mxu0 0.0
      %3979 = vmatpush1.msra.mxu0 %v3922
      %3980 = vmatprep.subr.mxu0 0.0
      %3981 = vmatpush1.msra.mxu0 %v3921
      %3982 = vmatprep.subr.mxu0 0.0
      %3983 = vmatpush1.msra.mxu0 %v3920
      %3984 = vmatprep.subr.mxu0 0.0
      %3985 = vmatpush2.msra.mxu0 0.0
      %3986 = vmatprep.subr.mxu0 0.0
      %3987 = vmatpush2.msra.mxu0 0.0
      %3988 = vmatprep.subr.mxu0 0.0
      %3989 = vmatpush2.msra.mxu0 0.0
      %3990 = vmatprep.subr.mxu0 0.0
      %3991 = vmatpush2.msra.mxu0 %v3950
      %3992 = vmatprep.subr.mxu0 0.0
      %3993 = vmatpush2.msra.mxu0 %v3947
      %3994 = vmatprep.subr.mxu0 0.0
      %3995 = vmatpush2.msra.mxu0 %v3946
      %3996 = vmatprep.subr.mxu0 0.0
      %3997 = vmatpush2.msra.mxu0 %v3945
      %3998 = vmatprep.subr.mxu0 0.0
      %3999 = vmatpush2.msra.mxu0 %v3944
      %4000 = vmatprep.subr.mxu0 0.0
      %4001 = vmatpush2.msra.mxu0 %v3943
      %4002 = vmatprep.subr.mxu0 0.0
      %4003 = vmatpush2.msra.mxu0 %v3942
      %4004 = vmatprep.subr.mxu0 0.0
      %4005 = vmatpush2.msra.mxu0 %v3941
      %4006 = vmatprep.subr.mxu0 0.0
      %4007 = vmatpush2.msra.mxu0 %v3940
      %4008 = vmatprep.subr.mxu0 0.0
      %4009 = vmatpush2.msra.mxu0 %v3939
      %4010 = vmatprep.subr.mxu0 0.0
      %4011 = vmatpush2.msra.mxu0 %v3938
      %4012 = vmatprep.subr.mxu0 0.0
      %4013 = vmatpush2.msra.mxu0 %v3937
      %4014 = vmatprep.subr.mxu0 0.0
      %4015 = vmatpush2.msra.mxu0 %v3936
      %4016 = vmatprep.mubr.f32.mxu0 %v3194
      %4017 = vmatmul.mubr.f32.gmra.mxu0 %v3161
      %v4018 = vpop.f32.mrf.mxu0
      %v4019 = vadd.f32 0.0, %v4018
      %v4020 = vpop.f32.mrf.mxu0
      %4021 = vdwg.mxu0
      %s4022 = scalar_lea.vmem %s6, 64
      %v4023 = vld [vmem:[%s4022] sm:$0xff]
      %v4024 = vld [vmem:[%s4022 + $0x8] sm:$0xff]
      %v4026 = vsel %vm3378, %v4023, 0
      %v4029 = vsel %vm3378, %v4024, 0
      %4031 = vmatprep.subr.mxu0 0.0
      %4032 = vmatpush1.msra.mxu0 0.0
      %4033 = vmatprep.subr.mxu0 0.0
      %4034 = vmatpush1.msra.mxu0 0.0
      %4035 = vmatprep.subr.mxu0 0.0
      %4036 = vmatpush1.msra.mxu0 0.0
      %4037 = vmatprep.subr.mxu0 0.0
      %4038 = vmatpush1.msra.mxu0 0.0
      %4039 = vmatprep.subr.mxu0 0.0
      %4040 = vmatpush1.msra.mxu0 0.0
      %4041 = vmatprep.subr.mxu0 0.0
      %4042 = vmatpush1.msra.mxu0 0.0
      %4043 = vmatprep.subr.mxu0 0.0
      %4044 = vmatpush1.msra.mxu0 0.0
      %4045 = vmatprep.subr.mxu0 0.0
      %4046 = vmatpush1.msra.mxu0 0.0
      %4047 = vmatprep.subr.mxu0 0.0
      %4048 = vmatpush1.msra.mxu0 0.0
      %4049 = vmatprep.subr.mxu0 0.0
      %4050 = vmatpush1.msra.mxu0 0.0
      %4051 = vmatprep.subr.mxu0 0.0
      %4052 = vmatpush1.msra.mxu0 0.0
      %4053 = vmatprep.subr.mxu0 0.0
      %4054 = vmatpush1.msra.mxu0 0.0
      %4055 = vmatprep.subr.mxu0 0.0
      %4056 = vmatpush1.msra.mxu0 0.0
      %4057 = vmatprep.subr.mxu0 0.0
      %4058 = vmatpush1.msra.mxu0 0.0
      %4059 = vmatprep.subr.mxu0 0.0
      %4060 = vmatpush1.msra.mxu0 0.0
      %4061 = vmatprep.subr.mxu0 0.0
      %4062 = vmatpush1.msra.mxu0 %v4019
      %4063 = vmatprep.subr.mxu0 0.0
      %4064 = vmatpush2.msra.mxu0 0.0
      %4065 = vmatprep.subr.mxu0 0.0
      %4066 = vmatpush2.msra.mxu0 0.0
      %4067 = vmatprep.subr.mxu0 0.0
      %4068 = vmatpush2.msra.mxu0 0.0
      %4069 = vmatprep.subr.mxu0 0.0
      %4070 = vmatpush2.msra.mxu0 0.0
      %4071 = vmatprep.subr.mxu0 0.0
      %4072 = vmatpush2.msra.mxu0 0.0
      %4073 = vmatprep.subr.mxu0 0.0
      %4074 = vmatpush2.msra.mxu0 0.0
      %4075 = vmatprep.subr.mxu0 0.0
      %4076 = vmatpush2.msra.mxu0 0.0
      %4077 = vmatprep.subr.mxu0 0.0
      %4078 = vmatpush2.msra.mxu0 0.0
      %4079 = vmatprep.subr.mxu0 0.0
      %4080 = vmatpush2.msra.mxu0 0.0
      %4081 = vmatprep.subr.mxu0 0.0
      %4082 = vmatpush2.msra.mxu0 0.0
      %4083 = vmatprep.subr.mxu0 0.0
      %4084 = vmatpush2.msra.mxu0 0.0
      %4085 = vmatprep.subr.mxu0 0.0
      %4086 = vmatpush2.msra.mxu0 0.0
      %4087 = vmatprep.subr.mxu0 0.0
      %4088 = vmatpush2.msra.mxu0 0.0
      %4089 = vmatprep.subr.mxu0 0.0
      %4090 = vmatpush2.msra.mxu0 0.0
      %4091 = vmatprep.subr.mxu0 0.0
      %4092 = vmatpush2.msra.mxu0 0.0
      %4093 = vmatprep.subr.mxu0 0.0
      %4094 = vmatpush2.msra.mxu0 0.0
      %4095 = vmatprep.mubr.f32.mxu0 0.0
      %4096 = vmatmul.mubr.f32.gmra.mxu0 %v4026
      %v4097 = vpop.f32.mrf.mxu0
      %v4098 = vadd.f32 0.0, %v4097
      %v4099 = vpop.f32.mrf.mxu0
      %4100 = vmatprep.mubr.f32.mxu0 0.0
      %4101 = vmatmul.mubr.f32.gmra.mxu0 %v4029
      %v4102 = vpop.f32.mrf.mxu0
      %v4103 = vadd.f32 0.0, %v4102
      %v4104 = vpop.f32.mrf.mxu0
      %4105 = vdwg.mxu0
      %v4106 = vadd.f32 %v3917, %v4098
      %v4107 = vadd.f32 %v3918, %v4103
      %s4108 = scalar_lea.vmem %s2, 1160
      %v4109 = vld [vmem:[%s4108] sm:$0xff]
      %v4110 = vld [vmem:[%s4108 + $0x8] sm:$0xff]
      %v4111 = vld [vmem:[%s4108 + $0x10] sm:$0xff]
      %v4112 = vld [vmem:[%s4108 + $0x18] sm:$0xff]
      %v4113 = vld [vmem:[%s4108 + $0x20] sm:$0xff]
      %v4114 = vld [vmem:[%s4108 + $0x28] sm:$0xff]
      %v4115 = vld [vmem:[%s4108 + $0x30] sm:$0xff]
      %v4116 = vld [vmem:[%s4108 + $0x38] sm:$0xff]
      %v4117 = vld [vmem:[%s4108 + $0x40] sm:$0xff]
      %v4118 = vld [vmem:[%s4108 + $0x48] sm:$0xff]
      %v4119 = vld [vmem:[%s4108 + $0x50] sm:$0xff]
      %v4120 = vld [vmem:[%s4108 + $0x58] sm:$0xff]
      %v4121 = vld [vmem:[%s4108 + $0x60] sm:$0xff]
      %v4122 = vld [vmem:[%s4108 + $0x68] sm:$0xff]
      %v4123 = vld [vmem:[%s4108 + $0x70] sm:$0xff]
      %v4124 = vld [vmem:[%s4108 + $0x78] sm:$0xff]
      %v4125 = vld [vmem:[%s4108 + $0x80] sm:$0xff]
      %v4126 = vld [vmem:[%s4108 + $0x88] sm:$0xff]
      %v4127 = vld [vmem:[%s4108 + $0x90] sm:$0xff]
      %v4128 = vld [vmem:[%s4108 + $0x98] sm:$0xff]
      %v4129 = vld [vmem:[%s4108 + $0xa0] sm:$0xff]
      %v4130 = vld [vmem:[%s4108 + $0xa8] sm:$0xff]
      %v4131 = vld [vmem:[%s4108 + $0xb0] sm:$0xff]
      %v4132 = vld [vmem:[%s4108 + $0xb8] sm:$0xff]
      %v4133 = vld [vmem:[%s4108 + $0xc0] sm:$0xff]
      %v4134 = vld [vmem:[%s4108 + $0xc8] sm:$0xff]
      %v4135 = vld [vmem:[%s4108 + $0xd0] sm:$0xff]
      %v4136 = vld [vmem:[%s4108 + $0xd8] sm:$0xff]
      %v4137 = vld [vmem:[%s4108 + $0xe0] sm:$0x1]
      %v4139 = vsel %vm3196, %v4137, 0
      %4141 = vmatprep.subr.mxu0 0.0
      %4142 = vmatpush1.msra.mxu0 %v4124
      %4143 = vmatprep.subr.mxu0 0.0
      %4144 = vmatpush1.msra.mxu0 %v4123
      %4145 = vmatprep.subr.mxu0 0.0
      %4146 = vmatpush1.msra.mxu0 %v4122
      %4147 = vmatprep.subr.mxu0 0.0
      %4148 = vmatpush1.msra.mxu0 %v4121
      %4149 = vmatprep.subr.mxu0 0.0
      %4150 = vmatpush1.msra.mxu0 %v4120
      %4151 = vmatprep.subr.mxu0 0.0
      %4152 = vmatpush1.msra.mxu0 %v4119
      %4153 = vmatprep.subr.mxu0 0.0
      %4154 = vmatpush1.msra.mxu0 %v4118
      %4155 = vmatprep.subr.mxu0 0.0
      %4156 = vmatpush1.msra.mxu0 %v4117
      %4157 = vmatprep.subr.mxu0 0.0
      %4158 = vmatpush1.msra.mxu0 %v4116
      %4159 = vmatprep.subr.mxu0 0.0
      %4160 = vmatpush1.msra.mxu0 %v4115
      %4161 = vmatprep.subr.mxu0 0.0
      %4162 = vmatpush1.msra.mxu0 %v4114
      %4163 = vmatprep.subr.mxu0 0.0
      %4164 = vmatpush1.msra.mxu0 %v4113
      %4165 = vmatprep.subr.mxu0 0.0
      %4166 = vmatpush1.msra.mxu0 %v4112
      %4167 = vmatprep.subr.mxu0 0.0
      %4168 = vmatpush1.msra.mxu0 %v4111
      %4169 = vmatprep.subr.mxu0 0.0
      %4170 = vmatpush1.msra.mxu0 %v4110
      %4171 = vmatprep.subr.mxu0 0.0
      %4172 = vmatpush1.msra.mxu0 %v4109
      %4173 = vmatprep.subr.mxu0 0.0
      %4174 = vmatpush2.msra.mxu0 0.0
      %4175 = vmatprep.subr.mxu0 0.0
      %4176 = vmatpush2.msra.mxu0 0.0
      %4177 = vmatprep.subr.mxu0 0.0
      %4178 = vmatpush2.msra.mxu0 0.0
      %4179 = vmatprep.subr.mxu0 0.0
      %4180 = vmatpush2.msra.mxu0 %v4139
      %4181 = vmatprep.subr.mxu0 0.0
      %4182 = vmatpush2.msra.mxu0 %v4136
      %4183 = vmatprep.subr.mxu0 0.0
      %4184 = vmatpush2.msra.mxu0 %v4135
      %4185 = vmatprep.subr.mxu0 0.0
      %4186 = vmatpush2.msra.mxu0 %v4134
      %4187 = vmatprep.subr.mxu0 0.0
      %4188 = vmatpush2.msra.mxu0 %v4133
      %4189 = vmatprep.subr.mxu0 0.0
      %4190 = vmatpush2.msra.mxu0 %v4132
      %4191 = vmatprep.subr.mxu0 0.0
      %4192 = vmatpush2.msra.mxu0 %v4131
      %4193 = vmatprep.subr.mxu0 0.0
      %4194 = vmatpush2.msra.mxu0 %v4130
      %4195 = vmatprep.subr.mxu0 0.0
      %4196 = vmatpush2.msra.mxu0 %v4129
      %4197 = vmatprep.subr.mxu0 0.0
      %4198 = vmatpush2.msra.mxu0 %v4128
      %4199 = vmatprep.subr.mxu0 0.0
      %4200 = vmatpush2.msra.mxu0 %v4127
      %4201 = vmatprep.subr.mxu0 0.0
      %4202 = vmatpush2.msra.mxu0 %v4126
      %4203 = vmatprep.subr.mxu0 0.0
      %4204 = vmatpush2.msra.mxu0 %v4125
      %4205 = vmatprep.mubr.f32.mxu0 %v3194
      %4206 = vmatmul.mubr.f32.gmra.mxu0 %v3161
      %v4207 = vpop.f32.mrf.mxu0
      %v4208 = vadd.f32 0.0, %v4207
      %v4209 = vpop.f32.mrf.mxu0
      %4210 = vdwg.mxu0
      %s4211 = scalar_lea.vmem %s6, 80
      %v4212 = vld [vmem:[%s4211] sm:$0xff]
      %v4213 = vld [vmem:[%s4211 + $0x8] sm:$0xff]
      %v4215 = vsel %vm3378, %v4212, 0
      %v4218 = vsel %vm3378, %v4213, 0
      %4220 = vmatprep.subr.mxu0 0.0
      %4221 = vmatpush1.msra.mxu0 0.0
      %4222 = vmatprep.subr.mxu0 0.0
      %4223 = vmatpush1.msra.mxu0 0.0
      %4224 = vmatprep.subr.mxu0 0.0
      %4225 = vmatpush1.msra.mxu0 0.0
      %4226 = vmatprep.subr.mxu0 0.0
      %4227 = vmatpush1.msra.mxu0 0.0
      %4228 = vmatprep.subr.mxu0 0.0
      %4229 = vmatpush1.msra.mxu0 0.0
      %4230 = vmatprep.subr.mxu0 0.0
      %4231 = vmatpush1.msra.mxu0 0.0
      %4232 = vmatprep.subr.mxu0 0.0
      %4233 = vmatpush1.msra.mxu0 0.0
      %4234 = vmatprep.subr.mxu0 0.0
      %4235 = vmatpush1.msra.mxu0 0.0
      %4236 = vmatprep.subr.mxu0 0.0
      %4237 = vmatpush1.msra.mxu0 0.0
      %4238 = vmatprep.subr.mxu0 0.0
      %4239 = vmatpush1.msra.mxu0 0.0
      %4240 = vmatprep.subr.mxu0 0.0
      %4241 = vmatpush1.msra.mxu0 0.0
      %4242 = vmatprep.subr.mxu0 0.0
      %4243 = vmatpush1.msra.mxu0 0.0
      %4244 = vmatprep.subr.mxu0 0.0
      %4245 = vmatpush1.msra.mxu0 0.0
      %4246 = vmatprep.subr.mxu0 0.0
      %4247 = vmatpush1.msra.mxu0 0.0
      %4248 = vmatprep.subr.mxu0 0.0
      %4249 = vmatpush1.msra.mxu0 0.0
      %4250 = vmatprep.subr.mxu0 0.0
      %4251 = vmatpush1.msra.mxu0 %v4208
      %4252 = vmatprep.subr.mxu0 0.0
      %4253 = vmatpush2.msra.mxu0 0.0
      %4254 = vmatprep.subr.mxu0 0.0
      %4255 = vmatpush2.msra.mxu0 0.0
      %4256 = vmatprep.subr.mxu0 0.0
      %4257 = vmatpush2.msra.mxu0 0.0
      %4258 = vmatprep.subr.mxu0 0.0
      %4259 = vmatpush2.msra.mxu0 0.0
      %4260 = vmatprep.subr.mxu0 0.0
      %4261 = vmatpush2.msra.mxu0 0.0
      %4262 = vmatprep.subr.mxu0 0.0
      %4263 = vmatpush2.msra.mxu0 0.0
      %4264 = vmatprep.subr.mxu0 0.0
      %4265 = vmatpush2.msra.mxu0 0.0
      %4266 = vmatprep.subr.mxu0 0.0
      %4267 = vmatpush2.msra.mxu0 0.0
      %4268 = vmatprep.subr.mxu0 0.0
      %4269 = vmatpush2.msra.mxu0 0.0
      %4270 = vmatprep.subr.mxu0 0.0
      %4271 = vmatpush2.msra.mxu0 0.0
      %4272 = vmatprep.subr.mxu0 0.0
      %4273 = vmatpush2.msra.mxu0 0.0
      %4274 = vmatprep.subr.mxu0 0.0
      %4275 = vmatpush2.msra.mxu0 0.0
      %4276 = vmatprep.subr.mxu0 0.0
      %4277 = vmatpush2.msra.mxu0 0.0
      %4278 = vmatprep.subr.mxu0 0.0
      %4279 = vmatpush2.msra.mxu0 0.0
      %4280 = vmatprep.subr.mxu0 0.0
      %4281 = vmatpush2.msra.mxu0 0.0
      %4282 = vmatprep.subr.mxu0 0.0
      %4283 = vmatpush2.msra.mxu0 0.0
      %4284 = vmatprep.mubr.f32.mxu0 0.0
      %4285 = vmatmul.mubr.f32.gmra.mxu0 %v4215
      %v4286 = vpop.f32.mrf.mxu0
      %v4287 = vadd.f32 0.0, %v4286
      %v4288 = vpop.f32.mrf.mxu0
      %4289 = vmatprep.mubr.f32.mxu0 0.0
      %4290 = vmatmul.mubr.f32.gmra.mxu0 %v4218
      %v4291 = vpop.f32.mrf.mxu0
      %v4292 = vadd.f32 0.0, %v4291
      %v4293 = vpop.f32.mrf.mxu0
      %4294 = vdwg.mxu0
      %v4295 = vadd.f32 %v4106, %v4287
      %v4296 = vadd.f32 %v4107, %v4292
      %s4297 = scalar_lea.vmem %s2, 1392
      %v4298 = vld [vmem:[%s4297] sm:$0xff]
      %v4299 = vld [vmem:[%s4297 + $0x8] sm:$0xff]
      %v4300 = vld [vmem:[%s4297 + $0x10] sm:$0xff]
      %v4301 = vld [vmem:[%s4297 + $0x18] sm:$0xff]
      %v4302 = vld [vmem:[%s4297 + $0x20] sm:$0xff]
      %v4303 = vld [vmem:[%s4297 + $0x28] sm:$0xff]
      %v4304 = vld [vmem:[%s4297 + $0x30] sm:$0xff]
      %v4305 = vld [vmem:[%s4297 + $0x38] sm:$0xff]
      %v4306 = vld [vmem:[%s4297 + $0x40] sm:$0xff]
      %v4307 = vld [vmem:[%s4297 + $0x48] sm:$0xff]
      %v4308 = vld [vmem:[%s4297 + $0x50] sm:$0xff]
      %v4309 = vld [vmem:[%s4297 + $0x58] sm:$0xff]
      %v4310 = vld [vmem:[%s4297 + $0x60] sm:$0xff]
      %v4311 = vld [vmem:[%s4297 + $0x68] sm:$0xff]
      %v4312 = vld [vmem:[%s4297 + $0x70] sm:$0xff]
      %v4313 = vld [vmem:[%s4297 + $0x78] sm:$0xff]
      %v4314 = vld [vmem:[%s4297 + $0x80] sm:$0xff]
      %v4315 = vld [vmem:[%s4297 + $0x88] sm:$0xff]
      %v4316 = vld [vmem:[%s4297 + $0x90] sm:$0xff]
      %v4317 = vld [vmem:[%s4297 + $0x98] sm:$0xff]
      %v4318 = vld [vmem:[%s4297 + $0xa0] sm:$0xff]
      %v4319 = vld [vmem:[%s4297 + $0xa8] sm:$0xff]
      %v4320 = vld [vmem:[%s4297 + $0xb0] sm:$0xff]
      %v4321 = vld [vmem:[%s4297 + $0xb8] sm:$0xff]
      %v4322 = vld [vmem:[%s4297 + $0xc0] sm:$0xff]
      %v4323 = vld [vmem:[%s4297 + $0xc8] sm:$0xff]
      %v4324 = vld [vmem:[%s4297 + $0xd0] sm:$0xff]
      %v4325 = vld [vmem:[%s4297 + $0xd8] sm:$0xff]
      %v4326 = vld [vmem:[%s4297 + $0xe0] sm:$0x1]
      %v4328 = vsel %vm3196, %v4326, 0
      %4330 = vmatprep.subr.mxu0 0.0
      %4331 = vmatpush1.msra.mxu0 %v4313
      %4332 = vmatprep.subr.mxu0 0.0
      %4333 = vmatpush1.msra.mxu0 %v4312
      %4334 = vmatprep.subr.mxu0 0.0
      %4335 = vmatpush1.msra.mxu0 %v4311
      %4336 = vmatprep.subr.mxu0 0.0
      %4337 = vmatpush1.msra.mxu0 %v4310
      %4338 = vmatprep.subr.mxu0 0.0
      %4339 = vmatpush1.msra.mxu0 %v4309
      %4340 = vmatprep.subr.mxu0 0.0
      %4341 = vmatpush1.msra.mxu0 %v4308
      %4342 = vmatprep.subr.mxu0 0.0
      %4343 = vmatpush1.msra.mxu0 %v4307
      %4344 = vmatprep.subr.mxu0 0.0
      %4345 = vmatpush1.msra.mxu0 %v4306
      %4346 = vmatprep.subr.mxu0 0.0
      %4347 = vmatpush1.msra.mxu0 %v4305
      %4348 = vmatprep.subr.mxu0 0.0
      %4349 = vmatpush1.msra.mxu0 %v4304
      %4350 = vmatprep.subr.mxu0 0.0
      %4351 = vmatpush1.msra.mxu0 %v4303
      %4352 = vmatprep.subr.mxu0 0.0
      %4353 = vmatpush1.msra.mxu0 %v4302
      %4354 = vmatprep.subr.mxu0 0.0
      %4355 = vmatpush1.msra.mxu0 %v4301
      %4356 = vmatprep.subr.mxu0 0.0
      %4357 = vmatpush1.msra.mxu0 %v4300
      %4358 = vmatprep.subr.mxu0 0.0
      %4359 = vmatpush1.msra.mxu0 %v4299
      %4360 = vmatprep.subr.mxu0 0.0
      %4361 = vmatpush1.msra.mxu0 %v4298
      %4362 = vmatprep.subr.mxu0 0.0
      %4363 = vmatpush2.msra.mxu0 0.0
      %4364 = vmatprep.subr.mxu0 0.0
      %4365 = vmatpush2.msra.mxu0 0.0
      %4366 = vmatprep.subr.mxu0 0.0
      %4367 = vmatpush2.msra.mxu0 0.0
      %4368 = vmatprep.subr.mxu0 0.0
      %4369 = vmatpush2.msra.mxu0 %v4328
      %4370 = vmatprep.subr.mxu0 0.0
      %4371 = vmatpush2.msra.mxu0 %v4325
      %4372 = vmatprep.subr.mxu0 0.0
      %4373 = vmatpush2.msra.mxu0 %v4324
      %4374 = vmatprep.subr.mxu0 0.0
      %4375 = vmatpush2.msra.mxu0 %v4323
      %4376 = vmatprep.subr.mxu0 0.0
      %4377 = vmatpush2.msra.mxu0 %v4322
      %4378 = vmatprep.subr.mxu0 0.0
      %4379 = vmatpush2.msra.mxu0 %v4321
      %4380 = vmatprep.subr.mxu0 0.0
      %4381 = vmatpush2.msra.mxu0 %v4320
      %4382 = vmatprep.subr.mxu0 0.0
      %4383 = vmatpush2.msra.mxu0 %v4319
      %4384 = vmatprep.subr.mxu0 0.0
      %4385 = vmatpush2.msra.mxu0 %v4318
      %4386 = vmatprep.subr.mxu0 0.0
      %4387 = vmatpush2.msra.mxu0 %v4317
      %4388 = vmatprep.subr.mxu0 0.0
      %4389 = vmatpush2.msra.mxu0 %v4316
      %4390 = vmatprep.subr.mxu0 0.0
      %4391 = vmatpush2.msra.mxu0 %v4315
      %4392 = vmatprep.subr.mxu0 0.0
      %4393 = vmatpush2.msra.mxu0 %v4314
      %4394 = vmatprep.mubr.f32.mxu0 %v3194
      %4395 = vmatmul.mubr.f32.gmra.mxu0 %v3161
      %v4396 = vpop.f32.mrf.mxu0
      %v4397 = vadd.f32 0.0, %v4396
      %v4398 = vpop.f32.mrf.mxu0
      %4399 = vdwg.mxu0
      %s4400 = scalar_lea.vmem %s6, 96
      %v4401 = vld [vmem:[%s4400] sm:$0xff]
      %v4402 = vld [vmem:[%s4400 + $0x8] sm:$0xff]
      %v4404 = vsel %vm3378, %v4401, 0
      %v4407 = vsel %vm3378, %v4402, 0
      %4409 = vmatprep.subr.mxu0 0.0
      %4410 = vmatpush1.msra.mxu0 0.0
      %4411 = vmatprep.subr.mxu0 0.0
      %4412 = vmatpush1.msra.mxu0 0.0
      %4413 = vmatprep.subr.mxu0 0.0
      %4414 = vmatpush1.msra.mxu0 0.0
      %4415 = vmatprep.subr.mxu0 0.0
      %4416 = vmatpush1.msra.mxu0 0.0
      %4417 = vmatprep.subr.mxu0 0.0
      %4418 = vmatpush1.msra.mxu0 0.0
      %4419 = vmatprep.subr.mxu0 0.0
      %4420 = vmatpush1.msra.mxu0 0.0
      %4421 = vmatprep.subr.mxu0 0.0
      %4422 = vmatpush1.msra.mxu0 0.0
      %4423 = vmatprep.subr.mxu0 0.0
      %4424 = vmatpush1.msra.mxu0 0.0
      %4425 = vmatprep.subr.mxu0 0.0
      %4426 = vmatpush1.msra.mxu0 0.0
      %4427 = vmatprep.subr.mxu0 0.0
      %4428 = vmatpush1.msra.mxu0 0.0
      %4429 = vmatprep.subr.mxu0 0.0
      %4430 = vmatpush1.msra.mxu0 0.0
      %4431 = vmatprep.subr.mxu0 0.0
      %4432 = vmatpush1.msra.mxu0 0.0
      %4433 = vmatprep.subr.mxu0 0.0
      %4434 = vmatpush1.msra.mxu0 0.0
      %4435 = vmatprep.subr.mxu0 0.0
      %4436 = vmatpush1.msra.mxu0 0.0
      %4437 = vmatprep.subr.mxu0 0.0
      %4438 = vmatpush1.msra.mxu0 0.0
      %4439 = vmatprep.subr.mxu0 0.0
      %4440 = vmatpush1.msra.mxu0 %v4397
      %4441 = vmatprep.subr.mxu0 0.0
      %4442 = vmatpush2.msra.mxu0 0.0
      %4443 = vmatprep.subr.mxu0 0.0
      %4444 = vmatpush2.msra.mxu0 0.0
      %4445 = vmatprep.subr.mxu0 0.0
      %4446 = vmatpush2.msra.mxu0 0.0
      %4447 = vmatprep.subr.mxu0 0.0
      %4448 = vmatpush2.msra.mxu0 0.0
      %4449 = vmatprep.subr.mxu0 0.0
      %4450 = vmatpush2.msra.mxu0 0.0
      %4451 = vmatprep.subr.mxu0 0.0
      %4452 = vmatpush2.msra.mxu0 0.0
      %4453 = vmatprep.subr.mxu0 0.0
      %4454 = vmatpush2.msra.mxu0 0.0
      %4455 = vmatprep.subr.mxu0 0.0
      %4456 = vmatpush2.msra.mxu0 0.0
      %4457 = vmatprep.subr.mxu0 0.0
      %4458 = vmatpush2.msra.mxu0 0.0
      %4459 = vmatprep.subr.mxu0 0.0
      %4460 = vmatpush2.msra.mxu0 0.0
      %4461 = vmatprep.subr.mxu0 0.0
      %4462 = vmatpush2.msra.mxu0 0.0
      %4463 = vmatprep.subr.mxu0 0.0
      %4464 = vmatpush2.msra.mxu0 0.0
      %4465 = vmatprep.subr.mxu0 0.0
      %4466 = vmatpush2.msra.mxu0 0.0
      %4467 = vmatprep.subr.mxu0 0.0
      %4468 = vmatpush2.msra.mxu0 0.0
      %4469 = vmatprep.subr.mxu0 0.0
      %4470 = vmatpush2.msra.mxu0 0.0
      %4471 = vmatprep.subr.mxu0 0.0
      %4472 = vmatpush2.msra.mxu0 0.0
      %4473 = vmatprep.mubr.f32.mxu0 0.0
      %4474 = vmatmul.mubr.f32.gmra.mxu0 %v4404
      %v4475 = vpop.f32.mrf.mxu0
      %v4476 = vadd.f32 0.0, %v4475
      %v4477 = vpop.f32.mrf.mxu0
      %4478 = vmatprep.mubr.f32.mxu0 0.0
      %4479 = vmatmul.mubr.f32.gmra.mxu0 %v4407
      %v4480 = vpop.f32.mrf.mxu0
      %v4481 = vadd.f32 0.0, %v4480
      %v4482 = vpop.f32.mrf.mxu0
      %4483 = vdwg.mxu0
      %v4484 = vadd.f32 %v4295, %v4476
      %v4485 = vadd.f32 %v4296, %v4481
      %s4486 = scalar_lea.vmem %s2, 1624
      %v4487 = vld [vmem:[%s4486] sm:$0xff]
      %v4488 = vld [vmem:[%s4486 + $0x8] sm:$0xff]
      %v4489 = vld [vmem:[%s4486 + $0x10] sm:$0xff]
      %v4490 = vld [vmem:[%s4486 + $0x18] sm:$0xff]
      %v4491 = vld [vmem:[%s4486 + $0x20] sm:$0xff]
      %v4492 = vld [vmem:[%s4486 + $0x28] sm:$0xff]
      %v4493 = vld [vmem:[%s4486 + $0x30] sm:$0xff]
      %v4494 = vld [vmem:[%s4486 + $0x38] sm:$0xff]
      %v4495 = vld [vmem:[%s4486 + $0x40] sm:$0xff]
      %v4496 = vld [vmem:[%s4486 + $0x48] sm:$0xff]
      %v4497 = vld [vmem:[%s4486 + $0x50] sm:$0xff]
      %v4498 = vld [vmem:[%s4486 + $0x58] sm:$0xff]
      %v4499 = vld [vmem:[%s4486 + $0x60] sm:$0xff]
      %v4500 = vld [vmem:[%s4486 + $0x68] sm:$0xff]
      %v4501 = vld [vmem:[%s4486 + $0x70] sm:$0xff]
      %v4502 = vld [vmem:[%s4486 + $0x78] sm:$0xff]
      %v4503 = vld [vmem:[%s4486 + $0x80] sm:$0xff]
      %v4504 = vld [vmem:[%s4486 + $0x88] sm:$0xff]
      %v4505 = vld [vmem:[%s4486 + $0x90] sm:$0xff]
      %v4506 = vld [vmem:[%s4486 + $0x98] sm:$0xff]
      %v4507 = vld [vmem:[%s4486 + $0xa0] sm:$0xff]
      %v4508 = vld [vmem:[%s4486 + $0xa8] sm:$0xff]
      %v4509 = vld [vmem:[%s4486 + $0xb0] sm:$0xff]
      %v4510 = vld [vmem:[%s4486 + $0xb8] sm:$0xff]
      %v4511 = vld [vmem:[%s4486 + $0xc0] sm:$0xff]
      %v4512 = vld [vmem:[%s4486 + $0xc8] sm:$0xff]
      %v4513 = vld [vmem:[%s4486 + $0xd0] sm:$0xff]
      %v4514 = vld [vmem:[%s4486 + $0xd8] sm:$0xff]
      %v4515 = vld [vmem:[%s4486 + $0xe0] sm:$0x1]
      %v4517 = vsel %vm3196, %v4515, 0
      %4519 = vmatprep.subr.mxu0 0.0
      %4520 = vmatpush1.msra.mxu0 %v4502
      %4521 = vmatprep.subr.mxu0 0.0
      %4522 = vmatpush1.msra.mxu0 %v4501
      %4523 = vmatprep.subr.mxu0 0.0
      %4524 = vmatpush1.msra.mxu0 %v4500
      %4525 = vmatprep.subr.mxu0 0.0
      %4526 = vmatpush1.msra.mxu0 %v4499
      %4527 = vmatprep.subr.mxu0 0.0
      %4528 = vmatpush1.msra.mxu0 %v4498
      %4529 = vmatprep.subr.mxu0 0.0
      %4530 = vmatpush1.msra.mxu0 %v4497
      %4531 = vmatprep.subr.mxu0 0.0
      %4532 = vmatpush1.msra.mxu0 %v4496
      %4533 = vmatprep.subr.mxu0 0.0
      %4534 = vmatpush1.msra.mxu0 %v4495
      %4535 = vmatprep.subr.mxu0 0.0
      %4536 = vmatpush1.msra.mxu0 %v4494
      %4537 = vmatprep.subr.mxu0 0.0
      %4538 = vmatpush1.msra.mxu0 %v4493
      %4539 = vmatprep.subr.mxu0 0.0
      %4540 = vmatpush1.msra.mxu0 %v4492
      %4541 = vmatprep.subr.mxu0 0.0
      %4542 = vmatpush1.msra.mxu0 %v4491
      %4543 = vmatprep.subr.mxu0 0.0
      %4544 = vmatpush1.msra.mxu0 %v4490
      %4545 = vmatprep.subr.mxu0 0.0
      %4546 = vmatpush1.msra.mxu0 %v4489
      %4547 = vmatprep.subr.mxu0 0.0
      %4548 = vmatpush1.msra.mxu0 %v4488
      %4549 = vmatprep.subr.mxu0 0.0
      %4550 = vmatpush1.msra.mxu0 %v4487
      %4551 = vmatprep.subr.mxu0 0.0
      %4552 = vmatpush2.msra.mxu0 0.0
      %4553 = vmatprep.subr.mxu0 0.0
      %4554 = vmatpush2.msra.mxu0 0.0
      %4555 = vmatprep.subr.mxu0 0.0
      %4556 = vmatpush2.msra.mxu0 0.0
      %4557 = vmatprep.subr.mxu0 0.0
      %4558 = vmatpush2.msra.mxu0 %v4517
      %4559 = vmatprep.subr.mxu0 0.0
      %4560 = vmatpush2.msra.mxu0 %v4514
      %4561 = vmatprep.subr.mxu0 0.0
      %4562 = vmatpush2.msra.mxu0 %v4513
      %4563 = vmatprep.subr.mxu0 0.0
      %4564 = vmatpush2.msra.mxu0 %v4512
      %4565 = vmatprep.subr.mxu0 0.0
      %4566 = vmatpush2.msra.mxu0 %v4511
      %4567 = vmatprep.subr.mxu0 0.0
      %4568 = vmatpush2.msra.mxu0 %v4510
      %4569 = vmatprep.subr.mxu0 0.0
      %4570 = vmatpush2.msra.mxu0 %v4509
      %4571 = vmatprep.subr.mxu0 0.0
      %4572 = vmatpush2.msra.mxu0 %v4508
      %4573 = vmatprep.subr.mxu0 0.0
      %4574 = vmatpush2.msra.mxu0 %v4507
      %4575 = vmatprep.subr.mxu0 0.0
      %4576 = vmatpush2.msra.mxu0 %v4506
      %4577 = vmatprep.subr.mxu0 0.0
      %4578 = vmatpush2.msra.mxu0 %v4505
      %4579 = vmatprep.subr.mxu0 0.0
      %4580 = vmatpush2.msra.mxu0 %v4504
      %4581 = vmatprep.subr.mxu0 0.0
      %4582 = vmatpush2.msra.mxu0 %v4503
      %4583 = vmatprep.mubr.f32.mxu0 %v3194
      %4584 = vmatmul.mubr.f32.gmra.mxu0 %v3161
      %v4585 = vpop.f32.mrf.mxu0
      %v4586 = vadd.f32 0.0, %v4585
      %v4587 = vpop.f32.mrf.mxu0
      %4588 = vdwg.mxu0
      %s4589 = scalar_lea.vmem %s6, 112
      %v4590 = vld [vmem:[%s4589] sm:$0xff]
      %v4591 = vld [vmem:[%s4589 + $0x8] sm:$0xff]
      %v4593 = vsel %vm3378, %v4590, 0
      %v4596 = vsel %vm3378, %v4591, 0
      %4598 = vmatprep.subr.mxu0 0.0
      %4599 = vmatpush1.msra.mxu0 0.0
      %4600 = vmatprep.subr.mxu0 0.0
      %4601 = vmatpush1.msra.mxu0 0.0
      %4602 = vmatprep.subr.mxu0 0.0
      %4603 = vmatpush1.msra.mxu0 0.0
      %4604 = vmatprep.subr.mxu0 0.0
      %4605 = vmatpush1.msra.mxu0 0.0
      %4606 = vmatprep.subr.mxu0 0.0
      %4607 = vmatpush1.msra.mxu0 0.0
      %4608 = vmatprep.subr.mxu0 0.0
      %4609 = vmatpush1.msra.mxu0 0.0
      %4610 = vmatprep.subr.mxu0 0.0
      %4611 = vmatpush1.msra.mxu0 0.0
      %4612 = vmatprep.subr.mxu0 0.0
      %4613 = vmatpush1.msra.mxu0 0.0
      %4614 = vmatprep.subr.mxu0 0.0
      %4615 = vmatpush1.msra.mxu0 0.0
      %4616 = vmatprep.subr.mxu0 0.0
      %4617 = vmatpush1.msra.mxu0 0.0
      %4618 = vmatprep.subr.mxu0 0.0
      %4619 = vmatpush1.msra.mxu0 0.0
      %4620 = vmatprep.subr.mxu0 0.0
      %4621 = vmatpush1.msra.mxu0 0.0
      %4622 = vmatprep.subr.mxu0 0.0
      %4623 = vmatpush1.msra.mxu0 0.0
      %4624 = vmatprep.subr.mxu0 0.0
      %4625 = vmatpush1.msra.mxu0 0.0
      %4626 = vmatprep.subr.mxu0 0.0
      %4627 = vmatpush1.msra.mxu0 0.0
      %4628 = vmatprep.subr.mxu0 0.0
      %4629 = vmatpush1.msra.mxu0 %v4586
      %4630 = vmatprep.subr.mxu0 0.0
      %4631 = vmatpush2.msra.mxu0 0.0
      %4632 = vmatprep.subr.mxu0 0.0
      %4633 = vmatpush2.msra.mxu0 0.0
      %4634 = vmatprep.subr.mxu0 0.0
      %4635 = vmatpush2.msra.mxu0 0.0
      %4636 = vmatprep.subr.mxu0 0.0
      %4637 = vmatpush2.msra.mxu0 0.0
      %4638 = vmatprep.subr.mxu0 0.0
      %4639 = vmatpush2.msra.mxu0 0.0
      %4640 = vmatprep.subr.mxu0 0.0
      %4641 = vmatpush2.msra.mxu0 0.0
      %4642 = vmatprep.subr.mxu0 0.0
      %4643 = vmatpush2.msra.mxu0 0.0
      %4644 = vmatprep.subr.mxu0 0.0
      %4645 = vmatpush2.msra.mxu0 0.0
      %4646 = vmatprep.subr.mxu0 0.0
      %4647 = vmatpush2.msra.mxu0 0.0
      %4648 = vmatprep.subr.mxu0 0.0
      %4649 = vmatpush2.msra.mxu0 0.0
      %4650 = vmatprep.subr.mxu0 0.0
      %4651 = vmatpush2.msra.mxu0 0.0
      %4652 = vmatprep.subr.mxu0 0.0
      %4653 = vmatpush2.msra.mxu0 0.0
      %4654 = vmatprep.subr.mxu0 0.0
      %4655 = vmatpush2.msra.mxu0 0.0
      %4656 = vmatprep.subr.mxu0 0.0
      %4657 = vmatpush2.msra.mxu0 0.0
      %4658 = vmatprep.subr.mxu0 0.0
      %4659 = vmatpush2.msra.mxu0 0.0
      %4660 = vmatprep.subr.mxu0 0.0
      %4661 = vmatpush2.msra.mxu0 0.0
      %4662 = vmatprep.mubr.f32.mxu0 0.0
      %4663 = vmatmul.mubr.f32.gmra.mxu0 %v4593
      %v4664 = vpop.f32.mrf.mxu0
      %v4665 = vadd.f32 0.0, %v4664
      %v4666 = vpop.f32.mrf.mxu0
      %4667 = vmatprep.mubr.f32.mxu0 0.0
      %4668 = vmatmul.mubr.f32.gmra.mxu0 %v4596
      %v4669 = vpop.f32.mrf.mxu0
      %v4670 = vadd.f32 0.0, %v4669
      %v4671 = vpop.f32.mrf.mxu0
      %4672 = vdwg.mxu0
      %v4673 = vadd.f32 %v4484, %v4665
      %v4674 = vadd.f32 %v4485, %v4670
      %s4675 = scalar_lea.vmem %s2, 1856
      %v4676 = vld [vmem:[%s4675] sm:$0xff]
      %v4677 = vld [vmem:[%s4675 + $0x8] sm:$0xff]
      %v4678 = vld [vmem:[%s4675 + $0x10] sm:$0xff]
      %v4679 = vld [vmem:[%s4675 + $0x18] sm:$0xff]
      %v4680 = vld [vmem:[%s4675 + $0x20] sm:$0xff]
      %v4681 = vld [vmem:[%s4675 + $0x28] sm:$0xff]
      %v4682 = vld [vmem:[%s4675 + $0x30] sm:$0xff]
      %v4683 = vld [vmem:[%s4675 + $0x38] sm:$0xff]
      %v4684 = vld [vmem:[%s4675 + $0x40] sm:$0xff]
      %v4685 = vld [vmem:[%s4675 + $0x48] sm:$0xff]
      %v4686 = vld [vmem:[%s4675 + $0x50] sm:$0xff]
      %v4687 = vld [vmem:[%s4675 + $0x58] sm:$0xff]
      %v4688 = vld [vmem:[%s4675 + $0x60] sm:$0xff]
      %v4689 = vld [vmem:[%s4675 + $0x68] sm:$0xff]
      %v4690 = vld [vmem:[%s4675 + $0x70] sm:$0xff]
      %v4691 = vld [vmem:[%s4675 + $0x78] sm:$0xff]
      %v4692 = vld [vmem:[%s4675 + $0x80] sm:$0xff]
      %v4693 = vld [vmem:[%s4675 + $0x88] sm:$0xff]
      %v4694 = vld [vmem:[%s4675 + $0x90] sm:$0xff]
      %v4695 = vld [vmem:[%s4675 + $0x98] sm:$0xff]
      %v4696 = vld [vmem:[%s4675 + $0xa0] sm:$0xff]
      %v4697 = vld [vmem:[%s4675 + $0xa8] sm:$0xff]
      %v4698 = vld [vmem:[%s4675 + $0xb0] sm:$0xff]
      %v4699 = vld [vmem:[%s4675 + $0xb8] sm:$0xff]
      %v4700 = vld [vmem:[%s4675 + $0xc0] sm:$0xff]
      %v4701 = vld [vmem:[%s4675 + $0xc8] sm:$0xff]
      %v4702 = vld [vmem:[%s4675 + $0xd0] sm:$0xff]
      %v4703 = vld [vmem:[%s4675 + $0xd8] sm:$0xff]
      %v4704 = vld [vmem:[%s4675 + $0xe0] sm:$0x1]
      %v4706 = vsel %vm3196, %v4704, 0
      %4708 = vmatprep.subr.mxu0 0.0
      %4709 = vmatpush1.msra.mxu0 %v4691
      %4710 = vmatprep.subr.mxu0 0.0
      %4711 = vmatpush1.msra.mxu0 %v4690
      %4712 = vmatprep.subr.mxu0 0.0
      %4713 = vmatpush1.msra.mxu0 %v4689
      %4714 = vmatprep.subr.mxu0 0.0
      %4715 = vmatpush1.msra.mxu0 %v4688
      %4716 = vmatprep.subr.mxu0 0.0
      %4717 = vmatpush1.msra.mxu0 %v4687
      %4718 = vmatprep.subr.mxu0 0.0
      %4719 = vmatpush1.msra.mxu0 %v4686
      %4720 = vmatprep.subr.mxu0 0.0
      %4721 = vmatpush1.msra.mxu0 %v4685
      %4722 = vmatprep.subr.mxu0 0.0
      %4723 = vmatpush1.msra.mxu0 %v4684
      %4724 = vmatprep.subr.mxu0 0.0
      %4725 = vmatpush1.msra.mxu0 %v4683
      %4726 = vmatprep.subr.mxu0 0.0
      %4727 = vmatpush1.msra.mxu0 %v4682
      %4728 = vmatprep.subr.mxu0 0.0
      %4729 = vmatpush1.msra.mxu0 %v4681
      %4730 = vmatprep.subr.mxu0 0.0
      %4731 = vmatpush1.msra.mxu0 %v4680
      %4732 = vmatprep.subr.mxu0 0.0
      %4733 = vmatpush1.msra.mxu0 %v4679
      %4734 = vmatprep.subr.mxu0 0.0
      %4735 = vmatpush1.msra.mxu0 %v4678
      %4736 = vmatprep.subr.mxu0 0.0
      %4737 = vmatpush1.msra.mxu0 %v4677
      %4738 = vmatprep.subr.mxu0 0.0
      %4739 = vmatpush1.msra.mxu0 %v4676
      %4740 = vmatprep.subr.mxu0 0.0
      %4741 = vmatpush2.msra.mxu0 0.0
      %4742 = vmatprep.subr.mxu0 0.0
      %4743 = vmatpush2.msra.mxu0 0.0
      %4744 = vmatprep.subr.mxu0 0.0
      %4745 = vmatpush2.msra.mxu0 0.0
      %4746 = vmatprep.subr.mxu0 0.0
      %4747 = vmatpush2.msra.mxu0 %v4706
      %4748 = vmatprep.subr.mxu0 0.0
      %4749 = vmatpush2.msra.mxu0 %v4703
      %4750 = vmatprep.subr.mxu0 0.0
      %4751 = vmatpush2.msra.mxu0 %v4702
      %4752 = vmatprep.subr.mxu0 0.0
      %4753 = vmatpush2.msra.mxu0 %v4701
      %4754 = vmatprep.subr.mxu0 0.0
      %4755 = vmatpush2.msra.mxu0 %v4700
      %4756 = vmatprep.subr.mxu0 0.0
      %4757 = vmatpush2.msra.mxu0 %v4699
      %4758 = vmatprep.subr.mxu0 0.0
      %4759 = vmatpush2.msra.mxu0 %v4698
      %4760 = vmatprep.subr.mxu0 0.0
      %4761 = vmatpush2.msra.mxu0 %v4697
      %4762 = vmatprep.subr.mxu0 0.0
      %4763 = vmatpush2.msra.mxu0 %v4696
      %4764 = vmatprep.subr.mxu0 0.0
      %4765 = vmatpush2.msra.mxu0 %v4695
      %4766 = vmatprep.subr.mxu0 0.0
      %4767 = vmatpush2.msra.mxu0 %v4694
      %4768 = vmatprep.subr.mxu0 0.0
      %4769 = vmatpush2.msra.mxu0 %v4693
      %4770 = vmatprep.subr.mxu0 0.0
      %4771 = vmatpush2.msra.mxu0 %v4692
      %4772 = vmatprep.mubr.f32.mxu0 %v3194
      %4773 = vmatmul.mubr.f32.gmra.mxu0 %v3161
      %v4774 = vpop.f32.mrf.mxu0
      %v4775 = vadd.f32 0.0, %v4774
      %v4776 = vpop.f32.mrf.mxu0
      %4777 = vdwg.mxu0
      %s4778 = scalar_lea.vmem %s6, 128
      %v4779 = vld [vmem:[%s4778] sm:$0xff]
      %v4780 = vld [vmem:[%s4778 + $0x8] sm:$0xff]
      %v4782 = vsel %vm3378, %v4779, 0
      %v4785 = vsel %vm3378, %v4780, 0
      %4787 = vmatprep.subr.mxu0 0.0
      %4788 = vmatpush1.msra.mxu0 0.0
      %4789 = vmatprep.subr.mxu0 0.0
      %4790 = vmatpush1.msra.mxu0 0.0
      %4791 = vmatprep.subr.mxu0 0.0
      %4792 = vmatpush1.msra.mxu0 0.0
      %4793 = vmatprep.subr.mxu0 0.0
      %4794 = vmatpush1.msra.mxu0 0.0
      %4795 = vmatprep.subr.mxu0 0.0
      %4796 = vmatpush1.msra.mxu0 0.0
      %4797 = vmatprep.subr.mxu0 0.0
      %4798 = vmatpush1.msra.mxu0 0.0
      %4799 = vmatprep.subr.mxu0 0.0
      %4800 = vmatpush1.msra.mxu0 0.0
      %4801 = vmatprep.subr.mxu0 0.0
      %4802 = vmatpush1.msra.mxu0 0.0
      %4803 = vmatprep.subr.mxu0 0.0
      %4804 = vmatpush1.msra.mxu0 0.0
      %4805 = vmatprep.subr.mxu0 0.0
      %4806 = vmatpush1.msra.mxu0 0.0
      %4807 = vmatprep.subr.mxu0 0.0
      %4808 = vmatpush1.msra.mxu0 0.0
      %4809 = vmatprep.subr.mxu0 0.0
      %4810 = vmatpush1.msra.mxu0 0.0
      %4811 = vmatprep.subr.mxu0 0.0
      %4812 = vmatpush1.msra.mxu0 0.0
      %4813 = vmatprep.subr.mxu0 0.0
      %4814 = vmatpush1.msra.mxu0 0.0
      %4815 = vmatprep.subr.mxu0 0.0
      %4816 = vmatpush1.msra.mxu0 0.0
      %4817 = vmatprep.subr.mxu0 0.0
      %4818 = vmatpush1.msra.mxu0 %v4775
      %4819 = vmatprep.subr.mxu0 0.0
      %4820 = vmatpush2.msra.mxu0 0.0
      %4821 = vmatprep.subr.mxu0 0.0
      %4822 = vmatpush2.msra.mxu0 0.0
      %4823 = vmatprep.subr.mxu0 0.0
      %4824 = vmatpush2.msra.mxu0 0.0
      %4825 = vmatprep.subr.mxu0 0.0
      %4826 = vmatpush2.msra.mxu0 0.0
      %4827 = vmatprep.subr.mxu0 0.0
      %4828 = vmatpush2.msra.mxu0 0.0
      %4829 = vmatprep.subr.mxu0 0.0
      %4830 = vmatpush2.msra.mxu0 0.0
      %4831 = vmatprep.subr.mxu0 0.0
      %4832 = vmatpush2.msra.mxu0 0.0
      %4833 = vmatprep.subr.mxu0 0.0
      %4834 = vmatpush2.msra.mxu0 0.0
      %4835 = vmatprep.subr.mxu0 0.0
      %4836 = vmatpush2.msra.mxu0 0.0
      %4837 = vmatprep.subr.mxu0 0.0
      %4838 = vmatpush2.msra.mxu0 0.0
      %4839 = vmatprep.subr.mxu0 0.0
      %4840 = vmatpush2.msra.mxu0 0.0
      %4841 = vmatprep.subr.mxu0 0.0
      %4842 = vmatpush2.msra.mxu0 0.0
      %4843 = vmatprep.subr.mxu0 0.0
      %4844 = vmatpush2.msra.mxu0 0.0
      %4845 = vmatprep.subr.mxu0 0.0
      %4846 = vmatpush2.msra.mxu0 0.0
      %4847 = vmatprep.subr.mxu0 0.0
      %4848 = vmatpush2.msra.mxu0 0.0
      %4849 = vmatprep.subr.mxu0 0.0
      %4850 = vmatpush2.msra.mxu0 0.0
      %4851 = vmatprep.mubr.f32.mxu0 0.0
      %4852 = vmatmul.mubr.f32.gmra.mxu0 %v4782
      %v4853 = vpop.f32.mrf.mxu0
      %v4854 = vadd.f32 0.0, %v4853
      %v4855 = vpop.f32.mrf.mxu0
      %4856 = vmatprep.mubr.f32.mxu0 0.0
      %4857 = vmatmul.mubr.f32.gmra.mxu0 %v4785
      %v4858 = vpop.f32.mrf.mxu0
      %v4859 = vadd.f32 0.0, %v4858
      %v4860 = vpop.f32.mrf.mxu0
      %4861 = vdwg.mxu0
      %v4862 = vadd.f32 %v4673, %v4854
      %v4863 = vadd.f32 %v4674, %v4859
      %s4864 = scalar_lea.vmem %s2, 2088
      %v4865 = vld [vmem:[%s4864] sm:$0xff]
      %v4866 = vld [vmem:[%s4864 + $0x8] sm:$0xff]
      %v4867 = vld [vmem:[%s4864 + $0x10] sm:$0xff]
      %v4868 = vld [vmem:[%s4864 + $0x18] sm:$0xff]
      %v4869 = vld [vmem:[%s4864 + $0x20] sm:$0xff]
      %v4870 = vld [vmem:[%s4864 + $0x28] sm:$0xff]
      %v4871 = vld [vmem:[%s4864 + $0x30] sm:$0xff]
      %v4872 = vld [vmem:[%s4864 + $0x38] sm:$0xff]
      %v4873 = vld [vmem:[%s4864 + $0x40] sm:$0xff]
      %v4874 = vld [vmem:[%s4864 + $0x48] sm:$0xff]
      %v4875 = vld [vmem:[%s4864 + $0x50] sm:$0xff]
      %v4876 = vld [vmem:[%s4864 + $0x58] sm:$0xff]
      %v4877 = vld [vmem:[%s4864 + $0x60] sm:$0xff]
      %v4878 = vld [vmem:[%s4864 + $0x68] sm:$0xff]
      %v4879 = vld [vmem:[%s4864 + $0x70] sm:$0xff]
      %v4880 = vld [vmem:[%s4864 + $0x78] sm:$0xff]
      %v4881 = vld [vmem:[%s4864 + $0x80] sm:$0xff]
      %v4882 = vld [vmem:[%s4864 + $0x88] sm:$0xff]
      %v4883 = vld [vmem:[%s4864 + $0x90] sm:$0xff]
      %v4884 = vld [vmem:[%s4864 + $0x98] sm:$0xff]
      %v4885 = vld [vmem:[%s4864 + $0xa0] sm:$0xff]
      %v4886 = vld [vmem:[%s4864 + $0xa8] sm:$0xff]
      %v4887 = vld [vmem:[%s4864 + $0xb0] sm:$0xff]
      %v4888 = vld [vmem:[%s4864 + $0xb8] sm:$0xff]
      %v4889 = vld [vmem:[%s4864 + $0xc0] sm:$0xff]
      %v4890 = vld [vmem:[%s4864 + $0xc8] sm:$0xff]
      %v4891 = vld [vmem:[%s4864 + $0xd0] sm:$0xff]
      %v4892 = vld [vmem:[%s4864 + $0xd8] sm:$0xff]
      %v4893 = vld [vmem:[%s4864 + $0xe0] sm:$0x1]
      %v4895 = vsel %vm3196, %v4893, 0
      %4897 = vmatprep.subr.mxu0 0.0
      %4898 = vmatpush1.msra.mxu0 %v4880
      %4899 = vmatprep.subr.mxu0 0.0
      %4900 = vmatpush1.msra.mxu0 %v4879
      %4901 = vmatprep.subr.mxu0 0.0
      %4902 = vmatpush1.msra.mxu0 %v4878
      %4903 = vmatprep.subr.mxu0 0.0
      %4904 = vmatpush1.msra.mxu0 %v4877
      %4905 = vmatprep.subr.mxu0 0.0
      %4906 = vmatpush1.msra.mxu0 %v4876
      %4907 = vmatprep.subr.mxu0 0.0
      %4908 = vmatpush1.msra.mxu0 %v4875
      %4909 = vmatprep.subr.mxu0 0.0
      %4910 = vmatpush1.msra.mxu0 %v4874
      %4911 = vmatprep.subr.mxu0 0.0
      %4912 = vmatpush1.msra.mxu0 %v4873
      %4913 = vmatprep.subr.mxu0 0.0
      %4914 = vmatpush1.msra.mxu0 %v4872
      %4915 = vmatprep.subr.mxu0 0.0
      %4916 = vmatpush1.msra.mxu0 %v4871
      %4917 = vmatprep.subr.mxu0 0.0
      %4918 = vmatpush1.msra.mxu0 %v4870
      %4919 = vmatprep.subr.mxu0 0.0
      %4920 = vmatpush1.msra.mxu0 %v4869
      %4921 = vmatprep.subr.mxu0 0.0
      %4922 = vmatpush1.msra.mxu0 %v4868
      %4923 = vmatprep.subr.mxu0 0.0
      %4924 = vmatpush1.msra.mxu0 %v4867
      %4925 = vmatprep.subr.mxu0 0.0
      %4926 = vmatpush1.msra.mxu0 %v4866
      %4927 = vmatprep.subr.mxu0 0.0
      %4928 = vmatpush1.msra.mxu0 %v4865
      %4929 = vmatprep.subr.mxu0 0.0
      %4930 = vmatpush2.msra.mxu0 0.0
      %4931 = vmatprep.subr.mxu0 0.0
      %4932 = vmatpush2.msra.mxu0 0.0
      %4933 = vmatprep.subr.mxu0 0.0
      %4934 = vmatpush2.msra.mxu0 0.0
      %4935 = vmatprep.subr.mxu0 0.0
      %4936 = vmatpush2.msra.mxu0 %v4895
      %4937 = vmatprep.subr.mxu0 0.0
      %4938 = vmatpush2.msra.mxu0 %v4892
      %4939 = vmatprep.subr.mxu0 0.0
      %4940 = vmatpush2.msra.mxu0 %v4891
      %4941 = vmatprep.subr.mxu0 0.0
      %4942 = vmatpush2.msra.mxu0 %v4890
      %4943 = vmatprep.subr.mxu0 0.0
      %4944 = vmatpush2.msra.mxu0 %v4889
      %4945 = vmatprep.subr.mxu0 0.0
      %4946 = vmatpush2.msra.mxu0 %v4888
      %4947 = vmatprep.subr.mxu0 0.0
      %4948 = vmatpush2.msra.mxu0 %v4887
      %4949 = vmatprep.subr.mxu0 0.0
      %4950 = vmatpush2.msra.mxu0 %v4886
      %4951 = vmatprep.subr.mxu0 0.0
      %4952 = vmatpush2.msra.mxu0 %v4885
      %4953 = vmatprep.subr.mxu0 0.0
      %4954 = vmatpush2.msra.mxu0 %v4884
      %4955 = vmatprep.subr.mxu0 0.0
      %4956 = vmatpush2.msra.mxu0 %v4883
      %4957 = vmatprep.subr.mxu0 0.0
      %4958 = vmatpush2.msra.mxu0 %v4882
      %4959 = vmatprep.subr.mxu0 0.0
      %4960 = vmatpush2.msra.mxu0 %v4881
      %4961 = vmatprep.mubr.f32.mxu0 %v3194
      %4962 = vmatmul.mubr.f32.gmra.mxu0 %v3161
      %v4963 = vpop.f32.mrf.mxu0
      %v4964 = vadd.f32 0.0, %v4963
      %v4965 = vpop.f32.mrf.mxu0
      %4966 = vdwg.mxu0
      %s4967 = scalar_lea.vmem %s6, 144
      %v4968 = vld [vmem:[%s4967] sm:$0xff]
      %v4969 = vld [vmem:[%s4967 + $0x8] sm:$0xff]
      %v4971 = vsel %vm3378, %v4968, 0
      %v4974 = vsel %vm3378, %v4969, 0
      %4976 = vmatprep.subr.mxu0 0.0
      %4977 = vmatpush1.msra.mxu0 0.0
      %4978 = vmatprep.subr.mxu0 0.0
      %4979 = vmatpush1.msra.mxu0 0.0
      %4980 = vmatprep.subr.mxu0 0.0
      %4981 = vmatpush1.msra.mxu0 0.0
      %4982 = vmatprep.subr.mxu0 0.0
      %4983 = vmatpush1.msra.mxu0 0.0
      %4984 = vmatprep.subr.mxu0 0.0
      %4985 = vmatpush1.msra.mxu0 0.0
      %4986 = vmatprep.subr.mxu0 0.0
      %4987 = vmatpush1.msra.mxu0 0.0
      %4988 = vmatprep.subr.mxu0 0.0
      %4989 = vmatpush1.msra.mxu0 0.0
      %4990 = vmatprep.subr.mxu0 0.0
      %4991 = vmatpush1.msra.mxu0 0.0
      %4992 = vmatprep.subr.mxu0 0.0
      %4993 = vmatpush1.msra.mxu0 0.0
      %4994 = vmatprep.subr.mxu0 0.0
      %4995 = vmatpush1.msra.mxu0 0.0
      %4996 = vmatprep.subr.mxu0 0.0
      %4997 = vmatpush1.msra.mxu0 0.0
      %4998 = vmatprep.subr.mxu0 0.0
      %4999 = vmatpush1.msra.mxu0 0.0
      %5000 = vmatprep.subr.mxu0 0.0
      %5001 = vmatpush1.msra.mxu0 0.0
      %5002 = vmatprep.subr.mxu0 0.0
      %5003 = vmatpush1.msra.mxu0 0.0
      %5004 = vmatprep.subr.mxu0 0.0
      %5005 = vmatpush1.msra.mxu0 0.0
      %5006 = vmatprep.subr.mxu0 0.0
      %5007 = vmatpush1.msra.mxu0 %v4964
      %5008 = vmatprep.subr.mxu0 0.0
      %5009 = vmatpush2.msra.mxu0 0.0
      %5010 = vmatprep.subr.mxu0 0.0
      %5011 = vmatpush2.msra.mxu0 0.0
      %5012 = vmatprep.subr.mxu0 0.0
      %5013 = vmatpush2.msra.mxu0 0.0
      %5014 = vmatprep.subr.mxu0 0.0
      %5015 = vmatpush2.msra.mxu0 0.0
      %5016 = vmatprep.subr.mxu0 0.0
      %5017 = vmatpush2.msra.mxu0 0.0
      %5018 = vmatprep.subr.mxu0 0.0
      %5019 = vmatpush2.msra.mxu0 0.0
      %5020 = vmatprep.subr.mxu0 0.0
      %5021 = vmatpush2.msra.mxu0 0.0
      %5022 = vmatprep.subr.mxu0 0.0
      %5023 = vmatpush2.msra.mxu0 0.0
      %5024 = vmatprep.subr.mxu0 0.0
      %5025 = vmatpush2.msra.mxu0 0.0
      %5026 = vmatprep.subr.mxu0 0.0
      %5027 = vmatpush2.msra.mxu0 0.0
      %5028 = vmatprep.subr.mxu0 0.0
      %5029 = vmatpush2.msra.mxu0 0.0
      %5030 = vmatprep.subr.mxu0 0.0
      %5031 = vmatpush2.msra.mxu0 0.0
      %5032 = vmatprep.subr.mxu0 0.0
      %5033 = vmatpush2.msra.mxu0 0.0
      %5034 = vmatprep.subr.mxu0 0.0
      %5035 = vmatpush2.msra.mxu0 0.0
      %5036 = vmatprep.subr.mxu0 0.0
      %5037 = vmatpush2.msra.mxu0 0.0
      %5038 = vmatprep.subr.mxu0 0.0
      %5039 = vmatpush2.msra.mxu0 0.0
      %5040 = vmatprep.mubr.f32.mxu0 0.0
      %5041 = vmatmul.mubr.f32.gmra.mxu0 %v4971
      %v5042 = vpop.f32.mrf.mxu0
      %v5043 = vadd.f32 0.0, %v5042
      %v5044 = vpop.f32.mrf.mxu0
      %5045 = vmatprep.mubr.f32.mxu0 0.0
      %5046 = vmatmul.mubr.f32.gmra.mxu0 %v4974
      %v5047 = vpop.f32.mrf.mxu0
      %v5048 = vadd.f32 0.0, %v5047
      %v5049 = vpop.f32.mrf.mxu0
      %5050 = vdwg.mxu0
      %v5051 = vadd.f32 %v4862, %v5043
      %v5052 = vadd.f32 %v4863, %v5048
      %s5053 = scalar_lea.vmem %s2, 2320
      %v5054 = vld [vmem:[%s5053] sm:$0xff]
      %v5055 = vld [vmem:[%s5053 + $0x8] sm:$0xff]
      %v5056 = vld [vmem:[%s5053 + $0x10] sm:$0xff]
      %v5057 = vld [vmem:[%s5053 + $0x18] sm:$0xff]
      %v5058 = vld [vmem:[%s5053 + $0x20] sm:$0xff]
      %v5059 = vld [vmem:[%s5053 + $0x28] sm:$0xff]
      %v5060 = vld [vmem:[%s5053 + $0x30] sm:$0xff]
      %v5061 = vld [vmem:[%s5053 + $0x38] sm:$0xff]
      %v5062 = vld [vmem:[%s5053 + $0x40] sm:$0xff]
      %v5063 = vld [vmem:[%s5053 + $0x48] sm:$0xff]
      %v5064 = vld [vmem:[%s5053 + $0x50] sm:$0xff]
      %v5065 = vld [vmem:[%s5053 + $0x58] sm:$0xff]
      %v5066 = vld [vmem:[%s5053 + $0x60] sm:$0xff]
      %v5067 = vld [vmem:[%s5053 + $0x68] sm:$0xff]
      %v5068 = vld [vmem:[%s5053 + $0x70] sm:$0xff]
      %v5069 = vld [vmem:[%s5053 + $0x78] sm:$0xff]
      %v5070 = vld [vmem:[%s5053 + $0x80] sm:$0xff]
      %v5071 = vld [vmem:[%s5053 + $0x88] sm:$0xff]
      %v5072 = vld [vmem:[%s5053 + $0x90] sm:$0xff]
      %v5073 = vld [vmem:[%s5053 + $0x98] sm:$0xff]
      %v5074 = vld [vmem:[%s5053 + $0xa0] sm:$0xff]
      %v5075 = vld [vmem:[%s5053 + $0xa8] sm:$0xff]
      %v5076 = vld [vmem:[%s5053 + $0xb0] sm:$0xff]
      %v5077 = vld [vmem:[%s5053 + $0xb8] sm:$0xff]
      %v5078 = vld [vmem:[%s5053 + $0xc0] sm:$0xff]
      %v5079 = vld [vmem:[%s5053 + $0xc8] sm:$0xff]
      %v5080 = vld [vmem:[%s5053 + $0xd0] sm:$0xff]
      %v5081 = vld [vmem:[%s5053 + $0xd8] sm:$0xff]
      %v5082 = vld [vmem:[%s5053 + $0xe0] sm:$0x1]
      %v5084 = vsel %vm3196, %v5082, 0
      %5086 = vmatprep.subr.mxu0 0.0
      %5087 = vmatpush1.msra.mxu0 %v5069
      %5088 = vmatprep.subr.mxu0 0.0
      %5089 = vmatpush1.msra.mxu0 %v5068
      %5090 = vmatprep.subr.mxu0 0.0
      %5091 = vmatpush1.msra.mxu0 %v5067
      %5092 = vmatprep.subr.mxu0 0.0
      %5093 = vmatpush1.msra.mxu0 %v5066
      %5094 = vmatprep.subr.mxu0 0.0
      %5095 = vmatpush1.msra.mxu0 %v5065
      %5096 = vmatprep.subr.mxu0 0.0
      %5097 = vmatpush1.msra.mxu0 %v5064
      %5098 = vmatprep.subr.mxu0 0.0
      %5099 = vmatpush1.msra.mxu0 %v5063
      %5100 = vmatprep.subr.mxu0 0.0
      %5101 = vmatpush1.msra.mxu0 %v5062
      %5102 = vmatprep.subr.mxu0 0.0
      %5103 = vmatpush1.msra.mxu0 %v5061
      %5104 = vmatprep.subr.mxu0 0.0
      %5105 = vmatpush1.msra.mxu0 %v5060
      %5106 = vmatprep.subr.mxu0 0.0
      %5107 = vmatpush1.msra.mxu0 %v5059
      %5108 = vmatprep.subr.mxu0 0.0
      %5109 = vmatpush1.msra.mxu0 %v5058
      %5110 = vmatprep.subr.mxu0 0.0
      %5111 = vmatpush1.msra.mxu0 %v5057
      %5112 = vmatprep.subr.mxu0 0.0
      %5113 = vmatpush1.msra.mxu0 %v5056
      %5114 = vmatprep.subr.mxu0 0.0
      %5115 = vmatpush1.msra.mxu0 %v5055
      %5116 = vmatprep.subr.mxu0 0.0
      %5117 = vmatpush1.msra.mxu0 %v5054
      %5118 = vmatprep.subr.mxu0 0.0
      %5119 = vmatpush2.msra.mxu0 0.0
      %5120 = vmatprep.subr.mxu0 0.0
      %5121 = vmatpush2.msra.mxu0 0.0
      %5122 = vmatprep.subr.mxu0 0.0
      %5123 = vmatpush2.msra.mxu0 0.0
      %5124 = vmatprep.subr.mxu0 0.0
      %5125 = vmatpush2.msra.mxu0 %v5084
      %5126 = vmatprep.subr.mxu0 0.0
      %5127 = vmatpush2.msra.mxu0 %v5081
      %5128 = vmatprep.subr.mxu0 0.0
      %5129 = vmatpush2.msra.mxu0 %v5080
      %5130 = vmatprep.subr.mxu0 0.0
      %5131 = vmatpush2.msra.mxu0 %v5079
      %5132 = vmatprep.subr.mxu0 0.0
      %5133 = vmatpush2.msra.mxu0 %v5078
      %5134 = vmatprep.subr.mxu0 0.0
      %5135 = vmatpush2.msra.mxu0 %v5077
      %5136 = vmatprep.subr.mxu0 0.0
      %5137 = vmatpush2.msra.mxu0 %v5076
      %5138 = vmatprep.subr.mxu0 0.0
      %5139 = vmatpush2.msra.mxu0 %v5075
      %5140 = vmatprep.subr.mxu0 0.0
      %5141 = vmatpush2.msra.mxu0 %v5074
      %5142 = vmatprep.subr.mxu0 0.0
      %5143 = vmatpush2.msra.mxu0 %v5073
      %5144 = vmatprep.subr.mxu0 0.0
      %5145 = vmatpush2.msra.mxu0 %v5072
      %5146 = vmatprep.subr.mxu0 0.0
      %5147 = vmatpush2.msra.mxu0 %v5071
      %5148 = vmatprep.subr.mxu0 0.0
      %5149 = vmatpush2.msra.mxu0 %v5070
      %5150 = vmatprep.mubr.f32.mxu0 %v3194
      %5151 = vmatmul.mubr.f32.gmra.mxu0 %v3161
      %v5152 = vpop.f32.mrf.mxu0
      %v5153 = vadd.f32 0.0, %v5152
      %v5154 = vpop.f32.mrf.mxu0
      %5155 = vdwg.mxu0
      %s5156 = scalar_lea.vmem %s6, 160
      %v5157 = vld [vmem:[%s5156] sm:$0xff]
      %v5158 = vld [vmem:[%s5156 + $0x8] sm:$0xff]
      %v5160 = vsel %vm3378, %v5157, 0
      %v5163 = vsel %vm3378, %v5158, 0
      %5165 = vmatprep.subr.mxu0 0.0
      %5166 = vmatpush1.msra.mxu0 0.0
      %5167 = vmatprep.subr.mxu0 0.0
      %5168 = vmatpush1.msra.mxu0 0.0
      %5169 = vmatprep.subr.mxu0 0.0
      %5170 = vmatpush1.msra.mxu0 0.0
      %5171 = vmatprep.subr.mxu0 0.0
      %5172 = vmatpush1.msra.mxu0 0.0
      %5173 = vmatprep.subr.mxu0 0.0
      %5174 = vmatpush1.msra.mxu0 0.0
      %5175 = vmatprep.subr.mxu0 0.0
      %5176 = vmatpush1.msra.mxu0 0.0
      %5177 = vmatprep.subr.mxu0 0.0
      %5178 = vmatpush1.msra.mxu0 0.0
      %5179 = vmatprep.subr.mxu0 0.0
      %5180 = vmatpush1.msra.mxu0 0.0
      %5181 = vmatprep.subr.mxu0 0.0
      %5182 = vmatpush1.msra.mxu0 0.0
      %5183 = vmatprep.subr.mxu0 0.0
      %5184 = vmatpush1.msra.mxu0 0.0
      %5185 = vmatprep.subr.mxu0 0.0
      %5186 = vmatpush1.msra.mxu0 0.0
      %5187 = vmatprep.subr.mxu0 0.0
      %5188 = vmatpush1.msra.mxu0 0.0
      %5189 = vmatprep.subr.mxu0 0.0
      %5190 = vmatpush1.msra.mxu0 0.0
      %5191 = vmatprep.subr.mxu0 0.0
      %5192 = vmatpush1.msra.mxu0 0.0
      %5193 = vmatprep.subr.mxu0 0.0
      %5194 = vmatpush1.msra.mxu0 0.0
      %5195 = vmatprep.subr.mxu0 0.0
      %5196 = vmatpush1.msra.mxu0 %v5153
      %5197 = vmatprep.subr.mxu0 0.0
      %5198 = vmatpush2.msra.mxu0 0.0
      %5199 = vmatprep.subr.mxu0 0.0
      %5200 = vmatpush2.msra.mxu0 0.0
      %5201 = vmatprep.subr.mxu0 0.0
      %5202 = vmatpush2.msra.mxu0 0.0
      %5203 = vmatprep.subr.mxu0 0.0
      %5204 = vmatpush2.msra.mxu0 0.0
      %5205 = vmatprep.subr.mxu0 0.0
      %5206 = vmatpush2.msra.mxu0 0.0
      %5207 = vmatprep.subr.mxu0 0.0
      %5208 = vmatpush2.msra.mxu0 0.0
      %5209 = vmatprep.subr.mxu0 0.0
      %5210 = vmatpush2.msra.mxu0 0.0
      %5211 = vmatprep.subr.mxu0 0.0
      %5212 = vmatpush2.msra.mxu0 0.0
      %5213 = vmatprep.subr.mxu0 0.0
      %5214 = vmatpush2.msra.mxu0 0.0
      %5215 = vmatprep.subr.mxu0 0.0
      %5216 = vmatpush2.msra.mxu0 0.0
      %5217 = vmatprep.subr.mxu0 0.0
      %5218 = vmatpush2.msra.mxu0 0.0
      %5219 = vmatprep.subr.mxu0 0.0
      %5220 = vmatpush2.msra.mxu0 0.0
      %5221 = vmatprep.subr.mxu0 0.0
      %5222 = vmatpush2.msra.mxu0 0.0
      %5223 = vmatprep.subr.mxu0 0.0
      %5224 = vmatpush2.msra.mxu0 0.0
      %5225 = vmatprep.subr.mxu0 0.0
      %5226 = vmatpush2.msra.mxu0 0.0
      %5227 = vmatprep.subr.mxu0 0.0
      %5228 = vmatpush2.msra.mxu0 0.0
      %5229 = vmatprep.mubr.f32.mxu0 0.0
      %5230 = vmatmul.mubr.f32.gmra.mxu0 %v5160
      %v5231 = vpop.f32.mrf.mxu0
      %v5232 = vadd.f32 0.0, %v5231
      %v5233 = vpop.f32.mrf.mxu0
      %5234 = vmatprep.mubr.f32.mxu0 0.0
      %5235 = vmatmul.mubr.f32.gmra.mxu0 %v5163
      %v5236 = vpop.f32.mrf.mxu0
      %v5237 = vadd.f32 0.0, %v5236
      %v5238 = vpop.f32.mrf.mxu0
      %5239 = vdwg.mxu0
      %v5240 = vadd.f32 %v5051, %v5232
      %v5241 = vadd.f32 %v5052, %v5237
      %s5242 = scalar_lea.vmem %s2, 2552
      %v5243 = vld [vmem:[%s5242] sm:$0xff]
      %v5244 = vld [vmem:[%s5242 + $0x8] sm:$0xff]
      %v5245 = vld [vmem:[%s5242 + $0x10] sm:$0xff]
      %v5246 = vld [vmem:[%s5242 + $0x18] sm:$0xff]
      %v5247 = vld [vmem:[%s5242 + $0x20] sm:$0xff]
      %v5248 = vld [vmem:[%s5242 + $0x28] sm:$0xff]
      %v5249 = vld [vmem:[%s5242 + $0x30] sm:$0xff]
      %v5250 = vld [vmem:[%s5242 + $0x38] sm:$0xff]
      %v5251 = vld [vmem:[%s5242 + $0x40] sm:$0xff]
      %v5252 = vld [vmem:[%s5242 + $0x48] sm:$0xff]
      %v5253 = vld [vmem:[%s5242 + $0x50] sm:$0xff]
      %v5254 = vld [vmem:[%s5242 + $0x58] sm:$0xff]
      %v5255 = vld [vmem:[%s5242 + $0x60] sm:$0xff]
      %v5256 = vld [vmem:[%s5242 + $0x68] sm:$0xff]
      %v5257 = vld [vmem:[%s5242 + $0x70] sm:$0xff]
      %v5258 = vld [vmem:[%s5242 + $0x78] sm:$0xff]
      %v5259 = vld [vmem:[%s5242 + $0x80] sm:$0xff]
      %v5260 = vld [vmem:[%s5242 + $0x88] sm:$0xff]
      %v5261 = vld [vmem:[%s5242 + $0x90] sm:$0xff]
      %v5262 = vld [vmem:[%s5242 + $0x98] sm:$0xff]
      %v5263 = vld [vmem:[%s5242 + $0xa0] sm:$0xff]
      %v5264 = vld [vmem:[%s5242 + $0xa8] sm:$0xff]
      %v5265 = vld [vmem:[%s5242 + $0xb0] sm:$0xff]
      %v5266 = vld [vmem:[%s5242 + $0xb8] sm:$0xff]
      %v5267 = vld [vmem:[%s5242 + $0xc0] sm:$0xff]
      %v5268 = vld [vmem:[%s5242 + $0xc8] sm:$0xff]
      %v5269 = vld [vmem:[%s5242 + $0xd0] sm:$0xff]
      %v5270 = vld [vmem:[%s5242 + $0xd8] sm:$0xff]
      %v5271 = vld [vmem:[%s5242 + $0xe0] sm:$0x1]
      %v5273 = vsel %vm3196, %v5271, 0
      %5275 = vmatprep.subr.mxu0 0.0
      %5276 = vmatpush1.msra.mxu0 %v5258
      %5277 = vmatprep.subr.mxu0 0.0
      %5278 = vmatpush1.msra.mxu0 %v5257
      %5279 = vmatprep.subr.mxu0 0.0
      %5280 = vmatpush1.msra.mxu0 %v5256
      %5281 = vmatprep.subr.mxu0 0.0
      %5282 = vmatpush1.msra.mxu0 %v5255
      %5283 = vmatprep.subr.mxu0 0.0
      %5284 = vmatpush1.msra.mxu0 %v5254
      %5285 = vmatprep.subr.mxu0 0.0
      %5286 = vmatpush1.msra.mxu0 %v5253
      %5287 = vmatprep.subr.mxu0 0.0
      %5288 = vmatpush1.msra.mxu0 %v5252
      %5289 = vmatprep.subr.mxu0 0.0
      %5290 = vmatpush1.msra.mxu0 %v5251
      %5291 = vmatprep.subr.mxu0 0.0
      %5292 = vmatpush1.msra.mxu0 %v5250
      %5293 = vmatprep.subr.mxu0 0.0
      %5294 = vmatpush1.msra.mxu0 %v5249
      %5295 = vmatprep.subr.mxu0 0.0
      %5296 = vmatpush1.msra.mxu0 %v5248
      %5297 = vmatprep.subr.mxu0 0.0
      %5298 = vmatpush1.msra.mxu0 %v5247
      %5299 = vmatprep.subr.mxu0 0.0
      %5300 = vmatpush1.msra.mxu0 %v5246
      %5301 = vmatprep.subr.mxu0 0.0
      %5302 = vmatpush1.msra.mxu0 %v5245
      %5303 = vmatprep.subr.mxu0 0.0
      %5304 = vmatpush1.msra.mxu0 %v5244
      %5305 = vmatprep.subr.mxu0 0.0
      %5306 = vmatpush1.msra.mxu0 %v5243
      %5307 = vmatprep.subr.mxu0 0.0
      %5308 = vmatpush2.msra.mxu0 0.0
      %5309 = vmatprep.subr.mxu0 0.0
      %5310 = vmatpush2.msra.mxu0 0.0
      %5311 = vmatprep.subr.mxu0 0.0
      %5312 = vmatpush2.msra.mxu0 0.0
      %5313 = vmatprep.subr.mxu0 0.0
      %5314 = vmatpush2.msra.mxu0 %v5273
      %5315 = vmatprep.subr.mxu0 0.0
      %5316 = vmatpush2.msra.mxu0 %v5270
      %5317 = vmatprep.subr.mxu0 0.0
      %5318 = vmatpush2.msra.mxu0 %v5269
      %5319 = vmatprep.subr.mxu0 0.0
      %5320 = vmatpush2.msra.mxu0 %v5268
      %5321 = vmatprep.subr.mxu0 0.0
      %5322 = vmatpush2.msra.mxu0 %v5267
      %5323 = vmatprep.subr.mxu0 0.0
      %5324 = vmatpush2.msra.mxu0 %v5266
      %5325 = vmatprep.subr.mxu0 0.0
      %5326 = vmatpush2.msra.mxu0 %v5265
      %5327 = vmatprep.subr.mxu0 0.0
      %5328 = vmatpush2.msra.mxu0 %v5264
      %5329 = vmatprep.subr.mxu0 0.0
      %5330 = vmatpush2.msra.mxu0 %v5263
      %5331 = vmatprep.subr.mxu0 0.0
      %5332 = vmatpush2.msra.mxu0 %v5262
      %5333 = vmatprep.subr.mxu0 0.0
      %5334 = vmatpush2.msra.mxu0 %v5261
      %5335 = vmatprep.subr.mxu0 0.0
      %5336 = vmatpush2.msra.mxu0 %v5260
      %5337 = vmatprep.subr.mxu0 0.0
      %5338 = vmatpush2.msra.mxu0 %v5259
      %5339 = vmatprep.mubr.f32.mxu0 %v3194
      %5340 = vmatmul.mubr.f32.gmra.mxu0 %v3161
      %v5341 = vpop.f32.mrf.mxu0
      %v5342 = vadd.f32 0.0, %v5341
      %v5343 = vpop.f32.mrf.mxu0
      %5344 = vdwg.mxu0
      %s5345 = scalar_lea.vmem %s6, 176
      %v5346 = vld [vmem:[%s5345] sm:$0xff]
      %v5347 = vld [vmem:[%s5345 + $0x8] sm:$0xff]
      %v5349 = vsel %vm3378, %v5346, 0
      %v5352 = vsel %vm3378, %v5347, 0
      %5354 = vmatprep.subr.mxu0 0.0
      %5355 = vmatpush1.msra.mxu0 0.0
      %5356 = vmatprep.subr.mxu0 0.0
      %5357 = vmatpush1.msra.mxu0 0.0
      %5358 = vmatprep.subr.mxu0 0.0
      %5359 = vmatpush1.msra.mxu0 0.0
      %5360 = vmatprep.subr.mxu0 0.0
      %5361 = vmatpush1.msra.mxu0 0.0
      %5362 = vmatprep.subr.mxu0 0.0
      %5363 = vmatpush1.msra.mxu0 0.0
      %5364 = vmatprep.subr.mxu0 0.0
      %5365 = vmatpush1.msra.mxu0 0.0
      %5366 = vmatprep.subr.mxu0 0.0
      %5367 = vmatpush1.msra.mxu0 0.0
      %5368 = vmatprep.subr.mxu0 0.0
      %5369 = vmatpush1.msra.mxu0 0.0
      %5370 = vmatprep.subr.mxu0 0.0
      %5371 = vmatpush1.msra.mxu0 0.0
      %5372 = vmatprep.subr.mxu0 0.0
      %5373 = vmatpush1.msra.mxu0 0.0
      %5374 = vmatprep.subr.mxu0 0.0
      %5375 = vmatpush1.msra.mxu0 0.0
      %5376 = vmatprep.subr.mxu0 0.0
      %5377 = vmatpush1.msra.mxu0 0.0
      %5378 = vmatprep.subr.mxu0 0.0
      %5379 = vmatpush1.msra.mxu0 0.0
      %5380 = vmatprep.subr.mxu0 0.0
      %5381 = vmatpush1.msra.mxu0 0.0
      %5382 = vmatprep.subr.mxu0 0.0
      %5383 = vmatpush1.msra.mxu0 0.0
      %5384 = vmatprep.subr.mxu0 0.0
      %5385 = vmatpush1.msra.mxu0 %v5342
      %5386 = vmatprep.subr.mxu0 0.0
      %5387 = vmatpush2.msra.mxu0 0.0
      %5388 = vmatprep.subr.mxu0 0.0
      %5389 = vmatpush2.msra.mxu0 0.0
      %5390 = vmatprep.subr.mxu0 0.0
      %5391 = vmatpush2.msra.mxu0 0.0
      %5392 = vmatprep.subr.mxu0 0.0
      %5393 = vmatpush2.msra.mxu0 0.0
      %5394 = vmatprep.subr.mxu0 0.0
      %5395 = vmatpush2.msra.mxu0 0.0
      %5396 = vmatprep.subr.mxu0 0.0
      %5397 = vmatpush2.msra.mxu0 0.0
      %5398 = vmatprep.subr.mxu0 0.0
      %5399 = vmatpush2.msra.mxu0 0.0
      %5400 = vmatprep.subr.mxu0 0.0
      %5401 = vmatpush2.msra.mxu0 0.0
      %5402 = vmatprep.subr.mxu0 0.0
      %5403 = vmatpush2.msra.mxu0 0.0
      %5404 = vmatprep.subr.mxu0 0.0
      %5405 = vmatpush2.msra.mxu0 0.0
      %5406 = vmatprep.subr.mxu0 0.0
      %5407 = vmatpush2.msra.mxu0 0.0
      %5408 = vmatprep.subr.mxu0 0.0
      %5409 = vmatpush2.msra.mxu0 0.0
      %5410 = vmatprep.subr.mxu0 0.0
      %5411 = vmatpush2.msra.mxu0 0.0
      %5412 = vmatprep.subr.mxu0 0.0
      %5413 = vmatpush2.msra.mxu0 0.0
      %5414 = vmatprep.subr.mxu0 0.0
      %5415 = vmatpush2.msra.mxu0 0.0
      %5416 = vmatprep.subr.mxu0 0.0
      %5417 = vmatpush2.msra.mxu0 0.0
      %5418 = vmatprep.mubr.f32.mxu0 0.0
      %5419 = vmatmul.mubr.f32.gmra.mxu0 %v5349
      %v5420 = vpop.f32.mrf.mxu0
      %v5421 = vadd.f32 0.0, %v5420
      %v5422 = vpop.f32.mrf.mxu0
      %5423 = vmatprep.mubr.f32.mxu0 0.0
      %5424 = vmatmul.mubr.f32.gmra.mxu0 %v5352
      %v5425 = vpop.f32.mrf.mxu0
      %v5426 = vadd.f32 0.0, %v5425
      %v5427 = vpop.f32.mrf.mxu0
      %5428 = vdwg.mxu0
      %v5429 = vadd.f32 %v5240, %v5421
      %v5430 = vadd.f32 %v5241, %v5426
      %s5431 = scalar_lea.vmem %s2, 2784
      %v5432 = vld [vmem:[%s5431] sm:$0xff]
      %v5433 = vld [vmem:[%s5431 + $0x8] sm:$0xff]
      %v5434 = vld [vmem:[%s5431 + $0x10] sm:$0xff]
      %v5435 = vld [vmem:[%s5431 + $0x18] sm:$0xff]
      %v5436 = vld [vmem:[%s5431 + $0x20] sm:$0xff]
      %v5437 = vld [vmem:[%s5431 + $0x28] sm:$0xff]
      %v5438 = vld [vmem:[%s5431 + $0x30] sm:$0xff]
      %v5439 = vld [vmem:[%s5431 + $0x38] sm:$0xff]
      %v5440 = vld [vmem:[%s5431 + $0x40] sm:$0xff]
      %v5441 = vld [vmem:[%s5431 + $0x48] sm:$0xff]
      %v5442 = vld [vmem:[%s5431 + $0x50] sm:$0xff]
      %v5443 = vld [vmem:[%s5431 + $0x58] sm:$0xff]
      %v5444 = vld [vmem:[%s5431 + $0x60] sm:$0xff]
      %v5445 = vld [vmem:[%s5431 + $0x68] sm:$0xff]
      %v5446 = vld [vmem:[%s5431 + $0x70] sm:$0xff]
      %v5447 = vld [vmem:[%s5431 + $0x78] sm:$0xff]
      %v5448 = vld [vmem:[%s5431 + $0x80] sm:$0xff]
      %v5449 = vld [vmem:[%s5431 + $0x88] sm:$0xff]
      %v5450 = vld [vmem:[%s5431 + $0x90] sm:$0xff]
      %v5451 = vld [vmem:[%s5431 + $0x98] sm:$0xff]
      %v5452 = vld [vmem:[%s5431 + $0xa0] sm:$0xff]
      %v5453 = vld [vmem:[%s5431 + $0xa8] sm:$0xff]
      %v5454 = vld [vmem:[%s5431 + $0xb0] sm:$0xff]
      %v5455 = vld [vmem:[%s5431 + $0xb8] sm:$0xff]
      %v5456 = vld [vmem:[%s5431 + $0xc0] sm:$0xff]
      %v5457 = vld [vmem:[%s5431 + $0xc8] sm:$0xff]
      %v5458 = vld [vmem:[%s5431 + $0xd0] sm:$0xff]
      %v5459 = vld [vmem:[%s5431 + $0xd8] sm:$0xff]
      %v5460 = vld [vmem:[%s5431 + $0xe0] sm:$0x1]
      %v5462 = vsel %vm3196, %v5460, 0
      %5464 = vmatprep.subr.mxu0 0.0
      %5465 = vmatpush1.msra.mxu0 %v5447
      %5466 = vmatprep.subr.mxu0 0.0
      %5467 = vmatpush1.msra.mxu0 %v5446
      %5468 = vmatprep.subr.mxu0 0.0
      %5469 = vmatpush1.msra.mxu0 %v5445
      %5470 = vmatprep.subr.mxu0 0.0
      %5471 = vmatpush1.msra.mxu0 %v5444
      %5472 = vmatprep.subr.mxu0 0.0
      %5473 = vmatpush1.msra.mxu0 %v5443
      %5474 = vmatprep.subr.mxu0 0.0
      %5475 = vmatpush1.msra.mxu0 %v5442
      %5476 = vmatprep.subr.mxu0 0.0
      %5477 = vmatpush1.msra.mxu0 %v5441
      %5478 = vmatprep.subr.mxu0 0.0
      %5479 = vmatpush1.msra.mxu0 %v5440
      %5480 = vmatprep.subr.mxu0 0.0
      %5481 = vmatpush1.msra.mxu0 %v5439
      %5482 = vmatprep.subr.mxu0 0.0
      %5483 = vmatpush1.msra.mxu0 %v5438
      %5484 = vmatprep.subr.mxu0 0.0
      %5485 = vmatpush1.msra.mxu0 %v5437
      %5486 = vmatprep.subr.mxu0 0.0
      %5487 = vmatpush1.msra.mxu0 %v5436
      %5488 = vmatprep.subr.mxu0 0.0
      %5489 = vmatpush1.msra.mxu0 %v5435
      %5490 = vmatprep.subr.mxu0 0.0
      %5491 = vmatpush1.msra.mxu0 %v5434
      %5492 = vmatprep.subr.mxu0 0.0
      %5493 = vmatpush1.msra.mxu0 %v5433
      %5494 = vmatprep.subr.mxu0 0.0
      %5495 = vmatpush1.msra.mxu0 %v5432
      %5496 = vmatprep.subr.mxu0 0.0
      %5497 = vmatpush2.msra.mxu0 0.0
      %5498 = vmatprep.subr.mxu0 0.0
      %5499 = vmatpush2.msra.mxu0 0.0
      %5500 = vmatprep.subr.mxu0 0.0
      %5501 = vmatpush2.msra.mxu0 0.0
      %5502 = vmatprep.subr.mxu0 0.0
      %5503 = vmatpush2.msra.mxu0 %v5462
      %5504 = vmatprep.subr.mxu0 0.0
      %5505 = vmatpush2.msra.mxu0 %v5459
      %5506 = vmatprep.subr.mxu0 0.0
      %5507 = vmatpush2.msra.mxu0 %v5458
      %5508 = vmatprep.subr.mxu0 0.0
      %5509 = vmatpush2.msra.mxu0 %v5457
      %5510 = vmatprep.subr.mxu0 0.0
      %5511 = vmatpush2.msra.mxu0 %v5456
      %5512 = vmatprep.subr.mxu0 0.0
      %5513 = vmatpush2.msra.mxu0 %v5455
      %5514 = vmatprep.subr.mxu0 0.0
      %5515 = vmatpush2.msra.mxu0 %v5454
      %5516 = vmatprep.subr.mxu0 0.0
      %5517 = vmatpush2.msra.mxu0 %v5453
      %5518 = vmatprep.subr.mxu0 0.0
      %5519 = vmatpush2.msra.mxu0 %v5452
      %5520 = vmatprep.subr.mxu0 0.0
      %5521 = vmatpush2.msra.mxu0 %v5451
      %5522 = vmatprep.subr.mxu0 0.0
      %5523 = vmatpush2.msra.mxu0 %v5450
      %5524 = vmatprep.subr.mxu0 0.0
      %5525 = vmatpush2.msra.mxu0 %v5449
      %5526 = vmatprep.subr.mxu0 0.0
      %5527 = vmatpush2.msra.mxu0 %v5448
      %5528 = vmatprep.mubr.f32.mxu0 %v3194
      %5529 = vmatmul.mubr.f32.gmra.mxu0 %v3161
      %v5530 = vpop.f32.mrf.mxu0
      %v5531 = vadd.f32 0.0, %v5530
      %v5532 = vpop.f32.mrf.mxu0
      %5533 = vdwg.mxu0
      %s5534 = scalar_lea.vmem %s6, 192
      %v5535 = vld [vmem:[%s5534] sm:$0xff]
      %v5536 = vld [vmem:[%s5534 + $0x8] sm:$0xff]
      %v5538 = vsel %vm3378, %v5535, 0
      %v5541 = vsel %vm3378, %v5536, 0
      %5543 = vmatprep.subr.mxu0 0.0
      %5544 = vmatpush1.msra.mxu0 0.0
      %5545 = vmatprep.subr.mxu0 0.0
      %5546 = vmatpush1.msra.mxu0 0.0
      %5547 = vmatprep.subr.mxu0 0.0
      %5548 = vmatpush1.msra.mxu0 0.0
      %5549 = vmatprep.subr.mxu0 0.0
      %5550 = vmatpush1.msra.mxu0 0.0
      %5551 = vmatprep.subr.mxu0 0.0
      %5552 = vmatpush1.msra.mxu0 0.0
      %5553 = vmatprep.subr.mxu0 0.0
      %5554 = vmatpush1.msra.mxu0 0.0
      %5555 = vmatprep.subr.mxu0 0.0
      %5556 = vmatpush1.msra.mxu0 0.0
      %5557 = vmatprep.subr.mxu0 0.0
      %5558 = vmatpush1.msra.mxu0 0.0
      %5559 = vmatprep.subr.mxu0 0.0
      %5560 = vmatpush1.msra.mxu0 0.0
      %5561 = vmatprep.subr.mxu0 0.0
      %5562 = vmatpush1.msra.mxu0 0.0
      %5563 = vmatprep.subr.mxu0 0.0
      %5564 = vmatpush1.msra.mxu0 0.0
      %5565 = vmatprep.subr.mxu0 0.0
      %5566 = vmatpush1.msra.mxu0 0.0
      %5567 = vmatprep.subr.mxu0 0.0
      %5568 = vmatpush1.msra.mxu0 0.0
      %5569 = vmatprep.subr.mxu0 0.0
      %5570 = vmatpush1.msra.mxu0 0.0
      %5571 = vmatprep.subr.mxu0 0.0
      %5572 = vmatpush1.msra.mxu0 0.0
      %5573 = vmatprep.subr.mxu0 0.0
      %5574 = vmatpush1.msra.mxu0 %v5531
      %5575 = vmatprep.subr.mxu0 0.0
      %5576 = vmatpush2.msra.mxu0 0.0
      %5577 = vmatprep.subr.mxu0 0.0
      %5578 = vmatpush2.msra.mxu0 0.0
      %5579 = vmatprep.subr.mxu0 0.0
      %5580 = vmatpush2.msra.mxu0 0.0
      %5581 = vmatprep.subr.mxu0 0.0
      %5582 = vmatpush2.msra.mxu0 0.0
      %5583 = vmatprep.subr.mxu0 0.0
      %5584 = vmatpush2.msra.mxu0 0.0
      %5585 = vmatprep.subr.mxu0 0.0
      %5586 = vmatpush2.msra.mxu0 0.0
      %5587 = vmatprep.subr.mxu0 0.0
      %5588 = vmatpush2.msra.mxu0 0.0
      %5589 = vmatprep.subr.mxu0 0.0
      %5590 = vmatpush2.msra.mxu0 0.0
      %5591 = vmatprep.subr.mxu0 0.0
      %5592 = vmatpush2.msra.mxu0 0.0
      %5593 = vmatprep.subr.mxu0 0.0
      %5594 = vmatpush2.msra.mxu0 0.0
      %5595 = vmatprep.subr.mxu0 0.0
      %5596 = vmatpush2.msra.mxu0 0.0
      %5597 = vmatprep.subr.mxu0 0.0
      %5598 = vmatpush2.msra.mxu0 0.0
      %5599 = vmatprep.subr.mxu0 0.0
      %5600 = vmatpush2.msra.mxu0 0.0
      %5601 = vmatprep.subr.mxu0 0.0
      %5602 = vmatpush2.msra.mxu0 0.0
      %5603 = vmatprep.subr.mxu0 0.0
      %5604 = vmatpush2.msra.mxu0 0.0
      %5605 = vmatprep.subr.mxu0 0.0
      %5606 = vmatpush2.msra.mxu0 0.0
      %5607 = vmatprep.mubr.f32.mxu0 0.0
      %5608 = vmatmul.mubr.f32.gmra.mxu0 %v5538
      %v5609 = vpop.f32.mrf.mxu0
      %v5610 = vadd.f32 0.0, %v5609
      %v5611 = vpop.f32.mrf.mxu0
      %5612 = vmatprep.mubr.f32.mxu0 0.0
      %5613 = vmatmul.mubr.f32.gmra.mxu0 %v5541
      %v5614 = vpop.f32.mrf.mxu0
      %v5615 = vadd.f32 0.0, %v5614
      %v5616 = vpop.f32.mrf.mxu0
      %5617 = vdwg.mxu0
      %v5618 = vadd.f32 %v5429, %v5610
      %v5619 = vadd.f32 %v5430, %v5615
      %s5620 = scalar_lea.vmem %s2, 3016
      %v5621 = vld [vmem:[%s5620] sm:$0xff]
      %v5622 = vld [vmem:[%s5620 + $0x8] sm:$0xff]
      %v5623 = vld [vmem:[%s5620 + $0x10] sm:$0xff]
      %v5624 = vld [vmem:[%s5620 + $0x18] sm:$0xff]
      %v5625 = vld [vmem:[%s5620 + $0x20] sm:$0xff]
      %v5626 = vld [vmem:[%s5620 + $0x28] sm:$0xff]
      %v5627 = vld [vmem:[%s5620 + $0x30] sm:$0xff]
      %v5628 = vld [vmem:[%s5620 + $0x38] sm:$0xff]
      %v5629 = vld [vmem:[%s5620 + $0x40] sm:$0xff]
      %v5630 = vld [vmem:[%s5620 + $0x48] sm:$0xff]
      %v5631 = vld [vmem:[%s5620 + $0x50] sm:$0xff]
      %v5632 = vld [vmem:[%s5620 + $0x58] sm:$0xff]
      %v5633 = vld [vmem:[%s5620 + $0x60] sm:$0xff]
      %v5634 = vld [vmem:[%s5620 + $0x68] sm:$0xff]
      %v5635 = vld [vmem:[%s5620 + $0x70] sm:$0xff]
      %v5636 = vld [vmem:[%s5620 + $0x78] sm:$0xff]
      %v5637 = vld [vmem:[%s5620 + $0x80] sm:$0xff]
      %v5638 = vld [vmem:[%s5620 + $0x88] sm:$0xff]
      %v5639 = vld [vmem:[%s5620 + $0x90] sm:$0xff]
      %v5640 = vld [vmem:[%s5620 + $0x98] sm:$0xff]
      %v5641 = vld [vmem:[%s5620 + $0xa0] sm:$0xff]
      %v5642 = vld [vmem:[%s5620 + $0xa8] sm:$0xff]
      %v5643 = vld [vmem:[%s5620 + $0xb0] sm:$0xff]
      %v5644 = vld [vmem:[%s5620 + $0xb8] sm:$0xff]
      %v5645 = vld [vmem:[%s5620 + $0xc0] sm:$0xff]
      %v5646 = vld [vmem:[%s5620 + $0xc8] sm:$0xff]
      %v5647 = vld [vmem:[%s5620 + $0xd0] sm:$0xff]
      %v5648 = vld [vmem:[%s5620 + $0xd8] sm:$0xff]
      %v5649 = vld [vmem:[%s5620 + $0xe0] sm:$0x1]
      %v5651 = vsel %vm3196, %v5649, 0
      %5653 = vmatprep.subr.mxu0 0.0
      %5654 = vmatpush1.msra.mxu0 %v5636
      %5655 = vmatprep.subr.mxu0 0.0
      %5656 = vmatpush1.msra.mxu0 %v5635
      %5657 = vmatprep.subr.mxu0 0.0
      %5658 = vmatpush1.msra.mxu0 %v5634
      %5659 = vmatprep.subr.mxu0 0.0
      %5660 = vmatpush1.msra.mxu0 %v5633
      %5661 = vmatprep.subr.mxu0 0.0
      %5662 = vmatpush1.msra.mxu0 %v5632
      %5663 = vmatprep.subr.mxu0 0.0
      %5664 = vmatpush1.msra.mxu0 %v5631
      %5665 = vmatprep.subr.mxu0 0.0
      %5666 = vmatpush1.msra.mxu0 %v5630
      %5667 = vmatprep.subr.mxu0 0.0
      %5668 = vmatpush1.msra.mxu0 %v5629
      %5669 = vmatprep.subr.mxu0 0.0
      %5670 = vmatpush1.msra.mxu0 %v5628
      %5671 = vmatprep.subr.mxu0 0.0
      %5672 = vmatpush1.msra.mxu0 %v5627
      %5673 = vmatprep.subr.mxu0 0.0
      %5674 = vmatpush1.msra.mxu0 %v5626
      %5675 = vmatprep.subr.mxu0 0.0
      %5676 = vmatpush1.msra.mxu0 %v5625
      %5677 = vmatprep.subr.mxu0 0.0
      %5678 = vmatpush1.msra.mxu0 %v5624
      %5679 = vmatprep.subr.mxu0 0.0
      %5680 = vmatpush1.msra.mxu0 %v5623
      %5681 = vmatprep.subr.mxu0 0.0
      %5682 = vmatpush1.msra.mxu0 %v5622
      %5683 = vmatprep.subr.mxu0 0.0
      %5684 = vmatpush1.msra.mxu0 %v5621
      %5685 = vmatprep.subr.mxu0 0.0
      %5686 = vmatpush2.msra.mxu0 0.0
      %5687 = vmatprep.subr.mxu0 0.0
      %5688 = vmatpush2.msra.mxu0 0.0
      %5689 = vmatprep.subr.mxu0 0.0
      %5690 = vmatpush2.msra.mxu0 0.0
      %5691 = vmatprep.subr.mxu0 0.0
      %5692 = vmatpush2.msra.mxu0 %v5651
      %5693 = vmatprep.subr.mxu0 0.0
      %5694 = vmatpush2.msra.mxu0 %v5648
      %5695 = vmatprep.subr.mxu0 0.0
      %5696 = vmatpush2.msra.mxu0 %v5647
      %5697 = vmatprep.subr.mxu0 0.0
      %5698 = vmatpush2.msra.mxu0 %v5646
      %5699 = vmatprep.subr.mxu0 0.0
      %5700 = vmatpush2.msra.mxu0 %v5645
      %5701 = vmatprep.subr.mxu0 0.0
      %5702 = vmatpush2.msra.mxu0 %v5644
      %5703 = vmatprep.subr.mxu0 0.0
      %5704 = vmatpush2.msra.mxu0 %v5643
      %5705 = vmatprep.subr.mxu0 0.0
      %5706 = vmatpush2.msra.mxu0 %v5642
      %5707 = vmatprep.subr.mxu0 0.0
      %5708 = vmatpush2.msra.mxu0 %v5641
      %5709 = vmatprep.subr.mxu0 0.0
      %5710 = vmatpush2.msra.mxu0 %v5640
      %5711 = vmatprep.subr.mxu0 0.0
      %5712 = vmatpush2.msra.mxu0 %v5639
      %5713 = vmatprep.subr.mxu0 0.0
      %5714 = vmatpush2.msra.mxu0 %v5638
      %5715 = vmatprep.subr.mxu0 0.0
      %5716 = vmatpush2.msra.mxu0 %v5637
      %5717 = vmatprep.mubr.f32.mxu0 %v3194
      %5718 = vmatmul.mubr.f32.gmra.mxu0 %v3161
      %v5719 = vpop.f32.mrf.mxu0
      %v5720 = vadd.f32 0.0, %v5719
      %v5721 = vpop.f32.mrf.mxu0
      %5722 = vdwg.mxu0
      %s5723 = scalar_lea.vmem %s6, 208
      %v5724 = vld [vmem:[%s5723] sm:$0xff]
      %v5725 = vld [vmem:[%s5723 + $0x8] sm:$0xff]
      %v5727 = vsel %vm3378, %v5724, 0
      %v5730 = vsel %vm3378, %v5725, 0
      %5732 = vmatprep.subr.mxu0 0.0
      %5733 = vmatpush1.msra.mxu0 0.0
      %5734 = vmatprep.subr.mxu0 0.0
      %5735 = vmatpush1.msra.mxu0 0.0
      %5736 = vmatprep.subr.mxu0 0.0
      %5737 = vmatpush1.msra.mxu0 0.0
      %5738 = vmatprep.subr.mxu0 0.0
      %5739 = vmatpush1.msra.mxu0 0.0
      %5740 = vmatprep.subr.mxu0 0.0
      %5741 = vmatpush1.msra.mxu0 0.0
      %5742 = vmatprep.subr.mxu0 0.0
      %5743 = vmatpush1.msra.mxu0 0.0
      %5744 = vmatprep.subr.mxu0 0.0
      %5745 = vmatpush1.msra.mxu0 0.0
      %5746 = vmatprep.subr.mxu0 0.0
      %5747 = vmatpush1.msra.mxu0 0.0
      %5748 = vmatprep.subr.mxu0 0.0
      %5749 = vmatpush1.msra.mxu0 0.0
      %5750 = vmatprep.subr.mxu0 0.0
      %5751 = vmatpush1.msra.mxu0 0.0
      %5752 = vmatprep.subr.mxu0 0.0
      %5753 = vmatpush1.msra.mxu0 0.0
      %5754 = vmatprep.subr.mxu0 0.0
      %5755 = vmatpush1.msra.mxu0 0.0
      %5756 = vmatprep.subr.mxu0 0.0
      %5757 = vmatpush1.msra.mxu0 0.0
      %5758 = vmatprep.subr.mxu0 0.0
      %5759 = vmatpush1.msra.mxu0 0.0
      %5760 = vmatprep.subr.mxu0 0.0
      %5761 = vmatpush1.msra.mxu0 0.0
      %5762 = vmatprep.subr.mxu0 0.0
      %5763 = vmatpush1.msra.mxu0 %v5720
      %5764 = vmatprep.subr.mxu0 0.0
      %5765 = vmatpush2.msra.mxu0 0.0
      %5766 = vmatprep.subr.mxu0 0.0
      %5767 = vmatpush2.msra.mxu0 0.0
      %5768 = vmatprep.subr.mxu0 0.0
      %5769 = vmatpush2.msra.mxu0 0.0
      %5770 = vmatprep.subr.mxu0 0.0
      %5771 = vmatpush2.msra.mxu0 0.0
      %5772 = vmatprep.subr.mxu0 0.0
      %5773 = vmatpush2.msra.mxu0 0.0
      %5774 = vmatprep.subr.mxu0 0.0
      %5775 = vmatpush2.msra.mxu0 0.0
      %5776 = vmatprep.subr.mxu0 0.0
      %5777 = vmatpush2.msra.mxu0 0.0
      %5778 = vmatprep.subr.mxu0 0.0
      %5779 = vmatpush2.msra.mxu0 0.0
      %5780 = vmatprep.subr.mxu0 0.0
      %5781 = vmatpush2.msra.mxu0 0.0
      %5782 = vmatprep.subr.mxu0 0.0
      %5783 = vmatpush2.msra.mxu0 0.0
      %5784 = vmatprep.subr.mxu0 0.0
      %5785 = vmatpush2.msra.mxu0 0.0
      %5786 = vmatprep.subr.mxu0 0.0
      %5787 = vmatpush2.msra.mxu0 0.0
      %5788 = vmatprep.subr.mxu0 0.0
      %5789 = vmatpush2.msra.mxu0 0.0
      %5790 = vmatprep.subr.mxu0 0.0
      %5791 = vmatpush2.msra.mxu0 0.0
      %5792 = vmatprep.subr.mxu0 0.0
      %5793 = vmatpush2.msra.mxu0 0.0
      %5794 = vmatprep.subr.mxu0 0.0
      %5795 = vmatpush2.msra.mxu0 0.0
      %5796 = vmatprep.mubr.f32.mxu0 0.0
      %5797 = vmatmul.mubr.f32.gmra.mxu0 %v5727
      %v5798 = vpop.f32.mrf.mxu0
      %v5799 = vadd.f32 0.0, %v5798
      %v5800 = vpop.f32.mrf.mxu0
      %5801 = vmatprep.mubr.f32.mxu0 0.0
      %5802 = vmatmul.mubr.f32.gmra.mxu0 %v5730
      %v5803 = vpop.f32.mrf.mxu0
      %v5804 = vadd.f32 0.0, %v5803
      %v5805 = vpop.f32.mrf.mxu0
      %5806 = vdwg.mxu0
      %v5807 = vadd.f32 %v5618, %v5799
      %v5808 = vadd.f32 %v5619, %v5804
      %s5809 = scalar_lea.vmem %s2, 3248
      %v5810 = vld [vmem:[%s5809] sm:$0xff]
      %v5811 = vld [vmem:[%s5809 + $0x8] sm:$0xff]
      %v5812 = vld [vmem:[%s5809 + $0x10] sm:$0xff]
      %v5813 = vld [vmem:[%s5809 + $0x18] sm:$0xff]
      %v5814 = vld [vmem:[%s5809 + $0x20] sm:$0xff]
      %v5815 = vld [vmem:[%s5809 + $0x28] sm:$0xff]
      %v5816 = vld [vmem:[%s5809 + $0x30] sm:$0xff]
      %v5817 = vld [vmem:[%s5809 + $0x38] sm:$0xff]
      %v5818 = vld [vmem:[%s5809 + $0x40] sm:$0xff]
      %v5819 = vld [vmem:[%s5809 + $0x48] sm:$0xff]
      %v5820 = vld [vmem:[%s5809 + $0x50] sm:$0xff]
      %v5821 = vld [vmem:[%s5809 + $0x58] sm:$0xff]
      %v5822 = vld [vmem:[%s5809 + $0x60] sm:$0xff]
      %v5823 = vld [vmem:[%s5809 + $0x68] sm:$0xff]
      %v5824 = vld [vmem:[%s5809 + $0x70] sm:$0xff]
      %v5825 = vld [vmem:[%s5809 + $0x78] sm:$0xff]
      %v5826 = vld [vmem:[%s5809 + $0x80] sm:$0xff]
      %v5827 = vld [vmem:[%s5809 + $0x88] sm:$0xff]
      %v5828 = vld [vmem:[%s5809 + $0x90] sm:$0xff]
      %v5829 = vld [vmem:[%s5809 + $0x98] sm:$0xff]
      %v5830 = vld [vmem:[%s5809 + $0xa0] sm:$0xff]
      %v5831 = vld [vmem:[%s5809 + $0xa8] sm:$0xff]
      %v5832 = vld [vmem:[%s5809 + $0xb0] sm:$0xff]
      %v5833 = vld [vmem:[%s5809 + $0xb8] sm:$0xff]
      %v5834 = vld [vmem:[%s5809 + $0xc0] sm:$0xff]
      %v5835 = vld [vmem:[%s5809 + $0xc8] sm:$0xff]
      %v5836 = vld [vmem:[%s5809 + $0xd0] sm:$0xff]
      %v5837 = vld [vmem:[%s5809 + $0xd8] sm:$0xff]
      %v5838 = vld [vmem:[%s5809 + $0xe0] sm:$0x1]
      %v5840 = vsel %vm3196, %v5838, 0
      %5842 = vmatprep.subr.mxu0 0.0
      %5843 = vmatpush1.msra.mxu0 %v5825
      %5844 = vmatprep.subr.mxu0 0.0
      %5845 = vmatpush1.msra.mxu0 %v5824
      %5846 = vmatprep.subr.mxu0 0.0
      %5847 = vmatpush1.msra.mxu0 %v5823
      %5848 = vmatprep.subr.mxu0 0.0
      %5849 = vmatpush1.msra.mxu0 %v5822
      %5850 = vmatprep.subr.mxu0 0.0
      %5851 = vmatpush1.msra.mxu0 %v5821
      %5852 = vmatprep.subr.mxu0 0.0
      %5853 = vmatpush1.msra.mxu0 %v5820
      %5854 = vmatprep.subr.mxu0 0.0
      %5855 = vmatpush1.msra.mxu0 %v5819
      %5856 = vmatprep.subr.mxu0 0.0
      %5857 = vmatpush1.msra.mxu0 %v5818
      %5858 = vmatprep.subr.mxu0 0.0
      %5859 = vmatpush1.msra.mxu0 %v5817
      %5860 = vmatprep.subr.mxu0 0.0
      %5861 = vmatpush1.msra.mxu0 %v5816
      %5862 = vmatprep.subr.mxu0 0.0
      %5863 = vmatpush1.msra.mxu0 %v5815
      %5864 = vmatprep.subr.mxu0 0.0
      %5865 = vmatpush1.msra.mxu0 %v5814
      %5866 = vmatprep.subr.mxu0 0.0
      %5867 = vmatpush1.msra.mxu0 %v5813
      %5868 = vmatprep.subr.mxu0 0.0
      %5869 = vmatpush1.msra.mxu0 %v5812
      %5870 = vmatprep.subr.mxu0 0.0
      %5871 = vmatpush1.msra.mxu0 %v5811
      %5872 = vmatprep.subr.mxu0 0.0
      %5873 = vmatpush1.msra.mxu0 %v5810
      %5874 = vmatprep.subr.mxu0 0.0
      %5875 = vmatpush2.msra.mxu0 0.0
      %5876 = vmatprep.subr.mxu0 0.0
      %5877 = vmatpush2.msra.mxu0 0.0
      %5878 = vmatprep.subr.mxu0 0.0
      %5879 = vmatpush2.msra.mxu0 0.0
      %5880 = vmatprep.subr.mxu0 0.0
      %5881 = vmatpush2.msra.mxu0 %v5840
      %5882 = vmatprep.subr.mxu0 0.0
      %5883 = vmatpush2.msra.mxu0 %v5837
      %5884 = vmatprep.subr.mxu0 0.0
      %5885 = vmatpush2.msra.mxu0 %v5836
      %5886 = vmatprep.subr.mxu0 0.0
      %5887 = vmatpush2.msra.mxu0 %v5835
      %5888 = vmatprep.subr.mxu0 0.0
      %5889 = vmatpush2.msra.mxu0 %v5834
      %5890 = vmatprep.subr.mxu0 0.0
      %5891 = vmatpush2.msra.mxu0 %v5833
      %5892 = vmatprep.subr.mxu0 0.0
      %5893 = vmatpush2.msra.mxu0 %v5832
      %5894 = vmatprep.subr.mxu0 0.0
      %5895 = vmatpush2.msra.mxu0 %v5831
      %5896 = vmatprep.subr.mxu0 0.0
      %5897 = vmatpush2.msra.mxu0 %v5830
      %5898 = vmatprep.subr.mxu0 0.0
      %5899 = vmatpush2.msra.mxu0 %v5829
      %5900 = vmatprep.subr.mxu0 0.0
      %5901 = vmatpush2.msra.mxu0 %v5828
      %5902 = vmatprep.subr.mxu0 0.0
      %5903 = vmatpush2.msra.mxu0 %v5827
      %5904 = vmatprep.subr.mxu0 0.0
      %5905 = vmatpush2.msra.mxu0 %v5826
      %5906 = vmatprep.mubr.f32.mxu0 %v3194
      %5907 = vmatmul.mubr.f32.gmra.mxu0 %v3161
      %v5908 = vpop.f32.mrf.mxu0
      %v5909 = vadd.f32 0.0, %v5908
      %v5910 = vpop.f32.mrf.mxu0
      %5911 = vdwg.mxu0
      %s5912 = scalar_lea.vmem %s6, 224
      %v5913 = vld [vmem:[%s5912] sm:$0xff]
      %v5914 = vld [vmem:[%s5912 + $0x8] sm:$0xff]
      %v5916 = vsel %vm3378, %v5913, 0
      %v5919 = vsel %vm3378, %v5914, 0
      %5921 = vmatprep.subr.mxu0 0.0
      %5922 = vmatpush1.msra.mxu0 0.0
      %5923 = vmatprep.subr.mxu0 0.0
      %5924 = vmatpush1.msra.mxu0 0.0
      %5925 = vmatprep.subr.mxu0 0.0
      %5926 = vmatpush1.msra.mxu0 0.0
      %5927 = vmatprep.subr.mxu0 0.0
      %5928 = vmatpush1.msra.mxu0 0.0
      %5929 = vmatprep.subr.mxu0 0.0
      %5930 = vmatpush1.msra.mxu0 0.0
      %5931 = vmatprep.subr.mxu0 0.0
      %5932 = vmatpush1.msra.mxu0 0.0
      %5933 = vmatprep.subr.mxu0 0.0
      %5934 = vmatpush1.msra.mxu0 0.0
      %5935 = vmatprep.subr.mxu0 0.0
      %5936 = vmatpush1.msra.mxu0 0.0
      %5937 = vmatprep.subr.mxu0 0.0
      %5938 = vmatpush1.msra.mxu0 0.0
      %5939 = vmatprep.subr.mxu0 0.0
      %5940 = vmatpush1.msra.mxu0 0.0
      %5941 = vmatprep.subr.mxu0 0.0
      %5942 = vmatpush1.msra.mxu0 0.0
      %5943 = vmatprep.subr.mxu0 0.0
      %5944 = vmatpush1.msra.mxu0 0.0
      %5945 = vmatprep.subr.mxu0 0.0
      %5946 = vmatpush1.msra.mxu0 0.0
      %5947 = vmatprep.subr.mxu0 0.0
      %5948 = vmatpush1.msra.mxu0 0.0
      %5949 = vmatprep.subr.mxu0 0.0
      %5950 = vmatpush1.msra.mxu0 0.0
      %5951 = vmatprep.subr.mxu0 0.0
      %5952 = vmatpush1.msra.mxu0 %v5909
      %5953 = vmatprep.subr.mxu0 0.0
      %5954 = vmatpush2.msra.mxu0 0.0
      %5955 = vmatprep.subr.mxu0 0.0
      %5956 = vmatpush2.msra.mxu0 0.0
      %5957 = vmatprep.subr.mxu0 0.0
      %5958 = vmatpush2.msra.mxu0 0.0
      %5959 = vmatprep.subr.mxu0 0.0
      %5960 = vmatpush2.msra.mxu0 0.0
      %5961 = vmatprep.subr.mxu0 0.0
      %5962 = vmatpush2.msra.mxu0 0.0
      %5963 = vmatprep.subr.mxu0 0.0
      %5964 = vmatpush2.msra.mxu0 0.0
      %5965 = vmatprep.subr.mxu0 0.0
      %5966 = vmatpush2.msra.mxu0 0.0
      %5967 = vmatprep.subr.mxu0 0.0
      %5968 = vmatpush2.msra.mxu0 0.0
      %5969 = vmatprep.subr.mxu0 0.0
      %5970 = vmatpush2.msra.mxu0 0.0
      %5971 = vmatprep.subr.mxu0 0.0
      %5972 = vmatpush2.msra.mxu0 0.0
      %5973 = vmatprep.subr.mxu0 0.0
      %5974 = vmatpush2.msra.mxu0 0.0
      %5975 = vmatprep.subr.mxu0 0.0
      %5976 = vmatpush2.msra.mxu0 0.0
      %5977 = vmatprep.subr.mxu0 0.0
      %5978 = vmatpush2.msra.mxu0 0.0
      %5979 = vmatprep.subr.mxu0 0.0
      %5980 = vmatpush2.msra.mxu0 0.0
      %5981 = vmatprep.subr.mxu0 0.0
      %5982 = vmatpush2.msra.mxu0 0.0
      %5983 = vmatprep.subr.mxu0 0.0
      %5984 = vmatpush2.msra.mxu0 0.0
      %5985 = vmatprep.mubr.f32.mxu0 0.0
      %5986 = vmatmul.mubr.f32.gmra.mxu0 %v5916
      %v5987 = vpop.f32.mrf.mxu0
      %v5988 = vadd.f32 0.0, %v5987
      %v5989 = vpop.f32.mrf.mxu0
      %5990 = vmatprep.mubr.f32.mxu0 0.0
      %5991 = vmatmul.mubr.f32.gmra.mxu0 %v5919
      %v5992 = vpop.f32.mrf.mxu0
      %v5993 = vadd.f32 0.0, %v5992
      %v5994 = vpop.f32.mrf.mxu0
      %5995 = vdwg.mxu0
      %v5996 = vadd.f32 %v5807, %v5988
      %v5997 = vadd.f32 %v5808, %v5993
      %s5998 = scalar_lea.vmem %s2, 3480
      %v5999 = vld [vmem:[%s5998] sm:$0xff]
      %v6000 = vld [vmem:[%s5998 + $0x8] sm:$0xff]
      %v6001 = vld [vmem:[%s5998 + $0x10] sm:$0xff]
      %v6002 = vld [vmem:[%s5998 + $0x18] sm:$0xff]
      %v6003 = vld [vmem:[%s5998 + $0x20] sm:$0xff]
      %v6004 = vld [vmem:[%s5998 + $0x28] sm:$0xff]
      %v6005 = vld [vmem:[%s5998 + $0x30] sm:$0xff]
      %v6006 = vld [vmem:[%s5998 + $0x38] sm:$0xff]
      %v6007 = vld [vmem:[%s5998 + $0x40] sm:$0xff]
      %v6008 = vld [vmem:[%s5998 + $0x48] sm:$0xff]
      %v6009 = vld [vmem:[%s5998 + $0x50] sm:$0xff]
      %v6010 = vld [vmem:[%s5998 + $0x58] sm:$0xff]
      %v6011 = vld [vmem:[%s5998 + $0x60] sm:$0xff]
      %v6012 = vld [vmem:[%s5998 + $0x68] sm:$0xff]
      %v6013 = vld [vmem:[%s5998 + $0x70] sm:$0xff]
      %v6014 = vld [vmem:[%s5998 + $0x78] sm:$0xff]
      %v6015 = vld [vmem:[%s5998 + $0x80] sm:$0xff]
      %v6016 = vld [vmem:[%s5998 + $0x88] sm:$0xff]
      %v6017 = vld [vmem:[%s5998 + $0x90] sm:$0xff]
      %v6018 = vld [vmem:[%s5998 + $0x98] sm:$0xff]
      %v6019 = vld [vmem:[%s5998 + $0xa0] sm:$0xff]
      %v6020 = vld [vmem:[%s5998 + $0xa8] sm:$0xff]
      %v6021 = vld [vmem:[%s5998 + $0xb0] sm:$0xff]
      %v6022 = vld [vmem:[%s5998 + $0xb8] sm:$0xff]
      %v6023 = vld [vmem:[%s5998 + $0xc0] sm:$0xff]
      %v6024 = vld [vmem:[%s5998 + $0xc8] sm:$0xff]
      %v6025 = vld [vmem:[%s5998 + $0xd0] sm:$0xff]
      %v6026 = vld [vmem:[%s5998 + $0xd8] sm:$0xff]
      %v6027 = vld [vmem:[%s5998 + $0xe0] sm:$0x1]
      %v6029 = vsel %vm3196, %v6027, 0
      %6031 = vmatprep.subr.mxu0 0.0
      %6032 = vmatpush1.msra.mxu0 %v6014
      %6033 = vmatprep.subr.mxu0 0.0
      %6034 = vmatpush1.msra.mxu0 %v6013
      %6035 = vmatprep.subr.mxu0 0.0
      %6036 = vmatpush1.msra.mxu0 %v6012
      %6037 = vmatprep.subr.mxu0 0.0
      %6038 = vmatpush1.msra.mxu0 %v6011
      %6039 = vmatprep.subr.mxu0 0.0
      %6040 = vmatpush1.msra.mxu0 %v6010
      %6041 = vmatprep.subr.mxu0 0.0
      %6042 = vmatpush1.msra.mxu0 %v6009
      %6043 = vmatprep.subr.mxu0 0.0
      %6044 = vmatpush1.msra.mxu0 %v6008
      %6045 = vmatprep.subr.mxu0 0.0
      %6046 = vmatpush1.msra.mxu0 %v6007
      %6047 = vmatprep.subr.mxu0 0.0
      %6048 = vmatpush1.msra.mxu0 %v6006
      %6049 = vmatprep.subr.mxu0 0.0
      %6050 = vmatpush1.msra.mxu0 %v6005
      %6051 = vmatprep.subr.mxu0 0.0
      %6052 = vmatpush1.msra.mxu0 %v6004
      %6053 = vmatprep.subr.mxu0 0.0
      %6054 = vmatpush1.msra.mxu0 %v6003
      %6055 = vmatprep.subr.mxu0 0.0
      %6056 = vmatpush1.msra.mxu0 %v6002
      %6057 = vmatprep.subr.mxu0 0.0
      %6058 = vmatpush1.msra.mxu0 %v6001
      %6059 = vmatprep.subr.mxu0 0.0
      %6060 = vmatpush1.msra.mxu0 %v6000
      %6061 = vmatprep.subr.mxu0 0.0
      %6062 = vmatpush1.msra.mxu0 %v5999
      %6063 = vmatprep.subr.mxu0 0.0
      %6064 = vmatpush2.msra.mxu0 0.0
      %6065 = vmatprep.subr.mxu0 0.0
      %6066 = vmatpush2.msra.mxu0 0.0
      %6067 = vmatprep.subr.mxu0 0.0
      %6068 = vmatpush2.msra.mxu0 0.0
      %6069 = vmatprep.subr.mxu0 0.0
      %6070 = vmatpush2.msra.mxu0 %v6029
      %6071 = vmatprep.subr.mxu0 0.0
      %6072 = vmatpush2.msra.mxu0 %v6026
      %6073 = vmatprep.subr.mxu0 0.0
      %6074 = vmatpush2.msra.mxu0 %v6025
      %6075 = vmatprep.subr.mxu0 0.0
      %6076 = vmatpush2.msra.mxu0 %v6024
      %6077 = vmatprep.subr.mxu0 0.0
      %6078 = vmatpush2.msra.mxu0 %v6023
      %6079 = vmatprep.subr.mxu0 0.0
      %6080 = vmatpush2.msra.mxu0 %v6022
      %6081 = vmatprep.subr.mxu0 0.0
      %6082 = vmatpush2.msra.mxu0 %v6021
      %6083 = vmatprep.subr.mxu0 0.0
      %6084 = vmatpush2.msra.mxu0 %v6020
      %6085 = vmatprep.subr.mxu0 0.0
      %6086 = vmatpush2.msra.mxu0 %v6019
      %6087 = vmatprep.subr.mxu0 0.0
      %6088 = vmatpush2.msra.mxu0 %v6018
      %6089 = vmatprep.subr.mxu0 0.0
      %6090 = vmatpush2.msra.mxu0 %v6017
      %6091 = vmatprep.subr.mxu0 0.0
      %6092 = vmatpush2.msra.mxu0 %v6016
      %6093 = vmatprep.subr.mxu0 0.0
      %6094 = vmatpush2.msra.mxu0 %v6015
      %6095 = vmatprep.mubr.f32.mxu0 %v3194
      %6096 = vmatmul.mubr.f32.gmra.mxu0 %v3161
      %v6097 = vpop.f32.mrf.mxu0
      %v6098 = vadd.f32 0.0, %v6097
      %v6099 = vpop.f32.mrf.mxu0
      %6100 = vdwg.mxu0
      %s6101 = scalar_lea.vmem %s6, 240
      %v6102 = vld [vmem:[%s6101] sm:$0xff]
      %v6103 = vld [vmem:[%s6101 + $0x8] sm:$0xff]
      %v6105 = vsel %vm3378, %v6102, 0
      %v6108 = vsel %vm3378, %v6103, 0
      %6110 = vmatprep.subr.mxu0 0.0
      %6111 = vmatpush1.msra.mxu0 0.0
      %6112 = vmatprep.subr.mxu0 0.0
      %6113 = vmatpush1.msra.mxu0 0.0
      %6114 = vmatprep.subr.mxu0 0.0
      %6115 = vmatpush1.msra.mxu0 0.0
      %6116 = vmatprep.subr.mxu0 0.0
      %6117 = vmatpush1.msra.mxu0 0.0
      %6118 = vmatprep.subr.mxu0 0.0
      %6119 = vmatpush1.msra.mxu0 0.0
      %6120 = vmatprep.subr.mxu0 0.0
      %6121 = vmatpush1.msra.mxu0 0.0
      %6122 = vmatprep.subr.mxu0 0.0
      %6123 = vmatpush1.msra.mxu0 0.0
      %6124 = vmatprep.subr.mxu0 0.0
      %6125 = vmatpush1.msra.mxu0 0.0
      %6126 = vmatprep.subr.mxu0 0.0
      %6127 = vmatpush1.msra.mxu0 0.0
      %6128 = vmatprep.subr.mxu0 0.0
      %6129 = vmatpush1.msra.mxu0 0.0
      %6130 = vmatprep.subr.mxu0 0.0
      %6131 = vmatpush1.msra.mxu0 0.0
      %6132 = vmatprep.subr.mxu0 0.0
      %6133 = vmatpush1.msra.mxu0 0.0
      %6134 = vmatprep.subr.mxu0 0.0
      %6135 = vmatpush1.msra.mxu0 0.0
      %6136 = vmatprep.subr.mxu0 0.0
      %6137 = vmatpush1.msra.mxu0 0.0
      %6138 = vmatprep.subr.mxu0 0.0
      %6139 = vmatpush1.msra.mxu0 0.0
      %6140 = vmatprep.subr.mxu0 0.0
      %6141 = vmatpush1.msra.mxu0 %v6098
      %6142 = vmatprep.subr.mxu0 0.0
      %6143 = vmatpush2.msra.mxu0 0.0
      %6144 = vmatprep.subr.mxu0 0.0
      %6145 = vmatpush2.msra.mxu0 0.0
      %6146 = vmatprep.subr.mxu0 0.0
      %6147 = vmatpush2.msra.mxu0 0.0
      %6148 = vmatprep.subr.mxu0 0.0
      %6149 = vmatpush2.msra.mxu0 0.0
      %6150 = vmatprep.subr.mxu0 0.0
      %6151 = vmatpush2.msra.mxu0 0.0
      %6152 = vmatprep.subr.mxu0 0.0
      %6153 = vmatpush2.msra.mxu0 0.0
      %6154 = vmatprep.subr.mxu0 0.0
      %6155 = vmatpush2.msra.mxu0 0.0
      %6156 = vmatprep.subr.mxu0 0.0
      %6157 = vmatpush2.msra.mxu0 0.0
      %6158 = vmatprep.subr.mxu0 0.0
      %6159 = vmatpush2.msra.mxu0 0.0
      %6160 = vmatprep.subr.mxu0 0.0
      %6161 = vmatpush2.msra.mxu0 0.0
      %6162 = vmatprep.subr.mxu0 0.0
      %6163 = vmatpush2.msra.mxu0 0.0
      %6164 = vmatprep.subr.mxu0 0.0
      %6165 = vmatpush2.msra.mxu0 0.0
      %6166 = vmatprep.subr.mxu0 0.0
      %6167 = vmatpush2.msra.mxu0 0.0
      %6168 = vmatprep.subr.mxu0 0.0
      %6169 = vmatpush2.msra.mxu0 0.0
      %6170 = vmatprep.subr.mxu0 0.0
      %6171 = vmatpush2.msra.mxu0 0.0
      %6172 = vmatprep.subr.mxu0 0.0
      %6173 = vmatpush2.msra.mxu0 0.0
      %6174 = vmatprep.mubr.f32.mxu0 0.0
      %6175 = vmatmul.mubr.f32.gmra.mxu0 %v6105
      %v6176 = vpop.f32.mrf.mxu0
      %v6177 = vadd.f32 0.0, %v6176
      %v6178 = vpop.f32.mrf.mxu0
      %6179 = vmatprep.mubr.f32.mxu0 0.0
      %6180 = vmatmul.mubr.f32.gmra.mxu0 %v6108
      %v6181 = vpop.f32.mrf.mxu0
      %v6182 = vadd.f32 0.0, %v6181
      %v6183 = vpop.f32.mrf.mxu0
      %6184 = vdwg.mxu0
      %v6185 = vadd.f32 %v5996, %v6177
      %v6186 = vadd.f32 %v5997, %v6182
      %vm6187 = vcmask 293888
      %v6188 = vsel %vm6187, %v6185, 0.0
      %6189 = vadd.xlane.f32.xlu0 %v6188
      %v6190 = vpop.xlane.xlu0 %6189
      %v6191 = vsel %vm6187, %v6186, 0.0
      %6192 = vadd.xlane.f32.xlu0 %v6191
      %v6193 = vpop.xlane.xlu0 %6192
      %v6194 = vrcp.pop 36.0
      %v6195 = vmul.f32 %v6190, %v6194
      %v6196 = vmul.f32 %v6193, %v6194
      %v6197 = vsub.f32 %v6185, %v6195
      %v6198 = vsub.f32 %v6186, %v6196
      %v6199 = vmul.f32 %v6197, %v6197
      %v6200 = vmul.f32 %v6198, %v6198
      %v6201 = vsel %vm6187, %v6199, 0.0
      %6202 = vadd.xlane.f32.xlu0 %v6201
      %v6203 = vpop.xlane.xlu0 %6202
      %v6204 = vsel %vm6187, %v6200, 0.0
      %6205 = vadd.xlane.f32.xlu0 %v6204
      %v6206 = vpop.xlane.xlu0 %6205
      %v6207 = vmul.f32 %v6203, %v6194
      %v6208 = vmul.f32 %v6206, %v6194
      %v6209 = vadd.f32 %v6207, 1e-05
      %v6210 = vadd.f32 %v6208, 1e-05
      %v6211 = vrsqrt.pop %v6209
      %v6212 = vrsqrt.pop %v6210
      %v6213 = vmul.f32 %v6197, %v6211
      %v6214 = vmul.f32 %v6198, %v6212
      %vm6215 = vcmp.ge.f32.partialorder %v6213, 0.0
      %vm6216 = vcmp.ge.f32.partialorder %v6214, 0.0
      %v6217 = vmul.f32 %v6213, 0.2
      %v6218 = vmul.f32 %v6214, 0.2
      %v6219 = vsel %vm6215, %v6213, %v6217
      %v6220 = vsel %vm6216, %v6214, %v6218
      %v6221 = vld [vmem:[%s3] sm:$0xff]
      %v6222 = vld [vmem:[%s3 + $0x8] sm:$0xff]
      %v6223 = vld [vmem:[%s3 + $0x10] sm:$0xff]
      %v6224 = vld [vmem:[%s3 + $0x18] sm:$0xff]
      %v6225 = vld [vmem:[%s3 + $0x20] sm:$0xf]
      %v6227 = vsel %vm6187, %v6219, 0
      %v6230 = vsel %vm6187, %v6220, 0
      %vm6232 = vcmask 1043456
      %v6234 = vsel %vm6232, %v6225, 0
      %6236 = vmatprep.subr.mxu0 0.0
      %6237 = vmatpush1.msra.mxu0 0.0
      %6238 = vmatprep.subr.mxu0 0.0
      %6239 = vmatpush1.msra.mxu0 0.0
      %6240 = vmatprep.subr.mxu0 0.0
      %6241 = vmatpush1.msra.mxu0 0.0
      %6242 = vmatprep.subr.mxu0 0.0
      %6243 = vmatpush1.msra.mxu0 0.0
      %6244 = vmatprep.subr.mxu0 0.0
      %6245 = vmatpush1.msra.mxu0 0.0
      %6246 = vmatprep.subr.mxu0 0.0
      %6247 = vmatpush1.msra.mxu0 0.0
      %6248 = vmatprep.subr.mxu0 0.0
      %6249 = vmatpush1.msra.mxu0 0.0
      %6250 = vmatprep.subr.mxu0 0.0
      %6251 = vmatpush1.msra.mxu0 0.0
      %6252 = vmatprep.subr.mxu0 0.0
      %6253 = vmatpush1.msra.mxu0 0.0
      %6254 = vmatprep.subr.mxu0 0.0
      %6255 = vmatpush1.msra.mxu0 0.0
      %6256 = vmatprep.subr.mxu0 0.0
      %6257 = vmatpush1.msra.mxu0 0.0
      %6258 = vmatprep.subr.mxu0 0.0
      %6259 = vmatpush1.msra.mxu0 %v6234
      %6260 = vmatprep.subr.mxu0 0.0
      %6261 = vmatpush1.msra.mxu0 %v6224
      %6262 = vmatprep.subr.mxu0 0.0
      %6263 = vmatpush1.msra.mxu0 %v6223
      %6264 = vmatprep.subr.mxu0 0.0
      %6265 = vmatpush1.msra.mxu0 %v6222
      %6266 = vmatprep.subr.mxu0 0.0
      %6267 = vmatpush1.msra.mxu0 %v6221
      %6268 = vmatprep.subr.mxu0 0.0
      %6269 = vmatpush2.msra.mxu0 0.0
      %6270 = vmatprep.subr.mxu0 0.0
      %6271 = vmatpush2.msra.mxu0 0.0
      %6272 = vmatprep.subr.mxu0 0.0
      %6273 = vmatpush2.msra.mxu0 0.0
      %6274 = vmatprep.subr.mxu0 0.0
      %6275 = vmatpush2.msra.mxu0 0.0
      %6276 = vmatprep.subr.mxu0 0.0
      %6277 = vmatpush2.msra.mxu0 0.0
      %6278 = vmatprep.subr.mxu0 0.0
      %6279 = vmatpush2.msra.mxu0 0.0
      %6280 = vmatprep.subr.mxu0 0.0
      %6281 = vmatpush2.msra.mxu0 0.0
      %6282 = vmatprep.subr.mxu0 0.0
      %6283 = vmatpush2.msra.mxu0 0.0
      %6284 = vmatprep.subr.mxu0 0.0
      %6285 = vmatpush2.msra.mxu0 0.0
      %6286 = vmatprep.subr.mxu0 0.0
      %6287 = vmatpush2.msra.mxu0 0.0
      %6288 = vmatprep.subr.mxu0 0.0
      %6289 = vmatpush2.msra.mxu0 0.0
      %6290 = vmatprep.subr.mxu0 0.0
      %6291 = vmatpush2.msra.mxu0 0.0
      %6292 = vmatprep.subr.mxu0 0.0
      %6293 = vmatpush2.msra.mxu0 0.0
      %6294 = vmatprep.subr.mxu0 0.0
      %6295 = vmatpush2.msra.mxu0 0.0
      %6296 = vmatprep.subr.mxu0 0.0
      %6297 = vmatpush2.msra.mxu0 0.0
      %6298 = vmatprep.subr.mxu0 0.0
      %6299 = vmatpush2.msra.mxu0 0.0
      %6300 = vmatprep.mubr.f32.mxu0 0.0
      %6301 = vmatmul.mubr.f32.gmra.mxu0 %v6227
      %v6302 = vpop.f32.mrf.mxu0
      %v6303 = vadd.f32 0.0, %v6302
      %v6304 = vpop.f32.mrf.mxu0
      %6305 = vmatprep.mubr.f32.mxu0 0.0
      %6306 = vmatmul.mubr.f32.gmra.mxu0 %v6230
      %v6307 = vpop.f32.mrf.mxu0
      %v6308 = vadd.f32 0.0, %v6307
      %v6309 = vpop.f32.mrf.mxu0
      %6310 = vdwg.mxu0
      %v6311 = vld [vmem:[%s7] sm:$0xff]
      %v6312 = vld [vmem:[%s7 + $0x8] sm:$0xff]
      %v6313 = vld [vmem:[%s7 + $0x10] sm:$0xff]
      %v6314 = vld [vmem:[%s7 + $0x18] sm:$0xff]
      %s6315 = scalar_lea.vmem %s3, 40
      %v6316 = vld [vmem:[%s6315] sm:$0xff]
      %v6317 = vld [vmem:[%s6315 + $0x8] sm:$0xff]
      %v6318 = vld [vmem:[%s6315 + $0x10] sm:$0xff]
      %v6319 = vld [vmem:[%s6315 + $0x18] sm:$0xff]
      %v6320 = vld [vmem:[%s6315 + $0x20] sm:$0xf]
      %v6322 = vsel %vm6232, %v6320, 0
      %6324 = vmatprep.subr.mxu0 0.0
      %6325 = vmatpush1.msra.mxu0 0.0
      %6326 = vmatprep.subr.mxu0 0.0
      %6327 = vmatpush1.msra.mxu0 0.0
      %6328 = vmatprep.subr.mxu0 0.0
      %6329 = vmatpush1.msra.mxu0 0.0
      %6330 = vmatprep.subr.mxu0 0.0
      %6331 = vmatpush1.msra.mxu0 0.0
      %6332 = vmatprep.subr.mxu0 0.0
      %6333 = vmatpush1.msra.mxu0 0.0
      %6334 = vmatprep.subr.mxu0 0.0
      %6335 = vmatpush1.msra.mxu0 0.0
      %6336 = vmatprep.subr.mxu0 0.0
      %6337 = vmatpush1.msra.mxu0 0.0
      %6338 = vmatprep.subr.mxu0 0.0
      %6339 = vmatpush1.msra.mxu0 0.0
      %6340 = vmatprep.subr.mxu0 0.0
      %6341 = vmatpush1.msra.mxu0 0.0
      %6342 = vmatprep.subr.mxu0 0.0
      %6343 = vmatpush1.msra.mxu0 0.0
      %6344 = vmatprep.subr.mxu0 0.0
      %6345 = vmatpush1.msra.mxu0 0.0
      %6346 = vmatprep.subr.mxu0 0.0
      %6347 = vmatpush1.msra.mxu0 %v6322
      %6348 = vmatprep.subr.mxu0 0.0
      %6349 = vmatpush1.msra.mxu0 %v6319
      %6350 = vmatprep.subr.mxu0 0.0
      %6351 = vmatpush1.msra.mxu0 %v6318
      %6352 = vmatprep.subr.mxu0 0.0
      %6353 = vmatpush1.msra.mxu0 %v6317
      %6354 = vmatprep.subr.mxu0 0.0
      %6355 = vmatpush1.msra.mxu0 %v6316
      %6356 = vmatprep.subr.mxu0 0.0
      %6357 = vmatpush2.msra.mxu0 0.0
      %6358 = vmatprep.subr.mxu0 0.0
      %6359 = vmatpush2.msra.mxu0 0.0
      %6360 = vmatprep.subr.mxu0 0.0
      %6361 = vmatpush2.msra.mxu0 0.0
      %6362 = vmatprep.subr.mxu0 0.0
      %6363 = vmatpush2.msra.mxu0 0.0
      %6364 = vmatprep.subr.mxu0 0.0
      %6365 = vmatpush2.msra.mxu0 0.0
      %6366 = vmatprep.subr.mxu0 0.0
      %6367 = vmatpush2.msra.mxu0 0.0
      %6368 = vmatprep.subr.mxu0 0.0
      %6369 = vmatpush2.msra.mxu0 0.0
      %6370 = vmatprep.subr.mxu0 0.0
      %6371 = vmatpush2.msra.mxu0 0.0
      %6372 = vmatprep.subr.mxu0 0.0
      %6373 = vmatpush2.msra.mxu0 0.0
      %6374 = vmatprep.subr.mxu0 0.0
      %6375 = vmatpush2.msra.mxu0 0.0
      %6376 = vmatprep.subr.mxu0 0.0
      %6377 = vmatpush2.msra.mxu0 0.0
      %6378 = vmatprep.subr.mxu0 0.0
      %6379 = vmatpush2.msra.mxu0 0.0
      %6380 = vmatprep.subr.mxu0 0.0
      %6381 = vmatpush2.msra.mxu0 0.0
      %6382 = vmatprep.subr.mxu0 0.0
      %6383 = vmatpush2.msra.mxu0 0.0
      %6384 = vmatprep.subr.mxu0 0.0
      %6385 = vmatpush2.msra.mxu0 0.0
      %6386 = vmatprep.subr.mxu0 0.0
      %6387 = vmatpush2.msra.mxu0 0.0
      %6388 = vmatprep.mubr.f32.mxu0 0.0
      %6389 = vmatmul.mubr.f32.gmra.mxu0 %v6227
      %v6390 = vpop.f32.mrf.mxu0
      %v6391 = vadd.f32 0.0, %v6390
      %v6392 = vpop.f32.mrf.mxu0
      %6393 = vmatprep.mubr.f32.mxu0 0.0
      %6394 = vmatmul.mubr.f32.gmra.mxu0 %v6230
      %v6395 = vpop.f32.mrf.mxu0
      %v6396 = vadd.f32 0.0, %v6395
      %v6397 = vpop.f32.mrf.mxu0
      %6398 = vdwg.mxu0
      %s6399 = scalar_lea.vmem %s7, 32
      %v6400 = vld [vmem:[%s6399] sm:$0xff]
      %v6401 = vld [vmem:[%s6399 + $0x8] sm:$0xff]
      %v6402 = vld [vmem:[%s6399 + $0x10] sm:$0xff]
      %v6403 = vld [vmem:[%s6399 + $0x18] sm:$0xff]
      %vm6404 = vcmask 130048
      %v6406 = vsel %vm6404, %v6400, 0
      %v6409 = vsel %vm6404, %v6401, 0
      %v6412 = vsel %vm6404, %v6402, 0
      %v6415 = vsel %vm6404, %v6403, 0
      %6417 = vmatprep.subr.mxu0 0.0
      %6418 = vmatpush1.msra.mxu0 0.0
      %6419 = vmatprep.subr.mxu0 0.0
      %6420 = vmatpush1.msra.mxu0 0.0
      %6421 = vmatprep.subr.mxu0 0.0
      %6422 = vmatpush1.msra.mxu0 0.0
      %6423 = vmatprep.subr.mxu0 0.0
      %6424 = vmatpush1.msra.mxu0 0.0
      %6425 = vmatprep.subr.mxu0 0.0
      %6426 = vmatpush1.msra.mxu0 0.0
      %6427 = vmatprep.subr.mxu0 0.0
      %6428 = vmatpush1.msra.mxu0 0.0
      %6429 = vmatprep.subr.mxu0 0.0
      %6430 = vmatpush1.msra.mxu0 0.0
      %6431 = vmatprep.subr.mxu0 0.0
      %6432 = vmatpush1.msra.mxu0 0.0
      %6433 = vmatprep.subr.mxu0 0.0
      %6434 = vmatpush1.msra.mxu0 0.0
      %6435 = vmatprep.subr.mxu0 0.0
      %6436 = vmatpush1.msra.mxu0 0.0
      %6437 = vmatprep.subr.mxu0 0.0
      %6438 = vmatpush1.msra.mxu0 0.0
      %6439 = vmatprep.subr.mxu0 0.0
      %6440 = vmatpush1.msra.mxu0 0.0
      %6441 = vmatprep.subr.mxu0 0.0
      %6442 = vmatpush1.msra.mxu0 0.0
      %6443 = vmatprep.subr.mxu0 0.0
      %6444 = vmatpush1.msra.mxu0 0.0
      %6445 = vmatprep.subr.mxu0 0.0
      %6446 = vmatpush1.msra.mxu0 %v6396
      %6447 = vmatprep.subr.mxu0 0.0
      %6448 = vmatpush1.msra.mxu0 %v6391
      %6449 = vmatprep.subr.mxu0 0.0
      %6450 = vmatpush2.msra.mxu0 0.0
      %6451 = vmatprep.subr.mxu0 0.0
      %6452 = vmatpush2.msra.mxu0 0.0
      %6453 = vmatprep.subr.mxu0 0.0
      %6454 = vmatpush2.msra.mxu0 0.0
      %6455 = vmatprep.subr.mxu0 0.0
      %6456 = vmatpush2.msra.mxu0 0.0
      %6457 = vmatprep.subr.mxu0 0.0
      %6458 = vmatpush2.msra.mxu0 0.0
      %6459 = vmatprep.subr.mxu0 0.0
      %6460 = vmatpush2.msra.mxu0 0.0
      %6461 = vmatprep.subr.mxu0 0.0
      %6462 = vmatpush2.msra.mxu0 0.0
      %6463 = vmatprep.subr.mxu0 0.0
      %6464 = vmatpush2.msra.mxu0 0.0
      %6465 = vmatprep.subr.mxu0 0.0
      %6466 = vmatpush2.msra.mxu0 0.0
      %6467 = vmatprep.subr.mxu0 0.0
      %6468 = vmatpush2.msra.mxu0 0.0
      %6469 = vmatprep.subr.mxu0 0.0
      %6470 = vmatpush2.msra.mxu0 0.0
      %6471 = vmatprep.subr.mxu0 0.0
      %6472 = vmatpush2.msra.mxu0 0.0
      %6473 = vmatprep.subr.mxu0 0.0
      %6474 = vmatpush2.msra.mxu0 0.0
      %6475 = vmatprep.subr.mxu0 0.0
      %6476 = vmatpush2.msra.mxu0 0.0
      %6477 = vmatprep.subr.mxu0 0.0
      %6478 = vmatpush2.msra.mxu0 0.0
      %6479 = vmatprep.subr.mxu0 0.0
      %6480 = vmatpush2.msra.mxu0 0.0
      %6481 = vmatprep.mubr.f32.mxu0 0.0
      %6482 = vmatmul.mubr.f32.gmra.mxu0 %v6406
      %v6483 = vpop.f32.mrf.mxu0
      %v6484 = vadd.f32 0.0, %v6483
      %v6485 = vpop.f32.mrf.mxu0
      %6486 = vmatprep.mubr.f32.mxu0 0.0
      %6487 = vmatmul.mubr.f32.gmra.mxu0 %v6409
      %v6488 = vpop.f32.mrf.mxu0
      %v6489 = vadd.f32 0.0, %v6488
      %v6490 = vpop.f32.mrf.mxu0
      %6491 = vmatprep.mubr.f32.mxu0 0.0
      %6492 = vmatmul.mubr.f32.gmra.mxu0 %v6412
      %v6493 = vpop.f32.mrf.mxu0
      %v6494 = vadd.f32 0.0, %v6493
      %v6495 = vpop.f32.mrf.mxu0
      %6496 = vmatprep.mubr.f32.mxu0 0.0
      %6497 = vmatmul.mubr.f32.gmra.mxu0 %v6415
      %v6498 = vpop.f32.mrf.mxu0
      %v6499 = vadd.f32 0.0, %v6498
      %v6500 = vpop.f32.mrf.mxu0
      %6501 = vdwg.mxu0
      %v6503 = vsel %vm6404, %v6311, 0
      %v6506 = vsel %vm6404, %v6312, 0
      %v6509 = vsel %vm6404, %v6313, 0
      %v6512 = vsel %vm6404, %v6314, 0
      %6514 = vmatprep.subr.mxu0 0.0
      %6515 = vmatpush1.msra.mxu0 0.0
      %6516 = vmatprep.subr.mxu0 0.0
      %6517 = vmatpush1.msra.mxu0 0.0
      %6518 = vmatprep.subr.mxu0 0.0
      %6519 = vmatpush1.msra.mxu0 0.0
      %6520 = vmatprep.subr.mxu0 0.0
      %6521 = vmatpush1.msra.mxu0 0.0
      %6522 = vmatprep.subr.mxu0 0.0
      %6523 = vmatpush1.msra.mxu0 0.0
      %6524 = vmatprep.subr.mxu0 0.0
      %6525 = vmatpush1.msra.mxu0 0.0
      %6526 = vmatprep.subr.mxu0 0.0
      %6527 = vmatpush1.msra.mxu0 0.0
      %6528 = vmatprep.subr.mxu0 0.0
      %6529 = vmatpush1.msra.mxu0 0.0
      %6530 = vmatprep.subr.mxu0 0.0
      %6531 = vmatpush1.msra.mxu0 0.0
      %6532 = vmatprep.subr.mxu0 0.0
      %6533 = vmatpush1.msra.mxu0 0.0
      %6534 = vmatprep.subr.mxu0 0.0
      %6535 = vmatpush1.msra.mxu0 0.0
      %6536 = vmatprep.subr.mxu0 0.0
      %6537 = vmatpush1.msra.mxu0 0.0
      %6538 = vmatprep.subr.mxu0 0.0
      %6539 = vmatpush1.msra.mxu0 0.0
      %6540 = vmatprep.subr.mxu0 0.0
      %6541 = vmatpush1.msra.mxu0 0.0
      %6542 = vmatprep.subr.mxu0 0.0
      %6543 = vmatpush1.msra.mxu0 %v6308
      %6544 = vmatprep.subr.mxu0 0.0
      %6545 = vmatpush1.msra.mxu0 %v6303
      %6546 = vmatprep.subr.mxu0 0.0
      %6547 = vmatpush2.msra.mxu0 0.0
      %6548 = vmatprep.subr.mxu0 0.0
      %6549 = vmatpush2.msra.mxu0 0.0
      %6550 = vmatprep.subr.mxu0 0.0
      %6551 = vmatpush2.msra.mxu0 0.0
      %6552 = vmatprep.subr.mxu0 0.0
      %6553 = vmatpush2.msra.mxu0 0.0
      %6554 = vmatprep.subr.mxu0 0.0
      %6555 = vmatpush2.msra.mxu0 0.0
      %6556 = vmatprep.subr.mxu0 0.0
      %6557 = vmatpush2.msra.mxu0 0.0
      %6558 = vmatprep.subr.mxu0 0.0
      %6559 = vmatpush2.msra.mxu0 0.0
      %6560 = vmatprep.subr.mxu0 0.0
      %6561 = vmatpush2.msra.mxu0 0.0
      %6562 = vmatprep.subr.mxu0 0.0
      %6563 = vmatpush2.msra.mxu0 0.0
      %6564 = vmatprep.subr.mxu0 0.0
      %6565 = vmatpush2.msra.mxu0 0.0
      %6566 = vmatprep.subr.mxu0 0.0
      %6567 = vmatpush2.msra.mxu0 0.0
      %6568 = vmatprep.subr.mxu0 0.0
      %6569 = vmatpush2.msra.mxu0 0.0
      %6570 = vmatprep.subr.mxu0 0.0
      %6571 = vmatpush2.msra.mxu0 0.0
      %6572 = vmatprep.subr.mxu0 0.0
      %6573 = vmatpush2.msra.mxu0 0.0
      %6574 = vmatprep.subr.mxu0 0.0
      %6575 = vmatpush2.msra.mxu0 0.0
      %6576 = vmatprep.subr.mxu0 0.0
      %6577 = vmatpush2.msra.mxu0 0.0
      %6578 = vmatprep.mubr.f32.mxu0 0.0
      %6579 = vmatmul.mubr.f32.gmra.mxu0 %v6503
      %v6580 = vpop.f32.mrf.mxu0
      %v6581 = vadd.f32 %v6484, %v6580
      %v6582 = vpop.f32.mrf.mxu0
      %6583 = vmatprep.mubr.f32.mxu0 0.0
      %6584 = vmatmul.mubr.f32.gmra.mxu0 %v6506
      %v6585 = vpop.f32.mrf.mxu0
      %v6586 = vadd.f32 %v6489, %v6585
      %v6587 = vpop.f32.mrf.mxu0
      %6588 = vmatprep.mubr.f32.mxu0 0.0
      %6589 = vmatmul.mubr.f32.gmra.mxu0 %v6509
      %v6590 = vpop.f32.mrf.mxu0
      %v6591 = vadd.f32 %v6494, %v6590
      %v6592 = vpop.f32.mrf.mxu0
      %6593 = vmatprep.mubr.f32.mxu0 0.0
      %6594 = vmatmul.mubr.f32.gmra.mxu0 %v6512
      %v6595 = vpop.f32.mrf.mxu0
      %v6596 = vadd.f32 %v6499, %v6595
      %v6597 = vpop.f32.mrf.mxu0
      %6598 = vdwg.mxu0
      %s6599 = scalar_lea.vmem %s3, 80
      %v6600 = vld [vmem:[%s6599] sm:$0xff]
      %v6601 = vld [vmem:[%s6599 + $0x8] sm:$0xff]
      %v6602 = vld [vmem:[%s6599 + $0x10] sm:$0xff]
      %v6603 = vld [vmem:[%s6599 + $0x18] sm:$0xff]
      %v6604 = vld [vmem:[%s6599 + $0x20] sm:$0xf]
      %v6606 = vsel %vm6232, %v6604, 0
      %6608 = vmatprep.subr.mxu0 0.0
      %6609 = vmatpush1.msra.mxu0 0.0
      %6610 = vmatprep.subr.mxu0 0.0
      %6611 = vmatpush1.msra.mxu0 0.0
      %6612 = vmatprep.subr.mxu0 0.0
      %6613 = vmatpush1.msra.mxu0 0.0
      %6614 = vmatprep.subr.mxu0 0.0
      %6615 = vmatpush1.msra.mxu0 0.0
      %6616 = vmatprep.subr.mxu0 0.0
      %6617 = vmatpush1.msra.mxu0 0.0
      %6618 = vmatprep.subr.mxu0 0.0
      %6619 = vmatpush1.msra.mxu0 0.0
      %6620 = vmatprep.subr.mxu0 0.0
      %6621 = vmatpush1.msra.mxu0 0.0
      %6622 = vmatprep.subr.mxu0 0.0
      %6623 = vmatpush1.msra.mxu0 0.0
      %6624 = vmatprep.subr.mxu0 0.0
      %6625 = vmatpush1.msra.mxu0 0.0
      %6626 = vmatprep.subr.mxu0 0.0
      %6627 = vmatpush1.msra.mxu0 0.0
      %6628 = vmatprep.subr.mxu0 0.0
      %6629 = vmatpush1.msra.mxu0 0.0
      %6630 = vmatprep.subr.mxu0 0.0
      %6631 = vmatpush1.msra.mxu0 %v6606
      %6632 = vmatprep.subr.mxu0 0.0
      %6633 = vmatpush1.msra.mxu0 %v6603
      %6634 = vmatprep.subr.mxu0 0.0
      %6635 = vmatpush1.msra.mxu0 %v6602
      %6636 = vmatprep.subr.mxu0 0.0
      %6637 = vmatpush1.msra.mxu0 %v6601
      %6638 = vmatprep.subr.mxu0 0.0
      %6639 = vmatpush1.msra.mxu0 %v6600
      %6640 = vmatprep.subr.mxu0 0.0
      %6641 = vmatpush2.msra.mxu0 0.0
      %6642 = vmatprep.subr.mxu0 0.0
      %6643 = vmatpush2.msra.mxu0 0.0
      %6644 = vmatprep.subr.mxu0 0.0
      %6645 = vmatpush2.msra.mxu0 0.0
      %6646 = vmatprep.subr.mxu0 0.0
      %6647 = vmatpush2.msra.mxu0 0.0
      %6648 = vmatprep.subr.mxu0 0.0
      %6649 = vmatpush2.msra.mxu0 0.0
      %6650 = vmatprep.subr.mxu0 0.0
      %6651 = vmatpush2.msra.mxu0 0.0
      %6652 = vmatprep.subr.mxu0 0.0
      %6653 = vmatpush2.msra.mxu0 0.0
      %6654 = vmatprep.subr.mxu0 0.0
      %6655 = vmatpush2.msra.mxu0 0.0
      %6656 = vmatprep.subr.mxu0 0.0
      %6657 = vmatpush2.msra.mxu0 0.0
      %6658 = vmatprep.subr.mxu0 0.0
      %6659 = vmatpush2.msra.mxu0 0.0
      %6660 = vmatprep.subr.mxu0 0.0
      %6661 = vmatpush2.msra.mxu0 0.0
      %6662 = vmatprep.subr.mxu0 0.0
      %6663 = vmatpush2.msra.mxu0 0.0
      %6664 = vmatprep.subr.mxu0 0.0
      %6665 = vmatpush2.msra.mxu0 0.0
      %6666 = vmatprep.subr.mxu0 0.0
      %6667 = vmatpush2.msra.mxu0 0.0
      %6668 = vmatprep.subr.mxu0 0.0
      %6669 = vmatpush2.msra.mxu0 0.0
      %6670 = vmatprep.subr.mxu0 0.0
      %6671 = vmatpush2.msra.mxu0 0.0
      %6672 = vmatprep.mubr.f32.mxu0 0.0
      %6673 = vmatmul.mubr.f32.gmra.mxu0 %v6227
      %v6674 = vpop.f32.mrf.mxu0
      %v6675 = vadd.f32 0.0, %v6674
      %v6676 = vpop.f32.mrf.mxu0
      %6677 = vmatprep.mubr.f32.mxu0 0.0
      %6678 = vmatmul.mubr.f32.gmra.mxu0 %v6230
      %v6679 = vpop.f32.mrf.mxu0
      %v6680 = vadd.f32 0.0, %v6679
      %v6681 = vpop.f32.mrf.mxu0
      %6682 = vdwg.mxu0
      %s6683 = scalar_lea.vmem %s7, 64
      %v6684 = vld [vmem:[%s6683] sm:$0xff]
      %v6685 = vld [vmem:[%s6683 + $0x8] sm:$0xff]
      %v6686 = vld [vmem:[%s6683 + $0x10] sm:$0xff]
      %v6687 = vld [vmem:[%s6683 + $0x18] sm:$0xff]
      %v6689 = vsel %vm6404, %v6684, 0
      %v6692 = vsel %vm6404, %v6685, 0
      %v6695 = vsel %vm6404, %v6686, 0
      %v6698 = vsel %vm6404, %v6687, 0
      %6700 = vmatprep.subr.mxu0 0.0
      %6701 = vmatpush1.msra.mxu0 0.0
      %6702 = vmatprep.subr.mxu0 0.0
      %6703 = vmatpush1.msra.mxu0 0.0
      %6704 = vmatprep.subr.mxu0 0.0
      %6705 = vmatpush1.msra.mxu0 0.0
      %6706 = vmatprep.subr.mxu0 0.0
      %6707 = vmatpush1.msra.mxu0 0.0
      %6708 = vmatprep.subr.mxu0 0.0
      %6709 = vmatpush1.msra.mxu0 0.0
      %6710 = vmatprep.subr.mxu0 0.0
      %6711 = vmatpush1.msra.mxu0 0.0
      %6712 = vmatprep.subr.mxu0 0.0
      %6713 = vmatpush1.msra.mxu0 0.0
      %6714 = vmatprep.subr.mxu0 0.0
      %6715 = vmatpush1.msra.mxu0 0.0
      %6716 = vmatprep.subr.mxu0 0.0
      %6717 = vmatpush1.msra.mxu0 0.0
      %6718 = vmatprep.subr.mxu0 0.0
      %6719 = vmatpush1.msra.mxu0 0.0
      %6720 = vmatprep.subr.mxu0 0.0
      %6721 = vmatpush1.msra.mxu0 0.0
      %6722 = vmatprep.subr.mxu0 0.0
      %6723 = vmatpush1.msra.mxu0 0.0
      %6724 = vmatprep.subr.mxu0 0.0
      %6725 = vmatpush1.msra.mxu0 0.0
      %6726 = vmatprep.subr.mxu0 0.0
      %6727 = vmatpush1.msra.mxu0 0.0
      %6728 = vmatprep.subr.mxu0 0.0
      %6729 = vmatpush1.msra.mxu0 %v6680
      %6730 = vmatprep.subr.mxu0 0.0
      %6731 = vmatpush1.msra.mxu0 %v6675
      %6732 = vmatprep.subr.mxu0 0.0
      %6733 = vmatpush2.msra.mxu0 0.0
      %6734 = vmatprep.subr.mxu0 0.0
      %6735 = vmatpush2.msra.mxu0 0.0
      %6736 = vmatprep.subr.mxu0 0.0
      %6737 = vmatpush2.msra.mxu0 0.0
      %6738 = vmatprep.subr.mxu0 0.0
      %6739 = vmatpush2.msra.mxu0 0.0
      %6740 = vmatprep.subr.mxu0 0.0
      %6741 = vmatpush2.msra.mxu0 0.0
      %6742 = vmatprep.subr.mxu0 0.0
      %6743 = vmatpush2.msra.mxu0 0.0
      %6744 = vmatprep.subr.mxu0 0.0
      %6745 = vmatpush2.msra.mxu0 0.0
      %6746 = vmatprep.subr.mxu0 0.0
      %6747 = vmatpush2.msra.mxu0 0.0
      %6748 = vmatprep.subr.mxu0 0.0
      %6749 = vmatpush2.msra.mxu0 0.0
      %6750 = vmatprep.subr.mxu0 0.0
      %6751 = vmatpush2.msra.mxu0 0.0
      %6752 = vmatprep.subr.mxu0 0.0
      %6753 = vmatpush2.msra.mxu0 0.0
      %6754 = vmatprep.subr.mxu0 0.0
      %6755 = vmatpush2.msra.mxu0 0.0
      %6756 = vmatprep.subr.mxu0 0.0
      %6757 = vmatpush2.msra.mxu0 0.0
      %6758 = vmatprep.subr.mxu0 0.0
      %6759 = vmatpush2.msra.mxu0 0.0
      %6760 = vmatprep.subr.mxu0 0.0
      %6761 = vmatpush2.msra.mxu0 0.0
      %6762 = vmatprep.subr.mxu0 0.0
      %6763 = vmatpush2.msra.mxu0 0.0
      %6764 = vmatprep.mubr.f32.mxu0 0.0
      %6765 = vmatmul.mubr.f32.gmra.mxu0 %v6689
      %v6766 = vpop.f32.mrf.mxu0
      %v6767 = vadd.f32 0.0, %v6766
      %v6768 = vpop.f32.mrf.mxu0
      %6769 = vmatprep.mubr.f32.mxu0 0.0
      %6770 = vmatmul.mubr.f32.gmra.mxu0 %v6692
      %v6771 = vpop.f32.mrf.mxu0
      %v6772 = vadd.f32 0.0, %v6771
      %v6773 = vpop.f32.mrf.mxu0
      %6774 = vmatprep.mubr.f32.mxu0 0.0
      %6775 = vmatmul.mubr.f32.gmra.mxu0 %v6695
      %v6776 = vpop.f32.mrf.mxu0
      %v6777 = vadd.f32 0.0, %v6776
      %v6778 = vpop.f32.mrf.mxu0
      %6779 = vmatprep.mubr.f32.mxu0 0.0
      %6780 = vmatmul.mubr.f32.gmra.mxu0 %v6698
      %v6781 = vpop.f32.mrf.mxu0
      %v6782 = vadd.f32 0.0, %v6781
      %v6783 = vpop.f32.mrf.mxu0
      %6784 = vdwg.mxu0
      %v6785 = vadd.f32 %v6581, %v6767
      %v6786 = vadd.f32 %v6586, %v6772
      %v6787 = vadd.f32 %v6591, %v6777
      %v6788 = vadd.f32 %v6596, %v6782
      %s6789 = scalar_lea.vmem %s3, 120
      %v6790 = vld [vmem:[%s6789] sm:$0xff]
      %v6791 = vld [vmem:[%s6789 + $0x8] sm:$0xff]
      %v6792 = vld [vmem:[%s6789 + $0x10] sm:$0xff]
      %v6793 = vld [vmem:[%s6789 + $0x18] sm:$0xff]
      %v6794 = vld [vmem:[%s6789 + $0x20] sm:$0xf]
      %v6796 = vsel %vm6232, %v6794, 0
      %6798 = vmatprep.subr.mxu0 0.0
      %6799 = vmatpush1.msra.mxu0 0.0
      %6800 = vmatprep.subr.mxu0 0.0
      %6801 = vmatpush1.msra.mxu0 0.0
      %6802 = vmatprep.subr.mxu0 0.0
      %6803 = vmatpush1.msra.mxu0 0.0
      %6804 = vmatprep.subr.mxu0 0.0
      %6805 = vmatpush1.msra.mxu0 0.0
      %6806 = vmatprep.subr.mxu0 0.0
      %6807 = vmatpush1.msra.mxu0 0.0
      %6808 = vmatprep.subr.mxu0 0.0
      %6809 = vmatpush1.msra.mxu0 0.0
      %6810 = vmatprep.subr.mxu0 0.0
      %6811 = vmatpush1.msra.mxu0 0.0
      %6812 = vmatprep.subr.mxu0 0.0
      %6813 = vmatpush1.msra.mxu0 0.0
      %6814 = vmatprep.subr.mxu0 0.0
      %6815 = vmatpush1.msra.mxu0 0.0
      %6816 = vmatprep.subr.mxu0 0.0
      %6817 = vmatpush1.msra.mxu0 0.0
      %6818 = vmatprep.subr.mxu0 0.0
      %6819 = vmatpush1.msra.mxu0 0.0
      %6820 = vmatprep.subr.mxu0 0.0
      %6821 = vmatpush1.msra.mxu0 %v6796
      %6822 = vmatprep.subr.mxu0 0.0
      %6823 = vmatpush1.msra.mxu0 %v6793
      %6824 = vmatprep.subr.mxu0 0.0
      %6825 = vmatpush1.msra.mxu0 %v6792
      %6826 = vmatprep.subr.mxu0 0.0
      %6827 = vmatpush1.msra.mxu0 %v6791
      %6828 = vmatprep.subr.mxu0 0.0
      %6829 = vmatpush1.msra.mxu0 %v6790
      %6830 = vmatprep.subr.mxu0 0.0
      %6831 = vmatpush2.msra.mxu0 0.0
      %6832 = vmatprep.subr.mxu0 0.0
      %6833 = vmatpush2.msra.mxu0 0.0
      %6834 = vmatprep.subr.mxu0 0.0
      %6835 = vmatpush2.msra.mxu0 0.0
      %6836 = vmatprep.subr.mxu0 0.0
      %6837 = vmatpush2.msra.mxu0 0.0
      %6838 = vmatprep.subr.mxu0 0.0
      %6839 = vmatpush2.msra.mxu0 0.0
      %6840 = vmatprep.subr.mxu0 0.0
      %6841 = vmatpush2.msra.mxu0 0.0
      %6842 = vmatprep.subr.mxu0 0.0
      %6843 = vmatpush2.msra.mxu0 0.0
      %6844 = vmatprep.subr.mxu0 0.0
      %6845 = vmatpush2.msra.mxu0 0.0
      %6846 = vmatprep.subr.mxu0 0.0
      %6847 = vmatpush2.msra.mxu0 0.0
      %6848 = vmatprep.subr.mxu0 0.0
      %6849 = vmatpush2.msra.mxu0 0.0
      %6850 = vmatprep.subr.mxu0 0.0
      %6851 = vmatpush2.msra.mxu0 0.0
      %6852 = vmatprep.subr.mxu0 0.0
      %6853 = vmatpush2.msra.mxu0 0.0
      %6854 = vmatprep.subr.mxu0 0.0
      %6855 = vmatpush2.msra.mxu0 0.0
      %6856 = vmatprep.subr.mxu0 0.0
      %6857 = vmatpush2.msra.mxu0 0.0
      %6858 = vmatprep.subr.mxu0 0.0
      %6859 = vmatpush2.msra.mxu0 0.0
      %6860 = vmatprep.subr.mxu0 0.0
      %6861 = vmatpush2.msra.mxu0 0.0
      %6862 = vmatprep.mubr.f32.mxu0 0.0
      %6863 = vmatmul.mubr.f32.gmra.mxu0 %v6227
      %v6864 = vpop.f32.mrf.mxu0
      %v6865 = vadd.f32 0.0, %v6864
      %v6866 = vpop.f32.mrf.mxu0
      %6867 = vmatprep.mubr.f32.mxu0 0.0
      %6868 = vmatmul.mubr.f32.gmra.mxu0 %v6230
      %v6869 = vpop.f32.mrf.mxu0
      %v6870 = vadd.f32 0.0, %v6869
      %v6871 = vpop.f32.mrf.mxu0
      %6872 = vdwg.mxu0
      %s6873 = scalar_lea.vmem %s7, 96
      %v6874 = vld [vmem:[%s6873] sm:$0xff]
      %v6875 = vld [vmem:[%s6873 + $0x8] sm:$0xff]
      %v6876 = vld [vmem:[%s6873 + $0x10] sm:$0xff]
      %v6877 = vld [vmem:[%s6873 + $0x18] sm:$0xff]
      %v6879 = vsel %vm6404, %v6874, 0
      %v6882 = vsel %vm6404, %v6875, 0
      %v6885 = vsel %vm6404, %v6876, 0
      %v6888 = vsel %vm6404, %v6877, 0
      %6890 = vmatprep.subr.mxu0 0.0
      %6891 = vmatpush1.msra.mxu0 0.0
      %6892 = vmatprep.subr.mxu0 0.0
      %6893 = vmatpush1.msra.mxu0 0.0
      %6894 = vmatprep.subr.mxu0 0.0
      %6895 = vmatpush1.msra.mxu0 0.0
      %6896 = vmatprep.subr.mxu0 0.0
      %6897 = vmatpush1.msra.mxu0 0.0
      %6898 = vmatprep.subr.mxu0 0.0
      %6899 = vmatpush1.msra.mxu0 0.0
      %6900 = vmatprep.subr.mxu0 0.0
      %6901 = vmatpush1.msra.mxu0 0.0
      %6902 = vmatprep.subr.mxu0 0.0
      %6903 = vmatpush1.msra.mxu0 0.0
      %6904 = vmatprep.subr.mxu0 0.0
      %6905 = vmatpush1.msra.mxu0 0.0
      %6906 = vmatprep.subr.mxu0 0.0
      %6907 = vmatpush1.msra.mxu0 0.0
      %6908 = vmatprep.subr.mxu0 0.0
      %6909 = vmatpush1.msra.mxu0 0.0
      %6910 = vmatprep.subr.mxu0 0.0
      %6911 = vmatpush1.msra.mxu0 0.0
      %6912 = vmatprep.subr.mxu0 0.0
      %6913 = vmatpush1.msra.mxu0 0.0
      %6914 = vmatprep.subr.mxu0 0.0
      %6915 = vmatpush1.msra.mxu0 0.0
      %6916 = vmatprep.subr.mxu0 0.0
      %6917 = vmatpush1.msra.mxu0 0.0
      %6918 = vmatprep.subr.mxu0 0.0
      %6919 = vmatpush1.msra.mxu0 %v6870
      %6920 = vmatprep.subr.mxu0 0.0
      %6921 = vmatpush1.msra.mxu0 %v6865
      %6922 = vmatprep.subr.mxu0 0.0
      %6923 = vmatpush2.msra.mxu0 0.0
      %6924 = vmatprep.subr.mxu0 0.0
      %6925 = vmatpush2.msra.mxu0 0.0
      %6926 = vmatprep.subr.mxu0 0.0
      %6927 = vmatpush2.msra.mxu0 0.0
      %6928 = vmatprep.subr.mxu0 0.0
      %6929 = vmatpush2.msra.mxu0 0.0
      %6930 = vmatprep.subr.mxu0 0.0
      %6931 = vmatpush2.msra.mxu0 0.0
      %6932 = vmatprep.subr.mxu0 0.0
      %6933 = vmatpush2.msra.mxu0 0.0
      %6934 = vmatprep.subr.mxu0 0.0
      %6935 = vmatpush2.msra.mxu0 0.0
      %6936 = vmatprep.subr.mxu0 0.0
      %6937 = vmatpush2.msra.mxu0 0.0
      %6938 = vmatprep.subr.mxu0 0.0
      %6939 = vmatpush2.msra.mxu0 0.0
      %6940 = vmatprep.subr.mxu0 0.0
      %6941 = vmatpush2.msra.mxu0 0.0
      %6942 = vmatprep.subr.mxu0 0.0
      %6943 = vmatpush2.msra.mxu0 0.0
      %6944 = vmatprep.subr.mxu0 0.0
      %6945 = vmatpush2.msra.mxu0 0.0
      %6946 = vmatprep.subr.mxu0 0.0
      %6947 = vmatpush2.msra.mxu0 0.0
      %6948 = vmatprep.subr.mxu0 0.0
      %6949 = vmatpush2.msra.mxu0 0.0
      %6950 = vmatprep.subr.mxu0 0.0
      %6951 = vmatpush2.msra.mxu0 0.0
      %6952 = vmatprep.subr.mxu0 0.0
      %6953 = vmatpush2.msra.mxu0 0.0
      %6954 = vmatprep.mubr.f32.mxu0 0.0
      %6955 = vmatmul.mubr.f32.gmra.mxu0 %v6879
      %v6956 = vpop.f32.mrf.mxu0
      %v6957 = vadd.f32 0.0, %v6956
      %v6958 = vpop.f32.mrf.mxu0
      %6959 = vmatprep.mubr.f32.mxu0 0.0
      %6960 = vmatmul.mubr.f32.gmra.mxu0 %v6882
      %v6961 = vpop.f32.mrf.mxu0
      %v6962 = vadd.f32 0.0, %v6961
      %v6963 = vpop.f32.mrf.mxu0
      %6964 = vmatprep.mubr.f32.mxu0 0.0
      %6965 = vmatmul.mubr.f32.gmra.mxu0 %v6885
      %v6966 = vpop.f32.mrf.mxu0
      %v6967 = vadd.f32 0.0, %v6966
      %v6968 = vpop.f32.mrf.mxu0
      %6969 = vmatprep.mubr.f32.mxu0 0.0
      %6970 = vmatmul.mubr.f32.gmra.mxu0 %v6888
      %v6971 = vpop.f32.mrf.mxu0
      %v6972 = vadd.f32 0.0, %v6971
      %v6973 = vpop.f32.mrf.mxu0
      %6974 = vdwg.mxu0
      %v6975 = vadd.f32 %v6785, %v6957
      %v6976 = vadd.f32 %v6786, %v6962
      %v6977 = vadd.f32 %v6787, %v6967
      %v6978 = vadd.f32 %v6788, %v6972
      %s6979 = scalar_lea.vmem %s3, 160
      %v6980 = vld [vmem:[%s6979] sm:$0xff]
      %v6981 = vld [vmem:[%s6979 + $0x8] sm:$0xff]
      %v6982 = vld [vmem:[%s6979 + $0x10] sm:$0xff]
      %v6983 = vld [vmem:[%s6979 + $0x18] sm:$0xff]
      %v6984 = vld [vmem:[%s6979 + $0x20] sm:$0xf]
      %v6986 = vsel %vm6232, %v6984, 0
      %6988 = vmatprep.subr.mxu0 0.0
      %6989 = vmatpush1.msra.mxu0 0.0
      %6990 = vmatprep.subr.mxu0 0.0
      %6991 = vmatpush1.msra.mxu0 0.0
      %6992 = vmatprep.subr.mxu0 0.0
      %6993 = vmatpush1.msra.mxu0 0.0
      %6994 = vmatprep.subr.mxu0 0.0
      %6995 = vmatpush1.msra.mxu0 0.0
      %6996 = vmatprep.subr.mxu0 0.0
      %6997 = vmatpush1.msra.mxu0 0.0
      %6998 = vmatprep.subr.mxu0 0.0
      %6999 = vmatpush1.msra.mxu0 0.0
      %7000 = vmatprep.subr.mxu0 0.0
      %7001 = vmatpush1.msra.mxu0 0.0
      %7002 = vmatprep.subr.mxu0 0.0
      %7003 = vmatpush1.msra.mxu0 0.0
      %7004 = vmatprep.subr.mxu0 0.0
      %7005 = vmatpush1.msra.mxu0 0.0
      %7006 = vmatprep.subr.mxu0 0.0
      %7007 = vmatpush1.msra.mxu0 0.0
      %7008 = vmatprep.subr.mxu0 0.0
      %7009 = vmatpush1.msra.mxu0 0.0
      %7010 = vmatprep.subr.mxu0 0.0
      %7011 = vmatpush1.msra.mxu0 %v6986
      %7012 = vmatprep.subr.mxu0 0.0
      %7013 = vmatpush1.msra.mxu0 %v6983
      %7014 = vmatprep.subr.mxu0 0.0
      %7015 = vmatpush1.msra.mxu0 %v6982
      %7016 = vmatprep.subr.mxu0 0.0
      %7017 = vmatpush1.msra.mxu0 %v6981
      %7018 = vmatprep.subr.mxu0 0.0
      %7019 = vmatpush1.msra.mxu0 %v6980
      %7020 = vmatprep.subr.mxu0 0.0
      %7021 = vmatpush2.msra.mxu0 0.0
      %7022 = vmatprep.subr.mxu0 0.0
      %7023 = vmatpush2.msra.mxu0 0.0
      %7024 = vmatprep.subr.mxu0 0.0
      %7025 = vmatpush2.msra.mxu0 0.0
      %7026 = vmatprep.subr.mxu0 0.0
      %7027 = vmatpush2.msra.mxu0 0.0
      %7028 = vmatprep.subr.mxu0 0.0
      %7029 = vmatpush2.msra.mxu0 0.0
      %7030 = vmatprep.subr.mxu0 0.0
      %7031 = vmatpush2.msra.mxu0 0.0
      %7032 = vmatprep.subr.mxu0 0.0
      %7033 = vmatpush2.msra.mxu0 0.0
      %7034 = vmatprep.subr.mxu0 0.0
      %7035 = vmatpush2.msra.mxu0 0.0
      %7036 = vmatprep.subr.mxu0 0.0
      %7037 = vmatpush2.msra.mxu0 0.0
      %7038 = vmatprep.subr.mxu0 0.0
      %7039 = vmatpush2.msra.mxu0 0.0
      %7040 = vmatprep.subr.mxu0 0.0
      %7041 = vmatpush2.msra.mxu0 0.0
      %7042 = vmatprep.subr.mxu0 0.0
      %7043 = vmatpush2.msra.mxu0 0.0
      %7044 = vmatprep.subr.mxu0 0.0
      %7045 = vmatpush2.msra.mxu0 0.0
      %7046 = vmatprep.subr.mxu0 0.0
      %7047 = vmatpush2.msra.mxu0 0.0
      %7048 = vmatprep.subr.mxu0 0.0
      %7049 = vmatpush2.msra.mxu0 0.0
      %7050 = vmatprep.subr.mxu0 0.0
      %7051 = vmatpush2.msra.mxu0 0.0
      %7052 = vmatprep.mubr.f32.mxu0 0.0
      %7053 = vmatmul.mubr.f32.gmra.mxu0 %v6227
      %v7054 = vpop.f32.mrf.mxu0
      %v7055 = vadd.f32 0.0, %v7054
      %v7056 = vpop.f32.mrf.mxu0
      %7057 = vmatprep.mubr.f32.mxu0 0.0
      %7058 = vmatmul.mubr.f32.gmra.mxu0 %v6230
      %v7059 = vpop.f32.mrf.mxu0
      %v7060 = vadd.f32 0.0, %v7059
      %v7061 = vpop.f32.mrf.mxu0
      %7062 = vdwg.mxu0
      %s7063 = scalar_lea.vmem %s7, 128
      %v7064 = vld [vmem:[%s7063] sm:$0xff]
      %v7065 = vld [vmem:[%s7063 + $0x8] sm:$0xff]
      %v7066 = vld [vmem:[%s7063 + $0x10] sm:$0xff]
      %v7067 = vld [vmem:[%s7063 + $0x18] sm:$0xff]
      %v7069 = vsel %vm6404, %v7064, 0
      %v7072 = vsel %vm6404, %v7065, 0
      %v7075 = vsel %vm6404, %v7066, 0
      %v7078 = vsel %vm6404, %v7067, 0
      %7080 = vmatprep.subr.mxu0 0.0
      %7081 = vmatpush1.msra.mxu0 0.0
      %7082 = vmatprep.subr.mxu0 0.0
      %7083 = vmatpush1.msra.mxu0 0.0
      %7084 = vmatprep.subr.mxu0 0.0
      %7085 = vmatpush1.msra.mxu0 0.0
      %7086 = vmatprep.subr.mxu0 0.0
      %7087 = vmatpush1.msra.mxu0 0.0
      %7088 = vmatprep.subr.mxu0 0.0
      %7089 = vmatpush1.msra.mxu0 0.0
      %7090 = vmatprep.subr.mxu0 0.0
      %7091 = vmatpush1.msra.mxu0 0.0
      %7092 = vmatprep.subr.mxu0 0.0
      %7093 = vmatpush1.msra.mxu0 0.0
      %7094 = vmatprep.subr.mxu0 0.0
      %7095 = vmatpush1.msra.mxu0 0.0
      %7096 = vmatprep.subr.mxu0 0.0
      %7097 = vmatpush1.msra.mxu0 0.0
      %7098 = vmatprep.subr.mxu0 0.0
      %7099 = vmatpush1.msra.mxu0 0.0
      %7100 = vmatprep.subr.mxu0 0.0
      %7101 = vmatpush1.msra.mxu0 0.0
      %7102 = vmatprep.subr.mxu0 0.0
      %7103 = vmatpush1.msra.mxu0 0.0
      %7104 = vmatprep.subr.mxu0 0.0
      %7105 = vmatpush1.msra.mxu0 0.0
      %7106 = vmatprep.subr.mxu0 0.0
      %7107 = vmatpush1.msra.mxu0 0.0
      %7108 = vmatprep.subr.mxu0 0.0
      %7109 = vmatpush1.msra.mxu0 %v7060
      %7110 = vmatprep.subr.mxu0 0.0
      %7111 = vmatpush1.msra.mxu0 %v7055
      %7112 = vmatprep.subr.mxu0 0.0
      %7113 = vmatpush2.msra.mxu0 0.0
      %7114 = vmatprep.subr.mxu0 0.0
      %7115 = vmatpush2.msra.mxu0 0.0
      %7116 = vmatprep.subr.mxu0 0.0
      %7117 = vmatpush2.msra.mxu0 0.0
      %7118 = vmatprep.subr.mxu0 0.0
      %7119 = vmatpush2.msra.mxu0 0.0
      %7120 = vmatprep.subr.mxu0 0.0
      %7121 = vmatpush2.msra.mxu0 0.0
      %7122 = vmatprep.subr.mxu0 0.0
      %7123 = vmatpush2.msra.mxu0 0.0
      %7124 = vmatprep.subr.mxu0 0.0
      %7125 = vmatpush2.msra.mxu0 0.0
      %7126 = vmatprep.subr.mxu0 0.0
      %7127 = vmatpush2.msra.mxu0 0.0
      %7128 = vmatprep.subr.mxu0 0.0
      %7129 = vmatpush2.msra.mxu0 0.0
      %7130 = vmatprep.subr.mxu0 0.0
      %7131 = vmatpush2.msra.mxu0 0.0
      %7132 = vmatprep.subr.mxu0 0.0
      %7133 = vmatpush2.msra.mxu0 0.0
      %7134 = vmatprep.subr.mxu0 0.0
      %7135 = vmatpush2.msra.mxu0 0.0
      %7136 = vmatprep.subr.mxu0 0.0
      %7137 = vmatpush2.msra.mxu0 0.0
      %7138 = vmatprep.subr.mxu0 0.0
      %7139 = vmatpush2.msra.mxu0 0.0
      %7140 = vmatprep.subr.mxu0 0.0
      %7141 = vmatpush2.msra.mxu0 0.0
      %7142 = vmatprep.subr.mxu0 0.0
      %7143 = vmatpush2.msra.mxu0 0.0
      %7144 = vmatprep.mubr.f32.mxu0 0.0
      %7145 = vmatmul.mubr.f32.gmra.mxu0 %v7069
      %v7146 = vpop.f32.mrf.mxu0
      %v7147 = vadd.f32 0.0, %v7146
      %v7148 = vpop.f32.mrf.mxu0
      %7149 = vmatprep.mubr.f32.mxu0 0.0
      %7150 = vmatmul.mubr.f32.gmra.mxu0 %v7072
      %v7151 = vpop.f32.mrf.mxu0
      %v7152 = vadd.f32 0.0, %v7151
      %v7153 = vpop.f32.mrf.mxu0
      %7154 = vmatprep.mubr.f32.mxu0 0.0
      %7155 = vmatmul.mubr.f32.gmra.mxu0 %v7075
      %v7156 = vpop.f32.mrf.mxu0
      %v7157 = vadd.f32 0.0, %v7156
      %v7158 = vpop.f32.mrf.mxu0
      %7159 = vmatprep.mubr.f32.mxu0 0.0
      %7160 = vmatmul.mubr.f32.gmra.mxu0 %v7078
      %v7161 = vpop.f32.mrf.mxu0
      %v7162 = vadd.f32 0.0, %v7161
      %v7163 = vpop.f32.mrf.mxu0
      %7164 = vdwg.mxu0
      %v7165 = vadd.f32 %v6975, %v7147
      %v7166 = vadd.f32 %v6976, %v7152
      %v7167 = vadd.f32 %v6977, %v7157
      %v7168 = vadd.f32 %v6978, %v7162
      %s7169 = scalar_lea.vmem %s3, 200
      %v7170 = vld [vmem:[%s7169] sm:$0xff]
      %v7171 = vld [vmem:[%s7169 + $0x8] sm:$0xff]
      %v7172 = vld [vmem:[%s7169 + $0x10] sm:$0xff]
      %v7173 = vld [vmem:[%s7169 + $0x18] sm:$0xff]
      %v7174 = vld [vmem:[%s7169 + $0x20] sm:$0xf]
      %v7176 = vsel %vm6232, %v7174, 0
      %7178 = vmatprep.subr.mxu0 0.0
      %7179 = vmatpush1.msra.mxu0 0.0
      %7180 = vmatprep.subr.mxu0 0.0
      %7181 = vmatpush1.msra.mxu0 0.0
      %7182 = vmatprep.subr.mxu0 0.0
      %7183 = vmatpush1.msra.mxu0 0.0
      %7184 = vmatprep.subr.mxu0 0.0
      %7185 = vmatpush1.msra.mxu0 0.0
      %7186 = vmatprep.subr.mxu0 0.0
      %7187 = vmatpush1.msra.mxu0 0.0
      %7188 = vmatprep.subr.mxu0 0.0
      %7189 = vmatpush1.msra.mxu0 0.0
      %7190 = vmatprep.subr.mxu0 0.0
      %7191 = vmatpush1.msra.mxu0 0.0
      %7192 = vmatprep.subr.mxu0 0.0
      %7193 = vmatpush1.msra.mxu0 0.0
      %7194 = vmatprep.subr.mxu0 0.0
      %7195 = vmatpush1.msra.mxu0 0.0
      %7196 = vmatprep.subr.mxu0 0.0
      %7197 = vmatpush1.msra.mxu0 0.0
      %7198 = vmatprep.subr.mxu0 0.0
      %7199 = vmatpush1.msra.mxu0 0.0
      %7200 = vmatprep.subr.mxu0 0.0
      %7201 = vmatpush1.msra.mxu0 %v7176
      %7202 = vmatprep.subr.mxu0 0.0
      %7203 = vmatpush1.msra.mxu0 %v7173
      %7204 = vmatprep.subr.mxu0 0.0
      %7205 = vmatpush1.msra.mxu0 %v7172
      %7206 = vmatprep.subr.mxu0 0.0
      %7207 = vmatpush1.msra.mxu0 %v7171
      %7208 = vmatprep.subr.mxu0 0.0
      %7209 = vmatpush1.msra.mxu0 %v7170
      %7210 = vmatprep.subr.mxu0 0.0
      %7211 = vmatpush2.msra.mxu0 0.0
      %7212 = vmatprep.subr.mxu0 0.0
      %7213 = vmatpush2.msra.mxu0 0.0
      %7214 = vmatprep.subr.mxu0 0.0
      %7215 = vmatpush2.msra.mxu0 0.0
      %7216 = vmatprep.subr.mxu0 0.0
      %7217 = vmatpush2.msra.mxu0 0.0
      %7218 = vmatprep.subr.mxu0 0.0
      %7219 = vmatpush2.msra.mxu0 0.0
      %7220 = vmatprep.subr.mxu0 0.0
      %7221 = vmatpush2.msra.mxu0 0.0
      %7222 = vmatprep.subr.mxu0 0.0
      %7223 = vmatpush2.msra.mxu0 0.0
      %7224 = vmatprep.subr.mxu0 0.0
      %7225 = vmatpush2.msra.mxu0 0.0
      %7226 = vmatprep.subr.mxu0 0.0
      %7227 = vmatpush2.msra.mxu0 0.0
      %7228 = vmatprep.subr.mxu0 0.0
      %7229 = vmatpush2.msra.mxu0 0.0
      %7230 = vmatprep.subr.mxu0 0.0
      %7231 = vmatpush2.msra.mxu0 0.0
      %7232 = vmatprep.subr.mxu0 0.0
      %7233 = vmatpush2.msra.mxu0 0.0
      %7234 = vmatprep.subr.mxu0 0.0
      %7235 = vmatpush2.msra.mxu0 0.0
      %7236 = vmatprep.subr.mxu0 0.0
      %7237 = vmatpush2.msra.mxu0 0.0
      %7238 = vmatprep.subr.mxu0 0.0
      %7239 = vmatpush2.msra.mxu0 0.0
      %7240 = vmatprep.subr.mxu0 0.0
      %7241 = vmatpush2.msra.mxu0 0.0
      %7242 = vmatprep.mubr.f32.mxu0 0.0
      %7243 = vmatmul.mubr.f32.gmra.mxu0 %v6227
      %v7244 = vpop.f32.mrf.mxu0
      %v7245 = vadd.f32 0.0, %v7244
      %v7246 = vpop.f32.mrf.mxu0
      %7247 = vmatprep.mubr.f32.mxu0 0.0
      %7248 = vmatmul.mubr.f32.gmra.mxu0 %v6230
      %v7249 = vpop.f32.mrf.mxu0
      %v7250 = vadd.f32 0.0, %v7249
      %v7251 = vpop.f32.mrf.mxu0
      %7252 = vdwg.mxu0
      %s7253 = scalar_lea.vmem %s7, 160
      %v7254 = vld [vmem:[%s7253] sm:$0xff]
      %v7255 = vld [vmem:[%s7253 + $0x8] sm:$0xff]
      %v7256 = vld [vmem:[%s7253 + $0x10] sm:$0xff]
      %v7257 = vld [vmem:[%s7253 + $0x18] sm:$0xff]
      %v7259 = vsel %vm6404, %v7254, 0
      %v7262 = vsel %vm6404, %v7255, 0
      %v7265 = vsel %vm6404, %v7256, 0
      %v7268 = vsel %vm6404, %v7257, 0
      %7270 = vmatprep.subr.mxu0 0.0
      %7271 = vmatpush1.msra.mxu0 0.0
      %7272 = vmatprep.subr.mxu0 0.0
      %7273 = vmatpush1.msra.mxu0 0.0
      %7274 = vmatprep.subr.mxu0 0.0
      %7275 = vmatpush1.msra.mxu0 0.0
      %7276 = vmatprep.subr.mxu0 0.0
      %7277 = vmatpush1.msra.mxu0 0.0
      %7278 = vmatprep.subr.mxu0 0.0
      %7279 = vmatpush1.msra.mxu0 0.0
      %7280 = vmatprep.subr.mxu0 0.0
      %7281 = vmatpush1.msra.mxu0 0.0
      %7282 = vmatprep.subr.mxu0 0.0
      %7283 = vmatpush1.msra.mxu0 0.0
      %7284 = vmatprep.subr.mxu0 0.0
      %7285 = vmatpush1.msra.mxu0 0.0
      %7286 = vmatprep.subr.mxu0 0.0
      %7287 = vmatpush1.msra.mxu0 0.0
      %7288 = vmatprep.subr.mxu0 0.0
      %7289 = vmatpush1.msra.mxu0 0.0
      %7290 = vmatprep.subr.mxu0 0.0
      %7291 = vmatpush1.msra.mxu0 0.0
      %7292 = vmatprep.subr.mxu0 0.0
      %7293 = vmatpush1.msra.mxu0 0.0
      %7294 = vmatprep.subr.mxu0 0.0
      %7295 = vmatpush1.msra.mxu0 0.0
      %7296 = vmatprep.subr.mxu0 0.0
      %7297 = vmatpush1.msra.mxu0 0.0
      %7298 = vmatprep.subr.mxu0 0.0
      %7299 = vmatpush1.msra.mxu0 %v7250
      %7300 = vmatprep.subr.mxu0 0.0
      %7301 = vmatpush1.msra.mxu0 %v7245
      %7302 = vmatprep.subr.mxu0 0.0
      %7303 = vmatpush2.msra.mxu0 0.0
      %7304 = vmatprep.subr.mxu0 0.0
      %7305 = vmatpush2.msra.mxu0 0.0
      %7306 = vmatprep.subr.mxu0 0.0
      %7307 = vmatpush2.msra.mxu0 0.0
      %7308 = vmatprep.subr.mxu0 0.0
      %7309 = vmatpush2.msra.mxu0 0.0
      %7310 = vmatprep.subr.mxu0 0.0
      %7311 = vmatpush2.msra.mxu0 0.0
      %7312 = vmatprep.subr.mxu0 0.0
      %7313 = vmatpush2.msra.mxu0 0.0
      %7314 = vmatprep.subr.mxu0 0.0
      %7315 = vmatpush2.msra.mxu0 0.0
      %7316 = vmatprep.subr.mxu0 0.0
      %7317 = vmatpush2.msra.mxu0 0.0
      %7318 = vmatprep.subr.mxu0 0.0
      %7319 = vmatpush2.msra.mxu0 0.0
      %7320 = vmatprep.subr.mxu0 0.0
      %7321 = vmatpush2.msra.mxu0 0.0
      %7322 = vmatprep.subr.mxu0 0.0
      %7323 = vmatpush2.msra.mxu0 0.0
      %7324 = vmatprep.subr.mxu0 0.0
      %7325 = vmatpush2.msra.mxu0 0.0
      %7326 = vmatprep.subr.mxu0 0.0
      %7327 = vmatpush2.msra.mxu0 0.0
      %7328 = vmatprep.subr.mxu0 0.0
      %7329 = vmatpush2.msra.mxu0 0.0
      %7330 = vmatprep.subr.mxu0 0.0
      %7331 = vmatpush2.msra.mxu0 0.0
      %7332 = vmatprep.subr.mxu0 0.0
      %7333 = vmatpush2.msra.mxu0 0.0
      %7334 = vmatprep.mubr.f32.mxu0 0.0
      %7335 = vmatmul.mubr.f32.gmra.mxu0 %v7259
      %v7336 = vpop.f32.mrf.mxu0
      %v7337 = vadd.f32 0.0, %v7336
      %v7338 = vpop.f32.mrf.mxu0
      %7339 = vmatprep.mubr.f32.mxu0 0.0
      %7340 = vmatmul.mubr.f32.gmra.mxu0 %v7262
      %v7341 = vpop.f32.mrf.mxu0
      %v7342 = vadd.f32 0.0, %v7341
      %v7343 = vpop.f32.mrf.mxu0
      %7344 = vmatprep.mubr.f32.mxu0 0.0
      %7345 = vmatmul.mubr.f32.gmra.mxu0 %v7265
      %v7346 = vpop.f32.mrf.mxu0
      %v7347 = vadd.f32 0.0, %v7346
      %v7348 = vpop.f32.mrf.mxu0
      %7349 = vmatprep.mubr.f32.mxu0 0.0
      %7350 = vmatmul.mubr.f32.gmra.mxu0 %v7268
      %v7351 = vpop.f32.mrf.mxu0
      %v7352 = vadd.f32 0.0, %v7351
      %v7353 = vpop.f32.mrf.mxu0
      %7354 = vdwg.mxu0
      %v7355 = vadd.f32 %v7165, %v7337
      %v7356 = vadd.f32 %v7166, %v7342
      %v7357 = vadd.f32 %v7167, %v7347
      %v7358 = vadd.f32 %v7168, %v7352
      %s7359 = scalar_lea.vmem %s3, 240
      %v7360 = vld [vmem:[%s7359] sm:$0xff]
      %v7361 = vld [vmem:[%s7359 + $0x8] sm:$0xff]
      %v7362 = vld [vmem:[%s7359 + $0x10] sm:$0xff]
      %v7363 = vld [vmem:[%s7359 + $0x18] sm:$0xff]
      %v7364 = vld [vmem:[%s7359 + $0x20] sm:$0xf]
      %v7366 = vsel %vm6232, %v7364, 0
      %7368 = vmatprep.subr.mxu0 0.0
      %7369 = vmatpush1.msra.mxu0 0.0
      %7370 = vmatprep.subr.mxu0 0.0
      %7371 = vmatpush1.msra.mxu0 0.0
      %7372 = vmatprep.subr.mxu0 0.0
      %7373 = vmatpush1.msra.mxu0 0.0
      %7374 = vmatprep.subr.mxu0 0.0
      %7375 = vmatpush1.msra.mxu0 0.0
      %7376 = vmatprep.subr.mxu0 0.0
      %7377 = vmatpush1.msra.mxu0 0.0
      %7378 = vmatprep.subr.mxu0 0.0
      %7379 = vmatpush1.msra.mxu0 0.0
      %7380 = vmatprep.subr.mxu0 0.0
      %7381 = vmatpush1.msra.mxu0 0.0
      %7382 = vmatprep.subr.mxu0 0.0
      %7383 = vmatpush1.msra.mxu0 0.0
      %7384 = vmatprep.subr.mxu0 0.0
      %7385 = vmatpush1.msra.mxu0 0.0
      %7386 = vmatprep.subr.mxu0 0.0
      %7387 = vmatpush1.msra.mxu0 0.0
      %7388 = vmatprep.subr.mxu0 0.0
      %7389 = vmatpush1.msra.mxu0 0.0
      %7390 = vmatprep.subr.mxu0 0.0
      %7391 = vmatpush1.msra.mxu0 %v7366
      %7392 = vmatprep.subr.mxu0 0.0
      %7393 = vmatpush1.msra.mxu0 %v7363
      %7394 = vmatprep.subr.mxu0 0.0
      %7395 = vmatpush1.msra.mxu0 %v7362
      %7396 = vmatprep.subr.mxu0 0.0
      %7397 = vmatpush1.msra.mxu0 %v7361
      %7398 = vmatprep.subr.mxu0 0.0
      %7399 = vmatpush1.msra.mxu0 %v7360
      %7400 = vmatprep.subr.mxu0 0.0
      %7401 = vmatpush2.msra.mxu0 0.0
      %7402 = vmatprep.subr.mxu0 0.0
      %7403 = vmatpush2.msra.mxu0 0.0
      %7404 = vmatprep.subr.mxu0 0.0
      %7405 = vmatpush2.msra.mxu0 0.0
      %7406 = vmatprep.subr.mxu0 0.0
      %7407 = vmatpush2.msra.mxu0 0.0
      %7408 = vmatprep.subr.mxu0 0.0
      %7409 = vmatpush2.msra.mxu0 0.0
      %7410 = vmatprep.subr.mxu0 0.0
      %7411 = vmatpush2.msra.mxu0 0.0
      %7412 = vmatprep.subr.mxu0 0.0
      %7413 = vmatpush2.msra.mxu0 0.0
      %7414 = vmatprep.subr.mxu0 0.0
      %7415 = vmatpush2.msra.mxu0 0.0
      %7416 = vmatprep.subr.mxu0 0.0
      %7417 = vmatpush2.msra.mxu0 0.0
      %7418 = vmatprep.subr.mxu0 0.0
      %7419 = vmatpush2.msra.mxu0 0.0
      %7420 = vmatprep.subr.mxu0 0.0
      %7421 = vmatpush2.msra.mxu0 0.0
      %7422 = vmatprep.subr.mxu0 0.0
      %7423 = vmatpush2.msra.mxu0 0.0
      %7424 = vmatprep.subr.mxu0 0.0
      %7425 = vmatpush2.msra.mxu0 0.0
      %7426 = vmatprep.subr.mxu0 0.0
      %7427 = vmatpush2.msra.mxu0 0.0
      %7428 = vmatprep.subr.mxu0 0.0
      %7429 = vmatpush2.msra.mxu0 0.0
      %7430 = vmatprep.subr.mxu0 0.0
      %7431 = vmatpush2.msra.mxu0 0.0
      %7432 = vmatprep.mubr.f32.mxu0 0.0
      %7433 = vmatmul.mubr.f32.gmra.mxu0 %v6227
      %v7434 = vpop.f32.mrf.mxu0
      %v7435 = vadd.f32 0.0, %v7434
      %v7436 = vpop.f32.mrf.mxu0
      %7437 = vmatprep.mubr.f32.mxu0 0.0
      %7438 = vmatmul.mubr.f32.gmra.mxu0 %v6230
      %v7439 = vpop.f32.mrf.mxu0
      %v7440 = vadd.f32 0.0, %v7439
      %v7441 = vpop.f32.mrf.mxu0
      %7442 = vdwg.mxu0
      %s7443 = scalar_lea.vmem %s7, 192
      %v7444 = vld [vmem:[%s7443] sm:$0xff]
      %v7445 = vld [vmem:[%s7443 + $0x8] sm:$0xff]
      %v7446 = vld [vmem:[%s7443 + $0x10] sm:$0xff]
      %v7447 = vld [vmem:[%s7443 + $0x18] sm:$0xff]
      %v7449 = vsel %vm6404, %v7444, 0
      %v7452 = vsel %vm6404, %v7445, 0
      %v7455 = vsel %vm6404, %v7446, 0
      %v7458 = vsel %vm6404, %v7447, 0
      %7460 = vmatprep.subr.mxu0 0.0
      %7461 = vmatpush1.msra.mxu0 0.0
      %7462 = vmatprep.subr.mxu0 0.0
      %7463 = vmatpush1.msra.mxu0 0.0
      %7464 = vmatprep.subr.mxu0 0.0
      %7465 = vmatpush1.msra.mxu0 0.0
      %7466 = vmatprep.subr.mxu0 0.0
      %7467 = vmatpush1.msra.mxu0 0.0
      %7468 = vmatprep.subr.mxu0 0.0
      %7469 = vmatpush1.msra.mxu0 0.0
      %7470 = vmatprep.subr.mxu0 0.0
      %7471 = vmatpush1.msra.mxu0 0.0
      %7472 = vmatprep.subr.mxu0 0.0
      %7473 = vmatpush1.msra.mxu0 0.0
      %7474 = vmatprep.subr.mxu0 0.0
      %7475 = vmatpush1.msra.mxu0 0.0
      %7476 = vmatprep.subr.mxu0 0.0
      %7477 = vmatpush1.msra.mxu0 0.0
      %7478 = vmatprep.subr.mxu0 0.0
      %7479 = vmatpush1.msra.mxu0 0.0
      %7480 = vmatprep.subr.mxu0 0.0
      %7481 = vmatpush1.msra.mxu0 0.0
      %7482 = vmatprep.subr.mxu0 0.0
      %7483 = vmatpush1.msra.mxu0 0.0
      %7484 = vmatprep.subr.mxu0 0.0
      %7485 = vmatpush1.msra.mxu0 0.0
      %7486 = vmatprep.subr.mxu0 0.0
      %7487 = vmatpush1.msra.mxu0 0.0
      %7488 = vmatprep.subr.mxu0 0.0
      %7489 = vmatpush1.msra.mxu0 %v7440
      %7490 = vmatprep.subr.mxu0 0.0
      %7491 = vmatpush1.msra.mxu0 %v7435
      %7492 = vmatprep.subr.mxu0 0.0
      %7493 = vmatpush2.msra.mxu0 0.0
      %7494 = vmatprep.subr.mxu0 0.0
      %7495 = vmatpush2.msra.mxu0 0.0
      %7496 = vmatprep.subr.mxu0 0.0
      %7497 = vmatpush2.msra.mxu0 0.0
      %7498 = vmatprep.subr.mxu0 0.0
      %7499 = vmatpush2.msra.mxu0 0.0
      %7500 = vmatprep.subr.mxu0 0.0
      %7501 = vmatpush2.msra.mxu0 0.0
      %7502 = vmatprep.subr.mxu0 0.0
      %7503 = vmatpush2.msra.mxu0 0.0
      %7504 = vmatprep.subr.mxu0 0.0
      %7505 = vmatpush2.msra.mxu0 0.0
      %7506 = vmatprep.subr.mxu0 0.0
      %7507 = vmatpush2.msra.mxu0 0.0
      %7508 = vmatprep.subr.mxu0 0.0
      %7509 = vmatpush2.msra.mxu0 0.0
      %7510 = vmatprep.subr.mxu0 0.0
      %7511 = vmatpush2.msra.mxu0 0.0
      %7512 = vmatprep.subr.mxu0 0.0
      %7513 = vmatpush2.msra.mxu0 0.0
      %7514 = vmatprep.subr.mxu0 0.0
      %7515 = vmatpush2.msra.mxu0 0.0
      %7516 = vmatprep.subr.mxu0 0.0
      %7517 = vmatpush2.msra.mxu0 0.0
      %7518 = vmatprep.subr.mxu0 0.0
      %7519 = vmatpush2.msra.mxu0 0.0
      %7520 = vmatprep.subr.mxu0 0.0
      %7521 = vmatpush2.msra.mxu0 0.0
      %7522 = vmatprep.subr.mxu0 0.0
      %7523 = vmatpush2.msra.mxu0 0.0
      %7524 = vmatprep.mubr.f32.mxu0 0.0
      %7525 = vmatmul.mubr.f32.gmra.mxu0 %v7449
      %v7526 = vpop.f32.mrf.mxu0
      %v7527 = vadd.f32 0.0, %v7526
      %v7528 = vpop.f32.mrf.mxu0
      %7529 = vmatprep.mubr.f32.mxu0 0.0
      %7530 = vmatmul.mubr.f32.gmra.mxu0 %v7452
      %v7531 = vpop.f32.mrf.mxu0
      %v7532 = vadd.f32 0.0, %v7531
      %v7533 = vpop.f32.mrf.mxu0
      %7534 = vmatprep.mubr.f32.mxu0 0.0
      %7535 = vmatmul.mubr.f32.gmra.mxu0 %v7455
      %v7536 = vpop.f32.mrf.mxu0
      %v7537 = vadd.f32 0.0, %v7536
      %v7538 = vpop.f32.mrf.mxu0
      %7539 = vmatprep.mubr.f32.mxu0 0.0
      %7540 = vmatmul.mubr.f32.gmra.mxu0 %v7458
      %v7541 = vpop.f32.mrf.mxu0
      %v7542 = vadd.f32 0.0, %v7541
      %v7543 = vpop.f32.mrf.mxu0
      %7544 = vdwg.mxu0
      %v7545 = vadd.f32 %v7355, %v7527
      %v7546 = vadd.f32 %v7356, %v7532
      %v7547 = vadd.f32 %v7357, %v7537
      %v7548 = vadd.f32 %v7358, %v7542
      %s7549 = scalar_lea.vmem %s3, 280
      %v7550 = vld [vmem:[%s7549] sm:$0xff]
      %v7551 = vld [vmem:[%s7549 + $0x8] sm:$0xff]
      %v7552 = vld [vmem:[%s7549 + $0x10] sm:$0xff]
      %v7553 = vld [vmem:[%s7549 + $0x18] sm:$0xff]
      %v7554 = vld [vmem:[%s7549 + $0x20] sm:$0xf]
      %v7556 = vsel %vm6232, %v7554, 0
      %7558 = vmatprep.subr.mxu0 0.0
      %7559 = vmatpush1.msra.mxu0 0.0
      %7560 = vmatprep.subr.mxu0 0.0
      %7561 = vmatpush1.msra.mxu0 0.0
      %7562 = vmatprep.subr.mxu0 0.0
      %7563 = vmatpush1.msra.mxu0 0.0
      %7564 = vmatprep.subr.mxu0 0.0
      %7565 = vmatpush1.msra.mxu0 0.0
      %7566 = vmatprep.subr.mxu0 0.0
      %7567 = vmatpush1.msra.mxu0 0.0
      %7568 = vmatprep.subr.mxu0 0.0
      %7569 = vmatpush1.msra.mxu0 0.0
      %7570 = vmatprep.subr.mxu0 0.0
      %7571 = vmatpush1.msra.mxu0 0.0
      %7572 = vmatprep.subr.mxu0 0.0
      %7573 = vmatpush1.msra.mxu0 0.0
      %7574 = vmatprep.subr.mxu0 0.0
      %7575 = vmatpush1.msra.mxu0 0.0
      %7576 = vmatprep.subr.mxu0 0.0
      %7577 = vmatpush1.msra.mxu0 0.0
      %7578 = vmatprep.subr.mxu0 0.0
      %7579 = vmatpush1.msra.mxu0 0.0
      %7580 = vmatprep.subr.mxu0 0.0
      %7581 = vmatpush1.msra.mxu0 %v7556
      %7582 = vmatprep.subr.mxu0 0.0
      %7583 = vmatpush1.msra.mxu0 %v7553
      %7584 = vmatprep.subr.mxu0 0.0
      %7585 = vmatpush1.msra.mxu0 %v7552
      %7586 = vmatprep.subr.mxu0 0.0
      %7587 = vmatpush1.msra.mxu0 %v7551
      %7588 = vmatprep.subr.mxu0 0.0
      %7589 = vmatpush1.msra.mxu0 %v7550
      %7590 = vmatprep.subr.mxu0 0.0
      %7591 = vmatpush2.msra.mxu0 0.0
      %7592 = vmatprep.subr.mxu0 0.0
      %7593 = vmatpush2.msra.mxu0 0.0
      %7594 = vmatprep.subr.mxu0 0.0
      %7595 = vmatpush2.msra.mxu0 0.0
      %7596 = vmatprep.subr.mxu0 0.0
      %7597 = vmatpush2.msra.mxu0 0.0
      %7598 = vmatprep.subr.mxu0 0.0
      %7599 = vmatpush2.msra.mxu0 0.0
      %7600 = vmatprep.subr.mxu0 0.0
      %7601 = vmatpush2.msra.mxu0 0.0
      %7602 = vmatprep.subr.mxu0 0.0
      %7603 = vmatpush2.msra.mxu0 0.0
      %7604 = vmatprep.subr.mxu0 0.0
      %7605 = vmatpush2.msra.mxu0 0.0
      %7606 = vmatprep.subr.mxu0 0.0
      %7607 = vmatpush2.msra.mxu0 0.0
      %7608 = vmatprep.subr.mxu0 0.0
      %7609 = vmatpush2.msra.mxu0 0.0
      %7610 = vmatprep.subr.mxu0 0.0
      %7611 = vmatpush2.msra.mxu0 0.0
      %7612 = vmatprep.subr.mxu0 0.0
      %7613 = vmatpush2.msra.mxu0 0.0
      %7614 = vmatprep.subr.mxu0 0.0
      %7615 = vmatpush2.msra.mxu0 0.0
      %7616 = vmatprep.subr.mxu0 0.0
      %7617 = vmatpush2.msra.mxu0 0.0
      %7618 = vmatprep.subr.mxu0 0.0
      %7619 = vmatpush2.msra.mxu0 0.0
      %7620 = vmatprep.subr.mxu0 0.0
      %7621 = vmatpush2.msra.mxu0 0.0
      %7622 = vmatprep.mubr.f32.mxu0 0.0
      %7623 = vmatmul.mubr.f32.gmra.mxu0 %v6227
      %v7624 = vpop.f32.mrf.mxu0
      %v7625 = vadd.f32 0.0, %v7624
      %v7626 = vpop.f32.mrf.mxu0
      %7627 = vmatprep.mubr.f32.mxu0 0.0
      %7628 = vmatmul.mubr.f32.gmra.mxu0 %v6230
      %v7629 = vpop.f32.mrf.mxu0
      %v7630 = vadd.f32 0.0, %v7629
      %v7631 = vpop.f32.mrf.mxu0
      %7632 = vdwg.mxu0
      %s7633 = scalar_lea.vmem %s7, 224
      %v7634 = vld [vmem:[%s7633] sm:$0xff]
      %v7635 = vld [vmem:[%s7633 + $0x8] sm:$0xff]
      %v7636 = vld [vmem:[%s7633 + $0x10] sm:$0xff]
      %v7637 = vld [vmem:[%s7633 + $0x18] sm:$0xff]
      %v7639 = vsel %vm6404, %v7634, 0
      %v7642 = vsel %vm6404, %v7635, 0
      %v7645 = vsel %vm6404, %v7636, 0
      %v7648 = vsel %vm6404, %v7637, 0
      %7650 = vmatprep.subr.mxu0 0.0
      %7651 = vmatpush1.msra.mxu0 0.0
      %7652 = vmatprep.subr.mxu0 0.0
      %7653 = vmatpush1.msra.mxu0 0.0
      %7654 = vmatprep.subr.mxu0 0.0
      %7655 = vmatpush1.msra.mxu0 0.0
      %7656 = vmatprep.subr.mxu0 0.0
      %7657 = vmatpush1.msra.mxu0 0.0
      %7658 = vmatprep.subr.mxu0 0.0
      %7659 = vmatpush1.msra.mxu0 0.0
      %7660 = vmatprep.subr.mxu0 0.0
      %7661 = vmatpush1.msra.mxu0 0.0
      %7662 = vmatprep.subr.mxu0 0.0
      %7663 = vmatpush1.msra.mxu0 0.0
      %7664 = vmatprep.subr.mxu0 0.0
      %7665 = vmatpush1.msra.mxu0 0.0
      %7666 = vmatprep.subr.mxu0 0.0
      %7667 = vmatpush1.msra.mxu0 0.0
      %7668 = vmatprep.subr.mxu0 0.0
      %7669 = vmatpush1.msra.mxu0 0.0
      %7670 = vmatprep.subr.mxu0 0.0
      %7671 = vmatpush1.msra.mxu0 0.0
      %7672 = vmatprep.subr.mxu0 0.0
      %7673 = vmatpush1.msra.mxu0 0.0
      %7674 = vmatprep.subr.mxu0 0.0
      %7675 = vmatpush1.msra.mxu0 0.0
      %7676 = vmatprep.subr.mxu0 0.0
      %7677 = vmatpush1.msra.mxu0 0.0
      %7678 = vmatprep.subr.mxu0 0.0
      %7679 = vmatpush1.msra.mxu0 %v7630
      %7680 = vmatprep.subr.mxu0 0.0
      %7681 = vmatpush1.msra.mxu0 %v7625
      %7682 = vmatprep.subr.mxu0 0.0
      %7683 = vmatpush2.msra.mxu0 0.0
      %7684 = vmatprep.subr.mxu0 0.0
      %7685 = vmatpush2.msra.mxu0 0.0
      %7686 = vmatprep.subr.mxu0 0.0
      %7687 = vmatpush2.msra.mxu0 0.0
      %7688 = vmatprep.subr.mxu0 0.0
      %7689 = vmatpush2.msra.mxu0 0.0
      %7690 = vmatprep.subr.mxu0 0.0
      %7691 = vmatpush2.msra.mxu0 0.0
      %7692 = vmatprep.subr.mxu0 0.0
      %7693 = vmatpush2.msra.mxu0 0.0
      %7694 = vmatprep.subr.mxu0 0.0
      %7695 = vmatpush2.msra.mxu0 0.0
      %7696 = vmatprep.subr.mxu0 0.0
      %7697 = vmatpush2.msra.mxu0 0.0
      %7698 = vmatprep.subr.mxu0 0.0
      %7699 = vmatpush2.msra.mxu0 0.0
      %7700 = vmatprep.subr.mxu0 0.0
      %7701 = vmatpush2.msra.mxu0 0.0
      %7702 = vmatprep.subr.mxu0 0.0
      %7703 = vmatpush2.msra.mxu0 0.0
      %7704 = vmatprep.subr.mxu0 0.0
      %7705 = vmatpush2.msra.mxu0 0.0
      %7706 = vmatprep.subr.mxu0 0.0
      %7707 = vmatpush2.msra.mxu0 0.0
      %7708 = vmatprep.subr.mxu0 0.0
      %7709 = vmatpush2.msra.mxu0 0.0
      %7710 = vmatprep.subr.mxu0 0.0
      %7711 = vmatpush2.msra.mxu0 0.0
      %7712 = vmatprep.subr.mxu0 0.0
      %7713 = vmatpush2.msra.mxu0 0.0
      %7714 = vmatprep.mubr.f32.mxu0 0.0
      %7715 = vmatmul.mubr.f32.gmra.mxu0 %v7639
      %v7716 = vpop.f32.mrf.mxu0
      %v7717 = vadd.f32 0.0, %v7716
      %v7718 = vpop.f32.mrf.mxu0
      %7719 = vmatprep.mubr.f32.mxu0 0.0
      %7720 = vmatmul.mubr.f32.gmra.mxu0 %v7642
      %v7721 = vpop.f32.mrf.mxu0
      %v7722 = vadd.f32 0.0, %v7721
      %v7723 = vpop.f32.mrf.mxu0
      %7724 = vmatprep.mubr.f32.mxu0 0.0
      %7725 = vmatmul.mubr.f32.gmra.mxu0 %v7645
      %v7726 = vpop.f32.mrf.mxu0
      %v7727 = vadd.f32 0.0, %v7726
      %v7728 = vpop.f32.mrf.mxu0
      %7729 = vmatprep.mubr.f32.mxu0 0.0
      %7730 = vmatmul.mubr.f32.gmra.mxu0 %v7648
      %v7731 = vpop.f32.mrf.mxu0
      %v7732 = vadd.f32 0.0, %v7731
      %v7733 = vpop.f32.mrf.mxu0
      %7734 = vdwg.mxu0
      %v7735 = vadd.f32 %v7545, %v7717
      %v7736 = vadd.f32 %v7546, %v7722
      %v7737 = vadd.f32 %v7547, %v7727
      %v7738 = vadd.f32 %v7548, %v7732
      %s7739 = scalar_lea.vmem %s3, 320
      %v7740 = vld [vmem:[%s7739] sm:$0xff]
      %v7741 = vld [vmem:[%s7739 + $0x8] sm:$0xff]
      %v7742 = vld [vmem:[%s7739 + $0x10] sm:$0xff]
      %v7743 = vld [vmem:[%s7739 + $0x18] sm:$0xff]
      %v7744 = vld [vmem:[%s7739 + $0x20] sm:$0xf]
      %v7746 = vsel %vm6232, %v7744, 0
      %7748 = vmatprep.subr.mxu0 0.0
      %7749 = vmatpush1.msra.mxu0 0.0
      %7750 = vmatprep.subr.mxu0 0.0
      %7751 = vmatpush1.msra.mxu0 0.0
      %7752 = vmatprep.subr.mxu0 0.0
      %7753 = vmatpush1.msra.mxu0 0.0
      %7754 = vmatprep.subr.mxu0 0.0
      %7755 = vmatpush1.msra.mxu0 0.0
      %7756 = vmatprep.subr.mxu0 0.0
      %7757 = vmatpush1.msra.mxu0 0.0
      %7758 = vmatprep.subr.mxu0 0.0
      %7759 = vmatpush1.msra.mxu0 0.0
      %7760 = vmatprep.subr.mxu0 0.0
      %7761 = vmatpush1.msra.mxu0 0.0
      %7762 = vmatprep.subr.mxu0 0.0
      %7763 = vmatpush1.msra.mxu0 0.0
      %7764 = vmatprep.subr.mxu0 0.0
      %7765 = vmatpush1.msra.mxu0 0.0
      %7766 = vmatprep.subr.mxu0 0.0
      %7767 = vmatpush1.msra.mxu0 0.0
      %7768 = vmatprep.subr.mxu0 0.0
      %7769 = vmatpush1.msra.mxu0 0.0
      %7770 = vmatprep.subr.mxu0 0.0
      %7771 = vmatpush1.msra.mxu0 %v7746
      %7772 = vmatprep.subr.mxu0 0.0
      %7773 = vmatpush1.msra.mxu0 %v7743
      %7774 = vmatprep.subr.mxu0 0.0
      %7775 = vmatpush1.msra.mxu0 %v7742
      %7776 = vmatprep.subr.mxu0 0.0
      %7777 = vmatpush1.msra.mxu0 %v7741
      %7778 = vmatprep.subr.mxu0 0.0
      %7779 = vmatpush1.msra.mxu0 %v7740
      %7780 = vmatprep.subr.mxu0 0.0
      %7781 = vmatpush2.msra.mxu0 0.0
      %7782 = vmatprep.subr.mxu0 0.0
      %7783 = vmatpush2.msra.mxu0 0.0
      %7784 = vmatprep.subr.mxu0 0.0
      %7785 = vmatpush2.msra.mxu0 0.0
      %7786 = vmatprep.subr.mxu0 0.0
      %7787 = vmatpush2.msra.mxu0 0.0
      %7788 = vmatprep.subr.mxu0 0.0
      %7789 = vmatpush2.msra.mxu0 0.0
      %7790 = vmatprep.subr.mxu0 0.0
      %7791 = vmatpush2.msra.mxu0 0.0
      %7792 = vmatprep.subr.mxu0 0.0
      %7793 = vmatpush2.msra.mxu0 0.0
      %7794 = vmatprep.subr.mxu0 0.0
      %7795 = vmatpush2.msra.mxu0 0.0
      %7796 = vmatprep.subr.mxu0 0.0
      %7797 = vmatpush2.msra.mxu0 0.0
      %7798 = vmatprep.subr.mxu0 0.0
      %7799 = vmatpush2.msra.mxu0 0.0
      %7800 = vmatprep.subr.mxu0 0.0
      %7801 = vmatpush2.msra.mxu0 0.0
      %7802 = vmatprep.subr.mxu0 0.0
      %7803 = vmatpush2.msra.mxu0 0.0
      %7804 = vmatprep.subr.mxu0 0.0
      %7805 = vmatpush2.msra.mxu0 0.0
      %7806 = vmatprep.subr.mxu0 0.0
      %7807 = vmatpush2.msra.mxu0 0.0
      %7808 = vmatprep.subr.mxu0 0.0
      %7809 = vmatpush2.msra.mxu0 0.0
      %7810 = vmatprep.subr.mxu0 0.0
      %7811 = vmatpush2.msra.mxu0 0.0
      %7812 = vmatprep.mubr.f32.mxu0 0.0
      %7813 = vmatmul.mubr.f32.gmra.mxu0 %v6227
      %v7814 = vpop.f32.mrf.mxu0
      %v7815 = vadd.f32 0.0, %v7814
      %v7816 = vpop.f32.mrf.mxu0
      %7817 = vmatprep.mubr.f32.mxu0 0.0
      %7818 = vmatmul.mubr.f32.gmra.mxu0 %v6230
      %v7819 = vpop.f32.mrf.mxu0
      %v7820 = vadd.f32 0.0, %v7819
      %v7821 = vpop.f32.mrf.mxu0
      %7822 = vdwg.mxu0
      %s7823 = scalar_lea.vmem %s7, 256
      %v7824 = vld [vmem:[%s7823] sm:$0xff]
      %v7825 = vld [vmem:[%s7823 + $0x8] sm:$0xff]
      %v7826 = vld [vmem:[%s7823 + $0x10] sm:$0xff]
      %v7827 = vld [vmem:[%s7823 + $0x18] sm:$0xff]
      %v7829 = vsel %vm6404, %v7824, 0
      %v7832 = vsel %vm6404, %v7825, 0
      %v7835 = vsel %vm6404, %v7826, 0
      %v7838 = vsel %vm6404, %v7827, 0
      %7840 = vmatprep.subr.mxu0 0.0
      %7841 = vmatpush1.msra.mxu0 0.0
      %7842 = vmatprep.subr.mxu0 0.0
      %7843 = vmatpush1.msra.mxu0 0.0
      %7844 = vmatprep.subr.mxu0 0.0
      %7845 = vmatpush1.msra.mxu0 0.0
      %7846 = vmatprep.subr.mxu0 0.0
      %7847 = vmatpush1.msra.mxu0 0.0
      %7848 = vmatprep.subr.mxu0 0.0
      %7849 = vmatpush1.msra.mxu0 0.0
      %7850 = vmatprep.subr.mxu0 0.0
      %7851 = vmatpush1.msra.mxu0 0.0
      %7852 = vmatprep.subr.mxu0 0.0
      %7853 = vmatpush1.msra.mxu0 0.0
      %7854 = vmatprep.subr.mxu0 0.0
      %7855 = vmatpush1.msra.mxu0 0.0
      %7856 = vmatprep.subr.mxu0 0.0
      %7857 = vmatpush1.msra.mxu0 0.0
      %7858 = vmatprep.subr.mxu0 0.0
      %7859 = vmatpush1.msra.mxu0 0.0
      %7860 = vmatprep.subr.mxu0 0.0
      %7861 = vmatpush1.msra.mxu0 0.0
      %7862 = vmatprep.subr.mxu0 0.0
      %7863 = vmatpush1.msra.mxu0 0.0
      %7864 = vmatprep.subr.mxu0 0.0
      %7865 = vmatpush1.msra.mxu0 0.0
      %7866 = vmatprep.subr.mxu0 0.0
      %7867 = vmatpush1.msra.mxu0 0.0
      %7868 = vmatprep.subr.mxu0 0.0
      %7869 = vmatpush1.msra.mxu0 %v7820
      %7870 = vmatprep.subr.mxu0 0.0
      %7871 = vmatpush1.msra.mxu0 %v7815
      %7872 = vmatprep.subr.mxu0 0.0
      %7873 = vmatpush2.msra.mxu0 0.0
      %7874 = vmatprep.subr.mxu0 0.0
      %7875 = vmatpush2.msra.mxu0 0.0
      %7876 = vmatprep.subr.mxu0 0.0
      %7877 = vmatpush2.msra.mxu0 0.0
      %7878 = vmatprep.subr.mxu0 0.0
      %7879 = vmatpush2.msra.mxu0 0.0
      %7880 = vmatprep.subr.mxu0 0.0
      %7881 = vmatpush2.msra.mxu0 0.0
      %7882 = vmatprep.subr.mxu0 0.0
      %7883 = vmatpush2.msra.mxu0 0.0
      %7884 = vmatprep.subr.mxu0 0.0
      %7885 = vmatpush2.msra.mxu0 0.0
      %7886 = vmatprep.subr.mxu0 0.0
      %7887 = vmatpush2.msra.mxu0 0.0
      %7888 = vmatprep.subr.mxu0 0.0
      %7889 = vmatpush2.msra.mxu0 0.0
      %7890 = vmatprep.subr.mxu0 0.0
      %7891 = vmatpush2.msra.mxu0 0.0
      %7892 = vmatprep.subr.mxu0 0.0
      %7893 = vmatpush2.msra.mxu0 0.0
      %7894 = vmatprep.subr.mxu0 0.0
      %7895 = vmatpush2.msra.mxu0 0.0
      %7896 = vmatprep.subr.mxu0 0.0
      %7897 = vmatpush2.msra.mxu0 0.0
      %7898 = vmatprep.subr.mxu0 0.0
      %7899 = vmatpush2.msra.mxu0 0.0
      %7900 = vmatprep.subr.mxu0 0.0
      %7901 = vmatpush2.msra.mxu0 0.0
      %7902 = vmatprep.subr.mxu0 0.0
      %7903 = vmatpush2.msra.mxu0 0.0
      %7904 = vmatprep.mubr.f32.mxu0 0.0
      %7905 = vmatmul.mubr.f32.gmra.mxu0 %v7829
      %v7906 = vpop.f32.mrf.mxu0
      %v7907 = vadd.f32 0.0, %v7906
      %v7908 = vpop.f32.mrf.mxu0
      %7909 = vmatprep.mubr.f32.mxu0 0.0
      %7910 = vmatmul.mubr.f32.gmra.mxu0 %v7832
      %v7911 = vpop.f32.mrf.mxu0
      %v7912 = vadd.f32 0.0, %v7911
      %v7913 = vpop.f32.mrf.mxu0
      %7914 = vmatprep.mubr.f32.mxu0 0.0
      %7915 = vmatmul.mubr.f32.gmra.mxu0 %v7835
      %v7916 = vpop.f32.mrf.mxu0
      %v7917 = vadd.f32 0.0, %v7916
      %v7918 = vpop.f32.mrf.mxu0
      %7919 = vmatprep.mubr.f32.mxu0 0.0
      %7920 = vmatmul.mubr.f32.gmra.mxu0 %v7838
      %v7921 = vpop.f32.mrf.mxu0
      %v7922 = vadd.f32 0.0, %v7921
      %v7923 = vpop.f32.mrf.mxu0
      %7924 = vdwg.mxu0
      %v7925 = vadd.f32 %v7735, %v7907
      %v7926 = vadd.f32 %v7736, %v7912
      %v7927 = vadd.f32 %v7737, %v7917
      %v7928 = vadd.f32 %v7738, %v7922
      %s7929 = scalar_lea.vmem %s3, 360
      %v7930 = vld [vmem:[%s7929] sm:$0xff]
      %v7931 = vld [vmem:[%s7929 + $0x8] sm:$0xff]
      %v7932 = vld [vmem:[%s7929 + $0x10] sm:$0xff]
      %v7933 = vld [vmem:[%s7929 + $0x18] sm:$0xff]
      %v7934 = vld [vmem:[%s7929 + $0x20] sm:$0xf]
      %v7936 = vsel %vm6232, %v7934, 0
      %7938 = vmatprep.subr.mxu0 0.0
      %7939 = vmatpush1.msra.mxu0 0.0
      %7940 = vmatprep.subr.mxu0 0.0
      %7941 = vmatpush1.msra.mxu0 0.0
      %7942 = vmatprep.subr.mxu0 0.0
      %7943 = vmatpush1.msra.mxu0 0.0
      %7944 = vmatprep.subr.mxu0 0.0
      %7945 = vmatpush1.msra.mxu0 0.0
      %7946 = vmatprep.subr.mxu0 0.0
      %7947 = vmatpush1.msra.mxu0 0.0
      %7948 = vmatprep.subr.mxu0 0.0
      %7949 = vmatpush1.msra.mxu0 0.0
      %7950 = vmatprep.subr.mxu0 0.0
      %7951 = vmatpush1.msra.mxu0 0.0
      %7952 = vmatprep.subr.mxu0 0.0
      %7953 = vmatpush1.msra.mxu0 0.0
      %7954 = vmatprep.subr.mxu0 0.0
      %7955 = vmatpush1.msra.mxu0 0.0
      %7956 = vmatprep.subr.mxu0 0.0
      %7957 = vmatpush1.msra.mxu0 0.0
      %7958 = vmatprep.subr.mxu0 0.0
      %7959 = vmatpush1.msra.mxu0 0.0
      %7960 = vmatprep.subr.mxu0 0.0
      %7961 = vmatpush1.msra.mxu0 %v7936
      %7962 = vmatprep.subr.mxu0 0.0
      %7963 = vmatpush1.msra.mxu0 %v7933
      %7964 = vmatprep.subr.mxu0 0.0
      %7965 = vmatpush1.msra.mxu0 %v7932
      %7966 = vmatprep.subr.mxu0 0.0
      %7967 = vmatpush1.msra.mxu0 %v7931
      %7968 = vmatprep.subr.mxu0 0.0
      %7969 = vmatpush1.msra.mxu0 %v7930
      %7970 = vmatprep.subr.mxu0 0.0
      %7971 = vmatpush2.msra.mxu0 0.0
      %7972 = vmatprep.subr.mxu0 0.0
      %7973 = vmatpush2.msra.mxu0 0.0
      %7974 = vmatprep.subr.mxu0 0.0
      %7975 = vmatpush2.msra.mxu0 0.0
      %7976 = vmatprep.subr.mxu0 0.0
      %7977 = vmatpush2.msra.mxu0 0.0
      %7978 = vmatprep.subr.mxu0 0.0
      %7979 = vmatpush2.msra.mxu0 0.0
      %7980 = vmatprep.subr.mxu0 0.0
      %7981 = vmatpush2.msra.mxu0 0.0
      %7982 = vmatprep.subr.mxu0 0.0
      %7983 = vmatpush2.msra.mxu0 0.0
      %7984 = vmatprep.subr.mxu0 0.0
      %7985 = vmatpush2.msra.mxu0 0.0
      %7986 = vmatprep.subr.mxu0 0.0
      %7987 = vmatpush2.msra.mxu0 0.0
      %7988 = vmatprep.subr.mxu0 0.0
      %7989 = vmatpush2.msra.mxu0 0.0
      %7990 = vmatprep.subr.mxu0 0.0
      %7991 = vmatpush2.msra.mxu0 0.0
      %7992 = vmatprep.subr.mxu0 0.0
      %7993 = vmatpush2.msra.mxu0 0.0
      %7994 = vmatprep.subr.mxu0 0.0
      %7995 = vmatpush2.msra.mxu0 0.0
      %7996 = vmatprep.subr.mxu0 0.0
      %7997 = vmatpush2.msra.mxu0 0.0
      %7998 = vmatprep.subr.mxu0 0.0
      %7999 = vmatpush2.msra.mxu0 0.0
      %8000 = vmatprep.subr.mxu0 0.0
      %8001 = vmatpush2.msra.mxu0 0.0
      %8002 = vmatprep.mubr.f32.mxu0 0.0
      %8003 = vmatmul.mubr.f32.gmra.mxu0 %v6227
      %v8004 = vpop.f32.mrf.mxu0
      %v8005 = vadd.f32 0.0, %v8004
      %v8006 = vpop.f32.mrf.mxu0
      %8007 = vmatprep.mubr.f32.mxu0 0.0
      %8008 = vmatmul.mubr.f32.gmra.mxu0 %v6230
      %v8009 = vpop.f32.mrf.mxu0
      %v8010 = vadd.f32 0.0, %v8009
      %v8011 = vpop.f32.mrf.mxu0
      %8012 = vdwg.mxu0
      %s8013 = scalar_lea.vmem %s7, 288
      %v8014 = vld [vmem:[%s8013] sm:$0xff]
      %v8015 = vld [vmem:[%s8013 + $0x8] sm:$0xff]
      %v8016 = vld [vmem:[%s8013 + $0x10] sm:$0xff]
      %v8017 = vld [vmem:[%s8013 + $0x18] sm:$0xff]
      %v8019 = vsel %vm6404, %v8014, 0
      %v8022 = vsel %vm6404, %v8015, 0
      %v8025 = vsel %vm6404, %v8016, 0
      %v8028 = vsel %vm6404, %v8017, 0
      %8030 = vmatprep.subr.mxu0 0.0
      %8031 = vmatpush1.msra.mxu0 0.0
      %8032 = vmatprep.subr.mxu0 0.0
      %8033 = vmatpush1.msra.mxu0 0.0
      %8034 = vmatprep.subr.mxu0 0.0
      %8035 = vmatpush1.msra.mxu0 0.0
      %8036 = vmatprep.subr.mxu0 0.0
      %8037 = vmatpush1.msra.mxu0 0.0
      %8038 = vmatprep.subr.mxu0 0.0
      %8039 = vmatpush1.msra.mxu0 0.0
      %8040 = vmatprep.subr.mxu0 0.0
      %8041 = vmatpush1.msra.mxu0 0.0
      %8042 = vmatprep.subr.mxu0 0.0
      %8043 = vmatpush1.msra.mxu0 0.0
      %8044 = vmatprep.subr.mxu0 0.0
      %8045 = vmatpush1.msra.mxu0 0.0
      %8046 = vmatprep.subr.mxu0 0.0
      %8047 = vmatpush1.msra.mxu0 0.0
      %8048 = vmatprep.subr.mxu0 0.0
      %8049 = vmatpush1.msra.mxu0 0.0
      %8050 = vmatprep.subr.mxu0 0.0
      %8051 = vmatpush1.msra.mxu0 0.0
      %8052 = vmatprep.subr.mxu0 0.0
      %8053 = vmatpush1.msra.mxu0 0.0
      %8054 = vmatprep.subr.mxu0 0.0
      %8055 = vmatpush1.msra.mxu0 0.0
      %8056 = vmatprep.subr.mxu0 0.0
      %8057 = vmatpush1.msra.mxu0 0.0
      %8058 = vmatprep.subr.mxu0 0.0
      %8059 = vmatpush1.msra.mxu0 %v8010
      %8060 = vmatprep.subr.mxu0 0.0
      %8061 = vmatpush1.msra.mxu0 %v8005
      %8062 = vmatprep.subr.mxu0 0.0
      %8063 = vmatpush2.msra.mxu0 0.0
      %8064 = vmatprep.subr.mxu0 0.0
      %8065 = vmatpush2.msra.mxu0 0.0
      %8066 = vmatprep.subr.mxu0 0.0
      %8067 = vmatpush2.msra.mxu0 0.0
      %8068 = vmatprep.subr.mxu0 0.0
      %8069 = vmatpush2.msra.mxu0 0.0
      %8070 = vmatprep.subr.mxu0 0.0
      %8071 = vmatpush2.msra.mxu0 0.0
      %8072 = vmatprep.subr.mxu0 0.0
      %8073 = vmatpush2.msra.mxu0 0.0
      %8074 = vmatprep.subr.mxu0 0.0
      %8075 = vmatpush2.msra.mxu0 0.0
      %8076 = vmatprep.subr.mxu0 0.0
      %8077 = vmatpush2.msra.mxu0 0.0
      %8078 = vmatprep.subr.mxu0 0.0
      %8079 = vmatpush2.msra.mxu0 0.0
      %8080 = vmatprep.subr.mxu0 0.0
      %8081 = vmatpush2.msra.mxu0 0.0
      %8082 = vmatprep.subr.mxu0 0.0
      %8083 = vmatpush2.msra.mxu0 0.0
      %8084 = vmatprep.subr.mxu0 0.0
      %8085 = vmatpush2.msra.mxu0 0.0
      %8086 = vmatprep.subr.mxu0 0.0
      %8087 = vmatpush2.msra.mxu0 0.0
      %8088 = vmatprep.subr.mxu0 0.0
      %8089 = vmatpush2.msra.mxu0 0.0
      %8090 = vmatprep.subr.mxu0 0.0
      %8091 = vmatpush2.msra.mxu0 0.0
      %8092 = vmatprep.subr.mxu0 0.0
      %8093 = vmatpush2.msra.mxu0 0.0
      %8094 = vmatprep.mubr.f32.mxu0 0.0
      %8095 = vmatmul.mubr.f32.gmra.mxu0 %v8019
      %v8096 = vpop.f32.mrf.mxu0
      %v8097 = vadd.f32 0.0, %v8096
      %v8098 = vpop.f32.mrf.mxu0
      %8099 = vmatprep.mubr.f32.mxu0 0.0
      %8100 = vmatmul.mubr.f32.gmra.mxu0 %v8022
      %v8101 = vpop.f32.mrf.mxu0
      %v8102 = vadd.f32 0.0, %v8101
      %v8103 = vpop.f32.mrf.mxu0
      %8104 = vmatprep.mubr.f32.mxu0 0.0
      %8105 = vmatmul.mubr.f32.gmra.mxu0 %v8025
      %v8106 = vpop.f32.mrf.mxu0
      %v8107 = vadd.f32 0.0, %v8106
      %v8108 = vpop.f32.mrf.mxu0
      %8109 = vmatprep.mubr.f32.mxu0 0.0
      %8110 = vmatmul.mubr.f32.gmra.mxu0 %v8028
      %v8111 = vpop.f32.mrf.mxu0
      %v8112 = vadd.f32 0.0, %v8111
      %v8113 = vpop.f32.mrf.mxu0
      %8114 = vdwg.mxu0
      %v8115 = vadd.f32 %v7925, %v8097
      %v8116 = vadd.f32 %v7926, %v8102
      %v8117 = vadd.f32 %v7927, %v8107
      %v8118 = vadd.f32 %v7928, %v8112
      %s8119 = scalar_lea.vmem %s3, 400
      %v8120 = vld [vmem:[%s8119] sm:$0xff]
      %v8121 = vld [vmem:[%s8119 + $0x8] sm:$0xff]
      %v8122 = vld [vmem:[%s8119 + $0x10] sm:$0xff]
      %v8123 = vld [vmem:[%s8119 + $0x18] sm:$0xff]
      %v8124 = vld [vmem:[%s8119 + $0x20] sm:$0xf]
      %v8126 = vsel %vm6232, %v8124, 0
      %8128 = vmatprep.subr.mxu0 0.0
      %8129 = vmatpush1.msra.mxu0 0.0
      %8130 = vmatprep.subr.mxu0 0.0
      %8131 = vmatpush1.msra.mxu0 0.0
      %8132 = vmatprep.subr.mxu0 0.0
      %8133 = vmatpush1.msra.mxu0 0.0
      %8134 = vmatprep.subr.mxu0 0.0
      %8135 = vmatpush1.msra.mxu0 0.0
      %8136 = vmatprep.subr.mxu0 0.0
      %8137 = vmatpush1.msra.mxu0 0.0
      %8138 = vmatprep.subr.mxu0 0.0
      %8139 = vmatpush1.msra.mxu0 0.0
      %8140 = vmatprep.subr.mxu0 0.0
      %8141 = vmatpush1.msra.mxu0 0.0
      %8142 = vmatprep.subr.mxu0 0.0
      %8143 = vmatpush1.msra.mxu0 0.0
      %8144 = vmatprep.subr.mxu0 0.0
      %8145 = vmatpush1.msra.mxu0 0.0
      %8146 = vmatprep.subr.mxu0 0.0
      %8147 = vmatpush1.msra.mxu0 0.0
      %8148 = vmatprep.subr.mxu0 0.0
      %8149 = vmatpush1.msra.mxu0 0.0
      %8150 = vmatprep.subr.mxu0 0.0
      %8151 = vmatpush1.msra.mxu0 %v8126
      %8152 = vmatprep.subr.mxu0 0.0
      %8153 = vmatpush1.msra.mxu0 %v8123
      %8154 = vmatprep.subr.mxu0 0.0
      %8155 = vmatpush1.msra.mxu0 %v8122
      %8156 = vmatprep.subr.mxu0 0.0
      %8157 = vmatpush1.msra.mxu0 %v8121
      %8158 = vmatprep.subr.mxu0 0.0
      %8159 = vmatpush1.msra.mxu0 %v8120
      %8160 = vmatprep.subr.mxu0 0.0
      %8161 = vmatpush2.msra.mxu0 0.0
      %8162 = vmatprep.subr.mxu0 0.0
      %8163 = vmatpush2.msra.mxu0 0.0
      %8164 = vmatprep.subr.mxu0 0.0
      %8165 = vmatpush2.msra.mxu0 0.0
      %8166 = vmatprep.subr.mxu0 0.0
      %8167 = vmatpush2.msra.mxu0 0.0
      %8168 = vmatprep.subr.mxu0 0.0
      %8169 = vmatpush2.msra.mxu0 0.0
      %8170 = vmatprep.subr.mxu0 0.0
      %8171 = vmatpush2.msra.mxu0 0.0
      %8172 = vmatprep.subr.mxu0 0.0
      %8173 = vmatpush2.msra.mxu0 0.0
      %8174 = vmatprep.subr.mxu0 0.0
      %8175 = vmatpush2.msra.mxu0 0.0
      %8176 = vmatprep.subr.mxu0 0.0
      %8177 = vmatpush2.msra.mxu0 0.0
      %8178 = vmatprep.subr.mxu0 0.0
      %8179 = vmatpush2.msra.mxu0 0.0
      %8180 = vmatprep.subr.mxu0 0.0
      %8181 = vmatpush2.msra.mxu0 0.0
      %8182 = vmatprep.subr.mxu0 0.0
      %8183 = vmatpush2.msra.mxu0 0.0
      %8184 = vmatprep.subr.mxu0 0.0
      %8185 = vmatpush2.msra.mxu0 0.0
      %8186 = vmatprep.subr.mxu0 0.0
      %8187 = vmatpush2.msra.mxu0 0.0
      %8188 = vmatprep.subr.mxu0 0.0
      %8189 = vmatpush2.msra.mxu0 0.0
      %8190 = vmatprep.subr.mxu0 0.0
      %8191 = vmatpush2.msra.mxu0 0.0
      %8192 = vmatprep.mubr.f32.mxu0 0.0
      %8193 = vmatmul.mubr.f32.gmra.mxu0 %v6227
      %v8194 = vpop.f32.mrf.mxu0
      %v8195 = vadd.f32 0.0, %v8194
      %v8196 = vpop.f32.mrf.mxu0
      %8197 = vmatprep.mubr.f32.mxu0 0.0
      %8198 = vmatmul.mubr.f32.gmra.mxu0 %v6230
      %v8199 = vpop.f32.mrf.mxu0
      %v8200 = vadd.f32 0.0, %v8199
      %v8201 = vpop.f32.mrf.mxu0
      %8202 = vdwg.mxu0
      %s8203 = scalar_lea.vmem %s7, 320
      %v8204 = vld [vmem:[%s8203] sm:$0xff]
      %v8205 = vld [vmem:[%s8203 + $0x8] sm:$0xff]
      %v8206 = vld [vmem:[%s8203 + $0x10] sm:$0xff]
      %v8207 = vld [vmem:[%s8203 + $0x18] sm:$0xff]
      %v8209 = vsel %vm6404, %v8204, 0
      %v8212 = vsel %vm6404, %v8205, 0
      %v8215 = vsel %vm6404, %v8206, 0
      %v8218 = vsel %vm6404, %v8207, 0
      %8220 = vmatprep.subr.mxu0 0.0
      %8221 = vmatpush1.msra.mxu0 0.0
      %8222 = vmatprep.subr.mxu0 0.0
      %8223 = vmatpush1.msra.mxu0 0.0
      %8224 = vmatprep.subr.mxu0 0.0
      %8225 = vmatpush1.msra.mxu0 0.0
      %8226 = vmatprep.subr.mxu0 0.0
      %8227 = vmatpush1.msra.mxu0 0.0
      %8228 = vmatprep.subr.mxu0 0.0
      %8229 = vmatpush1.msra.mxu0 0.0
      %8230 = vmatprep.subr.mxu0 0.0
      %8231 = vmatpush1.msra.mxu0 0.0
      %8232 = vmatprep.subr.mxu0 0.0
      %8233 = vmatpush1.msra.mxu0 0.0
      %8234 = vmatprep.subr.mxu0 0.0
      %8235 = vmatpush1.msra.mxu0 0.0
      %8236 = vmatprep.subr.mxu0 0.0
      %8237 = vmatpush1.msra.mxu0 0.0
      %8238 = vmatprep.subr.mxu0 0.0
      %8239 = vmatpush1.msra.mxu0 0.0
      %8240 = vmatprep.subr.mxu0 0.0
      %8241 = vmatpush1.msra.mxu0 0.0
      %8242 = vmatprep.subr.mxu0 0.0
      %8243 = vmatpush1.msra.mxu0 0.0
      %8244 = vmatprep.subr.mxu0 0.0
      %8245 = vmatpush1.msra.mxu0 0.0
      %8246 = vmatprep.subr.mxu0 0.0
      %8247 = vmatpush1.msra.mxu0 0.0
      %8248 = vmatprep.subr.mxu0 0.0
      %8249 = vmatpush1.msra.mxu0 %v8200
      %8250 = vmatprep.subr.mxu0 0.0
      %8251 = vmatpush1.msra.mxu0 %v8195
      %8252 = vmatprep.subr.mxu0 0.0
      %8253 = vmatpush2.msra.mxu0 0.0
      %8254 = vmatprep.subr.mxu0 0.0
      %8255 = vmatpush2.msra.mxu0 0.0
      %8256 = vmatprep.subr.mxu0 0.0
      %8257 = vmatpush2.msra.mxu0 0.0
      %8258 = vmatprep.subr.mxu0 0.0
      %8259 = vmatpush2.msra.mxu0 0.0
      %8260 = vmatprep.subr.mxu0 0.0
      %8261 = vmatpush2.msra.mxu0 0.0
      %8262 = vmatprep.subr.mxu0 0.0
      %8263 = vmatpush2.msra.mxu0 0.0
      %8264 = vmatprep.subr.mxu0 0.0
      %8265 = vmatpush2.msra.mxu0 0.0
      %8266 = vmatprep.subr.mxu0 0.0
      %8267 = vmatpush2.msra.mxu0 0.0
      %8268 = vmatprep.subr.mxu0 0.0
      %8269 = vmatpush2.msra.mxu0 0.0
      %8270 = vmatprep.subr.mxu0 0.0
      %8271 = vmatpush2.msra.mxu0 0.0
      %8272 = vmatprep.subr.mxu0 0.0
      %8273 = vmatpush2.msra.mxu0 0.0
      %8274 = vmatprep.subr.mxu0 0.0
      %8275 = vmatpush2.msra.mxu0 0.0
      %8276 = vmatprep.subr.mxu0 0.0
      %8277 = vmatpush2.msra.mxu0 0.0
      %8278 = vmatprep.subr.mxu0 0.0
      %8279 = vmatpush2.msra.mxu0 0.0
      %8280 = vmatprep.subr.mxu0 0.0
      %8281 = vmatpush2.msra.mxu0 0.0
      %8282 = vmatprep.subr.mxu0 0.0
      %8283 = vmatpush2.msra.mxu0 0.0
      %8284 = vmatprep.mubr.f32.mxu0 0.0
      %8285 = vmatmul.mubr.f32.gmra.mxu0 %v8209
      %v8286 = vpop.f32.mrf.mxu0
      %v8287 = vadd.f32 0.0, %v8286
      %v8288 = vpop.f32.mrf.mxu0
      %8289 = vmatprep.mubr.f32.mxu0 0.0
      %8290 = vmatmul.mubr.f32.gmra.mxu0 %v8212
      %v8291 = vpop.f32.mrf.mxu0
      %v8292 = vadd.f32 0.0, %v8291
      %v8293 = vpop.f32.mrf.mxu0
      %8294 = vmatprep.mubr.f32.mxu0 0.0
      %8295 = vmatmul.mubr.f32.gmra.mxu0 %v8215
      %v8296 = vpop.f32.mrf.mxu0
      %v8297 = vadd.f32 0.0, %v8296
      %v8298 = vpop.f32.mrf.mxu0
      %8299 = vmatprep.mubr.f32.mxu0 0.0
      %8300 = vmatmul.mubr.f32.gmra.mxu0 %v8218
      %v8301 = vpop.f32.mrf.mxu0
      %v8302 = vadd.f32 0.0, %v8301
      %v8303 = vpop.f32.mrf.mxu0
      %8304 = vdwg.mxu0
      %v8305 = vadd.f32 %v8115, %v8287
      %v8306 = vadd.f32 %v8116, %v8292
      %v8307 = vadd.f32 %v8117, %v8297
      %v8308 = vadd.f32 %v8118, %v8302
      %s8309 = scalar_lea.vmem %s3, 440
      %v8310 = vld [vmem:[%s8309] sm:$0xff]
      %v8311 = vld [vmem:[%s8309 + $0x8] sm:$0xff]
      %v8312 = vld [vmem:[%s8309 + $0x10] sm:$0xff]
      %v8313 = vld [vmem:[%s8309 + $0x18] sm:$0xff]
      %v8314 = vld [vmem:[%s8309 + $0x20] sm:$0xf]
      %v8316 = vsel %vm6232, %v8314, 0
      %8318 = vmatprep.subr.mxu0 0.0
      %8319 = vmatpush1.msra.mxu0 0.0
      %8320 = vmatprep.subr.mxu0 0.0
      %8321 = vmatpush1.msra.mxu0 0.0
      %8322 = vmatprep.subr.mxu0 0.0
      %8323 = vmatpush1.msra.mxu0 0.0
      %8324 = vmatprep.subr.mxu0 0.0
      %8325 = vmatpush1.msra.mxu0 0.0
      %8326 = vmatprep.subr.mxu0 0.0
      %8327 = vmatpush1.msra.mxu0 0.0
      %8328 = vmatprep.subr.mxu0 0.0
      %8329 = vmatpush1.msra.mxu0 0.0
      %8330 = vmatprep.subr.mxu0 0.0
      %8331 = vmatpush1.msra.mxu0 0.0
      %8332 = vmatprep.subr.mxu0 0.0
      %8333 = vmatpush1.msra.mxu0 0.0
      %8334 = vmatprep.subr.mxu0 0.0
      %8335 = vmatpush1.msra.mxu0 0.0
      %8336 = vmatprep.subr.mxu0 0.0
      %8337 = vmatpush1.msra.mxu0 0.0
      %8338 = vmatprep.subr.mxu0 0.0
      %8339 = vmatpush1.msra.mxu0 0.0
      %8340 = vmatprep.subr.mxu0 0.0
      %8341 = vmatpush1.msra.mxu0 %v8316
      %8342 = vmatprep.subr.mxu0 0.0
      %8343 = vmatpush1.msra.mxu0 %v8313
      %8344 = vmatprep.subr.mxu0 0.0
      %8345 = vmatpush1.msra.mxu0 %v8312
      %8346 = vmatprep.subr.mxu0 0.0
      %8347 = vmatpush1.msra.mxu0 %v8311
      %8348 = vmatprep.subr.mxu0 0.0
      %8349 = vmatpush1.msra.mxu0 %v8310
      %8350 = vmatprep.subr.mxu0 0.0
      %8351 = vmatpush2.msra.mxu0 0.0
      %8352 = vmatprep.subr.mxu0 0.0
      %8353 = vmatpush2.msra.mxu0 0.0
      %8354 = vmatprep.subr.mxu0 0.0
      %8355 = vmatpush2.msra.mxu0 0.0
      %8356 = vmatprep.subr.mxu0 0.0
      %8357 = vmatpush2.msra.mxu0 0.0
      %8358 = vmatprep.subr.mxu0 0.0
      %8359 = vmatpush2.msra.mxu0 0.0
      %8360 = vmatprep.subr.mxu0 0.0
      %8361 = vmatpush2.msra.mxu0 0.0
      %8362 = vmatprep.subr.mxu0 0.0
      %8363 = vmatpush2.msra.mxu0 0.0
      %8364 = vmatprep.subr.mxu0 0.0
      %8365 = vmatpush2.msra.mxu0 0.0
      %8366 = vmatprep.subr.mxu0 0.0
      %8367 = vmatpush2.msra.mxu0 0.0
      %8368 = vmatprep.subr.mxu0 0.0
      %8369 = vmatpush2.msra.mxu0 0.0
      %8370 = vmatprep.subr.mxu0 0.0
      %8371 = vmatpush2.msra.mxu0 0.0
      %8372 = vmatprep.subr.mxu0 0.0
      %8373 = vmatpush2.msra.mxu0 0.0
      %8374 = vmatprep.subr.mxu0 0.0
      %8375 = vmatpush2.msra.mxu0 0.0
      %8376 = vmatprep.subr.mxu0 0.0
      %8377 = vmatpush2.msra.mxu0 0.0
      %8378 = vmatprep.subr.mxu0 0.0
      %8379 = vmatpush2.msra.mxu0 0.0
      %8380 = vmatprep.subr.mxu0 0.0
      %8381 = vmatpush2.msra.mxu0 0.0
      %8382 = vmatprep.mubr.f32.mxu0 0.0
      %8383 = vmatmul.mubr.f32.gmra.mxu0 %v6227
      %v8384 = vpop.f32.mrf.mxu0
      %v8385 = vadd.f32 0.0, %v8384
      %v8386 = vpop.f32.mrf.mxu0
      %8387 = vmatprep.mubr.f32.mxu0 0.0
      %8388 = vmatmul.mubr.f32.gmra.mxu0 %v6230
      %v8389 = vpop.f32.mrf.mxu0
      %v8390 = vadd.f32 0.0, %v8389
      %v8391 = vpop.f32.mrf.mxu0
      %8392 = vdwg.mxu0
      %s8393 = scalar_lea.vmem %s7, 352
      %v8394 = vld [vmem:[%s8393] sm:$0xff]
      %v8395 = vld [vmem:[%s8393 + $0x8] sm:$0xff]
      %v8396 = vld [vmem:[%s8393 + $0x10] sm:$0xff]
      %v8397 = vld [vmem:[%s8393 + $0x18] sm:$0xff]
      %v8399 = vsel %vm6404, %v8394, 0
      %v8402 = vsel %vm6404, %v8395, 0
      %v8405 = vsel %vm6404, %v8396, 0
      %v8408 = vsel %vm6404, %v8397, 0
      %8410 = vmatprep.subr.mxu0 0.0
      %8411 = vmatpush1.msra.mxu0 0.0
      %8412 = vmatprep.subr.mxu0 0.0
      %8413 = vmatpush1.msra.mxu0 0.0
      %8414 = vmatprep.subr.mxu0 0.0
      %8415 = vmatpush1.msra.mxu0 0.0
      %8416 = vmatprep.subr.mxu0 0.0
      %8417 = vmatpush1.msra.mxu0 0.0
      %8418 = vmatprep.subr.mxu0 0.0
      %8419 = vmatpush1.msra.mxu0 0.0
      %8420 = vmatprep.subr.mxu0 0.0
      %8421 = vmatpush1.msra.mxu0 0.0
      %8422 = vmatprep.subr.mxu0 0.0
      %8423 = vmatpush1.msra.mxu0 0.0
      %8424 = vmatprep.subr.mxu0 0.0
      %8425 = vmatpush1.msra.mxu0 0.0
      %8426 = vmatprep.subr.mxu0 0.0
      %8427 = vmatpush1.msra.mxu0 0.0
      %8428 = vmatprep.subr.mxu0 0.0
      %8429 = vmatpush1.msra.mxu0 0.0
      %8430 = vmatprep.subr.mxu0 0.0
      %8431 = vmatpush1.msra.mxu0 0.0
      %8432 = vmatprep.subr.mxu0 0.0
      %8433 = vmatpush1.msra.mxu0 0.0
      %8434 = vmatprep.subr.mxu0 0.0
      %8435 = vmatpush1.msra.mxu0 0.0
      %8436 = vmatprep.subr.mxu0 0.0
      %8437 = vmatpush1.msra.mxu0 0.0
      %8438 = vmatprep.subr.mxu0 0.0
      %8439 = vmatpush1.msra.mxu0 %v8390
      %8440 = vmatprep.subr.mxu0 0.0
      %8441 = vmatpush1.msra.mxu0 %v8385
      %8442 = vmatprep.subr.mxu0 0.0
      %8443 = vmatpush2.msra.mxu0 0.0
      %8444 = vmatprep.subr.mxu0 0.0
      %8445 = vmatpush2.msra.mxu0 0.0
      %8446 = vmatprep.subr.mxu0 0.0
      %8447 = vmatpush2.msra.mxu0 0.0
      %8448 = vmatprep.subr.mxu0 0.0
      %8449 = vmatpush2.msra.mxu0 0.0
      %8450 = vmatprep.subr.mxu0 0.0
      %8451 = vmatpush2.msra.mxu0 0.0
      %8452 = vmatprep.subr.mxu0 0.0
      %8453 = vmatpush2.msra.mxu0 0.0
      %8454 = vmatprep.subr.mxu0 0.0
      %8455 = vmatpush2.msra.mxu0 0.0
      %8456 = vmatprep.subr.mxu0 0.0
      %8457 = vmatpush2.msra.mxu0 0.0
      %8458 = vmatprep.subr.mxu0 0.0
      %8459 = vmatpush2.msra.mxu0 0.0
      %8460 = vmatprep.subr.mxu0 0.0
      %8461 = vmatpush2.msra.mxu0 0.0
      %8462 = vmatprep.subr.mxu0 0.0
      %8463 = vmatpush2.msra.mxu0 0.0
      %8464 = vmatprep.subr.mxu0 0.0
      %8465 = vmatpush2.msra.mxu0 0.0
      %8466 = vmatprep.subr.mxu0 0.0
      %8467 = vmatpush2.msra.mxu0 0.0
      %8468 = vmatprep.subr.mxu0 0.0
      %8469 = vmatpush2.msra.mxu0 0.0
      %8470 = vmatprep.subr.mxu0 0.0
      %8471 = vmatpush2.msra.mxu0 0.0
      %8472 = vmatprep.subr.mxu0 0.0
      %8473 = vmatpush2.msra.mxu0 0.0
      %8474 = vmatprep.mubr.f32.mxu0 0.0
      %8475 = vmatmul.mubr.f32.gmra.mxu0 %v8399
      %v8476 = vpop.f32.mrf.mxu0
      %v8477 = vadd.f32 0.0, %v8476
      %v8478 = vpop.f32.mrf.mxu0
      %8479 = vmatprep.mubr.f32.mxu0 0.0
      %8480 = vmatmul.mubr.f32.gmra.mxu0 %v8402
      %v8481 = vpop.f32.mrf.mxu0
      %v8482 = vadd.f32 0.0, %v8481
      %v8483 = vpop.f32.mrf.mxu0
      %8484 = vmatprep.mubr.f32.mxu0 0.0
      %8485 = vmatmul.mubr.f32.gmra.mxu0 %v8405
      %v8486 = vpop.f32.mrf.mxu0
      %v8487 = vadd.f32 0.0, %v8486
      %v8488 = vpop.f32.mrf.mxu0
      %8489 = vmatprep.mubr.f32.mxu0 0.0
      %8490 = vmatmul.mubr.f32.gmra.mxu0 %v8408
      %v8491 = vpop.f32.mrf.mxu0
      %v8492 = vadd.f32 0.0, %v8491
      %v8493 = vpop.f32.mrf.mxu0
      %8494 = vdwg.mxu0
      %v8495 = vadd.f32 %v8305, %v8477
      %v8496 = vadd.f32 %v8306, %v8482
      %v8497 = vadd.f32 %v8307, %v8487
      %v8498 = vadd.f32 %v8308, %v8492
      %s8499 = scalar_lea.vmem %s3, 480
      %v8500 = vld [vmem:[%s8499] sm:$0xff]
      %v8501 = vld [vmem:[%s8499 + $0x8] sm:$0xff]
      %v8502 = vld [vmem:[%s8499 + $0x10] sm:$0xff]
      %v8503 = vld [vmem:[%s8499 + $0x18] sm:$0xff]
      %v8504 = vld [vmem:[%s8499 + $0x20] sm:$0xf]
      %v8506 = vsel %vm6232, %v8504, 0
      %8508 = vmatprep.subr.mxu0 0.0
      %8509 = vmatpush1.msra.mxu0 0.0
      %8510 = vmatprep.subr.mxu0 0.0
      %8511 = vmatpush1.msra.mxu0 0.0
      %8512 = vmatprep.subr.mxu0 0.0
      %8513 = vmatpush1.msra.mxu0 0.0
      %8514 = vmatprep.subr.mxu0 0.0
      %8515 = vmatpush1.msra.mxu0 0.0
      %8516 = vmatprep.subr.mxu0 0.0
      %8517 = vmatpush1.msra.mxu0 0.0
      %8518 = vmatprep.subr.mxu0 0.0
      %8519 = vmatpush1.msra.mxu0 0.0
      %8520 = vmatprep.subr.mxu0 0.0
      %8521 = vmatpush1.msra.mxu0 0.0
      %8522 = vmatprep.subr.mxu0 0.0
      %8523 = vmatpush1.msra.mxu0 0.0
      %8524 = vmatprep.subr.mxu0 0.0
      %8525 = vmatpush1.msra.mxu0 0.0
      %8526 = vmatprep.subr.mxu0 0.0
      %8527 = vmatpush1.msra.mxu0 0.0
      %8528 = vmatprep.subr.mxu0 0.0
      %8529 = vmatpush1.msra.mxu0 0.0
      %8530 = vmatprep.subr.mxu0 0.0
      %8531 = vmatpush1.msra.mxu0 %v8506
      %8532 = vmatprep.subr.mxu0 0.0
      %8533 = vmatpush1.msra.mxu0 %v8503
      %8534 = vmatprep.subr.mxu0 0.0
      %8535 = vmatpush1.msra.mxu0 %v8502
      %8536 = vmatprep.subr.mxu0 0.0
      %8537 = vmatpush1.msra.mxu0 %v8501
      %8538 = vmatprep.subr.mxu0 0.0
      %8539 = vmatpush1.msra.mxu0 %v8500
      %8540 = vmatprep.subr.mxu0 0.0
      %8541 = vmatpush2.msra.mxu0 0.0
      %8542 = vmatprep.subr.mxu0 0.0
      %8543 = vmatpush2.msra.mxu0 0.0
      %8544 = vmatprep.subr.mxu0 0.0
      %8545 = vmatpush2.msra.mxu0 0.0
      %8546 = vmatprep.subr.mxu0 0.0
      %8547 = vmatpush2.msra.mxu0 0.0
      %8548 = vmatprep.subr.mxu0 0.0
      %8549 = vmatpush2.msra.mxu0 0.0
      %8550 = vmatprep.subr.mxu0 0.0
      %8551 = vmatpush2.msra.mxu0 0.0
      %8552 = vmatprep.subr.mxu0 0.0
      %8553 = vmatpush2.msra.mxu0 0.0
      %8554 = vmatprep.subr.mxu0 0.0
      %8555 = vmatpush2.msra.mxu0 0.0
      %8556 = vmatprep.subr.mxu0 0.0
      %8557 = vmatpush2.msra.mxu0 0.0
      %8558 = vmatprep.subr.mxu0 0.0
      %8559 = vmatpush2.msra.mxu0 0.0
      %8560 = vmatprep.subr.mxu0 0.0
      %8561 = vmatpush2.msra.mxu0 0.0
      %8562 = vmatprep.subr.mxu0 0.0
      %8563 = vmatpush2.msra.mxu0 0.0
      %8564 = vmatprep.subr.mxu0 0.0
      %8565 = vmatpush2.msra.mxu0 0.0
      %8566 = vmatprep.subr.mxu0 0.0
      %8567 = vmatpush2.msra.mxu0 0.0
      %8568 = vmatprep.subr.mxu0 0.0
      %8569 = vmatpush2.msra.mxu0 0.0
      %8570 = vmatprep.subr.mxu0 0.0
      %8571 = vmatpush2.msra.mxu0 0.0
      %8572 = vmatprep.mubr.f32.mxu0 0.0
      %8573 = vmatmul.mubr.f32.gmra.mxu0 %v6227
      %v8574 = vpop.f32.mrf.mxu0
      %v8575 = vadd.f32 0.0, %v8574
      %v8576 = vpop.f32.mrf.mxu0
      %8577 = vmatprep.mubr.f32.mxu0 0.0
      %8578 = vmatmul.mubr.f32.gmra.mxu0 %v6230
      %v8579 = vpop.f32.mrf.mxu0
      %v8580 = vadd.f32 0.0, %v8579
      %v8581 = vpop.f32.mrf.mxu0
      %8582 = vdwg.mxu0
      %s8583 = scalar_lea.vmem %s7, 384
      %v8584 = vld [vmem:[%s8583] sm:$0xff]
      %v8585 = vld [vmem:[%s8583 + $0x8] sm:$0xff]
      %v8586 = vld [vmem:[%s8583 + $0x10] sm:$0xff]
      %v8587 = vld [vmem:[%s8583 + $0x18] sm:$0xff]
      %v8589 = vsel %vm6404, %v8584, 0
      %v8592 = vsel %vm6404, %v8585, 0
      %v8595 = vsel %vm6404, %v8586, 0
      %v8598 = vsel %vm6404, %v8587, 0
      %8600 = vmatprep.subr.mxu0 0.0
      %8601 = vmatpush1.msra.mxu0 0.0
      %8602 = vmatprep.subr.mxu0 0.0
      %8603 = vmatpush1.msra.mxu0 0.0
      %8604 = vmatprep.subr.mxu0 0.0
      %8605 = vmatpush1.msra.mxu0 0.0
      %8606 = vmatprep.subr.mxu0 0.0
      %8607 = vmatpush1.msra.mxu0 0.0
      %8608 = vmatprep.subr.mxu0 0.0
      %8609 = vmatpush1.msra.mxu0 0.0
      %8610 = vmatprep.subr.mxu0 0.0
      %8611 = vmatpush1.msra.mxu0 0.0
      %8612 = vmatprep.subr.mxu0 0.0
      %8613 = vmatpush1.msra.mxu0 0.0
      %8614 = vmatprep.subr.mxu0 0.0
      %8615 = vmatpush1.msra.mxu0 0.0
      %8616 = vmatprep.subr.mxu0 0.0
      %8617 = vmatpush1.msra.mxu0 0.0
      %8618 = vmatprep.subr.mxu0 0.0
      %8619 = vmatpush1.msra.mxu0 0.0
      %8620 = vmatprep.subr.mxu0 0.0
      %8621 = vmatpush1.msra.mxu0 0.0
      %8622 = vmatprep.subr.mxu0 0.0
      %8623 = vmatpush1.msra.mxu0 0.0
      %8624 = vmatprep.subr.mxu0 0.0
      %8625 = vmatpush1.msra.mxu0 0.0
      %8626 = vmatprep.subr.mxu0 0.0
      %8627 = vmatpush1.msra.mxu0 0.0
      %8628 = vmatprep.subr.mxu0 0.0
      %8629 = vmatpush1.msra.mxu0 %v8580
      %8630 = vmatprep.subr.mxu0 0.0
      %8631 = vmatpush1.msra.mxu0 %v8575
      %8632 = vmatprep.subr.mxu0 0.0
      %8633 = vmatpush2.msra.mxu0 0.0
      %8634 = vmatprep.subr.mxu0 0.0
      %8635 = vmatpush2.msra.mxu0 0.0
      %8636 = vmatprep.subr.mxu0 0.0
      %8637 = vmatpush2.msra.mxu0 0.0
      %8638 = vmatprep.subr.mxu0 0.0
      %8639 = vmatpush2.msra.mxu0 0.0
      %8640 = vmatprep.subr.mxu0 0.0
      %8641 = vmatpush2.msra.mxu0 0.0
      %8642 = vmatprep.subr.mxu0 0.0
      %8643 = vmatpush2.msra.mxu0 0.0
      %8644 = vmatprep.subr.mxu0 0.0
      %8645 = vmatpush2.msra.mxu0 0.0
      %8646 = vmatprep.subr.mxu0 0.0
      %8647 = vmatpush2.msra.mxu0 0.0
      %8648 = vmatprep.subr.mxu0 0.0
      %8649 = vmatpush2.msra.mxu0 0.0
      %8650 = vmatprep.subr.mxu0 0.0
      %8651 = vmatpush2.msra.mxu0 0.0
      %8652 = vmatprep.subr.mxu0 0.0
      %8653 = vmatpush2.msra.mxu0 0.0
      %8654 = vmatprep.subr.mxu0 0.0
      %8655 = vmatpush2.msra.mxu0 0.0
      %8656 = vmatprep.subr.mxu0 0.0
      %8657 = vmatpush2.msra.mxu0 0.0
      %8658 = vmatprep.subr.mxu0 0.0
      %8659 = vmatpush2.msra.mxu0 0.0
      %8660 = vmatprep.subr.mxu0 0.0
      %8661 = vmatpush2.msra.mxu0 0.0
      %8662 = vmatprep.subr.mxu0 0.0
      %8663 = vmatpush2.msra.mxu0 0.0
      %8664 = vmatprep.mubr.f32.mxu0 0.0
      %8665 = vmatmul.mubr.f32.gmra.mxu0 %v8589
      %v8666 = vpop.f32.mrf.mxu0
      %v8667 = vadd.f32 0.0, %v8666
      %v8668 = vpop.f32.mrf.mxu0
      %8669 = vmatprep.mubr.f32.mxu0 0.0
      %8670 = vmatmul.mubr.f32.gmra.mxu0 %v8592
      %v8671 = vpop.f32.mrf.mxu0
      %v8672 = vadd.f32 0.0, %v8671
      %v8673 = vpop.f32.mrf.mxu0
      %8674 = vmatprep.mubr.f32.mxu0 0.0
      %8675 = vmatmul.mubr.f32.gmra.mxu0 %v8595
      %v8676 = vpop.f32.mrf.mxu0
      %v8677 = vadd.f32 0.0, %v8676
      %v8678 = vpop.f32.mrf.mxu0
      %8679 = vmatprep.mubr.f32.mxu0 0.0
      %8680 = vmatmul.mubr.f32.gmra.mxu0 %v8598
      %v8681 = vpop.f32.mrf.mxu0
      %v8682 = vadd.f32 0.0, %v8681
      %v8683 = vpop.f32.mrf.mxu0
      %8684 = vdwg.mxu0
      %v8685 = vadd.f32 %v8495, %v8667
      %v8686 = vadd.f32 %v8496, %v8672
      %v8687 = vadd.f32 %v8497, %v8677
      %v8688 = vadd.f32 %v8498, %v8682
      %s8689 = scalar_lea.vmem %s3, 520
      %v8690 = vld [vmem:[%s8689] sm:$0xff]
      %v8691 = vld [vmem:[%s8689 + $0x8] sm:$0xff]
      %v8692 = vld [vmem:[%s8689 + $0x10] sm:$0xff]
      %v8693 = vld [vmem:[%s8689 + $0x18] sm:$0xff]
      %v8694 = vld [vmem:[%s8689 + $0x20] sm:$0xf]
      %v8696 = vsel %vm6232, %v8694, 0
      %8698 = vmatprep.subr.mxu0 0.0
      %8699 = vmatpush1.msra.mxu0 0.0
      %8700 = vmatprep.subr.mxu0 0.0
      %8701 = vmatpush1.msra.mxu0 0.0
      %8702 = vmatprep.subr.mxu0 0.0
      %8703 = vmatpush1.msra.mxu0 0.0
      %8704 = vmatprep.subr.mxu0 0.0
      %8705 = vmatpush1.msra.mxu0 0.0
      %8706 = vmatprep.subr.mxu0 0.0
      %8707 = vmatpush1.msra.mxu0 0.0
      %8708 = vmatprep.subr.mxu0 0.0
      %8709 = vmatpush1.msra.mxu0 0.0
      %8710 = vmatprep.subr.mxu0 0.0
      %8711 = vmatpush1.msra.mxu0 0.0
      %8712 = vmatprep.subr.mxu0 0.0
      %8713 = vmatpush1.msra.mxu0 0.0
      %8714 = vmatprep.subr.mxu0 0.0
      %8715 = vmatpush1.msra.mxu0 0.0
      %8716 = vmatprep.subr.mxu0 0.0
      %8717 = vmatpush1.msra.mxu0 0.0
      %8718 = vmatprep.subr.mxu0 0.0
      %8719 = vmatpush1.msra.mxu0 0.0
      %8720 = vmatprep.subr.mxu0 0.0
      %8721 = vmatpush1.msra.mxu0 %v8696
      %8722 = vmatprep.subr.mxu0 0.0
      %8723 = vmatpush1.msra.mxu0 %v8693
      %8724 = vmatprep.subr.mxu0 0.0
      %8725 = vmatpush1.msra.mxu0 %v8692
      %8726 = vmatprep.subr.mxu0 0.0
      %8727 = vmatpush1.msra.mxu0 %v8691
      %8728 = vmatprep.subr.mxu0 0.0
      %8729 = vmatpush1.msra.mxu0 %v8690
      %8730 = vmatprep.subr.mxu0 0.0
      %8731 = vmatpush2.msra.mxu0 0.0
      %8732 = vmatprep.subr.mxu0 0.0
      %8733 = vmatpush2.msra.mxu0 0.0
      %8734 = vmatprep.subr.mxu0 0.0
      %8735 = vmatpush2.msra.mxu0 0.0
      %8736 = vmatprep.subr.mxu0 0.0
      %8737 = vmatpush2.msra.mxu0 0.0
      %8738 = vmatprep.subr.mxu0 0.0
      %8739 = vmatpush2.msra.mxu0 0.0
      %8740 = vmatprep.subr.mxu0 0.0
      %8741 = vmatpush2.msra.mxu0 0.0
      %8742 = vmatprep.subr.mxu0 0.0
      %8743 = vmatpush2.msra.mxu0 0.0
      %8744 = vmatprep.subr.mxu0 0.0
      %8745 = vmatpush2.msra.mxu0 0.0
      %8746 = vmatprep.subr.mxu0 0.0
      %8747 = vmatpush2.msra.mxu0 0.0
      %8748 = vmatprep.subr.mxu0 0.0
      %8749 = vmatpush2.msra.mxu0 0.0
      %8750 = vmatprep.subr.mxu0 0.0
      %8751 = vmatpush2.msra.mxu0 0.0
      %8752 = vmatprep.subr.mxu0 0.0
      %8753 = vmatpush2.msra.mxu0 0.0
      %8754 = vmatprep.subr.mxu0 0.0
      %8755 = vmatpush2.msra.mxu0 0.0
      %8756 = vmatprep.subr.mxu0 0.0
      %8757 = vmatpush2.msra.mxu0 0.0
      %8758 = vmatprep.subr.mxu0 0.0
      %8759 = vmatpush2.msra.mxu0 0.0
      %8760 = vmatprep.subr.mxu0 0.0
      %8761 = vmatpush2.msra.mxu0 0.0
      %8762 = vmatprep.mubr.f32.mxu0 0.0
      %8763 = vmatmul.mubr.f32.gmra.mxu0 %v6227
      %v8764 = vpop.f32.mrf.mxu0
      %v8765 = vadd.f32 0.0, %v8764
      %v8766 = vpop.f32.mrf.mxu0
      %8767 = vmatprep.mubr.f32.mxu0 0.0
      %8768 = vmatmul.mubr.f32.gmra.mxu0 %v6230
      %v8769 = vpop.f32.mrf.mxu0
      %v8770 = vadd.f32 0.0, %v8769
      %v8771 = vpop.f32.mrf.mxu0
      %8772 = vdwg.mxu0
      %s8773 = scalar_lea.vmem %s7, 416
      %v8774 = vld [vmem:[%s8773] sm:$0xff]
      %v8775 = vld [vmem:[%s8773 + $0x8] sm:$0xff]
      %v8776 = vld [vmem:[%s8773 + $0x10] sm:$0xff]
      %v8777 = vld [vmem:[%s8773 + $0x18] sm:$0xff]
      %v8779 = vsel %vm6404, %v8774, 0
      %v8782 = vsel %vm6404, %v8775, 0
      %v8785 = vsel %vm6404, %v8776, 0
      %v8788 = vsel %vm6404, %v8777, 0
      %8790 = vmatprep.subr.mxu0 0.0
      %8791 = vmatpush1.msra.mxu0 0.0
      %8792 = vmatprep.subr.mxu0 0.0
      %8793 = vmatpush1.msra.mxu0 0.0
      %8794 = vmatprep.subr.mxu0 0.0
      %8795 = vmatpush1.msra.mxu0 0.0
      %8796 = vmatprep.subr.mxu0 0.0
      %8797 = vmatpush1.msra.mxu0 0.0
      %8798 = vmatprep.subr.mxu0 0.0
      %8799 = vmatpush1.msra.mxu0 0.0
      %8800 = vmatprep.subr.mxu0 0.0
      %8801 = vmatpush1.msra.mxu0 0.0
      %8802 = vmatprep.subr.mxu0 0.0
      %8803 = vmatpush1.msra.mxu0 0.0
      %8804 = vmatprep.subr.mxu0 0.0
      %8805 = vmatpush1.msra.mxu0 0.0
      %8806 = vmatprep.subr.mxu0 0.0
      %8807 = vmatpush1.msra.mxu0 0.0
      %8808 = vmatprep.subr.mxu0 0.0
      %8809 = vmatpush1.msra.mxu0 0.0
      %8810 = vmatprep.subr.mxu0 0.0
      %8811 = vmatpush1.msra.mxu0 0.0
      %8812 = vmatprep.subr.mxu0 0.0
      %8813 = vmatpush1.msra.mxu0 0.0
      %8814 = vmatprep.subr.mxu0 0.0
      %8815 = vmatpush1.msra.mxu0 0.0
      %8816 = vmatprep.subr.mxu0 0.0
      %8817 = vmatpush1.msra.mxu0 0.0
      %8818 = vmatprep.subr.mxu0 0.0
      %8819 = vmatpush1.msra.mxu0 %v8770
      %8820 = vmatprep.subr.mxu0 0.0
      %8821 = vmatpush1.msra.mxu0 %v8765
      %8822 = vmatprep.subr.mxu0 0.0
      %8823 = vmatpush2.msra.mxu0 0.0
      %8824 = vmatprep.subr.mxu0 0.0
      %8825 = vmatpush2.msra.mxu0 0.0
      %8826 = vmatprep.subr.mxu0 0.0
      %8827 = vmatpush2.msra.mxu0 0.0
      %8828 = vmatprep.subr.mxu0 0.0
      %8829 = vmatpush2.msra.mxu0 0.0
      %8830 = vmatprep.subr.mxu0 0.0
      %8831 = vmatpush2.msra.mxu0 0.0
      %8832 = vmatprep.subr.mxu0 0.0
      %8833 = vmatpush2.msra.mxu0 0.0
      %8834 = vmatprep.subr.mxu0 0.0
      %8835 = vmatpush2.msra.mxu0 0.0
      %8836 = vmatprep.subr.mxu0 0.0
      %8837 = vmatpush2.msra.mxu0 0.0
      %8838 = vmatprep.subr.mxu0 0.0
      %8839 = vmatpush2.msra.mxu0 0.0
      %8840 = vmatprep.subr.mxu0 0.0
      %8841 = vmatpush2.msra.mxu0 0.0
      %8842 = vmatprep.subr.mxu0 0.0
      %8843 = vmatpush2.msra.mxu0 0.0
      %8844 = vmatprep.subr.mxu0 0.0
      %8845 = vmatpush2.msra.mxu0 0.0
      %8846 = vmatprep.subr.mxu0 0.0
      %8847 = vmatpush2.msra.mxu0 0.0
      %8848 = vmatprep.subr.mxu0 0.0
      %8849 = vmatpush2.msra.mxu0 0.0
      %8850 = vmatprep.subr.mxu0 0.0
      %8851 = vmatpush2.msra.mxu0 0.0
      %8852 = vmatprep.subr.mxu0 0.0
      %8853 = vmatpush2.msra.mxu0 0.0
      %8854 = vmatprep.mubr.f32.mxu0 0.0
      %8855 = vmatmul.mubr.f32.gmra.mxu0 %v8779
      %v8856 = vpop.f32.mrf.mxu0
      %v8857 = vadd.f32 0.0, %v8856
      %v8858 = vpop.f32.mrf.mxu0
      %8859 = vmatprep.mubr.f32.mxu0 0.0
      %8860 = vmatmul.mubr.f32.gmra.mxu0 %v8782
      %v8861 = vpop.f32.mrf.mxu0
      %v8862 = vadd.f32 0.0, %v8861
      %v8863 = vpop.f32.mrf.mxu0
      %8864 = vmatprep.mubr.f32.mxu0 0.0
      %8865 = vmatmul.mubr.f32.gmra.mxu0 %v8785
      %v8866 = vpop.f32.mrf.mxu0
      %v8867 = vadd.f32 0.0, %v8866
      %v8868 = vpop.f32.mrf.mxu0
      %8869 = vmatprep.mubr.f32.mxu0 0.0
      %8870 = vmatmul.mubr.f32.gmra.mxu0 %v8788
      %v8871 = vpop.f32.mrf.mxu0
      %v8872 = vadd.f32 0.0, %v8871
      %v8873 = vpop.f32.mrf.mxu0
      %8874 = vdwg.mxu0
      %v8875 = vadd.f32 %v8685, %v8857
      %v8876 = vadd.f32 %v8686, %v8862
      %v8877 = vadd.f32 %v8687, %v8867
      %v8878 = vadd.f32 %v8688, %v8872
      %s8879 = scalar_lea.vmem %s3, 560
      %v8880 = vld [vmem:[%s8879] sm:$0xff]
      %v8881 = vld [vmem:[%s8879 + $0x8] sm:$0xff]
      %v8882 = vld [vmem:[%s8879 + $0x10] sm:$0xff]
      %v8883 = vld [vmem:[%s8879 + $0x18] sm:$0xff]
      %v8884 = vld [vmem:[%s8879 + $0x20] sm:$0xf]
      %v8886 = vsel %vm6232, %v8884, 0
      %8888 = vmatprep.subr.mxu0 0.0
      %8889 = vmatpush1.msra.mxu0 0.0
      %8890 = vmatprep.subr.mxu0 0.0
      %8891 = vmatpush1.msra.mxu0 0.0
      %8892 = vmatprep.subr.mxu0 0.0
      %8893 = vmatpush1.msra.mxu0 0.0
      %8894 = vmatprep.subr.mxu0 0.0
      %8895 = vmatpush1.msra.mxu0 0.0
      %8896 = vmatprep.subr.mxu0 0.0
      %8897 = vmatpush1.msra.mxu0 0.0
      %8898 = vmatprep.subr.mxu0 0.0
      %8899 = vmatpush1.msra.mxu0 0.0
      %8900 = vmatprep.subr.mxu0 0.0
      %8901 = vmatpush1.msra.mxu0 0.0
      %8902 = vmatprep.subr.mxu0 0.0
      %8903 = vmatpush1.msra.mxu0 0.0
      %8904 = vmatprep.subr.mxu0 0.0
      %8905 = vmatpush1.msra.mxu0 0.0
      %8906 = vmatprep.subr.mxu0 0.0
      %8907 = vmatpush1.msra.mxu0 0.0
      %8908 = vmatprep.subr.mxu0 0.0
      %8909 = vmatpush1.msra.mxu0 0.0
      %8910 = vmatprep.subr.mxu0 0.0
      %8911 = vmatpush1.msra.mxu0 %v8886
      %8912 = vmatprep.subr.mxu0 0.0
      %8913 = vmatpush1.msra.mxu0 %v8883
      %8914 = vmatprep.subr.mxu0 0.0
      %8915 = vmatpush1.msra.mxu0 %v8882
      %8916 = vmatprep.subr.mxu0 0.0
      %8917 = vmatpush1.msra.mxu0 %v8881
      %8918 = vmatprep.subr.mxu0 0.0
      %8919 = vmatpush1.msra.mxu0 %v8880
      %8920 = vmatprep.subr.mxu0 0.0
      %8921 = vmatpush2.msra.mxu0 0.0
      %8922 = vmatprep.subr.mxu0 0.0
      %8923 = vmatpush2.msra.mxu0 0.0
      %8924 = vmatprep.subr.mxu0 0.0
      %8925 = vmatpush2.msra.mxu0 0.0
      %8926 = vmatprep.subr.mxu0 0.0
      %8927 = vmatpush2.msra.mxu0 0.0
      %8928 = vmatprep.subr.mxu0 0.0
      %8929 = vmatpush2.msra.mxu0 0.0
      %8930 = vmatprep.subr.mxu0 0.0
      %8931 = vmatpush2.msra.mxu0 0.0
      %8932 = vmatprep.subr.mxu0 0.0
      %8933 = vmatpush2.msra.mxu0 0.0
      %8934 = vmatprep.subr.mxu0 0.0
      %8935 = vmatpush2.msra.mxu0 0.0
      %8936 = vmatprep.subr.mxu0 0.0
      %8937 = vmatpush2.msra.mxu0 0.0
      %8938 = vmatprep.subr.mxu0 0.0
      %8939 = vmatpush2.msra.mxu0 0.0
      %8940 = vmatprep.subr.mxu0 0.0
      %8941 = vmatpush2.msra.mxu0 0.0
      %8942 = vmatprep.subr.mxu0 0.0
      %8943 = vmatpush2.msra.mxu0 0.0
      %8944 = vmatprep.subr.mxu0 0.0
      %8945 = vmatpush2.msra.mxu0 0.0
      %8946 = vmatprep.subr.mxu0 0.0
      %8947 = vmatpush2.msra.mxu0 0.0
      %8948 = vmatprep.subr.mxu0 0.0
      %8949 = vmatpush2.msra.mxu0 0.0
      %8950 = vmatprep.subr.mxu0 0.0
      %8951 = vmatpush2.msra.mxu0 0.0
      %8952 = vmatprep.mubr.f32.mxu0 0.0
      %8953 = vmatmul.mubr.f32.gmra.mxu0 %v6227
      %v8954 = vpop.f32.mrf.mxu0
      %v8955 = vadd.f32 0.0, %v8954
      %v8956 = vpop.f32.mrf.mxu0
      %8957 = vmatprep.mubr.f32.mxu0 0.0
      %8958 = vmatmul.mubr.f32.gmra.mxu0 %v6230
      %v8959 = vpop.f32.mrf.mxu0
      %v8960 = vadd.f32 0.0, %v8959
      %v8961 = vpop.f32.mrf.mxu0
      %8962 = vdwg.mxu0
      %s8963 = scalar_lea.vmem %s7, 448
      %v8964 = vld [vmem:[%s8963] sm:$0xff]
      %v8965 = vld [vmem:[%s8963 + $0x8] sm:$0xff]
      %v8966 = vld [vmem:[%s8963 + $0x10] sm:$0xff]
      %v8967 = vld [vmem:[%s8963 + $0x18] sm:$0xff]
      %v8969 = vsel %vm6404, %v8964, 0
      %v8972 = vsel %vm6404, %v8965, 0
      %v8975 = vsel %vm6404, %v8966, 0
      %v8978 = vsel %vm6404, %v8967, 0
      %8980 = vmatprep.subr.mxu0 0.0
      %8981 = vmatpush1.msra.mxu0 0.0
      %8982 = vmatprep.subr.mxu0 0.0
      %8983 = vmatpush1.msra.mxu0 0.0
      %8984 = vmatprep.subr.mxu0 0.0
      %8985 = vmatpush1.msra.mxu0 0.0
      %8986 = vmatprep.subr.mxu0 0.0
      %8987 = vmatpush1.msra.mxu0 0.0
      %8988 = vmatprep.subr.mxu0 0.0
      %8989 = vmatpush1.msra.mxu0 0.0
      %8990 = vmatprep.subr.mxu0 0.0
      %8991 = vmatpush1.msra.mxu0 0.0
      %8992 = vmatprep.subr.mxu0 0.0
      %8993 = vmatpush1.msra.mxu0 0.0
      %8994 = vmatprep.subr.mxu0 0.0
      %8995 = vmatpush1.msra.mxu0 0.0
      %8996 = vmatprep.subr.mxu0 0.0
      %8997 = vmatpush1.msra.mxu0 0.0
      %8998 = vmatprep.subr.mxu0 0.0
      %8999 = vmatpush1.msra.mxu0 0.0
      %9000 = vmatprep.subr.mxu0 0.0
      %9001 = vmatpush1.msra.mxu0 0.0
      %9002 = vmatprep.subr.mxu0 0.0
      %9003 = vmatpush1.msra.mxu0 0.0
      %9004 = vmatprep.subr.mxu0 0.0
      %9005 = vmatpush1.msra.mxu0 0.0
      %9006 = vmatprep.subr.mxu0 0.0
      %9007 = vmatpush1.msra.mxu0 0.0
      %9008 = vmatprep.subr.mxu0 0.0
      %9009 = vmatpush1.msra.mxu0 %v8960
      %9010 = vmatprep.subr.mxu0 0.0
      %9011 = vmatpush1.msra.mxu0 %v8955
      %9012 = vmatprep.subr.mxu0 0.0
      %9013 = vmatpush2.msra.mxu0 0.0
      %9014 = vmatprep.subr.mxu0 0.0
      %9015 = vmatpush2.msra.mxu0 0.0
      %9016 = vmatprep.subr.mxu0 0.0
      %9017 = vmatpush2.msra.mxu0 0.0
      %9018 = vmatprep.subr.mxu0 0.0
      %9019 = vmatpush2.msra.mxu0 0.0
      %9020 = vmatprep.subr.mxu0 0.0
      %9021 = vmatpush2.msra.mxu0 0.0
      %9022 = vmatprep.subr.mxu0 0.0
      %9023 = vmatpush2.msra.mxu0 0.0
      %9024 = vmatprep.subr.mxu0 0.0
      %9025 = vmatpush2.msra.mxu0 0.0
      %9026 = vmatprep.subr.mxu0 0.0
      %9027 = vmatpush2.msra.mxu0 0.0
      %9028 = vmatprep.subr.mxu0 0.0
      %9029 = vmatpush2.msra.mxu0 0.0
      %9030 = vmatprep.subr.mxu0 0.0
      %9031 = vmatpush2.msra.mxu0 0.0
      %9032 = vmatprep.subr.mxu0 0.0
      %9033 = vmatpush2.msra.mxu0 0.0
      %9034 = vmatprep.subr.mxu0 0.0
      %9035 = vmatpush2.msra.mxu0 0.0
      %9036 = vmatprep.subr.mxu0 0.0
      %9037 = vmatpush2.msra.mxu0 0.0
      %9038 = vmatprep.subr.mxu0 0.0
      %9039 = vmatpush2.msra.mxu0 0.0
      %9040 = vmatprep.subr.mxu0 0.0
      %9041 = vmatpush2.msra.mxu0 0.0
      %9042 = vmatprep.subr.mxu0 0.0
      %9043 = vmatpush2.msra.mxu0 0.0
      %9044 = vmatprep.mubr.f32.mxu0 0.0
      %9045 = vmatmul.mubr.f32.gmra.mxu0 %v8969
      %v9046 = vpop.f32.mrf.mxu0
      %v9047 = vadd.f32 0.0, %v9046
      %v9048 = vpop.f32.mrf.mxu0
      %9049 = vmatprep.mubr.f32.mxu0 0.0
      %9050 = vmatmul.mubr.f32.gmra.mxu0 %v8972
      %v9051 = vpop.f32.mrf.mxu0
      %v9052 = vadd.f32 0.0, %v9051
      %v9053 = vpop.f32.mrf.mxu0
      %9054 = vmatprep.mubr.f32.mxu0 0.0
      %9055 = vmatmul.mubr.f32.gmra.mxu0 %v8975
      %v9056 = vpop.f32.mrf.mxu0
      %v9057 = vadd.f32 0.0, %v9056
      %v9058 = vpop.f32.mrf.mxu0
      %9059 = vmatprep.mubr.f32.mxu0 0.0
      %9060 = vmatmul.mubr.f32.gmra.mxu0 %v8978
      %v9061 = vpop.f32.mrf.mxu0
      %v9062 = vadd.f32 0.0, %v9061
      %v9063 = vpop.f32.mrf.mxu0
      %9064 = vdwg.mxu0
      %v9065 = vadd.f32 %v8875, %v9047
      %v9066 = vadd.f32 %v8876, %v9052
      %v9067 = vadd.f32 %v8877, %v9057
      %v9068 = vadd.f32 %v8878, %v9062
      %s9069 = scalar_lea.vmem %s3, 600
      %v9070 = vld [vmem:[%s9069] sm:$0xff]
      %v9071 = vld [vmem:[%s9069 + $0x8] sm:$0xff]
      %v9072 = vld [vmem:[%s9069 + $0x10] sm:$0xff]
      %v9073 = vld [vmem:[%s9069 + $0x18] sm:$0xff]
      %v9074 = vld [vmem:[%s9069 + $0x20] sm:$0xf]
      %v9076 = vsel %vm6232, %v9074, 0
      %9078 = vmatprep.subr.mxu0 0.0
      %9079 = vmatpush1.msra.mxu0 0.0
      %9080 = vmatprep.subr.mxu0 0.0
      %9081 = vmatpush1.msra.mxu0 0.0
      %9082 = vmatprep.subr.mxu0 0.0
      %9083 = vmatpush1.msra.mxu0 0.0
      %9084 = vmatprep.subr.mxu0 0.0
      %9085 = vmatpush1.msra.mxu0 0.0
      %9086 = vmatprep.subr.mxu0 0.0
      %9087 = vmatpush1.msra.mxu0 0.0
      %9088 = vmatprep.subr.mxu0 0.0
      %9089 = vmatpush1.msra.mxu0 0.0
      %9090 = vmatprep.subr.mxu0 0.0
      %9091 = vmatpush1.msra.mxu0 0.0
      %9092 = vmatprep.subr.mxu0 0.0
      %9093 = vmatpush1.msra.mxu0 0.0
      %9094 = vmatprep.subr.mxu0 0.0
      %9095 = vmatpush1.msra.mxu0 0.0
      %9096 = vmatprep.subr.mxu0 0.0
      %9097 = vmatpush1.msra.mxu0 0.0
      %9098 = vmatprep.subr.mxu0 0.0
      %9099 = vmatpush1.msra.mxu0 0.0
      %9100 = vmatprep.subr.mxu0 0.0
      %9101 = vmatpush1.msra.mxu0 %v9076
      %9102 = vmatprep.subr.mxu0 0.0
      %9103 = vmatpush1.msra.mxu0 %v9073
      %9104 = vmatprep.subr.mxu0 0.0
      %9105 = vmatpush1.msra.mxu0 %v9072
      %9106 = vmatprep.subr.mxu0 0.0
      %9107 = vmatpush1.msra.mxu0 %v9071
      %9108 = vmatprep.subr.mxu0 0.0
      %9109 = vmatpush1.msra.mxu0 %v9070
      %9110 = vmatprep.subr.mxu0 0.0
      %9111 = vmatpush2.msra.mxu0 0.0
      %9112 = vmatprep.subr.mxu0 0.0
      %9113 = vmatpush2.msra.mxu0 0.0
      %9114 = vmatprep.subr.mxu0 0.0
      %9115 = vmatpush2.msra.mxu0 0.0
      %9116 = vmatprep.subr.mxu0 0.0
      %9117 = vmatpush2.msra.mxu0 0.0
      %9118 = vmatprep.subr.mxu0 0.0
      %9119 = vmatpush2.msra.mxu0 0.0
      %9120 = vmatprep.subr.mxu0 0.0
      %9121 = vmatpush2.msra.mxu0 0.0
      %9122 = vmatprep.subr.mxu0 0.0
      %9123 = vmatpush2.msra.mxu0 0.0
      %9124 = vmatprep.subr.mxu0 0.0
      %9125 = vmatpush2.msra.mxu0 0.0
      %9126 = vmatprep.subr.mxu0 0.0
      %9127 = vmatpush2.msra.mxu0 0.0
      %9128 = vmatprep.subr.mxu0 0.0
      %9129 = vmatpush2.msra.mxu0 0.0
      %9130 = vmatprep.subr.mxu0 0.0
      %9131 = vmatpush2.msra.mxu0 0.0
      %9132 = vmatprep.subr.mxu0 0.0
      %9133 = vmatpush2.msra.mxu0 0.0
      %9134 = vmatprep.subr.mxu0 0.0
      %9135 = vmatpush2.msra.mxu0 0.0
      %9136 = vmatprep.subr.mxu0 0.0
      %9137 = vmatpush2.msra.mxu0 0.0
      %9138 = vmatprep.subr.mxu0 0.0
      %9139 = vmatpush2.msra.mxu0 0.0
      %9140 = vmatprep.subr.mxu0 0.0
      %9141 = vmatpush2.msra.mxu0 0.0
      %9142 = vmatprep.mubr.f32.mxu0 0.0
      %9143 = vmatmul.mubr.f32.gmra.mxu0 %v6227
      %v9144 = vpop.f32.mrf.mxu0
      %v9145 = vadd.f32 0.0, %v9144
      %v9146 = vpop.f32.mrf.mxu0
      %9147 = vmatprep.mubr.f32.mxu0 0.0
      %9148 = vmatmul.mubr.f32.gmra.mxu0 %v6230
      %v9149 = vpop.f32.mrf.mxu0
      %v9150 = vadd.f32 0.0, %v9149
      %v9151 = vpop.f32.mrf.mxu0
      %9152 = vdwg.mxu0
      %s9153 = scalar_lea.vmem %s7, 480
      %v9154 = vld [vmem:[%s9153] sm:$0xff]
      %v9155 = vld [vmem:[%s9153 + $0x8] sm:$0xff]
      %v9156 = vld [vmem:[%s9153 + $0x10] sm:$0xff]
      %v9157 = vld [vmem:[%s9153 + $0x18] sm:$0xff]
      %v9159 = vsel %vm6404, %v9154, 0
      %v9162 = vsel %vm6404, %v9155, 0
      %v9165 = vsel %vm6404, %v9156, 0
      %v9168 = vsel %vm6404, %v9157, 0
      %9170 = vmatprep.subr.mxu0 0.0
      %9171 = vmatpush1.msra.mxu0 0.0
      %9172 = vmatprep.subr.mxu0 0.0
      %9173 = vmatpush1.msra.mxu0 0.0
      %9174 = vmatprep.subr.mxu0 0.0
      %9175 = vmatpush1.msra.mxu0 0.0
      %9176 = vmatprep.subr.mxu0 0.0
      %9177 = vmatpush1.msra.mxu0 0.0
      %9178 = vmatprep.subr.mxu0 0.0
      %9179 = vmatpush1.msra.mxu0 0.0
      %9180 = vmatprep.subr.mxu0 0.0
      %9181 = vmatpush1.msra.mxu0 0.0
      %9182 = vmatprep.subr.mxu0 0.0
      %9183 = vmatpush1.msra.mxu0 0.0
      %9184 = vmatprep.subr.mxu0 0.0
      %9185 = vmatpush1.msra.mxu0 0.0
      %9186 = vmatprep.subr.mxu0 0.0
      %9187 = vmatpush1.msra.mxu0 0.0
      %9188 = vmatprep.subr.mxu0 0.0
      %9189 = vmatpush1.msra.mxu0 0.0
      %9190 = vmatprep.subr.mxu0 0.0
      %9191 = vmatpush1.msra.mxu0 0.0
      %9192 = vmatprep.subr.mxu0 0.0
      %9193 = vmatpush1.msra.mxu0 0.0
      %9194 = vmatprep.subr.mxu0 0.0
      %9195 = vmatpush1.msra.mxu0 0.0
      %9196 = vmatprep.subr.mxu0 0.0
      %9197 = vmatpush1.msra.mxu0 0.0
      %9198 = vmatprep.subr.mxu0 0.0
      %9199 = vmatpush1.msra.mxu0 %v9150
      %9200 = vmatprep.subr.mxu0 0.0
      %9201 = vmatpush1.msra.mxu0 %v9145
      %9202 = vmatprep.subr.mxu0 0.0
      %9203 = vmatpush2.msra.mxu0 0.0
      %9204 = vmatprep.subr.mxu0 0.0
      %9205 = vmatpush2.msra.mxu0 0.0
      %9206 = vmatprep.subr.mxu0 0.0
      %9207 = vmatpush2.msra.mxu0 0.0
      %9208 = vmatprep.subr.mxu0 0.0
      %9209 = vmatpush2.msra.mxu0 0.0
      %9210 = vmatprep.subr.mxu0 0.0
      %9211 = vmatpush2.msra.mxu0 0.0
      %9212 = vmatprep.subr.mxu0 0.0
      %9213 = vmatpush2.msra.mxu0 0.0
      %9214 = vmatprep.subr.mxu0 0.0
      %9215 = vmatpush2.msra.mxu0 0.0
      %9216 = vmatprep.subr.mxu0 0.0
      %9217 = vmatpush2.msra.mxu0 0.0
      %9218 = vmatprep.subr.mxu0 0.0
      %9219 = vmatpush2.msra.mxu0 0.0
      %9220 = vmatprep.subr.mxu0 0.0
      %9221 = vmatpush2.msra.mxu0 0.0
      %9222 = vmatprep.subr.mxu0 0.0
      %9223 = vmatpush2.msra.mxu0 0.0
      %9224 = vmatprep.subr.mxu0 0.0
      %9225 = vmatpush2.msra.mxu0 0.0
      %9226 = vmatprep.subr.mxu0 0.0
      %9227 = vmatpush2.msra.mxu0 0.0
      %9228 = vmatprep.subr.mxu0 0.0
      %9229 = vmatpush2.msra.mxu0 0.0
      %9230 = vmatprep.subr.mxu0 0.0
      %9231 = vmatpush2.msra.mxu0 0.0
      %9232 = vmatprep.subr.mxu0 0.0
      %9233 = vmatpush2.msra.mxu0 0.0
      %9234 = vmatprep.mubr.f32.mxu0 0.0
      %9235 = vmatmul.mubr.f32.gmra.mxu0 %v9159
      %v9236 = vpop.f32.mrf.mxu0
      %v9237 = vadd.f32 0.0, %v9236
      %v9238 = vpop.f32.mrf.mxu0
      %9239 = vmatprep.mubr.f32.mxu0 0.0
      %9240 = vmatmul.mubr.f32.gmra.mxu0 %v9162
      %v9241 = vpop.f32.mrf.mxu0
      %v9242 = vadd.f32 0.0, %v9241
      %v9243 = vpop.f32.mrf.mxu0
      %9244 = vmatprep.mubr.f32.mxu0 0.0
      %9245 = vmatmul.mubr.f32.gmra.mxu0 %v9165
      %v9246 = vpop.f32.mrf.mxu0
      %v9247 = vadd.f32 0.0, %v9246
      %v9248 = vpop.f32.mrf.mxu0
      %9249 = vmatprep.mubr.f32.mxu0 0.0
      %9250 = vmatmul.mubr.f32.gmra.mxu0 %v9168
      %v9251 = vpop.f32.mrf.mxu0
      %v9252 = vadd.f32 0.0, %v9251
      %v9253 = vpop.f32.mrf.mxu0
      %9254 = vdwg.mxu0
      %v9255 = vadd.f32 %v9065, %v9237
      %v9256 = vadd.f32 %v9066, %v9242
      %v9257 = vadd.f32 %v9067, %v9247
      %v9258 = vadd.f32 %v9068, %v9252
      %vm9259 = vcmask 31744
      %v9260 = vsel %vm9259, %v9255, 0.0
      %9261 = vadd.xlane.f32.xlu0 %v9260
      %v9262 = vpop.xlane.xlu0 %9261
      %v9263 = vsel %vm9259, %v9256, 0.0
      %9264 = vadd.xlane.f32.xlu0 %v9263
      %v9265 = vpop.xlane.xlu0 %9264
      %v9266 = vsel %vm9259, %v9257, 0.0
      %9267 = vadd.xlane.f32.xlu0 %v9266
      %v9268 = vpop.xlane.xlu0 %9267
      %v9269 = vsel %vm9259, %v9258, 0.0
      %9270 = vadd.xlane.f32.xlu0 %v9269
      %v9271 = vpop.xlane.xlu0 %9270
      %v9272 = vrcp.pop 4.0
      %v9273 = vmul.f32 %v9262, %v9272
      %v9274 = vmul.f32 %v9265, %v9272
      %v9275 = vmul.f32 %v9268, %v9272
      %v9276 = vmul.f32 %v9271, %v9272
      %v9277 = vsub.f32 %v9255, %v9273
      %v9278 = vsub.f32 %v9256, %v9274
      %v9279 = vsub.f32 %v9257, %v9275
      %v9280 = vsub.f32 %v9258, %v9276
      %v9281 = vmul.f32 %v9277, %v9277
      %v9282 = vmul.f32 %v9278, %v9278
      %v9283 = vmul.f32 %v9279, %v9279
      %v9284 = vmul.f32 %v9280, %v9280
      %v9285 = vsel %vm9259, %v9281, 0.0
      %9286 = vadd.xlane.f32.xlu0 %v9285
      %v9287 = vpop.xlane.xlu0 %9286
      %v9288 = vsel %vm9259, %v9282, 0.0
      %9289 = vadd.xlane.f32.xlu0 %v9288
      %v9290 = vpop.xlane.xlu0 %9289
      %v9291 = vsel %vm9259, %v9283, 0.0
      %9292 = vadd.xlane.f32.xlu0 %v9291
      %v9293 = vpop.xlane.xlu0 %9292
      %v9294 = vsel %vm9259, %v9284, 0.0
      %9295 = vadd.xlane.f32.xlu0 %v9294
      %v9296 = vpop.xlane.xlu0 %9295
      %v9297 = vmul.f32 %v9287, %v9272
      %v9298 = vmul.f32 %v9290, %v9272
      %v9299 = vmul.f32 %v9293, %v9272
      %v9300 = vmul.f32 %v9296, %v9272
      %v9301 = vadd.f32 %v9297, 1e-05
      %v9302 = vadd.f32 %v9298, 1e-05
      %v9303 = vadd.f32 %v9299, 1e-05
      %v9304 = vadd.f32 %v9300, 1e-05
      %v9305 = vrsqrt.pop %v9301
      %v9306 = vrsqrt.pop %v9302
      %v9307 = vrsqrt.pop %v9303
      %v9308 = vrsqrt.pop %v9304
      %v9309 = vmul.f32 %v9277, %v9305
      %v9310 = vmul.f32 %v9278, %v9306
      %v9311 = vmul.f32 %v9279, %v9307
      %v9312 = vmul.f32 %v9280, %v9308
      %vm9313 = vcmp.ge.f32.partialorder %v9309, 0.0
      %vm9314 = vcmp.ge.f32.partialorder %v9310, 0.0
      %vm9315 = vcmp.ge.f32.partialorder %v9311, 0.0
      %vm9316 = vcmp.ge.f32.partialorder %v9312, 0.0
      %v9317 = vmul.f32 %v9309, 0.2
      %v9318 = vmul.f32 %v9310, 0.2
      %v9319 = vmul.f32 %v9311, 0.2
      %v9320 = vmul.f32 %v9312, 0.2
      %v9321 = vsel %vm9313, %v9309, %v9317
      %v9322 = vsel %vm9314, %v9310, %v9318
      %v9323 = vsel %vm9315, %v9311, %v9319
      %v9324 = vsel %vm9316, %v9312, %v9320
      %v9325 = vld [vmem:[%s8] sm:$0xff]
      %v9326 = vld [vmem:[%s8 + $0x8] sm:$0xff]
      %v9327 = vld [vmem:[%s8 + $0x10] sm:$0xff]
      %v9328 = vld [vmem:[%s8 + $0x18] sm:$0xff]
      %9330 = vset.pattern.permute.xlu0 0
      %9331 = vperm.xlu0 %9330, %v9325
      %v9332 = vpop.permute.xlu0 %9331
      %9335 = vset.pattern.permute.xlu0 0
      %9336 = vperm.xlu0 %9335, %v9326
      %v9337 = vpop.permute.xlu0 %9336
      %9340 = vset.pattern.permute.xlu0 0
      %9341 = vperm.xlu0 %9340, %v9327
      %v9342 = vpop.permute.xlu0 %9341
      %9345 = vset.pattern.permute.xlu0 0
      %9346 = vperm.xlu0 %9345, %v9328
      %v9347 = vpop.permute.xlu0 %9346
      %v9349 = vmul.f32 %v9321, %v9332
      %v9350 = vmul.f32 %v9322, %v9337
      %v9351 = vmul.f32 %v9323, %v9342
      %v9352 = vmul.f32 %v9324, %v9347
      %v9353 = vsel %vm9259, %v9349, 0.0
      %v9354 = vsel %vm9259, %v9350, 0.0
      %v9355 = vadd.f32 %v9353, %v9354
      %v9356 = vsel %vm9259, %v9351, 0.0
      %v9357 = vadd.f32 %v9355, %v9356
      %v9358 = vsel %vm9259, %v9352, 0.0
      %v9359 = vadd.f32 %v9357, %v9358
      %v9360 = vrot.slane %v9359, 4
      %v9361 = vadd.f32 %v9359, %v9360
      %v9362 = vrot.slane %v9361, 2
      %v9363 = vadd.f32 %v9361, %v9362
      %v9364 = vrot.slane %v9363, 1
      %v9365 = vadd.f32 %v9363, %v9364
      %v9366 = vld [vmem:[#allocation2] sm:$0x1]
      %9368 = vset.pattern.permute.xlu0 0
      %9369 = vperm.xlu0 %9368, %v9366
      %v9370 = vpop.permute.xlu0 %9369
      %v9372 = vlaneseq
      %v9373 = vshrl.u32 %v9372, 7
      %v9374 = vsub.s32 0, %v9373
      %v9375 = vrot.slane %v9370, %v9374
      %v9376 = vadd.f32 %v9365, %v9375
      %vm9377 = vcmask 24576
      %9378 = vst.msk [vmem:[%s390] sm:$0x1] %vm9377, %v9376
      %v9379 = vxor.u32 %v9376, 2147483648
      %v9380 = vmul.f32 %v9379, 1.442695
      %v9381 = vpow.pop %v9380
      %v9382 = vadd.f32 %v9381, 1.0
      %v9383 = vrcp.pop %v9382
      %v9384 = vmul.f32 1.0, %v9383
      %9385 = vst.msk [vmem:[%s393] sm:$0x1] %vm9377, %v9384
      %p9386 = scmp.lt.s32.totalorder %s25, 1
      %s9387 = scalar_select %p9386, %s25, 1
      %s9388 = scalar_lea.vmem %s10, %s9387
      %p9389 = scmp.lt.s32.totalorder %s25, 1
      %s9390 = scalar_select %p9389, %s25, 1
      %s9391 = scalar_lea.vmem %s11, %s9390
      // Predicated region
      $region61: #{discriminator_forward.1} parent=59 // pred_check
        %p9392 = pneg %p258
      $region62: #{discriminator_forward.1} parent=59 // pred_check_branch
        %9394 = sbr.rel (%p9392) target = $region64
      $region63: #{discriminator_forward.1} parent=59 // pred_region
        _
      $region64: #{discriminator_forward.1} parent=59 // pred_fallthru
        _
      // Predicated region
      $region65: #{discriminator_forward.1} parent=59 // pred_check
        %p9395 = pneg %p284
      $region66: #{discriminator_forward.1} parent=59 // pred_check_branch
        %9397 = sbr.rel (%p9395) target = $region68
      $region67: #{discriminator_forward.1} parent=59 // pred_region
        _
      $region68: #{discriminator_forward.1} parent=59 // pred_fallthru
        _
    $region60: #{discriminator_forward.1} parent=5 // pred_fallthru
      _
    %p9398 = scmp.le.s32.totalorder 2, %s20
    // Predicated region
    $region69: #{discriminator_forward.1} parent=5 // pred_check
      %p9399 = pneg %p9398
    $region70: #{discriminator_forward.1} parent=5 // pred_check_branch
      %9401 = sbr.rel (%p9399) target = $region72
    $region71: #{discriminator_forward.1} parent=5 // pred_region
      %s9402 = ssub.s32 %s20, 2
      // Predicated region
      $region73: #{discriminator_forward.1} parent=71 // pred_check
        %p9403 = pneg %p264
      $region74: #{discriminator_forward.1} parent=71 // pred_check_branch
        %9405 = sbr.rel (%p9403) target = $region76
      $region75: #{discriminator_forward.1} parent=71 // pred_region
        %p9406 = scmp.lt.s32.totalorder %s26, 1
        %s9407 = scalar_select %p9406, %s26, 1
        %s9408 = scalar_lea.vmem %s10, %s9407
      $region76: #{discriminator_forward.1} parent=71 // pred_fallthru
        _
      // Predicated region
      $region77: #{discriminator_forward.1} parent=71 // pred_check
        %p9409 = pneg %p290
      $region78: #{discriminator_forward.1} parent=71 // pred_check_branch
        %9411 = sbr.rel (%p9409) target = $region80
      $region79: #{discriminator_forward.1} parent=71 // pred_region
        %p9412 = scmp.lt.s32.totalorder %s26, 1
        %s9413 = scalar_select %p9412, %s26, 1
        %s9414 = scalar_lea.vmem %s11, %s9413
      $region80: #{discriminator_forward.1} parent=71 // pred_fallthru
        _
    $region72: #{discriminator_forward.1} parent=5 // pred_fallthru
      _
  $region6: #{discriminator_forward.1} parent=0 // loop_footer
    %s24 = sadd.s32 1, %s20
  $region7: #{discriminator_forward.1} parent=0 // loop_footer_branch
    %19 = sbr.rel target = $region3
  $region8: #{discriminator_forward.1} parent=0 // loop_exit
    _

</llo_original>
